<compile_context>
chip_gen: v5e
topology: v5e:2x2
jax: 0.10.0
libtpu: 0.0.40
codegen_flags: <defaults>
</compile_context>

<pallas_src>
import functools

import jax
import jax.numpy as jnp
from jax.experimental import pallas as pl
from jax.experimental.pallas import tpu as pltpu


def _round_up(v, m):
    return (v + m - 1) // m * m


def _vmem_padded_bytes(shape, dtype):
    """VMEM footprint of an array accounting for (sublane, lane) tile padding."""
    itemsize = jnp.dtype(dtype).itemsize
    sublane = 8 * (4 // itemsize)          # 8 for f32, 16 for bf16
    s = list(shape)
    if len(s) >= 2:
        s[-1] = _round_up(s[-1], 128)
        s[-2] = _round_up(s[-2], sublane)
    else:
        s[-1] = _round_up(s[-1], 128)
    total = itemsize
    for d in s:
        total *= d
    return total


def _convblock_kernel(x_ref, w1_ref, b1_ref, w2_ref, b2_ref, out_ref,
                      xpad_ref, p1_ref, midpad_ref, p2_ref,
                      *, H, W, cin, planes):
    f32 = jnp.float32
    bf16 = jnp.bfloat16

    # ---- zero only the halo of the padded scratches (interior is fully
    #      overwritten every step; halo re-zeroed each step so correctness does
    #      not depend on which TensorCore ran the previous step) ----
    def zero_halo(ref, C):
        Wp = ref.shape[1]
        ref[0:1, :, :] = jnp.zeros((1, Wp, C), bf16)
        ref[H + 1:H + 2, :, :] = jnp.zeros((1, Wp, C), bf16)
        ref[1:H + 1, 0:1, :] = jnp.zeros((H, 1, C), bf16)
        ref[1:H + 1, W + 1:W + 2, :] = jnp.zeros((H, 1, C), bf16)

    zero_halo(xpad_ref, cin)
    zero_halo(midpad_ref, planes)

    # ---- in-kernel zero padding of the input (padding=1), bf16 straight copy ----
    xpad_ref[1:H + 1, 1:W + 1, :] = x_ref[0]

    # ---- conv1 (BN1 scale pre-folded into w1): im2col + one MXU matmul ----
    # im2col laid out as (H, W, 9*cin); single reshape at the dot.
    for dy in range(3):
        for dx in range(3):
            t = dy * 3 + dx
            p1_ref[:, :, t * cin:(t + 1) * cin] = xpad_ref[dy:dy + H, dx:dx + W, :]
    y1 = jnp.dot(p1_ref[...].reshape(H * W, 9 * cin), w1_ref[...],
                 preferred_element_type=f32)                    # (H*W, planes) f32
    y1 = jnp.maximum(y1 + b1_ref[...], 0.0)                     # BN bias + ReLU (f32 VPU)

    # padded intermediate for conv2 (single bf16 cast here)
    midpad_ref[1:H + 1, 1:W + 1, :] = y1.reshape(H, W, planes).astype(bf16)

    # ---- conv2 (BN2 scale pre-folded into w2) ----
    for dy in range(3):
        for dx in range(3):
            t = dy * 3 + dx
            p2_ref[:, :, t * planes:(t + 1) * planes] = midpad_ref[dy:dy + H, dx:dx + W, :]
    y2 = jnp.dot(p2_ref[...].reshape(H * W, 9 * planes), w2_ref[...],
                 preferred_element_type=f32)
    y2 = jnp.maximum(y2 + b2_ref[...], 0.0)

    out_ref[0] = y2.reshape(H, W, planes).astype(out_ref.dtype)


def conv_block_forward(x_nchw, params):
    """x_nchw: (N, Cin, H, W) f32. Returns (N, planes, H, W) f32."""
    w1, g1, be1, m1, v1, w2, g2, be2, m2, v2 = params
    eps = 1e-5
    s1 = g1 / jnp.sqrt(v1 + eps)
    s2 = g2 / jnp.sqrt(v2 + eps)
    b1 = (be1 - m1 * s1).reshape(1, -1).astype(jnp.float32)
    b2 = (be2 - m2 * s2).reshape(1, -1).astype(jnp.float32)

    N, cin, H, W = x_nchw.shape
    planes = w1.shape[0]

    # NCHW -> NHWC (channels on lanes); bf16 halves input HBM traffic.
    # Zero padding happens inside the kernel.
    x = jnp.transpose(x_nchw, (0, 2, 3, 1)).astype(jnp.bfloat16)

    # (cout, cin, kh, kw) -> (kh, kw, cin, cout), fold BN scale into cout,
    # flatten to the im2col contraction layout (dy, dx, cin) and cast to bf16.
    w1f = (jnp.transpose(w1, (2, 3, 1, 0)) * s1[None, None, None, :]
           ).reshape(9 * cin, planes).astype(jnp.bfloat16)
    w2f = (jnp.transpose(w2, (2, 3, 1, 0)) * s2[None, None, None, :]
           ).reshape(9 * planes, planes).astype(jnp.bfloat16)

    # Sublane-aligned padded width: image sits at column offset 1; the extra
    # columns past W+1 are never read.
    Wp = _round_up(W + 2, 8)

    scratch_specs = [
        ((H + 2, Wp, cin), jnp.bfloat16),      # padded input
        ((H, W, 9 * cin), jnp.bfloat16),       # im2col conv1
        ((H + 2, Wp, planes), jnp.bfloat16),   # padded intermediate
        ((H, W, 9 * planes), jnp.bfloat16),    # im2col conv2
    ]

    # Explicit VMEM budget: scratch + double-buffered I/O blocks + (double-
    # buffered) weights/biases, with 2x headroom, clamped to the smallest
    # physical VMEM across generations (v7x: 64 MiB).
    est = sum(_vmem_padded_bytes(s, d) for s, d in scratch_specs)
    est += 2 * _vmem_padded_bytes((H, W, cin), jnp.bfloat16)       # input block
    est += 2 * _vmem_padded_bytes((H, W, planes), jnp.float32)     # output block
    est += 2 * (_vmem_padded_bytes((9 * cin, planes), jnp.bfloat16)
                + _vmem_padded_bytes((9 * planes, planes), jnp.bfloat16)
                + 2 * _vmem_padded_bytes((1, planes), jnp.float32))
    vmem_limit = int(min(max(2 * est, 32 << 20), 64 << 20))

    kernel = functools.partial(_convblock_kernel, H=H, W=W, cin=cin, planes=planes)
    full = lambda a: pl.BlockSpec(a.shape, lambda n: (0,) * a.ndim)

    out_nhwc = pl.pallas_call(
        kernel,
        out_shape=jax.ShapeDtypeStruct((N, H, W, planes), jnp.float32),
        grid_spec=pltpu.PrefetchScalarGridSpec(
            num_scalar_prefetch=0,
            grid=(N,),
            in_specs=[
                pl.BlockSpec((1, H, W, cin), lambda n: (n, 0, 0, 0)),
                full(w1f), full(b1), full(w2f), full(b2),
            ],
            out_specs=pl.BlockSpec((1, H, W, planes), lambda n: (n, 0, 0, 0)),
            scratch_shapes=[pltpu.VMEM(s, d) for s, d in scratch_specs]),
        compiler_params=pltpu.CompilerParams(
            dimension_semantics=("parallel",),
            vmem_limit_bytes=vmem_limit),
    )(x, w1f, b1, w2f, b2)

    # NHWC -> NCHW to match the PyTorch output convention.
    return jnp.transpose(out_nhwc, (0, 3, 1, 2))


def _reference(x, params):
    """Pure-JAX (XLA) reference of the same eval-mode ConvBlock, all f32."""
    w1, g1, be1, m1, v1, w2, g2, be2, m2, v2 = params
    eps = 1e-5
    dn = ("NCHW", "OIHW", "NCHW")

    def bn(z, g, be, m, v):
        s = (g / jnp.sqrt(v + eps))[None, :, None, None]
        return (z - m[None, :, None, None]) * s + be[None, :, None, None]

    z = jax.lax.conv_general_dilated(x, w1, (1, 1), ((1, 1), (1, 1)),
                                     dimension_numbers=dn)
    z = jnp.maximum(bn(z, g1, be1, m1, v1), 0.0)
    z = jax.lax.conv_general_dilated(z, w2, (1, 1), ((1, 1), (1, 1)),
                                     dimension_numbers=dn)
    return jnp.maximum(bn(z, g2, be2, m2, v2), 0.0)


def init_params(key, inplanes, planes):
    ks = jax.random.split(key, 10)
    w1 = 0.1 * jax.random.normal(ks[0], (planes, inplanes, 3, 3), jnp.float32)
    g1 = 1.0 + 0.1 * jax.random.normal(ks[1], (planes,), jnp.float32)
    be1 = 0.1 * jax.random.normal(ks[2], (planes,), jnp.float32)
    m1 = 0.05 * jax.random.normal(ks[3], (planes,), jnp.float32)
    v1 = jnp.abs(1.0 + 0.1 * jax.random.normal(ks[4], (planes,), jnp.float32))
    w2 = 0.1 * jax.random.normal(ks[5], (planes, planes, 3, 3), jnp.float32)
    g2 = 1.0 + 0.05 * jax.random.normal(ks[6], (planes,), jnp.float32)
    be2 = 0.05 * jax.random.normal(ks[7], (planes,), jnp.float32)
    m2 = 0.02 * jax.random.normal(ks[8], (planes,), jnp.float32)
    v2 = jnp.abs(1.0 + 0.05 * jax.random.normal(ks[9], (planes,), jnp.float32))
    return (w1, g1, be1, m1, v1, w2, g2, be2, m2, v2)


if __name__ == "__main__":
    key = jax.random.PRNGKey(0)
    kx, kp = jax.random.split(key)

    N, inplanes, planes, H, W = 2, 4, 8, 16, 16
    x = jax.random.normal(kx, (N, inplanes, H, W), jnp.float32)
    params = init_params(kp, inplanes, planes)

    out = conv_block_forward(x, params)
    jax.block_until_ready(out)
    assert out.shape == (N, planes, H, W), out.shape

    # Loose sanity check vs XLA f32 reference (kernel uses bf16 MXU operands
    # and bf16 intermediate activations).
    ref = _reference(x, params)
    max_err = float(jnp.max(jnp.abs(out - ref)))
    assert max_err < 5e-2, f"max abs err {max_err}"

    print("KERNEL_OK")
</pallas_src>

<mosaic_0001>
module attributes {stable_mosaic.version = 11 : i64} {
  func.func @_convblock_kernel(%arg0: i32, %arg1: memref<1x16x16x4xbf16, #tpu.memory_space<vmem>>, %arg2: memref<36x8xbf16, #tpu.memory_space<vmem>>, %arg3: memref<1x8xf32, #tpu.memory_space<vmem>>, %arg4: memref<72x8xbf16, #tpu.memory_space<vmem>>, %arg5: memref<1x8xf32, #tpu.memory_space<vmem>>, %arg6: memref<1x16x16x8xf32, #tpu.memory_space<vmem>>, %arg7: memref<18x24x4xbf16, #tpu.memory_space<vmem>>, %arg8: memref<16x16x36xbf16, #tpu.memory_space<vmem>>, %arg9: memref<18x24x8xbf16, #tpu.memory_space<vmem>>, %arg10: memref<16x16x72xbf16, #tpu.memory_space<vmem>>) attributes {dimension_semantics = [#tpu.dimension_semantics<parallel>], iteration_bounds = array<i64: 2>, scalar_prefetch = 0 : i64, scratch_operands = 4 : i64, tpu.core_type = #tpu.core_type<tc>, window_params = [{transform_indices = @transform_0, window_bounds = array<i64: 1, 16, 16, 4>}, {pipeline_mode = #tpu.pipeline_mode<synchronous>, transform_indices = @transform_1, window_bounds = array<i64: 36, 8>}, {pipeline_mode = #tpu.pipeline_mode<synchronous>, transform_indices = @transform_2, window_bounds = array<i64: 1, 8>}, {pipeline_mode = #tpu.pipeline_mode<synchronous>, transform_indices = @transform_3, window_bounds = array<i64: 72, 8>}, {pipeline_mode = #tpu.pipeline_mode<synchronous>, transform_indices = @transform_4, window_bounds = array<i64: 1, 8>}, {transform_indices = @transform_5, window_bounds = array<i64: 1, 16, 16, 8>}]} {
    %cst = arith.constant 0.000000e+00 : bf16
    %0 = vector.broadcast %cst : bf16 to vector<1x24x4xbf16>
    %c0 = arith.constant 0 : index
    %c0_0 = arith.constant 0 : index
    %c0_1 = arith.constant 0 : index
    %1 = vector.load %arg7[%c0, %c0_0, %c0_1] : memref<18x24x4xbf16, #tpu.memory_space<vmem>>, vector<1x24x4xbf16>
    tpu.vector_store %arg7[%c0, %c0_0, %c0_1], %0 {strides = array<i32>} : memref<18x24x4xbf16, #tpu.memory_space<vmem>>, vector<1x24x4xbf16>,
    %cst_2 = arith.constant 0.000000e+00 : bf16
    %2 = vector.broadcast %cst_2 : bf16 to vector<1x24x4xbf16>
    %c17 = arith.constant 17 : index
    %c0_3 = arith.constant 0 : index
    %c0_4 = arith.constant 0 : index
    %3 = vector.load %arg7[%c17, %c0_3, %c0_4] : memref<18x24x4xbf16, #tpu.memory_space<vmem>>, vector<1x24x4xbf16>
    tpu.vector_store %arg7[%c17, %c0_3, %c0_4], %2 {strides = array<i32>} : memref<18x24x4xbf16, #tpu.memory_space<vmem>>, vector<1x24x4xbf16>,
    %cst_5 = arith.constant 0.000000e+00 : bf16
    %4 = vector.broadcast %cst_5 : bf16 to vector<16x1x4xbf16>
    %c1 = arith.constant 1 : index
    %c0_6 = arith.constant 0 : index
    %c0_7 = arith.constant 0 : index
    %5 = vector.load %arg7[%c1, %c0_6, %c0_7] : memref<18x24x4xbf16, #tpu.memory_space<vmem>>, vector<16x1x4xbf16>
    tpu.vector_store %arg7[%c1, %c0_6, %c0_7], %4 {strides = array<i32>} : memref<18x24x4xbf16, #tpu.memory_space<vmem>>, vector<16x1x4xbf16>,
    %cst_8 = arith.constant 0.000000e+00 : bf16
    %6 = vector.broadcast %cst_8 : bf16 to vector<16x1x4xbf16>
    %c1_9 = arith.constant 1 : index
    %c17_10 = arith.constant 17 : index
    %c0_11 = arith.constant 0 : index
    %7 = vector.load %arg7[%c1_9, %c17_10, %c0_11] : memref<18x24x4xbf16, #tpu.memory_space<vmem>>, vector<16x1x4xbf16>
    tpu.vector_store %arg7[%c1_9, %c17_10, %c0_11], %6 {strides = array<i32>} : memref<18x24x4xbf16, #tpu.memory_space<vmem>>, vector<16x1x4xbf16>,
    %cst_12 = arith.constant 0.000000e+00 : bf16
    %8 = vector.broadcast %cst_12 : bf16 to vector<1x24x8xbf16>
    %c0_13 = arith.constant 0 : index
    %c0_14 = arith.constant 0 : index
    %c0_15 = arith.constant 0 : index
    %9 = vector.load %arg9[%c0_13, %c0_14, %c0_15] : memref<18x24x8xbf16, #tpu.memory_space<vmem>>, vector<1x24x8xbf16>
    tpu.vector_store %arg9[%c0_13, %c0_14, %c0_15], %8 {strides = array<i32>} : memref<18x24x8xbf16, #tpu.memory_space<vmem>>, vector<1x24x8xbf16>,
    %cst_16 = arith.constant 0.000000e+00 : bf16
    %10 = vector.broadcast %cst_16 : bf16 to vector<1x24x8xbf16>
    %c17_17 = arith.constant 17 : index
    %c0_18 = arith.constant 0 : index
    %c0_19 = arith.constant 0 : index
    %11 = vector.load %arg9[%c17_17, %c0_18, %c0_19] : memref<18x24x8xbf16, #tpu.memory_space<vmem>>, vector<1x24x8xbf16>
    tpu.vector_store %arg9[%c17_17, %c0_18, %c0_19], %10 {strides = array<i32>} : memref<18x24x8xbf16, #tpu.memory_space<vmem>>, vector<1x24x8xbf16>,
    %cst_20 = arith.constant 0.000000e+00 : bf16
    %12 = vector.broadcast %cst_20 : bf16 to vector<16x1x8xbf16>
    %c1_21 = arith.constant 1 : index
    %c0_22 = arith.constant 0 : index
    %c0_23 = arith.constant 0 : index
    %13 = vector.load %arg9[%c1_21, %c0_22, %c0_23] : memref<18x24x8xbf16, #tpu.memory_space<vmem>>, vector<16x1x8xbf16>
    tpu.vector_store %arg9[%c1_21, %c0_22, %c0_23], %12 {strides = array<i32>} : memref<18x24x8xbf16, #tpu.memory_space<vmem>>, vector<16x1x8xbf16>,
    %cst_24 = arith.constant 0.000000e+00 : bf16
    %14 = vector.broadcast %cst_24 : bf16 to vector<16x1x8xbf16>
    %c1_25 = arith.constant 1 : index
    %c17_26 = arith.constant 17 : index
    %c0_27 = arith.constant 0 : index
    %15 = vector.load %arg9[%c1_25, %c17_26, %c0_27] : memref<18x24x8xbf16, #tpu.memory_space<vmem>>, vector<16x1x8xbf16>
    tpu.vector_store %arg9[%c1_25, %c17_26, %c0_27], %14 {strides = array<i32>} : memref<18x24x8xbf16, #tpu.memory_space<vmem>>, vector<16x1x8xbf16>,
    %c0_28 = arith.constant 0 : index
    %c0_29 = arith.constant 0 : index
    %c0_30 = arith.constant 0 : index
    %c0_31 = arith.constant 0 : index
    %16 = vector.load %arg1[%c0_28, %c0_29, %c0_30, %c0_31] : memref<1x16x16x4xbf16, #tpu.memory_space<vmem>>, vector<1x16x16x4xbf16>
    %17 = vector.shape_cast %16 : vector<1x16x16x4xbf16> to vector<16x16x4xbf16>
    %c1_32 = arith.constant 1 : index
    %c1_33 = arith.constant 1 : index
    %c0_34 = arith.constant 0 : index
    %18 = vector.load %arg7[%c1_32, %c1_33, %c0_34] : memref<18x24x4xbf16, #tpu.memory_space<vmem>>, vector<16x16x4xbf16>
    tpu.vector_store %arg7[%c1_32, %c1_33, %c0_34], %17 {strides = array<i32>} : memref<18x24x4xbf16, #tpu.memory_space<vmem>>, vector<16x16x4xbf16>,
    %c0_35 = arith.constant 0 : index
    %c0_36 = arith.constant 0 : index
    %c0_37 = arith.constant 0 : index
    %19 = vector.load %arg7[%c0_35, %c0_36, %c0_37] : memref<18x24x4xbf16, #tpu.memory_space<vmem>>, vector<16x16x4xbf16>
    %c0_38 = arith.constant 0 : index
    %c0_39 = arith.constant 0 : index
    %c0_40 = arith.constant 0 : index
    %20 = vector.load %arg8[%c0_38, %c0_39, %c0_40] : memref<16x16x36xbf16, #tpu.memory_space<vmem>>, vector<16x16x4xbf16>
    tpu.vector_store %arg8[%c0_38, %c0_39, %c0_40], %19 {strides = array<i32>} : memref<16x16x36xbf16, #tpu.memory_space<vmem>>, vector<16x16x4xbf16>,
    %c0_41 = arith.constant 0 : index
    %c1_42 = arith.constant 1 : index
    %c0_43 = arith.constant 0 : index
    %21 = vector.load %arg7[%c0_41, %c1_42, %c0_43] : memref<18x24x4xbf16, #tpu.memory_space<vmem>>, vector<16x16x4xbf16>
    %c0_44 = arith.constant 0 : index
    %c0_45 = arith.constant 0 : index
    %c4 = arith.constant 4 : index
    %22 = vector.load %arg8[%c0_44, %c0_45, %c4] : memref<16x16x36xbf16, #tpu.memory_space<vmem>>, vector<16x16x4xbf16>
    tpu.vector_store %arg8[%c0_44, %c0_45, %c4], %21 {strides = array<i32>} : memref<16x16x36xbf16, #tpu.memory_space<vmem>>, vector<16x16x4xbf16>,
    %c0_46 = arith.constant 0 : index
    %c2 = arith.constant 2 : index
    %c0_47 = arith.constant 0 : index
    %23 = vector.load %arg7[%c0_46, %c2, %c0_47] : memref<18x24x4xbf16, #tpu.memory_space<vmem>>, vector<16x16x4xbf16>
    %c0_48 = arith.constant 0 : index
    %c0_49 = arith.constant 0 : index
    %c8 = arith.constant 8 : index
    %24 = vector.load %arg8[%c0_48, %c0_49, %c8] : memref<16x16x36xbf16, #tpu.memory_space<vmem>>, vector<16x16x4xbf16>
    tpu.vector_store %arg8[%c0_48, %c0_49, %c8], %23 {strides = array<i32>} : memref<16x16x36xbf16, #tpu.memory_space<vmem>>, vector<16x16x4xbf16>,
    %c1_50 = arith.constant 1 : index
    %c0_51 = arith.constant 0 : index
    %c0_52 = arith.constant 0 : index
    %25 = vector.load %arg7[%c1_50, %c0_51, %c0_52] : memref<18x24x4xbf16, #tpu.memory_space<vmem>>, vector<16x16x4xbf16>
    %c0_53 = arith.constant 0 : index
    %c0_54 = arith.constant 0 : index
    %c12 = arith.constant 12 : index
    %26 = vector.load %arg8[%c0_53, %c0_54, %c12] : memref<16x16x36xbf16, #tpu.memory_space<vmem>>, vector<16x16x4xbf16>
    tpu.vector_store %arg8[%c0_53, %c0_54, %c12], %25 {strides = array<i32>} : memref<16x16x36xbf16, #tpu.memory_space<vmem>>, vector<16x16x4xbf16>,
    %c1_55 = arith.constant 1 : index
    %c1_56 = arith.constant 1 : index
    %c0_57 = arith.constant 0 : index
    %27 = vector.load %arg7[%c1_55, %c1_56, %c0_57] : memref<18x24x4xbf16, #tpu.memory_space<vmem>>, vector<16x16x4xbf16>
    %c0_58 = arith.constant 0 : index
    %c0_59 = arith.constant 0 : index
    %c16 = arith.constant 16 : index
    %28 = vector.load %arg8[%c0_58, %c0_59, %c16] : memref<16x16x36xbf16, #tpu.memory_space<vmem>>, vector<16x16x4xbf16>
    tpu.vector_store %arg8[%c0_58, %c0_59, %c16], %27 {strides = array<i32>} : memref<16x16x36xbf16, #tpu.memory_space<vmem>>, vector<16x16x4xbf16>,
    %c1_60 = arith.constant 1 : index
    %c2_61 = arith.constant 2 : index
    %c0_62 = arith.constant 0 : index
    %29 = vector.load %arg7[%c1_60, %c2_61, %c0_62] : memref<18x24x4xbf16, #tpu.memory_space<vmem>>, vector<16x16x4xbf16>
    %c0_63 = arith.constant 0 : index
    %c0_64 = arith.constant 0 : index
    %c20 = arith.constant 20 : index
    %30 = vector.load %arg8[%c0_63, %c0_64, %c20] : memref<16x16x36xbf16, #tpu.memory_space<vmem>>, vector<16x16x4xbf16>
    tpu.vector_store %arg8[%c0_63, %c0_64, %c20], %29 {strides = array<i32>} : memref<16x16x36xbf16, #tpu.memory_space<vmem>>, vector<16x16x4xbf16>,
    %c2_65 = arith.constant 2 : index
    %c0_66 = arith.constant 0 : index
    %c0_67 = arith.constant 0 : index
    %31 = vector.load %arg7[%c2_65, %c0_66, %c0_67] : memref<18x24x4xbf16, #tpu.memory_space<vmem>>, vector<16x16x4xbf16>
    %c0_68 = arith.constant 0 : index
    %c0_69 = arith.constant 0 : index
    %c24 = arith.constant 24 : index
    %32 = vector.load %arg8[%c0_68, %c0_69, %c24] : memref<16x16x36xbf16, #tpu.memory_space<vmem>>, vector<16x16x4xbf16>
    tpu.vector_store %arg8[%c0_68, %c0_69, %c24], %31 {strides = array<i32>} : memref<16x16x36xbf16, #tpu.memory_space<vmem>>, vector<16x16x4xbf16>,
    %c2_70 = arith.constant 2 : index
    %c1_71 = arith.constant 1 : index
    %c0_72 = arith.constant 0 : index
    %33 = vector.load %arg7[%c2_70, %c1_71, %c0_72] : memref<18x24x4xbf16, #tpu.memory_space<vmem>>, vector<16x16x4xbf16>
    %c0_73 = arith.constant 0 : index
    %c0_74 = arith.constant 0 : index
    %c28 = arith.constant 28 : index
    %34 = vector.load %arg8[%c0_73, %c0_74, %c28] : memref<16x16x36xbf16, #tpu.memory_space<vmem>>, vector<16x16x4xbf16>
    tpu.vector_store %arg8[%c0_73, %c0_74, %c28], %33 {strides = array<i32>} : memref<16x16x36xbf16, #tpu.memory_space<vmem>>, vector<16x16x4xbf16>,
    %c2_75 = arith.constant 2 : index
    %c2_76 = arith.constant 2 : index
    %c0_77 = arith.constant 0 : index
    %35 = vector.load %arg7[%c2_75, %c2_76, %c0_77] : memref<18x24x4xbf16, #tpu.memory_space<vmem>>, vector<16x16x4xbf16>
    %c0_78 = arith.constant 0 : index
    %c0_79 = arith.constant 0 : index
    %c32 = arith.constant 32 : index
    %36 = vector.load %arg8[%c0_78, %c0_79, %c32] : memref<16x16x36xbf16, #tpu.memory_space<vmem>>, vector<16x16x4xbf16>
    tpu.vector_store %arg8[%c0_78, %c0_79, %c32], %35 {strides = array<i32>} : memref<16x16x36xbf16, #tpu.memory_space<vmem>>, vector<16x16x4xbf16>,
    %c0_80 = arith.constant 0 : index
    %c0_81 = arith.constant 0 : index
    %c0_82 = arith.constant 0 : index
    %37 = vector.load %arg8[%c0_80, %c0_81, %c0_82] : memref<16x16x36xbf16, #tpu.memory_space<vmem>>, vector<16x16x36xbf16>
    %38 = vector.shape_cast %37 : vector<16x16x36xbf16> to vector<256x36xbf16>
    %c0_83 = arith.constant 0 : index
    %c0_84 = arith.constant 0 : index
    %39 = vector.load %arg2[%c0_83, %c0_84] : memref<36x8xbf16, #tpu.memory_space<vmem>>, vector<36x8xbf16>
    %cst_85 = arith.constant dense<0.000000e+00> : vector<256x8xf32>
    %40 = tpu.matmul %38, %39, %cst_85 {dimension_numbers = #tpu.dot_dimension_numbers<[1], [0], [0], [1], [0, 0, 1, 1], [], []>} : vector<256x36xbf16>, vector<36x8xbf16>, vector<256x8xf32> -> vector<256x8xf32>
    %c0_86 = arith.constant 0 : index
    %c0_87 = arith.constant 0 : index
    %41 = vector.load %arg3[%c0_86, %c0_87] : memref<1x8xf32, #tpu.memory_space<vmem>>, vector<1x8xf32>
    %42 = vector.broadcast %41 : vector<1x8xf32> to vector<256x8xf32>
    %43 = arith.addf %40, %42 : vector<256x8xf32>
    %cst_88 = arith.constant 0.000000e+00 : f32
    %44 = vector.broadcast %cst_88 : f32 to vector<256x8xf32>
    %45 = arith.maximumf %43, %44 : vector<256x8xf32>
    %46 = vector.shape_cast %45 : vector<256x8xf32> to vector<16x16x8xf32>
    %47 = arith.truncf %46 : vector<16x16x8xf32> to vector<16x16x8xbf16>
    %c1_89 = arith.constant 1 : index
    %c1_90 = arith.constant 1 : index
    %c0_91 = arith.constant 0 : index
    %48 = vector.load %arg9[%c1_89, %c1_90, %c0_91] : memref<18x24x8xbf16, #tpu.memory_space<vmem>>, vector<16x16x8xbf16>
    tpu.vector_store %arg9[%c1_89, %c1_90, %c0_91], %47 {strides = array<i32>} : memref<18x24x8xbf16, #tpu.memory_space<vmem>>, vector<16x16x8xbf16>,
    %c0_92 = arith.constant 0 : index
    %c0_93 = arith.constant 0 : index
    %c0_94 = arith.constant 0 : index
    %49 = vector.load %arg9[%c0_92, %c0_93, %c0_94] : memref<18x24x8xbf16, #tpu.memory_space<vmem>>, vector<16x16x8xbf16>
    %c0_95 = arith.constant 0 : index
    %c0_96 = arith.constant 0 : index
    %c0_97 = arith.constant 0 : index
    %50 = vector.load %arg10[%c0_95, %c0_96, %c0_97] : memref<16x16x72xbf16, #tpu.memory_space<vmem>>, vector<16x16x8xbf16>
    tpu.vector_store %arg10[%c0_95, %c0_96, %c0_97], %49 {strides = array<i32>} : memref<16x16x72xbf16, #tpu.memory_space<vmem>>, vector<16x16x8xbf16>,
    %c0_98 = arith.constant 0 : index
    %c1_99 = arith.constant 1 : index
    %c0_100 = arith.constant 0 : index
    %51 = vector.load %arg9[%c0_98, %c1_99, %c0_100] : memref<18x24x8xbf16, #tpu.memory_space<vmem>>, vector<16x16x8xbf16>
    %c0_101 = arith.constant 0 : index
    %c0_102 = arith.constant 0 : index
    %c8_103 = arith.constant 8 : index
    %52 = vector.load %arg10[%c0_101, %c0_102, %c8_103] : memref<16x16x72xbf16, #tpu.memory_space<vmem>>, vector<16x16x8xbf16>
    tpu.vector_store %arg10[%c0_101, %c0_102, %c8_103], %51 {strides = array<i32>} : memref<16x16x72xbf16, #tpu.memory_space<vmem>>, vector<16x16x8xbf16>,
    %c0_104 = arith.constant 0 : index
    %c2_105 = arith.constant 2 : index
    %c0_106 = arith.constant 0 : index
    %53 = vector.load %arg9[%c0_104, %c2_105, %c0_106] : memref<18x24x8xbf16, #tpu.memory_space<vmem>>, vector<16x16x8xbf16>
    %c0_107 = arith.constant 0 : index
    %c0_108 = arith.constant 0 : index
    %c16_109 = arith.constant 16 : index
    %54 = vector.load %arg10[%c0_107, %c0_108, %c16_109] : memref<16x16x72xbf16, #tpu.memory_space<vmem>>, vector<16x16x8xbf16>
    tpu.vector_store %arg10[%c0_107, %c0_108, %c16_109], %53 {strides = array<i32>} : memref<16x16x72xbf16, #tpu.memory_space<vmem>>, vector<16x16x8xbf16>,
    %c1_110 = arith.constant 1 : index
    %c0_111 = arith.constant 0 : index
    %c0_112 = arith.constant 0 : index
    %55 = vector.load %arg9[%c1_110, %c0_111, %c0_112] : memref<18x24x8xbf16, #tpu.memory_space<vmem>>, vector<16x16x8xbf16>
    %c0_113 = arith.constant 0 : index
    %c0_114 = arith.constant 0 : index
    %c24_115 = arith.constant 24 : index
    %56 = vector.load %arg10[%c0_113, %c0_114, %c24_115] : memref<16x16x72xbf16, #tpu.memory_space<vmem>>, vector<16x16x8xbf16>
    tpu.vector_store %arg10[%c0_113, %c0_114, %c24_115], %55 {strides = array<i32>} : memref<16x16x72xbf16, #tpu.memory_space<vmem>>, vector<16x16x8xbf16>,
    %c1_116 = arith.constant 1 : index
    %c1_117 = arith.constant 1 : index
    %c0_118 = arith.constant 0 : index
    %57 = vector.load %arg9[%c1_116, %c1_117, %c0_118] : memref<18x24x8xbf16, #tpu.memory_space<vmem>>, vector<16x16x8xbf16>
    %c0_119 = arith.constant 0 : index
    %c0_120 = arith.constant 0 : index
    %c32_121 = arith.constant 32 : index
    %58 = vector.load %arg10[%c0_119, %c0_120, %c32_121] : memref<16x16x72xbf16, #tpu.memory_space<vmem>>, vector<16x16x8xbf16>
    tpu.vector_store %arg10[%c0_119, %c0_120, %c32_121], %57 {strides = array<i32>} : memref<16x16x72xbf16, #tpu.memory_space<vmem>>, vector<16x16x8xbf16>,
    %c1_122 = arith.constant 1 : index
    %c2_123 = arith.constant 2 : index
    %c0_124 = arith.constant 0 : index
    %59 = vector.load %arg9[%c1_122, %c2_123, %c0_124] : memref<18x24x8xbf16, #tpu.memory_space<vmem>>, vector<16x16x8xbf16>
    %c0_125 = arith.constant 0 : index
    %c0_126 = arith.constant 0 : index
    %c40 = arith.constant 40 : index
    %60 = vector.load %arg10[%c0_125, %c0_126, %c40] : memref<16x16x72xbf16, #tpu.memory_space<vmem>>, vector<16x16x8xbf16>
    tpu.vector_store %arg10[%c0_125, %c0_126, %c40], %59 {strides = array<i32>} : memref<16x16x72xbf16, #tpu.memory_space<vmem>>, vector<16x16x8xbf16>,
    %c2_127 = arith.constant 2 : index
    %c0_128 = arith.constant 0 : index
    %c0_129 = arith.constant 0 : index
    %61 = vector.load %arg9[%c2_127, %c0_128, %c0_129] : memref<18x24x8xbf16, #tpu.memory_space<vmem>>, vector<16x16x8xbf16>
    %c0_130 = arith.constant 0 : index
    %c0_131 = arith.constant 0 : index
    %c48 = arith.constant 48 : index
    %62 = vector.load %arg10[%c0_130, %c0_131, %c48] : memref<16x16x72xbf16, #tpu.memory_space<vmem>>, vector<16x16x8xbf16>
    tpu.vector_store %arg10[%c0_130, %c0_131, %c48], %61 {strides = array<i32>} : memref<16x16x72xbf16, #tpu.memory_space<vmem>>, vector<16x16x8xbf16>,
    %c2_132 = arith.constant 2 : index
    %c1_133 = arith.constant 1 : index
    %c0_134 = arith.constant 0 : index
    %63 = vector.load %arg9[%c2_132, %c1_133, %c0_134] : memref<18x24x8xbf16, #tpu.memory_space<vmem>>, vector<16x16x8xbf16>
    %c0_135 = arith.constant 0 : index
    %c0_136 = arith.constant 0 : index
    %c56 = arith.constant 56 : index
    %64 = vector.load %arg10[%c0_135, %c0_136, %c56] : memref<16x16x72xbf16, #tpu.memory_space<vmem>>, vector<16x16x8xbf16>
    tpu.vector_store %arg10[%c0_135, %c0_136, %c56], %63 {strides = array<i32>} : memref<16x16x72xbf16, #tpu.memory_space<vmem>>, vector<16x16x8xbf16>,
    %c2_137 = arith.constant 2 : index
    %c2_138 = arith.constant 2 : index
    %c0_139 = arith.constant 0 : index
    %65 = vector.load %arg9[%c2_137, %c2_138, %c0_139] : memref<18x24x8xbf16, #tpu.memory_space<vmem>>, vector<16x16x8xbf16>
    %c0_140 = arith.constant 0 : index
    %c0_141 = arith.constant 0 : index
    %c64 = arith.constant 64 : index
    %66 = vector.load %arg10[%c0_140, %c0_141, %c64] : memref<16x16x72xbf16, #tpu.memory_space<vmem>>, vector<16x16x8xbf16>
    tpu.vector_store %arg10[%c0_140, %c0_141, %c64], %65 {strides = array<i32>} : memref<16x16x72xbf16, #tpu.memory_space<vmem>>, vector<16x16x8xbf16>,
    %c0_142 = arith.constant 0 : index
    %c0_143 = arith.constant 0 : index
    %c0_144 = arith.constant 0 : index
    %67 = vector.load %arg10[%c0_142, %c0_143, %c0_144] : memref<16x16x72xbf16, #tpu.memory_space<vmem>>, vector<16x16x72xbf16>
    %68 = vector.shape_cast %67 : vector<16x16x72xbf16> to vector<256x72xbf16>
    %c0_145 = arith.constant 0 : index
    %c0_146 = arith.constant 0 : index
    %69 = vector.load %arg4[%c0_145, %c0_146] : memref<72x8xbf16, #tpu.memory_space<vmem>>, vector<72x8xbf16>
    %cst_147 = arith.constant dense<0.000000e+00> : vector<256x8xf32>
    %70 = tpu.matmul %68, %69, %cst_147 {dimension_numbers = #tpu.dot_dimension_numbers<[1], [0], [0], [1], [0, 0, 1, 1], [], []>} : vector<256x72xbf16>, vector<72x8xbf16>, vector<256x8xf32> -> vector<256x8xf32>
    %c0_148 = arith.constant 0 : index
    %c0_149 = arith.constant 0 : index
    %71 = vector.load %arg5[%c0_148, %c0_149] : memref<1x8xf32, #tpu.memory_space<vmem>>, vector<1x8xf32>
    %72 = vector.broadcast %71 : vector<1x8xf32> to vector<256x8xf32>
    %73 = arith.addf %70, %72 : vector<256x8xf32>
    %cst_150 = arith.constant 0.000000e+00 : f32
    %74 = vector.broadcast %cst_150 : f32 to vector<256x8xf32>
    %75 = arith.maximumf %73, %74 : vector<256x8xf32>
    %76 = vector.shape_cast %75 : vector<256x8xf32> to vector<16x16x8xf32>
    %c0_151 = arith.constant 0 : index
    %c0_152 = arith.constant 0 : index
    %c0_153 = arith.constant 0 : index
    %c0_154 = arith.constant 0 : index
    %77 = vector.load %arg6[%c0_151, %c0_152, %c0_153, %c0_154] : memref<1x16x16x8xf32, #tpu.memory_space<vmem>>, vector<1x16x16x8xf32>
    %78 = vector.shape_cast %77 : vector<1x16x16x8xf32> to vector<16x16x8xf32>
    %79 = vector.shape_cast %76 : vector<16x16x8xf32> to vector<1x16x16x8xf32>
    tpu.vector_store %arg6[%c0_151, %c0_152, %c0_153, %c0_154], %79 {strides = array<i32>} : memref<1x16x16x8xf32, #tpu.memory_space<vmem>>, vector<1x16x16x8xf32>,
    return
  }
  func.func @transform_0(%arg0: i32) -> (i32, i32, i32, i32) {
    %c0_i32 = arith.constant 0 : i32
    %c0_i32_0 = arith.constant 0 : i32
    %c0_i32_1 = arith.constant 0 : i32
    %c0_i32_2 = arith.constant 0 : i32
    return %arg0, %c0_i32, %c0_i32_0, %c0_i32_1 : i32, i32, i32, i32
  }
  func.func @transform_1(%arg0: i32) -> (i32, i32) {
    %c0_i32 = arith.constant 0 : i32
    %c0_i32_0 = arith.constant 0 : i32
    %c0_i32_1 = arith.constant 0 : i32
    return %c0_i32, %c0_i32_0 : i32, i32
  }
  func.func @transform_2(%arg0: i32) -> (i32, i32) {
    %c0_i32 = arith.constant 0 : i32
    %c0_i32_0 = arith.constant 0 : i32
    %c0_i32_1 = arith.constant 0 : i32
    return %c0_i32, %c0_i32_0 : i32, i32
  }
  func.func @transform_3(%arg0: i32) -> (i32, i32) {
    %c0_i32 = arith.constant 0 : i32
    %c0_i32_0 = arith.constant 0 : i32
    %c0_i32_1 = arith.constant 0 : i32
    return %c0_i32, %c0_i32_0 : i32, i32
  }
  func.func @transform_4(%arg0: i32) -> (i32, i32) {
    %c0_i32 = arith.constant 0 : i32
    %c0_i32_0 = arith.constant 0 : i32
    %c0_i32_1 = arith.constant 0 : i32
    return %c0_i32, %c0_i32_0 : i32, i32
  }
  func.func @transform_5(%arg0: i32) -> (i32, i32, i32, i32) {
    %c0_i32 = arith.constant 0 : i32
    %c0_i32_0 = arith.constant 0 : i32
    %c0_i32_1 = arith.constant 0 : i32
    %c0_i32_2 = arith.constant 0 : i32
    return %arg0, %c0_i32, %c0_i32_0, %c0_i32_1 : i32, i32, i32, i32
  }
}

</mosaic_0001>

<llo_original>
// kernel: tpu_custom_call.1
$region0: #{tpu_custom_call.1}
  #allocation0 [shape = 'u32[]', space=smem, size = 0x4, offset = 0x4, fixed_abs, tag = 'smem constant byte address 0x4 - core index']
  #allocation1 [shape = 'u32[72,128]{1,0:T(1,128)}', space=vmem, size = 0x9000, scoped, tag = 'internal scratch']
  #allocation2 [shape = 'bf16[18,24,4]{2,1,0:T(8,128)(2,1)}', space=vmem, size = 0x1b000, scoped, tag = 'scratch operand']
  #allocation3 [shape = 'bf16[16,16,36]{2,1,0:T(8,128)(2,1)}', space=vmem, size = 0x10000, scoped, tag = 'scratch operand']
  #allocation4 [shape = 'bf16[18,24,8]{2,1,0:T(8,128)(2,1)}', space=vmem, size = 0x1b000, scoped, tag = 'scratch operand']
  #allocation5 [shape = 'bf16[16,16,72]{2,1,0:T(8,128)(2,1)}', space=vmem, size = 0x10000, scoped, tag = 'scratch operand']
  %s0 = inlined_call_operand.vmem [shape: bf16[2,16,16,4], index: 0, kind: input, shape index: {}]
  %s1 = inlined_call_operand.vmem [shape: bf16[36,8], index: 1, kind: input, shape index: {}]
  %s2 = inlined_call_operand.vmem [shape: f32[1,8], index: 2, kind: input, shape index: {}]
  %s3 = inlined_call_operand.vmem [shape: bf16[72,8], index: 3, kind: input, shape index: {}]
  %s4 = inlined_call_operand.vmem [shape: f32[1,8], index: 4, kind: input, shape index: {}]
  %s5 = inlined_call_operand.vmem [shape: f32[2,16,16,8], index: 5, kind: output, shape index: {}]
  %s6 = sld [smem:[#allocation0]]
  $region53: #{tpu_custom_call.1} parent=0
    _
  %s8 = ssub.s32 1, %s6
  %s9 = scalar_select 0, %s8, %s6
  loop: start=0, step=1, limit=4
  $region2: #{tpu_custom_call.1} parent=0 // loop_pre_header
    _
  $region3: #{tpu_custom_call.1} parent=0 // loop_header
    %s11 = sphi 0, %s15
    %p12 = scmp.ge.s32.totalorder %s11, 4
    %s21 = sphi 0, %s23
    %s24 = sphi 0, %s21
    %s25 = sphi 0, %s24
    %s41 = sphi 0, %s25
    %s45 = sphi 0, %s45
    %s47 = sphi 0, %s45
    %s48 = sphi 0, %s47
    %s62 = sphi 0, %s48
    %s66 = sphi 0, %s66
    %s68 = sphi 0, %s66
    %s69 = sphi 0, %s68
    %s83 = sphi 0, %s69
    %s87 = sphi 0, %s87
    %s89 = sphi 0, %s87
    %s90 = sphi 0, %s89
    %s104 = sphi 0, %s90
    %s108 = sphi 0, %s108
    %s110 = sphi 0, %s108
    %s111 = sphi 0, %s110
    %s125 = sphi 0, %s111
    %s131 = sphi 0, %s133
    %s134 = sphi 0, %s131
    %s135 = sphi 0, %s134
    %s151 = sphi 0, %s135
  $region4: #{tpu_custom_call.1} parent=0 // loop_header_branch
    %14 = sbr.rel (%p12) target = $region8
  $region5: #{tpu_custom_call.1} parent=0 // loop_body
    %s16 = ssub.s32 %s11, 1
    %s17 = ssub.s32 %s11, 2
    %s18 = sadd.s32 %s11, 1
    %s19 = ssub.s32 %s11, %s18
    %p20 = scmp.eq.s32.totalorder %s19, 0
    %s22 = sadd.s32 %s21, 1
    %s23 = scalar_select %p20, %s21, %s22
    %p26 = pneg %p20
    %p27 = scmp.eq.s32.totalorder %s11, 1
    %p28 = por %p26, %p27
    %p29 = scmp.ne.s32.totalorder %s21, %s24
    %p30 = scmp.eq.s32.totalorder %s11, 0
    %p31 = por %p29, %p30
    %p32 = scmp.ne.s32.totalorder %s21, %s24
    %p33 = scmp.eq.s32.totalorder %s16, 1
    %p34 = por %p32, %p33
    %p35 = scmp.ne.s32.totalorder %s24, %s25
    %p36 = scmp.eq.s32.totalorder %s16, 0
    %p37 = por %p35, %p36
    %p38 = scmp.ne.s32.totalorder %s24, %s25
    %p39 = scmp.eq.s32.totalorder %s17, 1
    %p40 = por %p38, %p39
    %p42 = scmp.ne.s32.totalorder %s25, %s41
    %p43 = scmp.eq.s32.totalorder %s17, 0
    %p44 = por %p42, %p43
    %s46 = sadd.s32 %s45, 1
    %p49 = scmp.eq.s32.totalorder %s11, 1
    %p50 = scmp.ne.s32.totalorder %s45, %s47
    %p51 = scmp.eq.s32.totalorder %s11, 0
    %p52 = por %p50, %p51
    %p53 = scmp.ne.s32.totalorder %s45, %s47
    %p54 = scmp.eq.s32.totalorder %s16, 1
    %p55 = por %p53, %p54
    %p56 = scmp.ne.s32.totalorder %s47, %s48
    %p57 = scmp.eq.s32.totalorder %s16, 0
    %p58 = por %p56, %p57
    %p59 = scmp.ne.s32.totalorder %s47, %s48
    %p60 = scmp.eq.s32.totalorder %s17, 1
    %p61 = por %p59, %p60
    %p63 = scmp.ne.s32.totalorder %s48, %s62
    %p64 = scmp.eq.s32.totalorder %s17, 0
    %p65 = por %p63, %p64
    %s67 = sadd.s32 %s66, 1
    %p70 = scmp.eq.s32.totalorder %s11, 1
    %p71 = scmp.ne.s32.totalorder %s66, %s68
    %p72 = scmp.eq.s32.totalorder %s11, 0
    %p73 = por %p71, %p72
    %p74 = scmp.ne.s32.totalorder %s66, %s68
    %p75 = scmp.eq.s32.totalorder %s16, 1
    %p76 = por %p74, %p75
    %p77 = scmp.ne.s32.totalorder %s68, %s69
    %p78 = scmp.eq.s32.totalorder %s16, 0
    %p79 = por %p77, %p78
    %p80 = scmp.ne.s32.totalorder %s68, %s69
    %p81 = scmp.eq.s32.totalorder %s17, 1
    %p82 = por %p80, %p81
    %p84 = scmp.ne.s32.totalorder %s69, %s83
    %p85 = scmp.eq.s32.totalorder %s17, 0
    %p86 = por %p84, %p85
    %s88 = sadd.s32 %s87, 1
    %p91 = scmp.eq.s32.totalorder %s11, 1
    %p92 = scmp.ne.s32.totalorder %s87, %s89
    %p93 = scmp.eq.s32.totalorder %s11, 0
    %p94 = por %p92, %p93
    %p95 = scmp.ne.s32.totalorder %s87, %s89
    %p96 = scmp.eq.s32.totalorder %s16, 1
    %p97 = por %p95, %p96
    %p98 = scmp.ne.s32.totalorder %s89, %s90
    %p99 = scmp.eq.s32.totalorder %s16, 0
    %p100 = por %p98, %p99
    %p101 = scmp.ne.s32.totalorder %s89, %s90
    %p102 = scmp.eq.s32.totalorder %s17, 1
    %p103 = por %p101, %p102
    %p105 = scmp.ne.s32.totalorder %s90, %s104
    %p106 = scmp.eq.s32.totalorder %s17, 0
    %p107 = por %p105, %p106
    %s109 = sadd.s32 %s108, 1
    %p112 = scmp.eq.s32.totalorder %s11, 1
    %p113 = scmp.ne.s32.totalorder %s108, %s110
    %p114 = scmp.eq.s32.totalorder %s11, 0
    %p115 = por %p113, %p114
    %p116 = scmp.ne.s32.totalorder %s108, %s110
    %p117 = scmp.eq.s32.totalorder %s16, 1
    %p118 = por %p116, %p117
    %p119 = scmp.ne.s32.totalorder %s110, %s111
    %p120 = scmp.eq.s32.totalorder %s16, 0
    %p121 = por %p119, %p120
    %p122 = scmp.ne.s32.totalorder %s110, %s111
    %p123 = scmp.eq.s32.totalorder %s17, 1
    %p124 = por %p122, %p123
    %p126 = scmp.ne.s32.totalorder %s111, %s125
    %p127 = scmp.eq.s32.totalorder %s17, 0
    %p128 = por %p126, %p127
    %s129 = ssub.s32 %s11, %s18
    %p130 = scmp.eq.s32.totalorder %s129, 0
    %s132 = sadd.s32 %s131, 1
    %s133 = scalar_select %p130, %s131, %s132
    %p136 = pneg %p130
    %p137 = scmp.eq.s32.totalorder %s11, 1
    %p138 = por %p136, %p137
    %p139 = scmp.ne.s32.totalorder %s131, %s134
    %p140 = scmp.eq.s32.totalorder %s11, 0
    %p141 = por %p139, %p140
    %p142 = scmp.ne.s32.totalorder %s131, %s134
    %p143 = scmp.eq.s32.totalorder %s16, 1
    %p144 = por %p142, %p143
    %p145 = scmp.ne.s32.totalorder %s134, %s135
    %p146 = scmp.eq.s32.totalorder %s16, 0
    %p147 = por %p145, %p146
    %p148 = scmp.ne.s32.totalorder %s134, %s135
    %p149 = scmp.eq.s32.totalorder %s17, 1
    %p150 = por %p148, %p149
    %p152 = scmp.ne.s32.totalorder %s135, %s151
    %p153 = scmp.eq.s32.totalorder %s17, 0
    %p154 = por %p152, %p153
    %p155 = scmp.le.s32.totalorder 1, %s11
    %p156 = scmp.lt.s32.totalorder %s11, 3
    %p157 = pnand %p155, %p156
    %p158 = pneg %p157
    // Predicated region
    $region9: #{tpu_custom_call.1} parent=5 // pred_check
      _
    $region10: #{tpu_custom_call.1} parent=5 // pred_check_branch
      %160 = sbr.rel (%p157) target = $region12
    $region11: #{tpu_custom_call.1} parent=5 // pred_region
      %s161 = ssub.s32 %s11, 1
      // Predicated region
      $region13: #{tpu_custom_call.1} parent=11 // pred_check
        %p162 = pneg %p58
      $region14: #{tpu_custom_call.1} parent=11 // pred_check_branch
        %164 = sbr.rel (%p162) target = $region16
      $region15: #{tpu_custom_call.1} parent=11 // pred_region
        _
      $region16: #{tpu_custom_call.1} parent=11 // pred_fallthru
        _
      // Predicated region
      $region17: #{tpu_custom_call.1} parent=11 // pred_check
        %p165 = pneg %p79
      $region18: #{tpu_custom_call.1} parent=11 // pred_check_branch
        %167 = sbr.rel (%p165) target = $region20
      $region19: #{tpu_custom_call.1} parent=11 // pred_region
        _
      $region20: #{tpu_custom_call.1} parent=11 // pred_fallthru
        _
      // Predicated region
      $region21: #{tpu_custom_call.1} parent=11 // pred_check
        %p168 = pneg %p100
      $region22: #{tpu_custom_call.1} parent=11 // pred_check_branch
        %170 = sbr.rel (%p168) target = $region24
      $region23: #{tpu_custom_call.1} parent=11 // pred_region
        _
      $region24: #{tpu_custom_call.1} parent=11 // pred_fallthru
        _
      // Predicated region
      $region25: #{tpu_custom_call.1} parent=11 // pred_check
        %p171 = pneg %p121
      $region26: #{tpu_custom_call.1} parent=11 // pred_check_branch
        %173 = sbr.rel (%p171) target = $region28
      $region27: #{tpu_custom_call.1} parent=11 // pred_region
        _
      $region28: #{tpu_custom_call.1} parent=11 // pred_fallthru
        _
    $region12: #{tpu_custom_call.1} parent=5 // pred_fallthru
      _
    %p174 = scmp.lt.s32.totalorder %s11, 2
    // Predicated region
    $region29: #{tpu_custom_call.1} parent=5 // pred_check
      %p175 = pneg %p174
    $region30: #{tpu_custom_call.1} parent=5 // pred_check_branch
      %177 = sbr.rel (%p175) target = $region32
    $region31: #{tpu_custom_call.1} parent=5 // pred_region
      // Predicated region
      $region33: #{tpu_custom_call.1} parent=31 // pred_check
        %p178 = pneg %p31
      $region34: #{tpu_custom_call.1} parent=31 // pred_check_branch
        %180 = sbr.rel (%p178) target = $region36
      $region35: #{tpu_custom_call.1} parent=31 // pred_region
        %p181 = scmp.lt.s32.totalorder %s11, 1
        %s182 = scalar_select %p181, %s11, 1
        %s183 = smul.addr %s182, 32
        %s184 = smul.addr %s183, 4
        %s185 = scalar_lea.vmem %s0, %s184
      $region36: #{tpu_custom_call.1} parent=31 // pred_fallthru
        _
    $region32: #{tpu_custom_call.1} parent=5 // pred_fallthru
      _
    %p186 = scmp.le.s32.totalorder 1, %s11
    %p187 = scmp.lt.s32.totalorder %s11, 3
    %p188 = pnand %p186, %p187
    %p189 = pneg %p188
    // Predicated region
    $region37: #{tpu_custom_call.1} parent=5 // pred_check
      _
    $region38: #{tpu_custom_call.1} parent=5 // pred_check_branch
      %191 = sbr.rel (%p188) target = $region40
    $region39: #{tpu_custom_call.1} parent=5 // pred_region
      %s192 = ssub.s32 %s11, 1
      %p193 = scmp.lt.s32.totalorder %s16, 1
      %s194 = scalar_select %p193, %s16, 1
      %s195 = smul.addr %s194, 32
      %s196 = smul.addr %s195, 4
      %s197 = scalar_lea.vmem %s0, %s196
      %p198 = pneg %p37
      %p199 = pneg %p34
      %p200 = pneg %p58
      %p201 = pneg %p55
      %p202 = pneg %p79
      %p203 = pneg %p76
      %p204 = pneg %p100
      %p205 = pneg %p97
      %p206 = pneg %p121
      %p207 = pneg %p118
      %p208 = pneg %p147
      %p209 = pneg %p144
      %p210 = scmp.lt.s32.totalorder %s16, 1
      %s211 = scalar_select %p210, %s16, 1
      %s212 = smul.addr %s211, 32
      %s213 = smul.addr %s212, 8
      %s214 = scalar_lea.vmem %s5, %s213
      %p215 = scmp.lt.s32.totalorder %s16, 1
      %s216 = scalar_select %p215, %s16, 1
      %s217 = smul.addr %s216, 32
      %s218 = smul.addr %s217, 4
      %s219 = scalar_lea.vmem %s0, %s218
      %p220 = scmp.lt.s32.totalorder %s16, 1
      %s221 = scalar_select %p220, %s16, 1
      %s222 = smul.addr %s221, 32
      %s223 = smul.addr %s222, 8
      %s224 = scalar_lea.vmem %s5, %s223
      %vm226 = vcmask 27648
      %227 = vst.msk [vmem:[#allocation2] sm:$0xf] %vm226, 0
      %228 = vst.msk [vmem:[#allocation2 + $0x4] sm:$0xf] %vm226, 0
      %229 = vst.msk [vmem:[#allocation2 + $0x8] sm:$0xf] %vm226, 0
      %s230 = scalar_lea.vmem [#allocation2], 204
      %231 = vst.msk [vmem:[%s230] sm:$0xf] %vm226, 0
      %232 = vst.msk [vmem:[%s230 + $0x4] sm:$0xf] %vm226, 0
      %233 = vst.msk [vmem:[%s230 + $0x8] sm:$0xf] %vm226, 0
      %s234 = scalar_lea.vmem [#allocation2], 12
      %vm235 = vcmask 24576
      %vm236 = vsmask.f32 256
      %vm237 = vmand %vm235, %vm236
      %v238 = vld [vmem:[%s234] sm:$0x1]
      %v239 = vsel %vm237, 0, %v238
      %240 = vst [vmem:[%s234] sm:$0x1] %v239
      %v241 = vld [vmem:[%s234 + $0xc] sm:$0x1]
      %v242 = vsel %vm237, 0, %v241
      %243 = vst [vmem:[%s234 + $0xc] sm:$0x1] %v242
      %v244 = vld [vmem:[%s234 + $0x18] sm:$0x1]
      %v245 = vsel %vm237, 0, %v244
      %246 = vst [vmem:[%s234 + $0x18] sm:$0x1] %v245
      %v247 = vld [vmem:[%s234 + $0x24] sm:$0x1]
      %v248 = vsel %vm237, 0, %v247
      %249 = vst [vmem:[%s234 + $0x24] sm:$0x1] %v248
      %v250 = vld [vmem:[%s234 + $0x30] sm:$0x1]
      %v251 = vsel %vm237, 0, %v250
      %252 = vst [vmem:[%s234 + $0x30] sm:$0x1] %v251
      %v253 = vld [vmem:[%s234 + $0x3c] sm:$0x1]
      %v254 = vsel %vm237, 0, %v253
      %255 = vst [vmem:[%s234 + $0x3c] sm:$0x1] %v254
      %v256 = vld [vmem:[%s234 + $0x48] sm:$0x1]
      %v257 = vsel %vm237, 0, %v256
      %258 = vst [vmem:[%s234 + $0x48] sm:$0x1] %v257
      %v259 = vld [vmem:[%s234 + $0x54] sm:$0x1]
      %v260 = vsel %vm237, 0, %v259
      %261 = vst [vmem:[%s234 + $0x54] sm:$0x1] %v260
      %v262 = vld [vmem:[%s234 + $0x60] sm:$0x1]
      %v263 = vsel %vm237, 0, %v262
      %264 = vst [vmem:[%s234 + $0x60] sm:$0x1] %v263
      %v265 = vld [vmem:[%s234 + $0x6c] sm:$0x1]
      %v266 = vsel %vm237, 0, %v265
      %267 = vst [vmem:[%s234 + $0x6c] sm:$0x1] %v266
      %v268 = vld [vmem:[%s234 + $0x78] sm:$0x1]
      %v269 = vsel %vm237, 0, %v268
      %270 = vst [vmem:[%s234 + $0x78] sm:$0x1] %v269
      %v271 = vld [vmem:[%s234 + $0x84] sm:$0x1]
      %v272 = vsel %vm237, 0, %v271
      %273 = vst [vmem:[%s234 + $0x84] sm:$0x1] %v272
      %v274 = vld [vmem:[%s234 + $0x90] sm:$0x1]
      %v275 = vsel %vm237, 0, %v274
      %276 = vst [vmem:[%s234 + $0x90] sm:$0x1] %v275
      %v277 = vld [vmem:[%s234 + $0x9c] sm:$0x1]
      %v278 = vsel %vm237, 0, %v277
      %279 = vst [vmem:[%s234 + $0x9c] sm:$0x1] %v278
      %v280 = vld [vmem:[%s234 + $0xa8] sm:$0x1]
      %v281 = vsel %vm237, 0, %v280
      %282 = vst [vmem:[%s234 + $0xa8] sm:$0x1] %v281
      %v283 = vld [vmem:[%s234 + $0xb4] sm:$0x1]
      %v284 = vsel %vm237, 0, %v283
      %285 = vst [vmem:[%s234 + $0xb4] sm:$0x1] %v284
      %vm286 = vsmask.f32 7938
      %vm287 = vmand %vm235, %vm286
      %v288 = vld [vmem:[%s234 + $0x8] sm:$0x1]
      %v289 = vsel %vm287, 0, %v288
      %290 = vst [vmem:[%s234 + $0x8] sm:$0x1] %v289
      %v291 = vld [vmem:[%s234 + $0x14] sm:$0x1]
      %v292 = vsel %vm287, 0, %v291
      %293 = vst [vmem:[%s234 + $0x14] sm:$0x1] %v292
      %v294 = vld [vmem:[%s234 + $0x20] sm:$0x1]
      %v295 = vsel %vm287, 0, %v294
      %296 = vst [vmem:[%s234 + $0x20] sm:$0x1] %v295
      %v297 = vld [vmem:[%s234 + $0x2c] sm:$0x1]
      %v298 = vsel %vm287, 0, %v297
      %299 = vst [vmem:[%s234 + $0x2c] sm:$0x1] %v298
      %v300 = vld [vmem:[%s234 + $0x38] sm:$0x1]
      %v301 = vsel %vm287, 0, %v300
      %302 = vst [vmem:[%s234 + $0x38] sm:$0x1] %v301
      %v303 = vld [vmem:[%s234 + $0x44] sm:$0x1]
      %v304 = vsel %vm287, 0, %v303
      %305 = vst [vmem:[%s234 + $0x44] sm:$0x1] %v304
      %v306 = vld [vmem:[%s234 + $0x50] sm:$0x1]
      %v307 = vsel %vm287, 0, %v306
      %308 = vst [vmem:[%s234 + $0x50] sm:$0x1] %v307
      %v309 = vld [vmem:[%s234 + $0x5c] sm:$0x1]
      %v310 = vsel %vm287, 0, %v309
      %311 = vst [vmem:[%s234 + $0x5c] sm:$0x1] %v310
      %v312 = vld [vmem:[%s234 + $0x68] sm:$0x1]
      %v313 = vsel %vm287, 0, %v312
      %314 = vst [vmem:[%s234 + $0x68] sm:$0x1] %v313
      %v315 = vld [vmem:[%s234 + $0x74] sm:$0x1]
      %v316 = vsel %vm287, 0, %v315
      %317 = vst [vmem:[%s234 + $0x74] sm:$0x1] %v316
      %v318 = vld [vmem:[%s234 + $0x80] sm:$0x1]
      %v319 = vsel %vm287, 0, %v318
      %320 = vst [vmem:[%s234 + $0x80] sm:$0x1] %v319
      %v321 = vld [vmem:[%s234 + $0x8c] sm:$0x1]
      %v322 = vsel %vm287, 0, %v321
      %323 = vst [vmem:[%s234 + $0x8c] sm:$0x1] %v322
      %v324 = vld [vmem:[%s234 + $0x98] sm:$0x1]
      %v325 = vsel %vm287, 0, %v324
      %326 = vst [vmem:[%s234 + $0x98] sm:$0x1] %v325
      %v327 = vld [vmem:[%s234 + $0xa4] sm:$0x1]
      %v328 = vsel %vm287, 0, %v327
      %329 = vst [vmem:[%s234 + $0xa4] sm:$0x1] %v328
      %v330 = vld [vmem:[%s234 + $0xb0] sm:$0x1]
      %v331 = vsel %vm287, 0, %v330
      %332 = vst [vmem:[%s234 + $0xb0] sm:$0x1] %v331
      %v333 = vld [vmem:[%s234 + $0xbc] sm:$0x1]
      %v334 = vsel %vm287, 0, %v333
      %335 = vst [vmem:[%s234 + $0xbc] sm:$0x1] %v334
      %vm336 = vcmask 60416
      %337 = vst.msk [vmem:[#allocation4] sm:$0xf] %vm336, 0
      %338 = vst.msk [vmem:[#allocation4 + $0x4] sm:$0xf] %vm336, 0
      %339 = vst.msk [vmem:[#allocation4 + $0x8] sm:$0xf] %vm336, 0
      %s340 = scalar_lea.vmem [#allocation4], 204
      %341 = vst.msk [vmem:[%s340] sm:$0xf] %vm336, 0
      %342 = vst.msk [vmem:[%s340 + $0x4] sm:$0xf] %vm336, 0
      %343 = vst.msk [vmem:[%s340 + $0x8] sm:$0xf] %vm336, 0
      %s344 = scalar_lea.vmem [#allocation4], 12
      %vm345 = vcmask 57344
      %vm346 = vmand %vm345, %vm236
      %v347 = vld [vmem:[%s344] sm:$0x1]
      %v348 = vsel %vm346, 0, %v347
      %349 = vst [vmem:[%s344] sm:$0x1] %v348
      %v350 = vld [vmem:[%s344 + $0xc] sm:$0x1]
      %v351 = vsel %vm346, 0, %v350
      %352 = vst [vmem:[%s344 + $0xc] sm:$0x1] %v351
      %v353 = vld [vmem:[%s344 + $0x18] sm:$0x1]
      %v354 = vsel %vm346, 0, %v353
      %355 = vst [vmem:[%s344 + $0x18] sm:$0x1] %v354
      %v356 = vld [vmem:[%s344 + $0x24] sm:$0x1]
      %v357 = vsel %vm346, 0, %v356
      %358 = vst [vmem:[%s344 + $0x24] sm:$0x1] %v357
      %v359 = vld [vmem:[%s344 + $0x30] sm:$0x1]
      %v360 = vsel %vm346, 0, %v359
      %361 = vst [vmem:[%s344 + $0x30] sm:$0x1] %v360
      %v362 = vld [vmem:[%s344 + $0x3c] sm:$0x1]
      %v363 = vsel %vm346, 0, %v362
      %364 = vst [vmem:[%s344 + $0x3c] sm:$0x1] %v363
      %v365 = vld [vmem:[%s344 + $0x48] sm:$0x1]
      %v366 = vsel %vm346, 0, %v365
      %367 = vst [vmem:[%s344 + $0x48] sm:$0x1] %v366
      %v368 = vld [vmem:[%s344 + $0x54] sm:$0x1]
      %v369 = vsel %vm346, 0, %v368
      %370 = vst [vmem:[%s344 + $0x54] sm:$0x1] %v369
      %v371 = vld [vmem:[%s344 + $0x60] sm:$0x1]
      %v372 = vsel %vm346, 0, %v371
      %373 = vst [vmem:[%s344 + $0x60] sm:$0x1] %v372
      %v374 = vld [vmem:[%s344 + $0x6c] sm:$0x1]
      %v375 = vsel %vm346, 0, %v374
      %376 = vst [vmem:[%s344 + $0x6c] sm:$0x1] %v375
      %v377 = vld [vmem:[%s344 + $0x78] sm:$0x1]
      %v378 = vsel %vm346, 0, %v377
      %379 = vst [vmem:[%s344 + $0x78] sm:$0x1] %v378
      %v380 = vld [vmem:[%s344 + $0x84] sm:$0x1]
      %v381 = vsel %vm346, 0, %v380
      %382 = vst [vmem:[%s344 + $0x84] sm:$0x1] %v381
      %v383 = vld [vmem:[%s344 + $0x90] sm:$0x1]
      %v384 = vsel %vm346, 0, %v383
      %385 = vst [vmem:[%s344 + $0x90] sm:$0x1] %v384
      %v386 = vld [vmem:[%s344 + $0x9c] sm:$0x1]
      %v387 = vsel %vm346, 0, %v386
      %388 = vst [vmem:[%s344 + $0x9c] sm:$0x1] %v387
      %v389 = vld [vmem:[%s344 + $0xa8] sm:$0x1]
      %v390 = vsel %vm346, 0, %v389
      %391 = vst [vmem:[%s344 + $0xa8] sm:$0x1] %v390
      %v392 = vld [vmem:[%s344 + $0xb4] sm:$0x1]
      %v393 = vsel %vm346, 0, %v392
      %394 = vst [vmem:[%s344 + $0xb4] sm:$0x1] %v393
      %vm395 = vmand %vm345, %vm286
      %v396 = vld [vmem:[%s344 + $0x8] sm:$0x1]
      %v397 = vsel %vm395, 0, %v396
      %398 = vst [vmem:[%s344 + $0x8] sm:$0x1] %v397
      %v399 = vld [vmem:[%s344 + $0x14] sm:$0x1]
      %v400 = vsel %vm395, 0, %v399
      %401 = vst [vmem:[%s344 + $0x14] sm:$0x1] %v400
      %v402 = vld [vmem:[%s344 + $0x20] sm:$0x1]
      %v403 = vsel %vm395, 0, %v402
      %404 = vst [vmem:[%s344 + $0x20] sm:$0x1] %v403
      %v405 = vld [vmem:[%s344 + $0x2c] sm:$0x1]
      %v406 = vsel %vm395, 0, %v405
      %407 = vst [vmem:[%s344 + $0x2c] sm:$0x1] %v406
      %v408 = vld [vmem:[%s344 + $0x38] sm:$0x1]
      %v409 = vsel %vm395, 0, %v408
      %410 = vst [vmem:[%s344 + $0x38] sm:$0x1] %v409
      %v411 = vld [vmem:[%s344 + $0x44] sm:$0x1]
      %v412 = vsel %vm395, 0, %v411
      %413 = vst [vmem:[%s344 + $0x44] sm:$0x1] %v412
      %v414 = vld [vmem:[%s344 + $0x50] sm:$0x1]
      %v415 = vsel %vm395, 0, %v414
      %416 = vst [vmem:[%s344 + $0x50] sm:$0x1] %v415
      %v417 = vld [vmem:[%s344 + $0x5c] sm:$0x1]
      %v418 = vsel %vm395, 0, %v417
      %419 = vst [vmem:[%s344 + $0x5c] sm:$0x1] %v418
      %v420 = vld [vmem:[%s344 + $0x68] sm:$0x1]
      %v421 = vsel %vm395, 0, %v420
      %422 = vst [vmem:[%s344 + $0x68] sm:$0x1] %v421
      %v423 = vld [vmem:[%s344 + $0x74] sm:$0x1]
      %v424 = vsel %vm395, 0, %v423
      %425 = vst [vmem:[%s344 + $0x74] sm:$0x1] %v424
      %v426 = vld [vmem:[%s344 + $0x80] sm:$0x1]
      %v427 = vsel %vm395, 0, %v426
      %428 = vst [vmem:[%s344 + $0x80] sm:$0x1] %v427
      %v429 = vld [vmem:[%s344 + $0x8c] sm:$0x1]
      %v430 = vsel %vm395, 0, %v429
      %431 = vst [vmem:[%s344 + $0x8c] sm:$0x1] %v430
      %v432 = vld [vmem:[%s344 + $0x98] sm:$0x1]
      %v433 = vsel %vm395, 0, %v432
      %434 = vst [vmem:[%s344 + $0x98] sm:$0x1] %v433
      %v435 = vld [vmem:[%s344 + $0xa4] sm:$0x1]
      %v436 = vsel %vm395, 0, %v435
      %437 = vst [vmem:[%s344 + $0xa4] sm:$0x1] %v436
      %v438 = vld [vmem:[%s344 + $0xb0] sm:$0x1]
      %v439 = vsel %vm395, 0, %v438
      %440 = vst [vmem:[%s344 + $0xb0] sm:$0x1] %v439
      %v441 = vld [vmem:[%s344 + $0xbc] sm:$0x1]
      %v442 = vsel %vm395, 0, %v441
      %443 = vst [vmem:[%s344 + $0xbc] sm:$0x1] %v442
      %v444 = vld [vmem:[%s219] sm:$0xf]
      %v445 = vld [vmem:[%s219 + $0x4] sm:$0xf]
      %v446 = vld [vmem:[%s219 + $0x8] sm:$0xf]
      %v447 = vld [vmem:[%s219 + $0xc] sm:$0xf]
      %v448 = vld [vmem:[%s219 + $0x10] sm:$0xf]
      %v449 = vld [vmem:[%s219 + $0x14] sm:$0xf]
      %v450 = vld [vmem:[%s219 + $0x18] sm:$0xf]
      %v451 = vld [vmem:[%s219 + $0x1c] sm:$0xf]
      %v452 = vld [vmem:[%s219 + $0x20] sm:$0xf]
      %v453 = vld [vmem:[%s219 + $0x24] sm:$0xf]
      %v454 = vld [vmem:[%s219 + $0x28] sm:$0xf]
      %v455 = vld [vmem:[%s219 + $0x2c] sm:$0xf]
      %v456 = vld [vmem:[%s219 + $0x30] sm:$0xf]
      %v457 = vld [vmem:[%s219 + $0x34] sm:$0xf]
      %v458 = vld [vmem:[%s219 + $0x38] sm:$0xf]
      %v459 = vld [vmem:[%s219 + $0x3c] sm:$0xf]
      %v460 = vld [vmem:[%s219 + $0x40] sm:$0xf]
      %v461 = vld [vmem:[%s219 + $0x44] sm:$0xf]
      %v462 = vld [vmem:[%s219 + $0x48] sm:$0xf]
      %v463 = vld [vmem:[%s219 + $0x4c] sm:$0xf]
      %v464 = vld [vmem:[%s219 + $0x50] sm:$0xf]
      %v465 = vld [vmem:[%s219 + $0x54] sm:$0xf]
      %v466 = vld [vmem:[%s219 + $0x58] sm:$0xf]
      %v467 = vld [vmem:[%s219 + $0x5c] sm:$0xf]
      %v468 = vld [vmem:[%s219 + $0x60] sm:$0xf]
      %v469 = vld [vmem:[%s219 + $0x64] sm:$0xf]
      %v470 = vld [vmem:[%s219 + $0x68] sm:$0xf]
      %v471 = vld [vmem:[%s219 + $0x6c] sm:$0xf]
      %v472 = vld [vmem:[%s219 + $0x70] sm:$0xf]
      %v473 = vld [vmem:[%s219 + $0x74] sm:$0xf]
      %v474 = vld [vmem:[%s219 + $0x78] sm:$0xf]
      %v475 = vld [vmem:[%s219 + $0x7c] sm:$0xf]
      %vm476 = vsmask.f32 4368
      %vm477 = vmor %vm236, %vm476
      %v479 = vshrl.u32 %v444, 16
      %v481 = vrot.slane %v479, 7
      %v482 = vshll.u32 %v444, 16
      %v484 = vor.u32 %v481, %v482
      %v485 = vrot.slane %v481, 4
      %v487 = vshrl.u32 %v445, 16
      %v489 = vrot.slane %v487, 7
      %v490 = vshll.u32 %v445, 16
      %v492 = vor.u32 %v489, %v490
      %v493 = vsel %vm477, %v485, %v492
      %v494 = vrot.slane %v489, 4
      %v496 = vshrl.u32 %v446, 16
      %v498 = vrot.slane %v496, 7
      %v499 = vshll.u32 %v446, 16
      %v501 = vor.u32 %v498, %v499
      %v502 = vrot.slane %v498, 4
      %v504 = vshrl.u32 %v447, 16
      %v506 = vrot.slane %v504, 7
      %v507 = vshll.u32 %v447, 16
      %v509 = vor.u32 %v506, %v507
      %v510 = vsel %vm477, %v502, %v509
      %v511 = vrot.slane %v506, 4
      %v513 = vshrl.u32 %v448, 16
      %v515 = vrot.slane %v513, 7
      %v516 = vshll.u32 %v448, 16
      %v518 = vor.u32 %v515, %v516
      %v519 = vrot.slane %v515, 4
      %v521 = vshrl.u32 %v449, 16
      %v523 = vrot.slane %v521, 7
      %v524 = vshll.u32 %v449, 16
      %v526 = vor.u32 %v523, %v524
      %v527 = vsel %vm477, %v519, %v526
      %v528 = vrot.slane %v523, 4
      %v530 = vshrl.u32 %v450, 16
      %v532 = vrot.slane %v530, 7
      %v533 = vshll.u32 %v450, 16
      %v535 = vor.u32 %v532, %v533
      %v536 = vrot.slane %v532, 4
      %v538 = vshrl.u32 %v451, 16
      %v540 = vrot.slane %v538, 7
      %v541 = vshll.u32 %v451, 16
      %v543 = vor.u32 %v540, %v541
      %v544 = vsel %vm477, %v536, %v543
      %v545 = vrot.slane %v540, 4
      %v547 = vshrl.u32 %v452, 16
      %v549 = vrot.slane %v547, 7
      %v550 = vshll.u32 %v452, 16
      %v552 = vor.u32 %v549, %v550
      %v553 = vrot.slane %v549, 4
      %v555 = vshrl.u32 %v453, 16
      %v557 = vrot.slane %v555, 7
      %v558 = vshll.u32 %v453, 16
      %v560 = vor.u32 %v557, %v558
      %v561 = vsel %vm477, %v553, %v560
      %v562 = vrot.slane %v557, 4
      %v564 = vshrl.u32 %v454, 16
      %v566 = vrot.slane %v564, 7
      %v567 = vshll.u32 %v454, 16
      %v569 = vor.u32 %v566, %v567
      %v570 = vrot.slane %v566, 4
      %v572 = vshrl.u32 %v455, 16
      %v574 = vrot.slane %v572, 7
      %v575 = vshll.u32 %v455, 16
      %v577 = vor.u32 %v574, %v575
      %v578 = vsel %vm477, %v570, %v577
      %v579 = vrot.slane %v574, 4
      %v581 = vshrl.u32 %v456, 16
      %v583 = vrot.slane %v581, 7
      %v584 = vshll.u32 %v456, 16
      %v586 = vor.u32 %v583, %v584
      %v587 = vrot.slane %v583, 4
      %v589 = vshrl.u32 %v457, 16
      %v591 = vrot.slane %v589, 7
      %v592 = vshll.u32 %v457, 16
      %v594 = vor.u32 %v591, %v592
      %v595 = vsel %vm477, %v587, %v594
      %v596 = vrot.slane %v591, 4
      %v598 = vshrl.u32 %v458, 16
      %v600 = vrot.slane %v598, 7
      %v601 = vshll.u32 %v458, 16
      %v603 = vor.u32 %v600, %v601
      %v604 = vrot.slane %v600, 4
      %v606 = vshrl.u32 %v459, 16
      %v608 = vrot.slane %v606, 7
      %v609 = vshll.u32 %v459, 16
      %v611 = vor.u32 %v608, %v609
      %v612 = vsel %vm477, %v604, %v611
      %v613 = vrot.slane %v608, 4
      %v615 = vshrl.u32 %v460, 16
      %v617 = vrot.slane %v615, 7
      %v618 = vshll.u32 %v460, 16
      %v620 = vor.u32 %v617, %v618
      %v621 = vrot.slane %v617, 4
      %v623 = vshrl.u32 %v461, 16
      %v625 = vrot.slane %v623, 7
      %v626 = vshll.u32 %v461, 16
      %v628 = vor.u32 %v625, %v626
      %v629 = vsel %vm477, %v621, %v628
      %v630 = vrot.slane %v625, 4
      %v632 = vshrl.u32 %v462, 16
      %v634 = vrot.slane %v632, 7
      %v635 = vshll.u32 %v462, 16
      %v637 = vor.u32 %v634, %v635
      %v638 = vrot.slane %v634, 4
      %v640 = vshrl.u32 %v463, 16
      %v642 = vrot.slane %v640, 7
      %v643 = vshll.u32 %v463, 16
      %v645 = vor.u32 %v642, %v643
      %v646 = vsel %vm477, %v638, %v645
      %v647 = vrot.slane %v642, 4
      %v649 = vshrl.u32 %v464, 16
      %v651 = vrot.slane %v649, 7
      %v652 = vshll.u32 %v464, 16
      %v654 = vor.u32 %v651, %v652
      %v655 = vrot.slane %v651, 4
      %v657 = vshrl.u32 %v465, 16
      %v659 = vrot.slane %v657, 7
      %v660 = vshll.u32 %v465, 16
      %v662 = vor.u32 %v659, %v660
      %v663 = vsel %vm477, %v655, %v662
      %v664 = vrot.slane %v659, 4
      %v666 = vshrl.u32 %v466, 16
      %v668 = vrot.slane %v666, 7
      %v669 = vshll.u32 %v466, 16
      %v671 = vor.u32 %v668, %v669
      %v672 = vrot.slane %v668, 4
      %v674 = vshrl.u32 %v467, 16
      %v676 = vrot.slane %v674, 7
      %v677 = vshll.u32 %v467, 16
      %v679 = vor.u32 %v676, %v677
      %v680 = vsel %vm477, %v672, %v679
      %v681 = vrot.slane %v676, 4
      %v683 = vshrl.u32 %v468, 16
      %v685 = vrot.slane %v683, 7
      %v686 = vshll.u32 %v468, 16
      %v688 = vor.u32 %v685, %v686
      %v689 = vrot.slane %v685, 4
      %v691 = vshrl.u32 %v469, 16
      %v693 = vrot.slane %v691, 7
      %v694 = vshll.u32 %v469, 16
      %v696 = vor.u32 %v693, %v694
      %v697 = vsel %vm477, %v689, %v696
      %v698 = vrot.slane %v693, 4
      %v700 = vshrl.u32 %v470, 16
      %v702 = vrot.slane %v700, 7
      %v703 = vshll.u32 %v470, 16
      %v705 = vor.u32 %v702, %v703
      %v706 = vrot.slane %v702, 4
      %v708 = vshrl.u32 %v471, 16
      %v710 = vrot.slane %v708, 7
      %v711 = vshll.u32 %v471, 16
      %v713 = vor.u32 %v710, %v711
      %v714 = vsel %vm477, %v706, %v713
      %v715 = vrot.slane %v710, 4
      %v717 = vshrl.u32 %v472, 16
      %v719 = vrot.slane %v717, 7
      %v720 = vshll.u32 %v472, 16
      %v722 = vor.u32 %v719, %v720
      %v723 = vrot.slane %v719, 4
      %v725 = vshrl.u32 %v473, 16
      %v727 = vrot.slane %v725, 7
      %v728 = vshll.u32 %v473, 16
      %v730 = vor.u32 %v727, %v728
      %v731 = vsel %vm477, %v723, %v730
      %v732 = vrot.slane %v727, 4
      %v734 = vshrl.u32 %v474, 16
      %v736 = vrot.slane %v734, 7
      %v737 = vshll.u32 %v474, 16
      %v739 = vor.u32 %v736, %v737
      %v740 = vrot.slane %v736, 4
      %v742 = vshrl.u32 %v475, 16
      %v744 = vrot.slane %v742, 7
      %v745 = vshll.u32 %v475, 16
      %v747 = vor.u32 %v744, %v745
      %v748 = vsel %vm477, %v740, %v747
      %v749 = vrot.slane %v744, 4
      %vm798 = vcmask 27648
      %vm799 = vmand %vm798, %vm286
      %v800 = vld [vmem:[%s234] sm:$0xf]
      %v801 = vsel %vm799, %v484, %v800
      %802 = vst [vmem:[%s234] sm:$0xf] %v801
      %803 = vst.msk [vmem:[%s234 + $0x4] sm:$0xf] %vm226, %v493
      %v804 = vld [vmem:[%s234 + $0x8] sm:$0x1]
      %v805 = vsel %vm237, %v494, %v804
      %806 = vst [vmem:[%s234 + $0x8] sm:$0x1] %v805
      %v807 = vld [vmem:[%s234 + $0xc] sm:$0xf]
      %v808 = vsel %vm799, %v501, %v807
      %809 = vst [vmem:[%s234 + $0xc] sm:$0xf] %v808
      %810 = vst.msk [vmem:[%s234 + $0x10] sm:$0xf] %vm226, %v510
      %v811 = vld [vmem:[%s234 + $0x14] sm:$0x1]
      %v812 = vsel %vm237, %v511, %v811
      %813 = vst [vmem:[%s234 + $0x14] sm:$0x1] %v812
      %v814 = vld [vmem:[%s234 + $0x18] sm:$0xf]
      %v815 = vsel %vm799, %v518, %v814
      %816 = vst [vmem:[%s234 + $0x18] sm:$0xf] %v815
      %817 = vst.msk [vmem:[%s234 + $0x1c] sm:$0xf] %vm226, %v527
      %v818 = vld [vmem:[%s234 + $0x20] sm:$0x1]
      %v819 = vsel %vm237, %v528, %v818
      %820 = vst [vmem:[%s234 + $0x20] sm:$0x1] %v819
      %v821 = vld [vmem:[%s234 + $0x24] sm:$0xf]
      %v822 = vsel %vm799, %v535, %v821
      %823 = vst [vmem:[%s234 + $0x24] sm:$0xf] %v822
      %824 = vst.msk [vmem:[%s234 + $0x28] sm:$0xf] %vm226, %v544
      %v825 = vld [vmem:[%s234 + $0x2c] sm:$0x1]
      %v826 = vsel %vm237, %v545, %v825
      %827 = vst [vmem:[%s234 + $0x2c] sm:$0x1] %v826
      %v828 = vld [vmem:[%s234 + $0x30] sm:$0xf]
      %v829 = vsel %vm799, %v552, %v828
      %830 = vst [vmem:[%s234 + $0x30] sm:$0xf] %v829
      %831 = vst.msk [vmem:[%s234 + $0x34] sm:$0xf] %vm226, %v561
      %v832 = vld [vmem:[%s234 + $0x38] sm:$0x1]
      %v833 = vsel %vm237, %v562, %v832
      %834 = vst [vmem:[%s234 + $0x38] sm:$0x1] %v833
      %v835 = vld [vmem:[%s234 + $0x3c] sm:$0xf]
      %v836 = vsel %vm799, %v569, %v835
      %837 = vst [vmem:[%s234 + $0x3c] sm:$0xf] %v836
      %838 = vst.msk [vmem:[%s234 + $0x40] sm:$0xf] %vm226, %v578
      %v839 = vld [vmem:[%s234 + $0x44] sm:$0x1]
      %v840 = vsel %vm237, %v579, %v839
      %841 = vst [vmem:[%s234 + $0x44] sm:$0x1] %v840
      %v842 = vld [vmem:[%s234 + $0x48] sm:$0xf]
      %v843 = vsel %vm799, %v586, %v842
      %844 = vst [vmem:[%s234 + $0x48] sm:$0xf] %v843
      %845 = vst.msk [vmem:[%s234 + $0x4c] sm:$0xf] %vm226, %v595
      %v846 = vld [vmem:[%s234 + $0x50] sm:$0x1]
      %v847 = vsel %vm237, %v596, %v846
      %848 = vst [vmem:[%s234 + $0x50] sm:$0x1] %v847
      %v849 = vld [vmem:[%s234 + $0x54] sm:$0xf]
      %v850 = vsel %vm799, %v603, %v849
      %851 = vst [vmem:[%s234 + $0x54] sm:$0xf] %v850
      %852 = vst.msk [vmem:[%s234 + $0x58] sm:$0xf] %vm226, %v612
      %v853 = vld [vmem:[%s234 + $0x5c] sm:$0x1]
      %v854 = vsel %vm237, %v613, %v853
      %855 = vst [vmem:[%s234 + $0x5c] sm:$0x1] %v854
      %v856 = vld [vmem:[%s234 + $0x60] sm:$0xf]
      %v857 = vsel %vm799, %v620, %v856
      %858 = vst [vmem:[%s234 + $0x60] sm:$0xf] %v857
      %859 = vst.msk [vmem:[%s234 + $0x64] sm:$0xf] %vm226, %v629
      %v860 = vld [vmem:[%s234 + $0x68] sm:$0x1]
      %v861 = vsel %vm237, %v630, %v860
      %862 = vst [vmem:[%s234 + $0x68] sm:$0x1] %v861
      %v863 = vld [vmem:[%s234 + $0x6c] sm:$0xf]
      %v864 = vsel %vm799, %v637, %v863
      %865 = vst [vmem:[%s234 + $0x6c] sm:$0xf] %v864
      %866 = vst.msk [vmem:[%s234 + $0x70] sm:$0xf] %vm226, %v646
      %v867 = vld [vmem:[%s234 + $0x74] sm:$0x1]
      %v868 = vsel %vm237, %v647, %v867
      %869 = vst [vmem:[%s234 + $0x74] sm:$0x1] %v868
      %v870 = vld [vmem:[%s234 + $0x78] sm:$0xf]
      %v871 = vsel %vm799, %v654, %v870
      %872 = vst [vmem:[%s234 + $0x78] sm:$0xf] %v871
      %873 = vst.msk [vmem:[%s234 + $0x7c] sm:$0xf] %vm226, %v663
      %v874 = vld [vmem:[%s234 + $0x80] sm:$0x1]
      %v875 = vsel %vm237, %v664, %v874
      %876 = vst [vmem:[%s234 + $0x80] sm:$0x1] %v875
      %v877 = vld [vmem:[%s234 + $0x84] sm:$0xf]
      %v878 = vsel %vm799, %v671, %v877
      %879 = vst [vmem:[%s234 + $0x84] sm:$0xf] %v878
      %880 = vst.msk [vmem:[%s234 + $0x88] sm:$0xf] %vm226, %v680
      %v881 = vld [vmem:[%s234 + $0x8c] sm:$0x1]
      %v882 = vsel %vm237, %v681, %v881
      %883 = vst [vmem:[%s234 + $0x8c] sm:$0x1] %v882
      %v884 = vld [vmem:[%s234 + $0x90] sm:$0xf]
      %v885 = vsel %vm799, %v688, %v884
      %886 = vst [vmem:[%s234 + $0x90] sm:$0xf] %v885
      %887 = vst.msk [vmem:[%s234 + $0x94] sm:$0xf] %vm226, %v697
      %v888 = vld [vmem:[%s234 + $0x98] sm:$0x1]
      %v889 = vsel %vm237, %v698, %v888
      %890 = vst [vmem:[%s234 + $0x98] sm:$0x1] %v889
      %v891 = vld [vmem:[%s234 + $0x9c] sm:$0xf]
      %v892 = vsel %vm799, %v705, %v891
      %893 = vst [vmem:[%s234 + $0x9c] sm:$0xf] %v892
      %894 = vst.msk [vmem:[%s234 + $0xa0] sm:$0xf] %vm226, %v714
      %v895 = vld [vmem:[%s234 + $0xa4] sm:$0x1]
      %v896 = vsel %vm237, %v715, %v895
      %897 = vst [vmem:[%s234 + $0xa4] sm:$0x1] %v896
      %v898 = vld [vmem:[%s234 + $0xa8] sm:$0xf]
      %v899 = vsel %vm799, %v722, %v898
      %900 = vst [vmem:[%s234 + $0xa8] sm:$0xf] %v899
      %901 = vst.msk [vmem:[%s234 + $0xac] sm:$0xf] %vm226, %v731
      %v902 = vld [vmem:[%s234 + $0xb0] sm:$0x1]
      %v903 = vsel %vm237, %v732, %v902
      %904 = vst [vmem:[%s234 + $0xb0] sm:$0x1] %v903
      %v905 = vld [vmem:[%s234 + $0xb4] sm:$0xf]
      %v906 = vsel %vm799, %v739, %v905
      %907 = vst [vmem:[%s234 + $0xb4] sm:$0xf] %v906
      %908 = vst.msk [vmem:[%s234 + $0xb8] sm:$0xf] %vm226, %v748
      %v909 = vld [vmem:[%s234 + $0xbc] sm:$0x1]
      %v910 = vsel %vm237, %v749, %v909
      %911 = vst [vmem:[%s234 + $0xbc] sm:$0x1] %v910
      %v912 = vld [vmem:[#allocation2] sm:$0xf]
      %v913 = vld [vmem:[#allocation2 + $0x4] sm:$0xf]
      %v914 = vld [vmem:[#allocation2 + $0xc] sm:$0xf]
      %v915 = vld [vmem:[#allocation2 + $0x10] sm:$0xf]
      %v916 = vld [vmem:[#allocation2 + $0x18] sm:$0xf]
      %v917 = vld [vmem:[#allocation2 + $0x1c] sm:$0xf]
      %v918 = vld [vmem:[#allocation2 + $0x24] sm:$0xf]
      %v919 = vld [vmem:[#allocation2 + $0x28] sm:$0xf]
      %v920 = vld [vmem:[#allocation2 + $0x30] sm:$0xf]
      %v921 = vld [vmem:[#allocation2 + $0x34] sm:$0xf]
      %v922 = vld [vmem:[#allocation2 + $0x3c] sm:$0xf]
      %v923 = vld [vmem:[#allocation2 + $0x40] sm:$0xf]
      %v924 = vld [vmem:[#allocation2 + $0x48] sm:$0xf]
      %v925 = vld [vmem:[#allocation2 + $0x4c] sm:$0xf]
      %v926 = vld [vmem:[#allocation2 + $0x54] sm:$0xf]
      %v927 = vld [vmem:[#allocation2 + $0x58] sm:$0xf]
      %v928 = vld [vmem:[#allocation2 + $0x60] sm:$0xf]
      %v929 = vld [vmem:[#allocation2 + $0x64] sm:$0xf]
      %v930 = vld [vmem:[#allocation2 + $0x6c] sm:$0xf]
      %v931 = vld [vmem:[#allocation2 + $0x70] sm:$0xf]
      %v932 = vld [vmem:[#allocation2 + $0x78] sm:$0xf]
      %v933 = vld [vmem:[#allocation2 + $0x7c] sm:$0xf]
      %v934 = vld [vmem:[#allocation2 + $0x84] sm:$0xf]
      %v935 = vld [vmem:[#allocation2 + $0x88] sm:$0xf]
      %v936 = vld [vmem:[#allocation2 + $0x90] sm:$0xf]
      %v937 = vld [vmem:[#allocation2 + $0x94] sm:$0xf]
      %v938 = vld [vmem:[#allocation2 + $0x9c] sm:$0xf]
      %v939 = vld [vmem:[#allocation2 + $0xa0] sm:$0xf]
      %v940 = vld [vmem:[#allocation2 + $0xa8] sm:$0xf]
      %v941 = vld [vmem:[#allocation2 + $0xac] sm:$0xf]
      %v942 = vld [vmem:[#allocation2 + $0xb4] sm:$0xf]
      %v943 = vld [vmem:[#allocation2 + $0xb8] sm:$0xf]
      %944 = vst.msk [vmem:[#allocation3] sm:$0xf] %vm226, %v912
      %945 = vst.msk [vmem:[#allocation3 + $0x4] sm:$0xf] %vm226, %v913
      %946 = vst.msk [vmem:[#allocation3 + $0x8] sm:$0xf] %vm226, %v914
      %947 = vst.msk [vmem:[#allocation3 + $0xc] sm:$0xf] %vm226, %v915
      %948 = vst.msk [vmem:[#allocation3 + $0x10] sm:$0xf] %vm226, %v916
      %949 = vst.msk [vmem:[#allocation3 + $0x14] sm:$0xf] %vm226, %v917
      %950 = vst.msk [vmem:[#allocation3 + $0x18] sm:$0xf] %vm226, %v918
      %951 = vst.msk [vmem:[#allocation3 + $0x1c] sm:$0xf] %vm226, %v919
      %952 = vst.msk [vmem:[#allocation3 + $0x20] sm:$0xf] %vm226, %v920
      %953 = vst.msk [vmem:[#allocation3 + $0x24] sm:$0xf] %vm226, %v921
      %954 = vst.msk [vmem:[#allocation3 + $0x28] sm:$0xf] %vm226, %v922
      %955 = vst.msk [vmem:[#allocation3 + $0x2c] sm:$0xf] %vm226, %v923
      %956 = vst.msk [vmem:[#allocation3 + $0x30] sm:$0xf] %vm226, %v924
      %957 = vst.msk [vmem:[#allocation3 + $0x34] sm:$0xf] %vm226, %v925
      %958 = vst.msk [vmem:[#allocation3 + $0x38] sm:$0xf] %vm226, %v926
      %959 = vst.msk [vmem:[#allocation3 + $0x3c] sm:$0xf] %vm226, %v927
      %960 = vst.msk [vmem:[#allocation3 + $0x40] sm:$0xf] %vm226, %v928
      %961 = vst.msk [vmem:[#allocation3 + $0x44] sm:$0xf] %vm226, %v929
      %962 = vst.msk [vmem:[#allocation3 + $0x48] sm:$0xf] %vm226, %v930
      %963 = vst.msk [vmem:[#allocation3 + $0x4c] sm:$0xf] %vm226, %v931
      %964 = vst.msk [vmem:[#allocation3 + $0x50] sm:$0xf] %vm226, %v932
      %965 = vst.msk [vmem:[#allocation3 + $0x54] sm:$0xf] %vm226, %v933
      %966 = vst.msk [vmem:[#allocation3 + $0x58] sm:$0xf] %vm226, %v934
      %967 = vst.msk [vmem:[#allocation3 + $0x5c] sm:$0xf] %vm226, %v935
      %968 = vst.msk [vmem:[#allocation3 + $0x60] sm:$0xf] %vm226, %v936
      %969 = vst.msk [vmem:[#allocation3 + $0x64] sm:$0xf] %vm226, %v937
      %970 = vst.msk [vmem:[#allocation3 + $0x68] sm:$0xf] %vm226, %v938
      %971 = vst.msk [vmem:[#allocation3 + $0x6c] sm:$0xf] %vm226, %v939
      %972 = vst.msk [vmem:[#allocation3 + $0x70] sm:$0xf] %vm226, %v940
      %973 = vst.msk [vmem:[#allocation3 + $0x74] sm:$0xf] %vm226, %v941
      %974 = vst.msk [vmem:[#allocation3 + $0x78] sm:$0xf] %vm226, %v942
      %975 = vst.msk [vmem:[#allocation3 + $0x7c] sm:$0xf] %vm226, %v943
      %v976 = vld [vmem:[#allocation2] sm:$0xf]
      %v977 = vld [vmem:[#allocation2 + $0x4] sm:$0xf]
      %v978 = vld [vmem:[#allocation2 + $0x8] sm:$0x1]
      %v979 = vld [vmem:[#allocation2 + $0xc] sm:$0xf]
      %v980 = vld [vmem:[#allocation2 + $0x10] sm:$0xf]
      %v981 = vld [vmem:[#allocation2 + $0x14] sm:$0x1]
      %v982 = vld [vmem:[#allocation2 + $0x18] sm:$0xf]
      %v983 = vld [vmem:[#allocation2 + $0x1c] sm:$0xf]
      %v984 = vld [vmem:[#allocation2 + $0x20] sm:$0x1]
      %v985 = vld [vmem:[#allocation2 + $0x24] sm:$0xf]
      %v986 = vld [vmem:[#allocation2 + $0x28] sm:$0xf]
      %v987 = vld [vmem:[#allocation2 + $0x2c] sm:$0x1]
      %v988 = vld [vmem:[#allocation2 + $0x30] sm:$0xf]
      %v989 = vld [vmem:[#allocation2 + $0x34] sm:$0xf]
      %v990 = vld [vmem:[#allocation2 + $0x38] sm:$0x1]
      %v991 = vld [vmem:[#allocation2 + $0x3c] sm:$0xf]
      %v992 = vld [vmem:[#allocation2 + $0x40] sm:$0xf]
      %v993 = vld [vmem:[#allocation2 + $0x44] sm:$0x1]
      %v994 = vld [vmem:[#allocation2 + $0x48] sm:$0xf]
      %v995 = vld [vmem:[#allocation2 + $0x4c] sm:$0xf]
      %v996 = vld [vmem:[#allocation2 + $0x50] sm:$0x1]
      %v997 = vld [vmem:[#allocation2 + $0x54] sm:$0xf]
      %v998 = vld [vmem:[#allocation2 + $0x58] sm:$0xf]
      %v999 = vld [vmem:[#allocation2 + $0x5c] sm:$0x1]
      %v1000 = vld [vmem:[#allocation2 + $0x60] sm:$0xf]
      %v1001 = vld [vmem:[#allocation2 + $0x64] sm:$0xf]
      %v1002 = vld [vmem:[#allocation2 + $0x68] sm:$0x1]
      %v1003 = vld [vmem:[#allocation2 + $0x6c] sm:$0xf]
      %v1004 = vld [vmem:[#allocation2 + $0x70] sm:$0xf]
      %v1005 = vld [vmem:[#allocation2 + $0x74] sm:$0x1]
      %v1006 = vld [vmem:[#allocation2 + $0x78] sm:$0xf]
      %v1007 = vld [vmem:[#allocation2 + $0x7c] sm:$0xf]
      %v1008 = vld [vmem:[#allocation2 + $0x80] sm:$0x1]
      %v1009 = vld [vmem:[#allocation2 + $0x84] sm:$0xf]
      %v1010 = vld [vmem:[#allocation2 + $0x88] sm:$0xf]
      %v1011 = vld [vmem:[#allocation2 + $0x8c] sm:$0x1]
      %v1012 = vld [vmem:[#allocation2 + $0x90] sm:$0xf]
      %v1013 = vld [vmem:[#allocation2 + $0x94] sm:$0xf]
      %v1014 = vld [vmem:[#allocation2 + $0x98] sm:$0x1]
      %v1015 = vld [vmem:[#allocation2 + $0x9c] sm:$0xf]
      %v1016 = vld [vmem:[#allocation2 + $0xa0] sm:$0xf]
      %v1017 = vld [vmem:[#allocation2 + $0xa4] sm:$0x1]
      %v1018 = vld [vmem:[#allocation2 + $0xa8] sm:$0xf]
      %v1019 = vld [vmem:[#allocation2 + $0xac] sm:$0xf]
      %v1020 = vld [vmem:[#allocation2 + $0xb0] sm:$0x1]
      %v1021 = vld [vmem:[#allocation2 + $0xb4] sm:$0xf]
      %v1022 = vld [vmem:[#allocation2 + $0xb8] sm:$0xf]
      %v1023 = vld [vmem:[#allocation2 + $0xbc] sm:$0x1]
      %vm1024 = vsmask.f32 3328
      %vm1025 = vsmask.f32 7440
      %vm1026 = vmor %vm1024, %vm1025
      %v1028 = vshrl.u32 %v976, 16
      %v1030 = vrot.slane %v1028, 4
      %v1031 = vshll.u32 %v976, 16
      %v1033 = vrot.slane %v1031, 5
      %v1034 = vor.u32 %v1030, %v1033
      %v1035 = vrot.slane %v1034, 4
      %v1037 = vshll.u32 %v977, 16
      %v1039 = vrot.slane %v1037, 5
      %v1040 = vsel %vm1026, %v1035, %v1039
      %v1041 = vshrl.u32 %v977, 16
      %v1043 = vrot.slane %v1041, 4
      %v1044 = vor.u32 %v1043, %v1039
      %v1045 = vrot.slane %v1044, 4
      %v1047 = vshll.u32 %v978, 16
      %v1049 = vrot.slane %v1047, 5
      %v1050 = vsel %vm1026, %v1045, %v1049
      %v1052 = vshrl.u32 %v979, 16
      %v1054 = vrot.slane %v1052, 4
      %v1055 = vshll.u32 %v979, 16
      %v1057 = vrot.slane %v1055, 5
      %v1058 = vor.u32 %v1054, %v1057
      %v1059 = vrot.slane %v1058, 4
      %v1061 = vshll.u32 %v980, 16
      %v1063 = vrot.slane %v1061, 5
      %v1064 = vsel %vm1026, %v1059, %v1063
      %v1065 = vshrl.u32 %v980, 16
      %v1067 = vrot.slane %v1065, 4
      %v1068 = vor.u32 %v1067, %v1063
      %v1069 = vrot.slane %v1068, 4
      %v1071 = vshll.u32 %v981, 16
      %v1073 = vrot.slane %v1071, 5
      %v1074 = vsel %vm1026, %v1069, %v1073
      %v1076 = vshrl.u32 %v982, 16
      %v1078 = vrot.slane %v1076, 4
      %v1079 = vshll.u32 %v982, 16
      %v1081 = vrot.slane %v1079, 5
      %v1082 = vor.u32 %v1078, %v1081
      %v1083 = vrot.slane %v1082, 4
      %v1085 = vshll.u32 %v983, 16
      %v1087 = vrot.slane %v1085, 5
      %v1088 = vsel %vm1026, %v1083, %v1087
      %v1089 = vshrl.u32 %v983, 16
      %v1091 = vrot.slane %v1089, 4
      %v1092 = vor.u32 %v1091, %v1087
      %v1093 = vrot.slane %v1092, 4
      %v1095 = vshll.u32 %v984, 16
      %v1097 = vrot.slane %v1095, 5
      %v1098 = vsel %vm1026, %v1093, %v1097
      %v1100 = vshrl.u32 %v985, 16
      %v1102 = vrot.slane %v1100, 4
      %v1103 = vshll.u32 %v985, 16
      %v1105 = vrot.slane %v1103, 5
      %v1106 = vor.u32 %v1102, %v1105
      %v1107 = vrot.slane %v1106, 4
      %v1109 = vshll.u32 %v986, 16
      %v1111 = vrot.slane %v1109, 5
      %v1112 = vsel %vm1026, %v1107, %v1111
      %v1113 = vshrl.u32 %v986, 16
      %v1115 = vrot.slane %v1113, 4
      %v1116 = vor.u32 %v1115, %v1111
      %v1117 = vrot.slane %v1116, 4
      %v1119 = vshll.u32 %v987, 16
      %v1121 = vrot.slane %v1119, 5
      %v1122 = vsel %vm1026, %v1117, %v1121
      %v1124 = vshrl.u32 %v988, 16
      %v1126 = vrot.slane %v1124, 4
      %v1127 = vshll.u32 %v988, 16
      %v1129 = vrot.slane %v1127, 5
      %v1130 = vor.u32 %v1126, %v1129
      %v1131 = vrot.slane %v1130, 4
      %v1133 = vshll.u32 %v989, 16
      %v1135 = vrot.slane %v1133, 5
      %v1136 = vsel %vm1026, %v1131, %v1135
      %v1137 = vshrl.u32 %v989, 16
      %v1139 = vrot.slane %v1137, 4
      %v1140 = vor.u32 %v1139, %v1135
      %v1141 = vrot.slane %v1140, 4
      %v1143 = vshll.u32 %v990, 16
      %v1145 = vrot.slane %v1143, 5
      %v1146 = vsel %vm1026, %v1141, %v1145
      %v1148 = vshrl.u32 %v991, 16
      %v1150 = vrot.slane %v1148, 4
      %v1151 = vshll.u32 %v991, 16
      %v1153 = vrot.slane %v1151, 5
      %v1154 = vor.u32 %v1150, %v1153
      %v1155 = vrot.slane %v1154, 4
      %v1157 = vshll.u32 %v992, 16
      %v1159 = vrot.slane %v1157, 5
      %v1160 = vsel %vm1026, %v1155, %v1159
      %v1161 = vshrl.u32 %v992, 16
      %v1163 = vrot.slane %v1161, 4
      %v1164 = vor.u32 %v1163, %v1159
      %v1165 = vrot.slane %v1164, 4
      %v1167 = vshll.u32 %v993, 16
      %v1169 = vrot.slane %v1167, 5
      %v1170 = vsel %vm1026, %v1165, %v1169
      %v1172 = vshrl.u32 %v994, 16
      %v1174 = vrot.slane %v1172, 4
      %v1175 = vshll.u32 %v994, 16
      %v1177 = vrot.slane %v1175, 5
      %v1178 = vor.u32 %v1174, %v1177
      %v1179 = vrot.slane %v1178, 4
      %v1181 = vshll.u32 %v995, 16
      %v1183 = vrot.slane %v1181, 5
      %v1184 = vsel %vm1026, %v1179, %v1183
      %v1185 = vshrl.u32 %v995, 16
      %v1187 = vrot.slane %v1185, 4
      %v1188 = vor.u32 %v1187, %v1183
      %v1189 = vrot.slane %v1188, 4
      %v1191 = vshll.u32 %v996, 16
      %v1193 = vrot.slane %v1191, 5
      %v1194 = vsel %vm1026, %v1189, %v1193
      %v1196 = vshrl.u32 %v997, 16
      %v1198 = vrot.slane %v1196, 4
      %v1199 = vshll.u32 %v997, 16
      %v1201 = vrot.slane %v1199, 5
      %v1202 = vor.u32 %v1198, %v1201
      %v1203 = vrot.slane %v1202, 4
      %v1205 = vshll.u32 %v998, 16
      %v1207 = vrot.slane %v1205, 5
      %v1208 = vsel %vm1026, %v1203, %v1207
      %v1209 = vshrl.u32 %v998, 16
      %v1211 = vrot.slane %v1209, 4
      %v1212 = vor.u32 %v1211, %v1207
      %v1213 = vrot.slane %v1212, 4
      %v1215 = vshll.u32 %v999, 16
      %v1217 = vrot.slane %v1215, 5
      %v1218 = vsel %vm1026, %v1213, %v1217
      %v1220 = vshrl.u32 %v1000, 16
      %v1222 = vrot.slane %v1220, 4
      %v1223 = vshll.u32 %v1000, 16
      %v1225 = vrot.slane %v1223, 5
      %v1226 = vor.u32 %v1222, %v1225
      %v1227 = vrot.slane %v1226, 4
      %v1229 = vshll.u32 %v1001, 16
      %v1231 = vrot.slane %v1229, 5
      %v1232 = vsel %vm1026, %v1227, %v1231
      %v1233 = vshrl.u32 %v1001, 16
      %v1235 = vrot.slane %v1233, 4
      %v1236 = vor.u32 %v1235, %v1231
      %v1237 = vrot.slane %v1236, 4
      %v1239 = vshll.u32 %v1002, 16
      %v1241 = vrot.slane %v1239, 5
      %v1242 = vsel %vm1026, %v1237, %v1241
      %v1244 = vshrl.u32 %v1003, 16
      %v1246 = vrot.slane %v1244, 4
      %v1247 = vshll.u32 %v1003, 16
      %v1249 = vrot.slane %v1247, 5
      %v1250 = vor.u32 %v1246, %v1249
      %v1251 = vrot.slane %v1250, 4
      %v1253 = vshll.u32 %v1004, 16
      %v1255 = vrot.slane %v1253, 5
      %v1256 = vsel %vm1026, %v1251, %v1255
      %v1257 = vshrl.u32 %v1004, 16
      %v1259 = vrot.slane %v1257, 4
      %v1260 = vor.u32 %v1259, %v1255
      %v1261 = vrot.slane %v1260, 4
      %v1263 = vshll.u32 %v1005, 16
      %v1265 = vrot.slane %v1263, 5
      %v1266 = vsel %vm1026, %v1261, %v1265
      %v1268 = vshrl.u32 %v1006, 16
      %v1270 = vrot.slane %v1268, 4
      %v1271 = vshll.u32 %v1006, 16
      %v1273 = vrot.slane %v1271, 5
      %v1274 = vor.u32 %v1270, %v1273
      %v1275 = vrot.slane %v1274, 4
      %v1277 = vshll.u32 %v1007, 16
      %v1279 = vrot.slane %v1277, 5
      %v1280 = vsel %vm1026, %v1275, %v1279
      %v1281 = vshrl.u32 %v1007, 16
      %v1283 = vrot.slane %v1281, 4
      %v1284 = vor.u32 %v1283, %v1279
      %v1285 = vrot.slane %v1284, 4
      %v1287 = vshll.u32 %v1008, 16
      %v1289 = vrot.slane %v1287, 5
      %v1290 = vsel %vm1026, %v1285, %v1289
      %v1292 = vshrl.u32 %v1009, 16
      %v1294 = vrot.slane %v1292, 4
      %v1295 = vshll.u32 %v1009, 16
      %v1297 = vrot.slane %v1295, 5
      %v1298 = vor.u32 %v1294, %v1297
      %v1299 = vrot.slane %v1298, 4
      %v1301 = vshll.u32 %v1010, 16
      %v1303 = vrot.slane %v1301, 5
      %v1304 = vsel %vm1026, %v1299, %v1303
      %v1305 = vshrl.u32 %v1010, 16
      %v1307 = vrot.slane %v1305, 4
      %v1308 = vor.u32 %v1307, %v1303
      %v1309 = vrot.slane %v1308, 4
      %v1311 = vshll.u32 %v1011, 16
      %v1313 = vrot.slane %v1311, 5
      %v1314 = vsel %vm1026, %v1309, %v1313
      %v1316 = vshrl.u32 %v1012, 16
      %v1318 = vrot.slane %v1316, 4
      %v1319 = vshll.u32 %v1012, 16
      %v1321 = vrot.slane %v1319, 5
      %v1322 = vor.u32 %v1318, %v1321
      %v1323 = vrot.slane %v1322, 4
      %v1325 = vshll.u32 %v1013, 16
      %v1327 = vrot.slane %v1325, 5
      %v1328 = vsel %vm1026, %v1323, %v1327
      %v1329 = vshrl.u32 %v1013, 16
      %v1331 = vrot.slane %v1329, 4
      %v1332 = vor.u32 %v1331, %v1327
      %v1333 = vrot.slane %v1332, 4
      %v1335 = vshll.u32 %v1014, 16
      %v1337 = vrot.slane %v1335, 5
      %v1338 = vsel %vm1026, %v1333, %v1337
      %v1340 = vshrl.u32 %v1015, 16
      %v1342 = vrot.slane %v1340, 4
      %v1343 = vshll.u32 %v1015, 16
      %v1345 = vrot.slane %v1343, 5
      %v1346 = vor.u32 %v1342, %v1345
      %v1347 = vrot.slane %v1346, 4
      %v1349 = vshll.u32 %v1016, 16
      %v1351 = vrot.slane %v1349, 5
      %v1352 = vsel %vm1026, %v1347, %v1351
      %v1353 = vshrl.u32 %v1016, 16
      %v1355 = vrot.slane %v1353, 4
      %v1356 = vor.u32 %v1355, %v1351
      %v1357 = vrot.slane %v1356, 4
      %v1359 = vshll.u32 %v1017, 16
      %v1361 = vrot.slane %v1359, 5
      %v1362 = vsel %vm1026, %v1357, %v1361
      %v1364 = vshrl.u32 %v1018, 16
      %v1366 = vrot.slane %v1364, 4
      %v1367 = vshll.u32 %v1018, 16
      %v1369 = vrot.slane %v1367, 5
      %v1370 = vor.u32 %v1366, %v1369
      %v1371 = vrot.slane %v1370, 4
      %v1373 = vshll.u32 %v1019, 16
      %v1375 = vrot.slane %v1373, 5
      %v1376 = vsel %vm1026, %v1371, %v1375
      %v1377 = vshrl.u32 %v1019, 16
      %v1379 = vrot.slane %v1377, 4
      %v1380 = vor.u32 %v1379, %v1375
      %v1381 = vrot.slane %v1380, 4
      %v1383 = vshll.u32 %v1020, 16
      %v1385 = vrot.slane %v1383, 5
      %v1386 = vsel %vm1026, %v1381, %v1385
      %v1388 = vshrl.u32 %v1021, 16
      %v1390 = vrot.slane %v1388, 4
      %v1391 = vshll.u32 %v1021, 16
      %v1393 = vrot.slane %v1391, 5
      %v1394 = vor.u32 %v1390, %v1393
      %v1395 = vrot.slane %v1394, 4
      %v1397 = vshll.u32 %v1022, 16
      %v1399 = vrot.slane %v1397, 5
      %v1400 = vsel %vm1026, %v1395, %v1399
      %v1401 = vshrl.u32 %v1022, 16
      %v1403 = vrot.slane %v1401, 4
      %v1404 = vor.u32 %v1403, %v1399
      %v1405 = vrot.slane %v1404, 4
      %v1407 = vshll.u32 %v1023, 16
      %v1409 = vrot.slane %v1407, 5
      %v1410 = vsel %vm1026, %v1405, %v1409
      %1411 = vrot.lane.b32.xlu0 %v1040, 4
      %v1412 = vpop.permute.xlu0 %1411
      %1413 = vrot.lane.b32.xlu0 %v1050, 4
      %v1414 = vpop.permute.xlu0 %1413
      %1415 = vrot.lane.b32.xlu0 %v1064, 4
      %v1416 = vpop.permute.xlu0 %1415
      %1417 = vrot.lane.b32.xlu0 %v1074, 4
      %v1418 = vpop.permute.xlu0 %1417
      %1419 = vrot.lane.b32.xlu0 %v1088, 4
      %v1420 = vpop.permute.xlu0 %1419
      %1421 = vrot.lane.b32.xlu0 %v1098, 4
      %v1422 = vpop.permute.xlu0 %1421
      %1423 = vrot.lane.b32.xlu0 %v1112, 4
      %v1424 = vpop.permute.xlu0 %1423
      %1425 = vrot.lane.b32.xlu0 %v1122, 4
      %v1426 = vpop.permute.xlu0 %1425
      %1427 = vrot.lane.b32.xlu0 %v1136, 4
      %v1428 = vpop.permute.xlu0 %1427
      %1429 = vrot.lane.b32.xlu0 %v1146, 4
      %v1430 = vpop.permute.xlu0 %1429
      %1431 = vrot.lane.b32.xlu0 %v1160, 4
      %v1432 = vpop.permute.xlu0 %1431
      %1433 = vrot.lane.b32.xlu0 %v1170, 4
      %v1434 = vpop.permute.xlu0 %1433
      %1435 = vrot.lane.b32.xlu0 %v1184, 4
      %v1436 = vpop.permute.xlu0 %1435
      %1437 = vrot.lane.b32.xlu0 %v1194, 4
      %v1438 = vpop.permute.xlu0 %1437
      %1439 = vrot.lane.b32.xlu0 %v1208, 4
      %v1440 = vpop.permute.xlu0 %1439
      %1441 = vrot.lane.b32.xlu0 %v1218, 4
      %v1442 = vpop.permute.xlu0 %1441
      %1443 = vrot.lane.b32.xlu0 %v1232, 4
      %v1444 = vpop.permute.xlu0 %1443
      %1445 = vrot.lane.b32.xlu0 %v1242, 4
      %v1446 = vpop.permute.xlu0 %1445
      %1447 = vrot.lane.b32.xlu0 %v1256, 4
      %v1448 = vpop.permute.xlu0 %1447
      %1449 = vrot.lane.b32.xlu0 %v1266, 4
      %v1450 = vpop.permute.xlu0 %1449
      %1451 = vrot.lane.b32.xlu0 %v1280, 4
      %v1452 = vpop.permute.xlu0 %1451
      %1453 = vrot.lane.b32.xlu0 %v1290, 4
      %v1454 = vpop.permute.xlu0 %1453
      %1455 = vrot.lane.b32.xlu0 %v1304, 4
      %v1456 = vpop.permute.xlu0 %1455
      %1457 = vrot.lane.b32.xlu0 %v1314, 4
      %v1458 = vpop.permute.xlu0 %1457
      %1459 = vrot.lane.b32.xlu0 %v1328, 4
      %v1460 = vpop.permute.xlu0 %1459
      %1461 = vrot.lane.b32.xlu0 %v1338, 4
      %v1462 = vpop.permute.xlu0 %1461
      %1463 = vrot.lane.b32.xlu0 %v1352, 4
      %v1464 = vpop.permute.xlu0 %1463
      %1465 = vrot.lane.b32.xlu0 %v1362, 4
      %v1466 = vpop.permute.xlu0 %1465
      %1467 = vrot.lane.b32.xlu0 %v1376, 4
      %v1468 = vpop.permute.xlu0 %1467
      %1469 = vrot.lane.b32.xlu0 %v1386, 4
      %v1470 = vpop.permute.xlu0 %1469
      %1471 = vrot.lane.b32.xlu0 %v1400, 4
      %v1472 = vpop.permute.xlu0 %1471
      %1473 = vrot.lane.b32.xlu0 %v1410, 4
      %v1474 = vpop.permute.xlu0 %1473
      %vm1507 = vcmask 60448
      %1508 = vst.msk [vmem:[#allocation3] sm:$0xf] %vm1507, %v1412
      %1509 = vst.msk [vmem:[#allocation3 + $0x4] sm:$0xf] %vm1507, %v1414
      %1510 = vst.msk [vmem:[#allocation3 + $0x8] sm:$0xf] %vm1507, %v1416
      %1511 = vst.msk [vmem:[#allocation3 + $0xc] sm:$0xf] %vm1507, %v1418
      %1512 = vst.msk [vmem:[#allocation3 + $0x10] sm:$0xf] %vm1507, %v1420
      %1513 = vst.msk [vmem:[#allocation3 + $0x14] sm:$0xf] %vm1507, %v1422
      %1514 = vst.msk [vmem:[#allocation3 + $0x18] sm:$0xf] %vm1507, %v1424
      %1515 = vst.msk [vmem:[#allocation3 + $0x1c] sm:$0xf] %vm1507, %v1426
      %1516 = vst.msk [vmem:[#allocation3 + $0x20] sm:$0xf] %vm1507, %v1428
      %1517 = vst.msk [vmem:[#allocation3 + $0x24] sm:$0xf] %vm1507, %v1430
      %1518 = vst.msk [vmem:[#allocation3 + $0x28] sm:$0xf] %vm1507, %v1432
      %1519 = vst.msk [vmem:[#allocation3 + $0x2c] sm:$0xf] %vm1507, %v1434
      %1520 = vst.msk [vmem:[#allocation3 + $0x30] sm:$0xf] %vm1507, %v1436
      %1521 = vst.msk [vmem:[#allocation3 + $0x34] sm:$0xf] %vm1507, %v1438
      %1522 = vst.msk [vmem:[#allocation3 + $0x38] sm:$0xf] %vm1507, %v1440
      %1523 = vst.msk [vmem:[#allocation3 + $0x3c] sm:$0xf] %vm1507, %v1442
      %1524 = vst.msk [vmem:[#allocation3 + $0x40] sm:$0xf] %vm1507, %v1444
      %1525 = vst.msk [vmem:[#allocation3 + $0x44] sm:$0xf] %vm1507, %v1446
      %1526 = vst.msk [vmem:[#allocation3 + $0x48] sm:$0xf] %vm1507, %v1448
      %1527 = vst.msk [vmem:[#allocation3 + $0x4c] sm:$0xf] %vm1507, %v1450
      %1528 = vst.msk [vmem:[#allocation3 + $0x50] sm:$0xf] %vm1507, %v1452
      %1529 = vst.msk [vmem:[#allocation3 + $0x54] sm:$0xf] %vm1507, %v1454
      %1530 = vst.msk [vmem:[#allocation3 + $0x58] sm:$0xf] %vm1507, %v1456
      %1531 = vst.msk [vmem:[#allocation3 + $0x5c] sm:$0xf] %vm1507, %v1458
      %1532 = vst.msk [vmem:[#allocation3 + $0x60] sm:$0xf] %vm1507, %v1460
      %1533 = vst.msk [vmem:[#allocation3 + $0x64] sm:$0xf] %vm1507, %v1462
      %1534 = vst.msk [vmem:[#allocation3 + $0x68] sm:$0xf] %vm1507, %v1464
      %1535 = vst.msk [vmem:[#allocation3 + $0x6c] sm:$0xf] %vm1507, %v1466
      %1536 = vst.msk [vmem:[#allocation3 + $0x70] sm:$0xf] %vm1507, %v1468
      %1537 = vst.msk [vmem:[#allocation3 + $0x74] sm:$0xf] %vm1507, %v1470
      %1538 = vst.msk [vmem:[#allocation3 + $0x78] sm:$0xf] %vm1507, %v1472
      %1539 = vst.msk [vmem:[#allocation3 + $0x7c] sm:$0xf] %vm1507, %v1474
      %v1540 = vld [vmem:[#allocation2] sm:$0xe]
      %v1541 = vld [vmem:[#allocation2 + $0x4] sm:$0xf]
      %v1542 = vld [vmem:[#allocation2 + $0x8] sm:$0x1]
      %v1543 = vld [vmem:[#allocation2 + $0xc] sm:$0xe]
      %v1544 = vld [vmem:[#allocation2 + $0x10] sm:$0xf]
      %v1545 = vld [vmem:[#allocation2 + $0x14] sm:$0x1]
      %v1546 = vld [vmem:[#allocation2 + $0x18] sm:$0xe]
      %v1547 = vld [vmem:[#allocation2 + $0x1c] sm:$0xf]
      %v1548 = vld [vmem:[#allocation2 + $0x20] sm:$0x1]
      %v1549 = vld [vmem:[#allocation2 + $0x24] sm:$0xe]
      %v1550 = vld [vmem:[#allocation2 + $0x28] sm:$0xf]
      %v1551 = vld [vmem:[#allocation2 + $0x2c] sm:$0x1]
      %v1552 = vld [vmem:[#allocation2 + $0x30] sm:$0xe]
      %v1553 = vld [vmem:[#allocation2 + $0x34] sm:$0xf]
      %v1554 = vld [vmem:[#allocation2 + $0x38] sm:$0x1]
      %v1555 = vld [vmem:[#allocation2 + $0x3c] sm:$0xe]
      %v1556 = vld [vmem:[#allocation2 + $0x40] sm:$0xf]
      %v1557 = vld [vmem:[#allocation2 + $0x44] sm:$0x1]
      %v1558 = vld [vmem:[#allocation2 + $0x48] sm:$0xe]
      %v1559 = vld [vmem:[#allocation2 + $0x4c] sm:$0xf]
      %v1560 = vld [vmem:[#allocation2 + $0x50] sm:$0x1]
      %v1561 = vld [vmem:[#allocation2 + $0x54] sm:$0xe]
      %v1562 = vld [vmem:[#allocation2 + $0x58] sm:$0xf]
      %v1563 = vld [vmem:[#allocation2 + $0x5c] sm:$0x1]
      %v1564 = vld [vmem:[#allocation2 + $0x60] sm:$0xe]
      %v1565 = vld [vmem:[#allocation2 + $0x64] sm:$0xf]
      %v1566 = vld [vmem:[#allocation2 + $0x68] sm:$0x1]
      %v1567 = vld [vmem:[#allocation2 + $0x6c] sm:$0xe]
      %v1568 = vld [vmem:[#allocation2 + $0x70] sm:$0xf]
      %v1569 = vld [vmem:[#allocation2 + $0x74] sm:$0x1]
      %v1570 = vld [vmem:[#allocation2 + $0x78] sm:$0xe]
      %v1571 = vld [vmem:[#allocation2 + $0x7c] sm:$0xf]
      %v1572 = vld [vmem:[#allocation2 + $0x80] sm:$0x1]
      %v1573 = vld [vmem:[#allocation2 + $0x84] sm:$0xe]
      %v1574 = vld [vmem:[#allocation2 + $0x88] sm:$0xf]
      %v1575 = vld [vmem:[#allocation2 + $0x8c] sm:$0x1]
      %v1576 = vld [vmem:[#allocation2 + $0x90] sm:$0xe]
      %v1577 = vld [vmem:[#allocation2 + $0x94] sm:$0xf]
      %v1578 = vld [vmem:[#allocation2 + $0x98] sm:$0x1]
      %v1579 = vld [vmem:[#allocation2 + $0x9c] sm:$0xe]
      %v1580 = vld [vmem:[#allocation2 + $0xa0] sm:$0xf]
      %v1581 = vld [vmem:[#allocation2 + $0xa4] sm:$0x1]
      %v1582 = vld [vmem:[#allocation2 + $0xa8] sm:$0xe]
      %v1583 = vld [vmem:[#allocation2 + $0xac] sm:$0xf]
      %v1584 = vld [vmem:[#allocation2 + $0xb0] sm:$0x1]
      %v1585 = vld [vmem:[#allocation2 + $0xb4] sm:$0xe]
      %v1586 = vld [vmem:[#allocation2 + $0xb8] sm:$0xf]
      %v1587 = vld [vmem:[#allocation2 + $0xbc] sm:$0x1]
      %vm1636 = vcmask 1042432
      %vm1637 = vcmask 1046532
      %vm1638 = vmor %vm1636, %vm1637
      %v1639 = vrot.slane %v1540, 5
      %v1640 = vrot.slane %v1639, 4
      %v1641 = vrot.slane %v1541, 5
      %v1642 = vsel %vm1638, %v1640, %v1641
      %v1643 = vrot.slane %v1641, 4
      %v1644 = vrot.slane %v1542, 5
      %v1645 = vsel %vm1638, %v1643, %v1644
      %v1646 = vrot.slane %v1543, 5
      %v1647 = vrot.slane %v1646, 4
      %v1648 = vrot.slane %v1544, 5
      %v1649 = vsel %vm1638, %v1647, %v1648
      %v1650 = vrot.slane %v1648, 4
      %v1651 = vrot.slane %v1545, 5
      %v1652 = vsel %vm1638, %v1650, %v1651
      %v1653 = vrot.slane %v1546, 5
      %v1654 = vrot.slane %v1653, 4
      %v1655 = vrot.slane %v1547, 5
      %v1656 = vsel %vm1638, %v1654, %v1655
      %v1657 = vrot.slane %v1655, 4
      %v1658 = vrot.slane %v1548, 5
      %v1659 = vsel %vm1638, %v1657, %v1658
      %v1660 = vrot.slane %v1549, 5
      %v1661 = vrot.slane %v1660, 4
      %v1662 = vrot.slane %v1550, 5
      %v1663 = vsel %vm1638, %v1661, %v1662
      %v1664 = vrot.slane %v1662, 4
      %v1665 = vrot.slane %v1551, 5
      %v1666 = vsel %vm1638, %v1664, %v1665
      %v1667 = vrot.slane %v1552, 5
      %v1668 = vrot.slane %v1667, 4
      %v1669 = vrot.slane %v1553, 5
      %v1670 = vsel %vm1638, %v1668, %v1669
      %v1671 = vrot.slane %v1669, 4
      %v1672 = vrot.slane %v1554, 5
      %v1673 = vsel %vm1638, %v1671, %v1672
      %v1674 = vrot.slane %v1555, 5
      %v1675 = vrot.slane %v1674, 4
      %v1676 = vrot.slane %v1556, 5
      %v1677 = vsel %vm1638, %v1675, %v1676
      %v1678 = vrot.slane %v1676, 4
      %v1679 = vrot.slane %v1557, 5
      %v1680 = vsel %vm1638, %v1678, %v1679
      %v1681 = vrot.slane %v1558, 5
      %v1682 = vrot.slane %v1681, 4
      %v1683 = vrot.slane %v1559, 5
      %v1684 = vsel %vm1638, %v1682, %v1683
      %v1685 = vrot.slane %v1683, 4
      %v1686 = vrot.slane %v1560, 5
      %v1687 = vsel %vm1638, %v1685, %v1686
      %v1688 = vrot.slane %v1561, 5
      %v1689 = vrot.slane %v1688, 4
      %v1690 = vrot.slane %v1562, 5
      %v1691 = vsel %vm1638, %v1689, %v1690
      %v1692 = vrot.slane %v1690, 4
      %v1693 = vrot.slane %v1563, 5
      %v1694 = vsel %vm1638, %v1692, %v1693
      %v1695 = vrot.slane %v1564, 5
      %v1696 = vrot.slane %v1695, 4
      %v1697 = vrot.slane %v1565, 5
      %v1698 = vsel %vm1638, %v1696, %v1697
      %v1699 = vrot.slane %v1697, 4
      %v1700 = vrot.slane %v1566, 5
      %v1701 = vsel %vm1638, %v1699, %v1700
      %v1702 = vrot.slane %v1567, 5
      %v1703 = vrot.slane %v1702, 4
      %v1704 = vrot.slane %v1568, 5
      %v1705 = vsel %vm1638, %v1703, %v1704
      %v1706 = vrot.slane %v1704, 4
      %v1707 = vrot.slane %v1569, 5
      %v1708 = vsel %vm1638, %v1706, %v1707
      %v1709 = vrot.slane %v1570, 5
      %v1710 = vrot.slane %v1709, 4
      %v1711 = vrot.slane %v1571, 5
      %v1712 = vsel %vm1638, %v1710, %v1711
      %v1713 = vrot.slane %v1711, 4
      %v1714 = vrot.slane %v1572, 5
      %v1715 = vsel %vm1638, %v1713, %v1714
      %v1716 = vrot.slane %v1573, 5
      %v1717 = vrot.slane %v1716, 4
      %v1718 = vrot.slane %v1574, 5
      %v1719 = vsel %vm1638, %v1717, %v1718
      %v1720 = vrot.slane %v1718, 4
      %v1721 = vrot.slane %v1575, 5
      %v1722 = vsel %vm1638, %v1720, %v1721
      %v1723 = vrot.slane %v1576, 5
      %v1724 = vrot.slane %v1723, 4
      %v1725 = vrot.slane %v1577, 5
      %v1726 = vsel %vm1638, %v1724, %v1725
      %v1727 = vrot.slane %v1725, 4
      %v1728 = vrot.slane %v1578, 5
      %v1729 = vsel %vm1638, %v1727, %v1728
      %v1730 = vrot.slane %v1579, 5
      %v1731 = vrot.slane %v1730, 4
      %v1732 = vrot.slane %v1580, 5
      %v1733 = vsel %vm1638, %v1731, %v1732
      %v1734 = vrot.slane %v1732, 4
      %v1735 = vrot.slane %v1581, 5
      %v1736 = vsel %vm1638, %v1734, %v1735
      %v1737 = vrot.slane %v1582, 5
      %v1738 = vrot.slane %v1737, 4
      %v1739 = vrot.slane %v1583, 5
      %v1740 = vsel %vm1638, %v1738, %v1739
      %v1741 = vrot.slane %v1739, 4
      %v1742 = vrot.slane %v1584, 5
      %v1743 = vsel %vm1638, %v1741, %v1742
      %v1744 = vrot.slane %v1585, 5
      %v1745 = vrot.slane %v1744, 4
      %v1746 = vrot.slane %v1586, 5
      %v1747 = vsel %vm1638, %v1745, %v1746
      %v1748 = vrot.slane %v1746, 4
      %v1749 = vrot.slane %v1587, 5
      %v1750 = vsel %vm1638, %v1748, %v1749
      %1751 = vrot.lane.b32.xlu0 %v1642, 8
      %v1752 = vpop.permute.xlu0 %1751
      %1753 = vrot.lane.b32.xlu0 %v1645, 8
      %v1754 = vpop.permute.xlu0 %1753
      %1755 = vrot.lane.b32.xlu0 %v1649, 8
      %v1756 = vpop.permute.xlu0 %1755
      %1757 = vrot.lane.b32.xlu0 %v1652, 8
      %v1758 = vpop.permute.xlu0 %1757
      %1759 = vrot.lane.b32.xlu0 %v1656, 8
      %v1760 = vpop.permute.xlu0 %1759
      %1761 = vrot.lane.b32.xlu0 %v1659, 8
      %v1762 = vpop.permute.xlu0 %1761
      %1763 = vrot.lane.b32.xlu0 %v1663, 8
      %v1764 = vpop.permute.xlu0 %1763
      %1765 = vrot.lane.b32.xlu0 %v1666, 8
      %v1766 = vpop.permute.xlu0 %1765
      %1767 = vrot.lane.b32.xlu0 %v1670, 8
      %v1768 = vpop.permute.xlu0 %1767
      %1769 = vrot.lane.b32.xlu0 %v1673, 8
      %v1770 = vpop.permute.xlu0 %1769
      %1771 = vrot.lane.b32.xlu0 %v1677, 8
      %v1772 = vpop.permute.xlu0 %1771
      %1773 = vrot.lane.b32.xlu0 %v1680, 8
      %v1774 = vpop.permute.xlu0 %1773
      %1775 = vrot.lane.b32.xlu0 %v1684, 8
      %v1776 = vpop.permute.xlu0 %1775
      %1777 = vrot.lane.b32.xlu0 %v1687, 8
      %v1778 = vpop.permute.xlu0 %1777
      %1779 = vrot.lane.b32.xlu0 %v1691, 8
      %v1780 = vpop.permute.xlu0 %1779
      %1781 = vrot.lane.b32.xlu0 %v1694, 8
      %v1782 = vpop.permute.xlu0 %1781
      %1783 = vrot.lane.b32.xlu0 %v1698, 8
      %v1784 = vpop.permute.xlu0 %1783
      %1785 = vrot.lane.b32.xlu0 %v1701, 8
      %v1786 = vpop.permute.xlu0 %1785
      %1787 = vrot.lane.b32.xlu0 %v1705, 8
      %v1788 = vpop.permute.xlu0 %1787
      %1789 = vrot.lane.b32.xlu0 %v1708, 8
      %v1790 = vpop.permute.xlu0 %1789
      %1791 = vrot.lane.b32.xlu0 %v1712, 8
      %v1792 = vpop.permute.xlu0 %1791
      %1793 = vrot.lane.b32.xlu0 %v1715, 8
      %v1794 = vpop.permute.xlu0 %1793
      %1795 = vrot.lane.b32.xlu0 %v1719, 8
      %v1796 = vpop.permute.xlu0 %1795
      %1797 = vrot.lane.b32.xlu0 %v1722, 8
      %v1798 = vpop.permute.xlu0 %1797
      %1799 = vrot.lane.b32.xlu0 %v1726, 8
      %v1800 = vpop.permute.xlu0 %1799
      %1801 = vrot.lane.b32.xlu0 %v1729, 8
      %v1802 = vpop.permute.xlu0 %1801
      %1803 = vrot.lane.b32.xlu0 %v1733, 8
      %v1804 = vpop.permute.xlu0 %1803
      %1805 = vrot.lane.b32.xlu0 %v1736, 8
      %v1806 = vpop.permute.xlu0 %1805
      %1807 = vrot.lane.b32.xlu0 %v1740, 8
      %v1808 = vpop.permute.xlu0 %1807
      %1809 = vrot.lane.b32.xlu0 %v1743, 8
      %v1810 = vpop.permute.xlu0 %1809
      %1811 = vrot.lane.b32.xlu0 %v1747, 8
      %v1812 = vpop.permute.xlu0 %1811
      %1813 = vrot.lane.b32.xlu0 %v1750, 8
      %v1814 = vpop.permute.xlu0 %1813
      %vm1847 = vcmask 93248
      %1848 = vst.msk [vmem:[#allocation3] sm:$0xf] %vm1847, %v1752
      %1849 = vst.msk [vmem:[#allocation3 + $0x4] sm:$0xf] %vm1847, %v1754
      %1850 = vst.msk [vmem:[#allocation3 + $0x8] sm:$0xf] %vm1847, %v1756
      %1851 = vst.msk [vmem:[#allocation3 + $0xc] sm:$0xf] %vm1847, %v1758
      %1852 = vst.msk [vmem:[#allocation3 + $0x10] sm:$0xf] %vm1847, %v1760
      %1853 = vst.msk [vmem:[#allocation3 + $0x14] sm:$0xf] %vm1847, %v1762
      %1854 = vst.msk [vmem:[#allocation3 + $0x18] sm:$0xf] %vm1847, %v1764
      %1855 = vst.msk [vmem:[#allocation3 + $0x1c] sm:$0xf] %vm1847, %v1766
      %1856 = vst.msk [vmem:[#allocation3 + $0x20] sm:$0xf] %vm1847, %v1768
      %1857 = vst.msk [vmem:[#allocation3 + $0x24] sm:$0xf] %vm1847, %v1770
      %1858 = vst.msk [vmem:[#allocation3 + $0x28] sm:$0xf] %vm1847, %v1772
      %1859 = vst.msk [vmem:[#allocation3 + $0x2c] sm:$0xf] %vm1847, %v1774
      %1860 = vst.msk [vmem:[#allocation3 + $0x30] sm:$0xf] %vm1847, %v1776
      %1861 = vst.msk [vmem:[#allocation3 + $0x34] sm:$0xf] %vm1847, %v1778
      %1862 = vst.msk [vmem:[#allocation3 + $0x38] sm:$0xf] %vm1847, %v1780
      %1863 = vst.msk [vmem:[#allocation3 + $0x3c] sm:$0xf] %vm1847, %v1782
      %1864 = vst.msk [vmem:[#allocation3 + $0x40] sm:$0xf] %vm1847, %v1784
      %1865 = vst.msk [vmem:[#allocation3 + $0x44] sm:$0xf] %vm1847, %v1786
      %1866 = vst.msk [vmem:[#allocation3 + $0x48] sm:$0xf] %vm1847, %v1788
      %1867 = vst.msk [vmem:[#allocation3 + $0x4c] sm:$0xf] %vm1847, %v1790
      %1868 = vst.msk [vmem:[#allocation3 + $0x50] sm:$0xf] %vm1847, %v1792
      %1869 = vst.msk [vmem:[#allocation3 + $0x54] sm:$0xf] %vm1847, %v1794
      %1870 = vst.msk [vmem:[#allocation3 + $0x58] sm:$0xf] %vm1847, %v1796
      %1871 = vst.msk [vmem:[#allocation3 + $0x5c] sm:$0xf] %vm1847, %v1798
      %1872 = vst.msk [vmem:[#allocation3 + $0x60] sm:$0xf] %vm1847, %v1800
      %1873 = vst.msk [vmem:[#allocation3 + $0x64] sm:$0xf] %vm1847, %v1802
      %1874 = vst.msk [vmem:[#allocation3 + $0x68] sm:$0xf] %vm1847, %v1804
      %1875 = vst.msk [vmem:[#allocation3 + $0x6c] sm:$0xf] %vm1847, %v1806
      %1876 = vst.msk [vmem:[#allocation3 + $0x70] sm:$0xf] %vm1847, %v1808
      %1877 = vst.msk [vmem:[#allocation3 + $0x74] sm:$0xf] %vm1847, %v1810
      %1878 = vst.msk [vmem:[#allocation3 + $0x78] sm:$0xf] %vm1847, %v1812
      %1879 = vst.msk [vmem:[#allocation3 + $0x7c] sm:$0xf] %vm1847, %v1814
      %v1880 = vld [vmem:[%s234] sm:$0xf]
      %v1881 = vld [vmem:[%s234 + $0x4] sm:$0xf]
      %v1882 = vld [vmem:[%s234 + $0xc] sm:$0xf]
      %v1883 = vld [vmem:[%s234 + $0x10] sm:$0xf]
      %v1884 = vld [vmem:[%s234 + $0x18] sm:$0xf]
      %v1885 = vld [vmem:[%s234 + $0x1c] sm:$0xf]
      %v1886 = vld [vmem:[%s234 + $0x24] sm:$0xf]
      %v1887 = vld [vmem:[%s234 + $0x28] sm:$0xf]
      %v1888 = vld [vmem:[%s234 + $0x30] sm:$0xf]
      %v1889 = vld [vmem:[%s234 + $0x34] sm:$0xf]
      %v1890 = vld [vmem:[%s234 + $0x3c] sm:$0xf]
      %v1891 = vld [vmem:[%s234 + $0x40] sm:$0xf]
      %v1892 = vld [vmem:[%s234 + $0x48] sm:$0xf]
      %v1893 = vld [vmem:[%s234 + $0x4c] sm:$0xf]
      %v1894 = vld [vmem:[%s234 + $0x54] sm:$0xf]
      %v1895 = vld [vmem:[%s234 + $0x58] sm:$0xf]
      %v1896 = vld [vmem:[%s234 + $0x60] sm:$0xf]
      %v1897 = vld [vmem:[%s234 + $0x64] sm:$0xf]
      %v1898 = vld [vmem:[%s234 + $0x6c] sm:$0xf]
      %v1899 = vld [vmem:[%s234 + $0x70] sm:$0xf]
      %v1900 = vld [vmem:[%s234 + $0x78] sm:$0xf]
      %v1901 = vld [vmem:[%s234 + $0x7c] sm:$0xf]
      %v1902 = vld [vmem:[%s234 + $0x84] sm:$0xf]
      %v1903 = vld [vmem:[%s234 + $0x88] sm:$0xf]
      %v1904 = vld [vmem:[%s234 + $0x90] sm:$0xf]
      %v1905 = vld [vmem:[%s234 + $0x94] sm:$0xf]
      %v1906 = vld [vmem:[%s234 + $0x9c] sm:$0xf]
      %v1907 = vld [vmem:[%s234 + $0xa0] sm:$0xf]
      %v1908 = vld [vmem:[%s234 + $0xa8] sm:$0xf]
      %v1909 = vld [vmem:[%s234 + $0xac] sm:$0xf]
      %v1910 = vld [vmem:[%s234 + $0xb4] sm:$0xf]
      %v1911 = vld [vmem:[%s234 + $0xb8] sm:$0xf]
      %1944 = vrot.lane.b32.xlu0 %v1880, 12
      %v1945 = vpop.permute.xlu0 %1944
      %1946 = vrot.lane.b32.xlu0 %v1881, 12
      %v1947 = vpop.permute.xlu0 %1946
      %1948 = vrot.lane.b32.xlu0 %v1882, 12
      %v1949 = vpop.permute.xlu0 %1948
      %1950 = vrot.lane.b32.xlu0 %v1883, 12
      %v1951 = vpop.permute.xlu0 %1950
      %1952 = vrot.lane.b32.xlu0 %v1884, 12
      %v1953 = vpop.permute.xlu0 %1952
      %1954 = vrot.lane.b32.xlu0 %v1885, 12
      %v1955 = vpop.permute.xlu0 %1954
      %1956 = vrot.lane.b32.xlu0 %v1886, 12
      %v1957 = vpop.permute.xlu0 %1956
      %1958 = vrot.lane.b32.xlu0 %v1887, 12
      %v1959 = vpop.permute.xlu0 %1958
      %1960 = vrot.lane.b32.xlu0 %v1888, 12
      %v1961 = vpop.permute.xlu0 %1960
      %1962 = vrot.lane.b32.xlu0 %v1889, 12
      %v1963 = vpop.permute.xlu0 %1962
      %1964 = vrot.lane.b32.xlu0 %v1890, 12
      %v1965 = vpop.permute.xlu0 %1964
      %1966 = vrot.lane.b32.xlu0 %v1891, 12
      %v1967 = vpop.permute.xlu0 %1966
      %1968 = vrot.lane.b32.xlu0 %v1892, 12
      %v1969 = vpop.permute.xlu0 %1968
      %1970 = vrot.lane.b32.xlu0 %v1893, 12
      %v1971 = vpop.permute.xlu0 %1970
      %1972 = vrot.lane.b32.xlu0 %v1894, 12
      %v1973 = vpop.permute.xlu0 %1972
      %1974 = vrot.lane.b32.xlu0 %v1895, 12
      %v1975 = vpop.permute.xlu0 %1974
      %1976 = vrot.lane.b32.xlu0 %v1896, 12
      %v1977 = vpop.permute.xlu0 %1976
      %1978 = vrot.lane.b32.xlu0 %v1897, 12
      %v1979 = vpop.permute.xlu0 %1978
      %1980 = vrot.lane.b32.xlu0 %v1898, 12
      %v1981 = vpop.permute.xlu0 %1980
      %1982 = vrot.lane.b32.xlu0 %v1899, 12
      %v1983 = vpop.permute.xlu0 %1982
      %1984 = vrot.lane.b32.xlu0 %v1900, 12
      %v1985 = vpop.permute.xlu0 %1984
      %1986 = vrot.lane.b32.xlu0 %v1901, 12
      %v1987 = vpop.permute.xlu0 %1986
      %1988 = vrot.lane.b32.xlu0 %v1902, 12
      %v1989 = vpop.permute.xlu0 %1988
      %1990 = vrot.lane.b32.xlu0 %v1903, 12
      %v1991 = vpop.permute.xlu0 %1990
      %1992 = vrot.lane.b32.xlu0 %v1904, 12
      %v1993 = vpop.permute.xlu0 %1992
      %1994 = vrot.lane.b32.xlu0 %v1905, 12
      %v1995 = vpop.permute.xlu0 %1994
      %1996 = vrot.lane.b32.xlu0 %v1906, 12
      %v1997 = vpop.permute.xlu0 %1996
      %1998 = vrot.lane.b32.xlu0 %v1907, 12
      %v1999 = vpop.permute.xlu0 %1998
      %2000 = vrot.lane.b32.xlu0 %v1908, 12
      %v2001 = vpop.permute.xlu0 %2000
      %2002 = vrot.lane.b32.xlu0 %v1909, 12
      %v2003 = vpop.permute.xlu0 %2002
      %2004 = vrot.lane.b32.xlu0 %v1910, 12
      %v2005 = vpop.permute.xlu0 %2004
      %2006 = vrot.lane.b32.xlu0 %v1911, 12
      %v2007 = vpop.permute.xlu0 %2006
      %vm2040 = vcmask 126048
      %2041 = vst.msk [vmem:[#allocation3] sm:$0xf] %vm2040, %v1945
      %2042 = vst.msk [vmem:[#allocation3 + $0x4] sm:$0xf] %vm2040, %v1947
      %2043 = vst.msk [vmem:[#allocation3 + $0x8] sm:$0xf] %vm2040, %v1949
      %2044 = vst.msk [vmem:[#allocation3 + $0xc] sm:$0xf] %vm2040, %v1951
      %2045 = vst.msk [vmem:[#allocation3 + $0x10] sm:$0xf] %vm2040, %v1953
      %2046 = vst.msk [vmem:[#allocation3 + $0x14] sm:$0xf] %vm2040, %v1955
      %2047 = vst.msk [vmem:[#allocation3 + $0x18] sm:$0xf] %vm2040, %v1957
      %2048 = vst.msk [vmem:[#allocation3 + $0x1c] sm:$0xf] %vm2040, %v1959
      %2049 = vst.msk [vmem:[#allocation3 + $0x20] sm:$0xf] %vm2040, %v1961
      %2050 = vst.msk [vmem:[#allocation3 + $0x24] sm:$0xf] %vm2040, %v1963
      %2051 = vst.msk [vmem:[#allocation3 + $0x28] sm:$0xf] %vm2040, %v1965
      %2052 = vst.msk [vmem:[#allocation3 + $0x2c] sm:$0xf] %vm2040, %v1967
      %2053 = vst.msk [vmem:[#allocation3 + $0x30] sm:$0xf] %vm2040, %v1969
      %2054 = vst.msk [vmem:[#allocation3 + $0x34] sm:$0xf] %vm2040, %v1971
      %2055 = vst.msk [vmem:[#allocation3 + $0x38] sm:$0xf] %vm2040, %v1973
      %2056 = vst.msk [vmem:[#allocation3 + $0x3c] sm:$0xf] %vm2040, %v1975
      %2057 = vst.msk [vmem:[#allocation3 + $0x40] sm:$0xf] %vm2040, %v1977
      %2058 = vst.msk [vmem:[#allocation3 + $0x44] sm:$0xf] %vm2040, %v1979
      %2059 = vst.msk [vmem:[#allocation3 + $0x48] sm:$0xf] %vm2040, %v1981
      %2060 = vst.msk [vmem:[#allocation3 + $0x4c] sm:$0xf] %vm2040, %v1983
      %2061 = vst.msk [vmem:[#allocation3 + $0x50] sm:$0xf] %vm2040, %v1985
      %2062 = vst.msk [vmem:[#allocation3 + $0x54] sm:$0xf] %vm2040, %v1987
      %2063 = vst.msk [vmem:[#allocation3 + $0x58] sm:$0xf] %vm2040, %v1989
      %2064 = vst.msk [vmem:[#allocation3 + $0x5c] sm:$0xf] %vm2040, %v1991
      %2065 = vst.msk [vmem:[#allocation3 + $0x60] sm:$0xf] %vm2040, %v1993
      %2066 = vst.msk [vmem:[#allocation3 + $0x64] sm:$0xf] %vm2040, %v1995
      %2067 = vst.msk [vmem:[#allocation3 + $0x68] sm:$0xf] %vm2040, %v1997
      %2068 = vst.msk [vmem:[#allocation3 + $0x6c] sm:$0xf] %vm2040, %v1999
      %2069 = vst.msk [vmem:[#allocation3 + $0x70] sm:$0xf] %vm2040, %v2001
      %2070 = vst.msk [vmem:[#allocation3 + $0x74] sm:$0xf] %vm2040, %v2003
      %2071 = vst.msk [vmem:[#allocation3 + $0x78] sm:$0xf] %vm2040, %v2005
      %2072 = vst.msk [vmem:[#allocation3 + $0x7c] sm:$0xf] %vm2040, %v2007
      %v2073 = vld [vmem:[%s234] sm:$0xf]
      %v2074 = vld [vmem:[%s234 + $0x4] sm:$0xf]
      %v2075 = vld [vmem:[%s234 + $0x8] sm:$0x1]
      %v2076 = vld [vmem:[%s234 + $0xc] sm:$0xf]
      %v2077 = vld [vmem:[%s234 + $0x10] sm:$0xf]
      %v2078 = vld [vmem:[%s234 + $0x14] sm:$0x1]
      %v2079 = vld [vmem:[%s234 + $0x18] sm:$0xf]
      %v2080 = vld [vmem:[%s234 + $0x1c] sm:$0xf]
      %v2081 = vld [vmem:[%s234 + $0x20] sm:$0x1]
      %v2082 = vld [vmem:[%s234 + $0x24] sm:$0xf]
      %v2083 = vld [vmem:[%s234 + $0x28] sm:$0xf]
      %v2084 = vld [vmem:[%s234 + $0x2c] sm:$0x1]
      %v2085 = vld [vmem:[%s234 + $0x30] sm:$0xf]
      %v2086 = vld [vmem:[%s234 + $0x34] sm:$0xf]
      %v2087 = vld [vmem:[%s234 + $0x38] sm:$0x1]
      %v2088 = vld [vmem:[%s234 + $0x3c] sm:$0xf]
      %v2089 = vld [vmem:[%s234 + $0x40] sm:$0xf]
      %v2090 = vld [vmem:[%s234 + $0x44] sm:$0x1]
      %v2091 = vld [vmem:[%s234 + $0x48] sm:$0xf]
      %v2092 = vld [vmem:[%s234 + $0x4c] sm:$0xf]
      %v2093 = vld [vmem:[%s234 + $0x50] sm:$0x1]
      %v2094 = vld [vmem:[%s234 + $0x54] sm:$0xf]
      %v2095 = vld [vmem:[%s234 + $0x58] sm:$0xf]
      %v2096 = vld [vmem:[%s234 + $0x5c] sm:$0x1]
      %v2097 = vld [vmem:[%s234 + $0x60] sm:$0xf]
      %v2098 = vld [vmem:[%s234 + $0x64] sm:$0xf]
      %v2099 = vld [vmem:[%s234 + $0x68] sm:$0x1]
      %v2100 = vld [vmem:[%s234 + $0x6c] sm:$0xf]
      %v2101 = vld [vmem:[%s234 + $0x70] sm:$0xf]
      %v2102 = vld [vmem:[%s234 + $0x74] sm:$0x1]
      %v2103 = vld [vmem:[%s234 + $0x78] sm:$0xf]
      %v2104 = vld [vmem:[%s234 + $0x7c] sm:$0xf]
      %v2105 = vld [vmem:[%s234 + $0x80] sm:$0x1]
      %v2106 = vld [vmem:[%s234 + $0x84] sm:$0xf]
      %v2107 = vld [vmem:[%s234 + $0x88] sm:$0xf]
      %v2108 = vld [vmem:[%s234 + $0x8c] sm:$0x1]
      %v2109 = vld [vmem:[%s234 + $0x90] sm:$0xf]
      %v2110 = vld [vmem:[%s234 + $0x94] sm:$0xf]
      %v2111 = vld [vmem:[%s234 + $0x98] sm:$0x1]
      %v2112 = vld [vmem:[%s234 + $0x9c] sm:$0xf]
      %v2113 = vld [vmem:[%s234 + $0xa0] sm:$0xf]
      %v2114 = vld [vmem:[%s234 + $0xa4] sm:$0x1]
      %v2115 = vld [vmem:[%s234 + $0xa8] sm:$0xf]
      %v2116 = vld [vmem:[%s234 + $0xac] sm:$0xf]
      %v2117 = vld [vmem:[%s234 + $0xb0] sm:$0x1]
      %v2118 = vld [vmem:[%s234 + $0xb4] sm:$0xf]
      %v2119 = vld [vmem:[%s234 + $0xb8] sm:$0xf]
      %v2120 = vld [vmem:[%s234 + $0xbc] sm:$0x1]
      %v2122 = vshrl.u32 %v2073, 16
      %v2124 = vrot.slane %v2122, 4
      %v2125 = vshll.u32 %v2073, 16
      %v2127 = vrot.slane %v2125, 5
      %v2128 = vor.u32 %v2124, %v2127
      %v2129 = vrot.slane %v2128, 4
      %v2131 = vshll.u32 %v2074, 16
      %v2133 = vrot.slane %v2131, 5
      %v2134 = vsel %vm1026, %v2129, %v2133
      %v2135 = vshrl.u32 %v2074, 16
      %v2137 = vrot.slane %v2135, 4
      %v2138 = vor.u32 %v2137, %v2133
      %v2139 = vrot.slane %v2138, 4
      %v2141 = vshll.u32 %v2075, 16
      %v2143 = vrot.slane %v2141, 5
      %v2144 = vsel %vm1026, %v2139, %v2143
      %v2146 = vshrl.u32 %v2076, 16
      %v2148 = vrot.slane %v2146, 4
      %v2149 = vshll.u32 %v2076, 16
      %v2151 = vrot.slane %v2149, 5
      %v2152 = vor.u32 %v2148, %v2151
      %v2153 = vrot.slane %v2152, 4
      %v2155 = vshll.u32 %v2077, 16
      %v2157 = vrot.slane %v2155, 5
      %v2158 = vsel %vm1026, %v2153, %v2157
      %v2159 = vshrl.u32 %v2077, 16
      %v2161 = vrot.slane %v2159, 4
      %v2162 = vor.u32 %v2161, %v2157
      %v2163 = vrot.slane %v2162, 4
      %v2165 = vshll.u32 %v2078, 16
      %v2167 = vrot.slane %v2165, 5
      %v2168 = vsel %vm1026, %v2163, %v2167
      %v2170 = vshrl.u32 %v2079, 16
      %v2172 = vrot.slane %v2170, 4
      %v2173 = vshll.u32 %v2079, 16
      %v2175 = vrot.slane %v2173, 5
      %v2176 = vor.u32 %v2172, %v2175
      %v2177 = vrot.slane %v2176, 4
      %v2179 = vshll.u32 %v2080, 16
      %v2181 = vrot.slane %v2179, 5
      %v2182 = vsel %vm1026, %v2177, %v2181
      %v2183 = vshrl.u32 %v2080, 16
      %v2185 = vrot.slane %v2183, 4
      %v2186 = vor.u32 %v2185, %v2181
      %v2187 = vrot.slane %v2186, 4
      %v2189 = vshll.u32 %v2081, 16
      %v2191 = vrot.slane %v2189, 5
      %v2192 = vsel %vm1026, %v2187, %v2191
      %v2194 = vshrl.u32 %v2082, 16
      %v2196 = vrot.slane %v2194, 4
      %v2197 = vshll.u32 %v2082, 16
      %v2199 = vrot.slane %v2197, 5
      %v2200 = vor.u32 %v2196, %v2199
      %v2201 = vrot.slane %v2200, 4
      %v2203 = vshll.u32 %v2083, 16
      %v2205 = vrot.slane %v2203, 5
      %v2206 = vsel %vm1026, %v2201, %v2205
      %v2207 = vshrl.u32 %v2083, 16
      %v2209 = vrot.slane %v2207, 4
      %v2210 = vor.u32 %v2209, %v2205
      %v2211 = vrot.slane %v2210, 4
      %v2213 = vshll.u32 %v2084, 16
      %v2215 = vrot.slane %v2213, 5
      %v2216 = vsel %vm1026, %v2211, %v2215
      %v2218 = vshrl.u32 %v2085, 16
      %v2220 = vrot.slane %v2218, 4
      %v2221 = vshll.u32 %v2085, 16
      %v2223 = vrot.slane %v2221, 5
      %v2224 = vor.u32 %v2220, %v2223
      %v2225 = vrot.slane %v2224, 4
      %v2227 = vshll.u32 %v2086, 16
      %v2229 = vrot.slane %v2227, 5
      %v2230 = vsel %vm1026, %v2225, %v2229
      %v2231 = vshrl.u32 %v2086, 16
      %v2233 = vrot.slane %v2231, 4
      %v2234 = vor.u32 %v2233, %v2229
      %v2235 = vrot.slane %v2234, 4
      %v2237 = vshll.u32 %v2087, 16
      %v2239 = vrot.slane %v2237, 5
      %v2240 = vsel %vm1026, %v2235, %v2239
      %v2242 = vshrl.u32 %v2088, 16
      %v2244 = vrot.slane %v2242, 4
      %v2245 = vshll.u32 %v2088, 16
      %v2247 = vrot.slane %v2245, 5
      %v2248 = vor.u32 %v2244, %v2247
      %v2249 = vrot.slane %v2248, 4
      %v2251 = vshll.u32 %v2089, 16
      %v2253 = vrot.slane %v2251, 5
      %v2254 = vsel %vm1026, %v2249, %v2253
      %v2255 = vshrl.u32 %v2089, 16
      %v2257 = vrot.slane %v2255, 4
      %v2258 = vor.u32 %v2257, %v2253
      %v2259 = vrot.slane %v2258, 4
      %v2261 = vshll.u32 %v2090, 16
      %v2263 = vrot.slane %v2261, 5
      %v2264 = vsel %vm1026, %v2259, %v2263
      %v2266 = vshrl.u32 %v2091, 16
      %v2268 = vrot.slane %v2266, 4
      %v2269 = vshll.u32 %v2091, 16
      %v2271 = vrot.slane %v2269, 5
      %v2272 = vor.u32 %v2268, %v2271
      %v2273 = vrot.slane %v2272, 4
      %v2275 = vshll.u32 %v2092, 16
      %v2277 = vrot.slane %v2275, 5
      %v2278 = vsel %vm1026, %v2273, %v2277
      %v2279 = vshrl.u32 %v2092, 16
      %v2281 = vrot.slane %v2279, 4
      %v2282 = vor.u32 %v2281, %v2277
      %v2283 = vrot.slane %v2282, 4
      %v2285 = vshll.u32 %v2093, 16
      %v2287 = vrot.slane %v2285, 5
      %v2288 = vsel %vm1026, %v2283, %v2287
      %v2290 = vshrl.u32 %v2094, 16
      %v2292 = vrot.slane %v2290, 4
      %v2293 = vshll.u32 %v2094, 16
      %v2295 = vrot.slane %v2293, 5
      %v2296 = vor.u32 %v2292, %v2295
      %v2297 = vrot.slane %v2296, 4
      %v2299 = vshll.u32 %v2095, 16
      %v2301 = vrot.slane %v2299, 5
      %v2302 = vsel %vm1026, %v2297, %v2301
      %v2303 = vshrl.u32 %v2095, 16
      %v2305 = vrot.slane %v2303, 4
      %v2306 = vor.u32 %v2305, %v2301
      %v2307 = vrot.slane %v2306, 4
      %v2309 = vshll.u32 %v2096, 16
      %v2311 = vrot.slane %v2309, 5
      %v2312 = vsel %vm1026, %v2307, %v2311
      %v2314 = vshrl.u32 %v2097, 16
      %v2316 = vrot.slane %v2314, 4
      %v2317 = vshll.u32 %v2097, 16
      %v2319 = vrot.slane %v2317, 5
      %v2320 = vor.u32 %v2316, %v2319
      %v2321 = vrot.slane %v2320, 4
      %v2323 = vshll.u32 %v2098, 16
      %v2325 = vrot.slane %v2323, 5
      %v2326 = vsel %vm1026, %v2321, %v2325
      %v2327 = vshrl.u32 %v2098, 16
      %v2329 = vrot.slane %v2327, 4
      %v2330 = vor.u32 %v2329, %v2325
      %v2331 = vrot.slane %v2330, 4
      %v2333 = vshll.u32 %v2099, 16
      %v2335 = vrot.slane %v2333, 5
      %v2336 = vsel %vm1026, %v2331, %v2335
      %v2338 = vshrl.u32 %v2100, 16
      %v2340 = vrot.slane %v2338, 4
      %v2341 = vshll.u32 %v2100, 16
      %v2343 = vrot.slane %v2341, 5
      %v2344 = vor.u32 %v2340, %v2343
      %v2345 = vrot.slane %v2344, 4
      %v2347 = vshll.u32 %v2101, 16
      %v2349 = vrot.slane %v2347, 5
      %v2350 = vsel %vm1026, %v2345, %v2349
      %v2351 = vshrl.u32 %v2101, 16
      %v2353 = vrot.slane %v2351, 4
      %v2354 = vor.u32 %v2353, %v2349
      %v2355 = vrot.slane %v2354, 4
      %v2357 = vshll.u32 %v2102, 16
      %v2359 = vrot.slane %v2357, 5
      %v2360 = vsel %vm1026, %v2355, %v2359
      %v2362 = vshrl.u32 %v2103, 16
      %v2364 = vrot.slane %v2362, 4
      %v2365 = vshll.u32 %v2103, 16
      %v2367 = vrot.slane %v2365, 5
      %v2368 = vor.u32 %v2364, %v2367
      %v2369 = vrot.slane %v2368, 4
      %v2371 = vshll.u32 %v2104, 16
      %v2373 = vrot.slane %v2371, 5
      %v2374 = vsel %vm1026, %v2369, %v2373
      %v2375 = vshrl.u32 %v2104, 16
      %v2377 = vrot.slane %v2375, 4
      %v2378 = vor.u32 %v2377, %v2373
      %v2379 = vrot.slane %v2378, 4
      %v2381 = vshll.u32 %v2105, 16
      %v2383 = vrot.slane %v2381, 5
      %v2384 = vsel %vm1026, %v2379, %v2383
      %v2386 = vshrl.u32 %v2106, 16
      %v2388 = vrot.slane %v2386, 4
      %v2389 = vshll.u32 %v2106, 16
      %v2391 = vrot.slane %v2389, 5
      %v2392 = vor.u32 %v2388, %v2391
      %v2393 = vrot.slane %v2392, 4
      %v2395 = vshll.u32 %v2107, 16
      %v2397 = vrot.slane %v2395, 5
      %v2398 = vsel %vm1026, %v2393, %v2397
      %v2399 = vshrl.u32 %v2107, 16
      %v2401 = vrot.slane %v2399, 4
      %v2402 = vor.u32 %v2401, %v2397
      %v2403 = vrot.slane %v2402, 4
      %v2405 = vshll.u32 %v2108, 16
      %v2407 = vrot.slane %v2405, 5
      %v2408 = vsel %vm1026, %v2403, %v2407
      %v2410 = vshrl.u32 %v2109, 16
      %v2412 = vrot.slane %v2410, 4
      %v2413 = vshll.u32 %v2109, 16
      %v2415 = vrot.slane %v2413, 5
      %v2416 = vor.u32 %v2412, %v2415
      %v2417 = vrot.slane %v2416, 4
      %v2419 = vshll.u32 %v2110, 16
      %v2421 = vrot.slane %v2419, 5
      %v2422 = vsel %vm1026, %v2417, %v2421
      %v2423 = vshrl.u32 %v2110, 16
      %v2425 = vrot.slane %v2423, 4
      %v2426 = vor.u32 %v2425, %v2421
      %v2427 = vrot.slane %v2426, 4
      %v2429 = vshll.u32 %v2111, 16
      %v2431 = vrot.slane %v2429, 5
      %v2432 = vsel %vm1026, %v2427, %v2431
      %v2434 = vshrl.u32 %v2112, 16
      %v2436 = vrot.slane %v2434, 4
      %v2437 = vshll.u32 %v2112, 16
      %v2439 = vrot.slane %v2437, 5
      %v2440 = vor.u32 %v2436, %v2439
      %v2441 = vrot.slane %v2440, 4
      %v2443 = vshll.u32 %v2113, 16
      %v2445 = vrot.slane %v2443, 5
      %v2446 = vsel %vm1026, %v2441, %v2445
      %v2447 = vshrl.u32 %v2113, 16
      %v2449 = vrot.slane %v2447, 4
      %v2450 = vor.u32 %v2449, %v2445
      %v2451 = vrot.slane %v2450, 4
      %v2453 = vshll.u32 %v2114, 16
      %v2455 = vrot.slane %v2453, 5
      %v2456 = vsel %vm1026, %v2451, %v2455
      %v2458 = vshrl.u32 %v2115, 16
      %v2460 = vrot.slane %v2458, 4
      %v2461 = vshll.u32 %v2115, 16
      %v2463 = vrot.slane %v2461, 5
      %v2464 = vor.u32 %v2460, %v2463
      %v2465 = vrot.slane %v2464, 4
      %v2467 = vshll.u32 %v2116, 16
      %v2469 = vrot.slane %v2467, 5
      %v2470 = vsel %vm1026, %v2465, %v2469
      %v2471 = vshrl.u32 %v2116, 16
      %v2473 = vrot.slane %v2471, 4
      %v2474 = vor.u32 %v2473, %v2469
      %v2475 = vrot.slane %v2474, 4
      %v2477 = vshll.u32 %v2117, 16
      %v2479 = vrot.slane %v2477, 5
      %v2480 = vsel %vm1026, %v2475, %v2479
      %v2482 = vshrl.u32 %v2118, 16
      %v2484 = vrot.slane %v2482, 4
      %v2485 = vshll.u32 %v2118, 16
      %v2487 = vrot.slane %v2485, 5
      %v2488 = vor.u32 %v2484, %v2487
      %v2489 = vrot.slane %v2488, 4
      %v2491 = vshll.u32 %v2119, 16
      %v2493 = vrot.slane %v2491, 5
      %v2494 = vsel %vm1026, %v2489, %v2493
      %v2495 = vshrl.u32 %v2119, 16
      %v2497 = vrot.slane %v2495, 4
      %v2498 = vor.u32 %v2497, %v2493
      %v2499 = vrot.slane %v2498, 4
      %v2501 = vshll.u32 %v2120, 16
      %v2503 = vrot.slane %v2501, 5
      %v2504 = vsel %vm1026, %v2499, %v2503
      %2505 = vrot.lane.b32.xlu0 %v2134, 16
      %v2506 = vpop.permute.xlu0 %2505
      %2507 = vrot.lane.b32.xlu0 %v2144, 16
      %v2508 = vpop.permute.xlu0 %2507
      %2509 = vrot.lane.b32.xlu0 %v2158, 16
      %v2510 = vpop.permute.xlu0 %2509
      %2511 = vrot.lane.b32.xlu0 %v2168, 16
      %v2512 = vpop.permute.xlu0 %2511
      %2513 = vrot.lane.b32.xlu0 %v2182, 16
      %v2514 = vpop.permute.xlu0 %2513
      %2515 = vrot.lane.b32.xlu0 %v2192, 16
      %v2516 = vpop.permute.xlu0 %2515
      %2517 = vrot.lane.b32.xlu0 %v2206, 16
      %v2518 = vpop.permute.xlu0 %2517
      %2519 = vrot.lane.b32.xlu0 %v2216, 16
      %v2520 = vpop.permute.xlu0 %2519
      %2521 = vrot.lane.b32.xlu0 %v2230, 16
      %v2522 = vpop.permute.xlu0 %2521
      %2523 = vrot.lane.b32.xlu0 %v2240, 16
      %v2524 = vpop.permute.xlu0 %2523
      %2525 = vrot.lane.b32.xlu0 %v2254, 16
      %v2526 = vpop.permute.xlu0 %2525
      %2527 = vrot.lane.b32.xlu0 %v2264, 16
      %v2528 = vpop.permute.xlu0 %2527
      %2529 = vrot.lane.b32.xlu0 %v2278, 16
      %v2530 = vpop.permute.xlu0 %2529
      %2531 = vrot.lane.b32.xlu0 %v2288, 16
      %v2532 = vpop.permute.xlu0 %2531
      %2533 = vrot.lane.b32.xlu0 %v2302, 16
      %v2534 = vpop.permute.xlu0 %2533
      %2535 = vrot.lane.b32.xlu0 %v2312, 16
      %v2536 = vpop.permute.xlu0 %2535
      %2537 = vrot.lane.b32.xlu0 %v2326, 16
      %v2538 = vpop.permute.xlu0 %2537
      %2539 = vrot.lane.b32.xlu0 %v2336, 16
      %v2540 = vpop.permute.xlu0 %2539
      %2541 = vrot.lane.b32.xlu0 %v2350, 16
      %v2542 = vpop.permute.xlu0 %2541
      %2543 = vrot.lane.b32.xlu0 %v2360, 16
      %v2544 = vpop.permute.xlu0 %2543
      %2545 = vrot.lane.b32.xlu0 %v2374, 16
      %v2546 = vpop.permute.xlu0 %2545
      %2547 = vrot.lane.b32.xlu0 %v2384, 16
      %v2548 = vpop.permute.xlu0 %2547
      %2549 = vrot.lane.b32.xlu0 %v2398, 16
      %v2550 = vpop.permute.xlu0 %2549
      %2551 = vrot.lane.b32.xlu0 %v2408, 16
      %v2552 = vpop.permute.xlu0 %2551
      %2553 = vrot.lane.b32.xlu0 %v2422, 16
      %v2554 = vpop.permute.xlu0 %2553
      %2555 = vrot.lane.b32.xlu0 %v2432, 16
      %v2556 = vpop.permute.xlu0 %2555
      %2557 = vrot.lane.b32.xlu0 %v2446, 16
      %v2558 = vpop.permute.xlu0 %2557
      %2559 = vrot.lane.b32.xlu0 %v2456, 16
      %v2560 = vpop.permute.xlu0 %2559
      %2561 = vrot.lane.b32.xlu0 %v2470, 16
      %v2562 = vpop.permute.xlu0 %2561
      %2563 = vrot.lane.b32.xlu0 %v2480, 16
      %v2564 = vpop.permute.xlu0 %2563
      %2565 = vrot.lane.b32.xlu0 %v2494, 16
      %v2566 = vpop.permute.xlu0 %2565
      %2567 = vrot.lane.b32.xlu0 %v2504, 16
      %v2568 = vpop.permute.xlu0 %2567
      %vm2601 = vcmask 158848
      %2602 = vst.msk [vmem:[#allocation3] sm:$0xf] %vm2601, %v2506
      %2603 = vst.msk [vmem:[#allocation3 + $0x4] sm:$0xf] %vm2601, %v2508
      %2604 = vst.msk [vmem:[#allocation3 + $0x8] sm:$0xf] %vm2601, %v2510
      %2605 = vst.msk [vmem:[#allocation3 + $0xc] sm:$0xf] %vm2601, %v2512
      %2606 = vst.msk [vmem:[#allocation3 + $0x10] sm:$0xf] %vm2601, %v2514
      %2607 = vst.msk [vmem:[#allocation3 + $0x14] sm:$0xf] %vm2601, %v2516
      %2608 = vst.msk [vmem:[#allocation3 + $0x18] sm:$0xf] %vm2601, %v2518
      %2609 = vst.msk [vmem:[#allocation3 + $0x1c] sm:$0xf] %vm2601, %v2520
      %2610 = vst.msk [vmem:[#allocation3 + $0x20] sm:$0xf] %vm2601, %v2522
      %2611 = vst.msk [vmem:[#allocation3 + $0x24] sm:$0xf] %vm2601, %v2524
      %2612 = vst.msk [vmem:[#allocation3 + $0x28] sm:$0xf] %vm2601, %v2526
      %2613 = vst.msk [vmem:[#allocation3 + $0x2c] sm:$0xf] %vm2601, %v2528
      %2614 = vst.msk [vmem:[#allocation3 + $0x30] sm:$0xf] %vm2601, %v2530
      %2615 = vst.msk [vmem:[#allocation3 + $0x34] sm:$0xf] %vm2601, %v2532
      %2616 = vst.msk [vmem:[#allocation3 + $0x38] sm:$0xf] %vm2601, %v2534
      %2617 = vst.msk [vmem:[#allocation3 + $0x3c] sm:$0xf] %vm2601, %v2536
      %2618 = vst.msk [vmem:[#allocation3 + $0x40] sm:$0xf] %vm2601, %v2538
      %2619 = vst.msk [vmem:[#allocation3 + $0x44] sm:$0xf] %vm2601, %v2540
      %2620 = vst.msk [vmem:[#allocation3 + $0x48] sm:$0xf] %vm2601, %v2542
      %2621 = vst.msk [vmem:[#allocation3 + $0x4c] sm:$0xf] %vm2601, %v2544
      %2622 = vst.msk [vmem:[#allocation3 + $0x50] sm:$0xf] %vm2601, %v2546
      %2623 = vst.msk [vmem:[#allocation3 + $0x54] sm:$0xf] %vm2601, %v2548
      %2624 = vst.msk [vmem:[#allocation3 + $0x58] sm:$0xf] %vm2601, %v2550
      %2625 = vst.msk [vmem:[#allocation3 + $0x5c] sm:$0xf] %vm2601, %v2552
      %2626 = vst.msk [vmem:[#allocation3 + $0x60] sm:$0xf] %vm2601, %v2554
      %2627 = vst.msk [vmem:[#allocation3 + $0x64] sm:$0xf] %vm2601, %v2556
      %2628 = vst.msk [vmem:[#allocation3 + $0x68] sm:$0xf] %vm2601, %v2558
      %2629 = vst.msk [vmem:[#allocation3 + $0x6c] sm:$0xf] %vm2601, %v2560
      %2630 = vst.msk [vmem:[#allocation3 + $0x70] sm:$0xf] %vm2601, %v2562
      %2631 = vst.msk [vmem:[#allocation3 + $0x74] sm:$0xf] %vm2601, %v2564
      %2632 = vst.msk [vmem:[#allocation3 + $0x78] sm:$0xf] %vm2601, %v2566
      %2633 = vst.msk [vmem:[#allocation3 + $0x7c] sm:$0xf] %vm2601, %v2568
      %v2634 = vld [vmem:[%s234] sm:$0xe]
      %v2635 = vld [vmem:[%s234 + $0x4] sm:$0xf]
      %v2636 = vld [vmem:[%s234 + $0x8] sm:$0x1]
      %v2637 = vld [vmem:[%s234 + $0xc] sm:$0xe]
      %v2638 = vld [vmem:[%s234 + $0x10] sm:$0xf]
      %v2639 = vld [vmem:[%s234 + $0x14] sm:$0x1]
      %v2640 = vld [vmem:[%s234 + $0x18] sm:$0xe]
      %v2641 = vld [vmem:[%s234 + $0x1c] sm:$0xf]
      %v2642 = vld [vmem:[%s234 + $0x20] sm:$0x1]
      %v2643 = vld [vmem:[%s234 + $0x24] sm:$0xe]
      %v2644 = vld [vmem:[%s234 + $0x28] sm:$0xf]
      %v2645 = vld [vmem:[%s234 + $0x2c] sm:$0x1]
      %v2646 = vld [vmem:[%s234 + $0x30] sm:$0xe]
      %v2647 = vld [vmem:[%s234 + $0x34] sm:$0xf]
      %v2648 = vld [vmem:[%s234 + $0x38] sm:$0x1]
      %v2649 = vld [vmem:[%s234 + $0x3c] sm:$0xe]
      %v2650 = vld [vmem:[%s234 + $0x40] sm:$0xf]
      %v2651 = vld [vmem:[%s234 + $0x44] sm:$0x1]
      %v2652 = vld [vmem:[%s234 + $0x48] sm:$0xe]
      %v2653 = vld [vmem:[%s234 + $0x4c] sm:$0xf]
      %v2654 = vld [vmem:[%s234 + $0x50] sm:$0x1]
      %v2655 = vld [vmem:[%s234 + $0x54] sm:$0xe]
      %v2656 = vld [vmem:[%s234 + $0x58] sm:$0xf]
      %v2657 = vld [vmem:[%s234 + $0x5c] sm:$0x1]
      %v2658 = vld [vmem:[%s234 + $0x60] sm:$0xe]
      %v2659 = vld [vmem:[%s234 + $0x64] sm:$0xf]
      %v2660 = vld [vmem:[%s234 + $0x68] sm:$0x1]
      %v2661 = vld [vmem:[%s234 + $0x6c] sm:$0xe]
      %v2662 = vld [vmem:[%s234 + $0x70] sm:$0xf]
      %v2663 = vld [vmem:[%s234 + $0x74] sm:$0x1]
      %v2664 = vld [vmem:[%s234 + $0x78] sm:$0xe]
      %v2665 = vld [vmem:[%s234 + $0x7c] sm:$0xf]
      %v2666 = vld [vmem:[%s234 + $0x80] sm:$0x1]
      %v2667 = vld [vmem:[%s234 + $0x84] sm:$0xe]
      %v2668 = vld [vmem:[%s234 + $0x88] sm:$0xf]
      %v2669 = vld [vmem:[%s234 + $0x8c] sm:$0x1]
      %v2670 = vld [vmem:[%s234 + $0x90] sm:$0xe]
      %v2671 = vld [vmem:[%s234 + $0x94] sm:$0xf]
      %v2672 = vld [vmem:[%s234 + $0x98] sm:$0x1]
      %v2673 = vld [vmem:[%s234 + $0x9c] sm:$0xe]
      %v2674 = vld [vmem:[%s234 + $0xa0] sm:$0xf]
      %v2675 = vld [vmem:[%s234 + $0xa4] sm:$0x1]
      %v2676 = vld [vmem:[%s234 + $0xa8] sm:$0xe]
      %v2677 = vld [vmem:[%s234 + $0xac] sm:$0xf]
      %v2678 = vld [vmem:[%s234 + $0xb0] sm:$0x1]
      %v2679 = vld [vmem:[%s234 + $0xb4] sm:$0xe]
      %v2680 = vld [vmem:[%s234 + $0xb8] sm:$0xf]
      %v2681 = vld [vmem:[%s234 + $0xbc] sm:$0x1]
      %v2730 = vrot.slane %v2634, 5
      %v2731 = vrot.slane %v2730, 4
      %v2732 = vrot.slane %v2635, 5
      %v2733 = vsel %vm1638, %v2731, %v2732
      %v2734 = vrot.slane %v2732, 4
      %v2735 = vrot.slane %v2636, 5
      %v2736 = vsel %vm1638, %v2734, %v2735
      %v2737 = vrot.slane %v2637, 5
      %v2738 = vrot.slane %v2737, 4
      %v2739 = vrot.slane %v2638, 5
      %v2740 = vsel %vm1638, %v2738, %v2739
      %v2741 = vrot.slane %v2739, 4
      %v2742 = vrot.slane %v2639, 5
      %v2743 = vsel %vm1638, %v2741, %v2742
      %v2744 = vrot.slane %v2640, 5
      %v2745 = vrot.slane %v2744, 4
      %v2746 = vrot.slane %v2641, 5
      %v2747 = vsel %vm1638, %v2745, %v2746
      %v2748 = vrot.slane %v2746, 4
      %v2749 = vrot.slane %v2642, 5
      %v2750 = vsel %vm1638, %v2748, %v2749
      %v2751 = vrot.slane %v2643, 5
      %v2752 = vrot.slane %v2751, 4
      %v2753 = vrot.slane %v2644, 5
      %v2754 = vsel %vm1638, %v2752, %v2753
      %v2755 = vrot.slane %v2753, 4
      %v2756 = vrot.slane %v2645, 5
      %v2757 = vsel %vm1638, %v2755, %v2756
      %v2758 = vrot.slane %v2646, 5
      %v2759 = vrot.slane %v2758, 4
      %v2760 = vrot.slane %v2647, 5
      %v2761 = vsel %vm1638, %v2759, %v2760
      %v2762 = vrot.slane %v2760, 4
      %v2763 = vrot.slane %v2648, 5
      %v2764 = vsel %vm1638, %v2762, %v2763
      %v2765 = vrot.slane %v2649, 5
      %v2766 = vrot.slane %v2765, 4
      %v2767 = vrot.slane %v2650, 5
      %v2768 = vsel %vm1638, %v2766, %v2767
      %v2769 = vrot.slane %v2767, 4
      %v2770 = vrot.slane %v2651, 5
      %v2771 = vsel %vm1638, %v2769, %v2770
      %v2772 = vrot.slane %v2652, 5
      %v2773 = vrot.slane %v2772, 4
      %v2774 = vrot.slane %v2653, 5
      %v2775 = vsel %vm1638, %v2773, %v2774
      %v2776 = vrot.slane %v2774, 4
      %v2777 = vrot.slane %v2654, 5
      %v2778 = vsel %vm1638, %v2776, %v2777
      %v2779 = vrot.slane %v2655, 5
      %v2780 = vrot.slane %v2779, 4
      %v2781 = vrot.slane %v2656, 5
      %v2782 = vsel %vm1638, %v2780, %v2781
      %v2783 = vrot.slane %v2781, 4
      %v2784 = vrot.slane %v2657, 5
      %v2785 = vsel %vm1638, %v2783, %v2784
      %v2786 = vrot.slane %v2658, 5
      %v2787 = vrot.slane %v2786, 4
      %v2788 = vrot.slane %v2659, 5
      %v2789 = vsel %vm1638, %v2787, %v2788
      %v2790 = vrot.slane %v2788, 4
      %v2791 = vrot.slane %v2660, 5
      %v2792 = vsel %vm1638, %v2790, %v2791
      %v2793 = vrot.slane %v2661, 5
      %v2794 = vrot.slane %v2793, 4
      %v2795 = vrot.slane %v2662, 5
      %v2796 = vsel %vm1638, %v2794, %v2795
      %v2797 = vrot.slane %v2795, 4
      %v2798 = vrot.slane %v2663, 5
      %v2799 = vsel %vm1638, %v2797, %v2798
      %v2800 = vrot.slane %v2664, 5
      %v2801 = vrot.slane %v2800, 4
      %v2802 = vrot.slane %v2665, 5
      %v2803 = vsel %vm1638, %v2801, %v2802
      %v2804 = vrot.slane %v2802, 4
      %v2805 = vrot.slane %v2666, 5
      %v2806 = vsel %vm1638, %v2804, %v2805
      %v2807 = vrot.slane %v2667, 5
      %v2808 = vrot.slane %v2807, 4
      %v2809 = vrot.slane %v2668, 5
      %v2810 = vsel %vm1638, %v2808, %v2809
      %v2811 = vrot.slane %v2809, 4
      %v2812 = vrot.slane %v2669, 5
      %v2813 = vsel %vm1638, %v2811, %v2812
      %v2814 = vrot.slane %v2670, 5
      %v2815 = vrot.slane %v2814, 4
      %v2816 = vrot.slane %v2671, 5
      %v2817 = vsel %vm1638, %v2815, %v2816
      %v2818 = vrot.slane %v2816, 4
      %v2819 = vrot.slane %v2672, 5
      %v2820 = vsel %vm1638, %v2818, %v2819
      %v2821 = vrot.slane %v2673, 5
      %v2822 = vrot.slane %v2821, 4
      %v2823 = vrot.slane %v2674, 5
      %v2824 = vsel %vm1638, %v2822, %v2823
      %v2825 = vrot.slane %v2823, 4
      %v2826 = vrot.slane %v2675, 5
      %v2827 = vsel %vm1638, %v2825, %v2826
      %v2828 = vrot.slane %v2676, 5
      %v2829 = vrot.slane %v2828, 4
      %v2830 = vrot.slane %v2677, 5
      %v2831 = vsel %vm1638, %v2829, %v2830
      %v2832 = vrot.slane %v2830, 4
      %v2833 = vrot.slane %v2678, 5
      %v2834 = vsel %vm1638, %v2832, %v2833
      %v2835 = vrot.slane %v2679, 5
      %v2836 = vrot.slane %v2835, 4
      %v2837 = vrot.slane %v2680, 5
      %v2838 = vsel %vm1638, %v2836, %v2837
      %v2839 = vrot.slane %v2837, 4
      %v2840 = vrot.slane %v2681, 5
      %v2841 = vsel %vm1638, %v2839, %v2840
      %2842 = vrot.lane.b32.xlu0 %v2733, 20
      %v2843 = vpop.permute.xlu0 %2842
      %2844 = vrot.lane.b32.xlu0 %v2736, 20
      %v2845 = vpop.permute.xlu0 %2844
      %2846 = vrot.lane.b32.xlu0 %v2740, 20
      %v2847 = vpop.permute.xlu0 %2846
      %2848 = vrot.lane.b32.xlu0 %v2743, 20
      %v2849 = vpop.permute.xlu0 %2848
      %2850 = vrot.lane.b32.xlu0 %v2747, 20
      %v2851 = vpop.permute.xlu0 %2850
      %2852 = vrot.lane.b32.xlu0 %v2750, 20
      %v2853 = vpop.permute.xlu0 %2852
      %2854 = vrot.lane.b32.xlu0 %v2754, 20
      %v2855 = vpop.permute.xlu0 %2854
      %2856 = vrot.lane.b32.xlu0 %v2757, 20
      %v2857 = vpop.permute.xlu0 %2856
      %2858 = vrot.lane.b32.xlu0 %v2761, 20
      %v2859 = vpop.permute.xlu0 %2858
      %2860 = vrot.lane.b32.xlu0 %v2764, 20
      %v2861 = vpop.permute.xlu0 %2860
      %2862 = vrot.lane.b32.xlu0 %v2768, 20
      %v2863 = vpop.permute.xlu0 %2862
      %2864 = vrot.lane.b32.xlu0 %v2771, 20
      %v2865 = vpop.permute.xlu0 %2864
      %2866 = vrot.lane.b32.xlu0 %v2775, 20
      %v2867 = vpop.permute.xlu0 %2866
      %2868 = vrot.lane.b32.xlu0 %v2778, 20
      %v2869 = vpop.permute.xlu0 %2868
      %2870 = vrot.lane.b32.xlu0 %v2782, 20
      %v2871 = vpop.permute.xlu0 %2870
      %2872 = vrot.lane.b32.xlu0 %v2785, 20
      %v2873 = vpop.permute.xlu0 %2872
      %2874 = vrot.lane.b32.xlu0 %v2789, 20
      %v2875 = vpop.permute.xlu0 %2874
      %2876 = vrot.lane.b32.xlu0 %v2792, 20
      %v2877 = vpop.permute.xlu0 %2876
      %2878 = vrot.lane.b32.xlu0 %v2796, 20
      %v2879 = vpop.permute.xlu0 %2878
      %2880 = vrot.lane.b32.xlu0 %v2799, 20
      %v2881 = vpop.permute.xlu0 %2880
      %2882 = vrot.lane.b32.xlu0 %v2803, 20
      %v2883 = vpop.permute.xlu0 %2882
      %2884 = vrot.lane.b32.xlu0 %v2806, 20
      %v2885 = vpop.permute.xlu0 %2884
      %2886 = vrot.lane.b32.xlu0 %v2810, 20
      %v2887 = vpop.permute.xlu0 %2886
      %2888 = vrot.lane.b32.xlu0 %v2813, 20
      %v2889 = vpop.permute.xlu0 %2888
      %2890 = vrot.lane.b32.xlu0 %v2817, 20
      %v2891 = vpop.permute.xlu0 %2890
      %2892 = vrot.lane.b32.xlu0 %v2820, 20
      %v2893 = vpop.permute.xlu0 %2892
      %2894 = vrot.lane.b32.xlu0 %v2824, 20
      %v2895 = vpop.permute.xlu0 %2894
      %2896 = vrot.lane.b32.xlu0 %v2827, 20
      %v2897 = vpop.permute.xlu0 %2896
      %2898 = vrot.lane.b32.xlu0 %v2831, 20
      %v2899 = vpop.permute.xlu0 %2898
      %2900 = vrot.lane.b32.xlu0 %v2834, 20
      %v2901 = vpop.permute.xlu0 %2900
      %2902 = vrot.lane.b32.xlu0 %v2838, 20
      %v2903 = vpop.permute.xlu0 %2902
      %2904 = vrot.lane.b32.xlu0 %v2841, 20
      %v2905 = vpop.permute.xlu0 %2904
      %vm2938 = vcmask 191648
      %2939 = vst.msk [vmem:[#allocation3] sm:$0xf] %vm2938, %v2843
      %2940 = vst.msk [vmem:[#allocation3 + $0x4] sm:$0xf] %vm2938, %v2845
      %2941 = vst.msk [vmem:[#allocation3 + $0x8] sm:$0xf] %vm2938, %v2847
      %2942 = vst.msk [vmem:[#allocation3 + $0xc] sm:$0xf] %vm2938, %v2849
      %2943 = vst.msk [vmem:[#allocation3 + $0x10] sm:$0xf] %vm2938, %v2851
      %2944 = vst.msk [vmem:[#allocation3 + $0x14] sm:$0xf] %vm2938, %v2853
      %2945 = vst.msk [vmem:[#allocation3 + $0x18] sm:$0xf] %vm2938, %v2855
      %2946 = vst.msk [vmem:[#allocation3 + $0x1c] sm:$0xf] %vm2938, %v2857
      %2947 = vst.msk [vmem:[#allocation3 + $0x20] sm:$0xf] %vm2938, %v2859
      %2948 = vst.msk [vmem:[#allocation3 + $0x24] sm:$0xf] %vm2938, %v2861
      %2949 = vst.msk [vmem:[#allocation3 + $0x28] sm:$0xf] %vm2938, %v2863
      %2950 = vst.msk [vmem:[#allocation3 + $0x2c] sm:$0xf] %vm2938, %v2865
      %2951 = vst.msk [vmem:[#allocation3 + $0x30] sm:$0xf] %vm2938, %v2867
      %2952 = vst.msk [vmem:[#allocation3 + $0x34] sm:$0xf] %vm2938, %v2869
      %2953 = vst.msk [vmem:[#allocation3 + $0x38] sm:$0xf] %vm2938, %v2871
      %2954 = vst.msk [vmem:[#allocation3 + $0x3c] sm:$0xf] %vm2938, %v2873
      %2955 = vst.msk [vmem:[#allocation3 + $0x40] sm:$0xf] %vm2938, %v2875
      %2956 = vst.msk [vmem:[#allocation3 + $0x44] sm:$0xf] %vm2938, %v2877
      %2957 = vst.msk [vmem:[#allocation3 + $0x48] sm:$0xf] %vm2938, %v2879
      %2958 = vst.msk [vmem:[#allocation3 + $0x4c] sm:$0xf] %vm2938, %v2881
      %2959 = vst.msk [vmem:[#allocation3 + $0x50] sm:$0xf] %vm2938, %v2883
      %2960 = vst.msk [vmem:[#allocation3 + $0x54] sm:$0xf] %vm2938, %v2885
      %2961 = vst.msk [vmem:[#allocation3 + $0x58] sm:$0xf] %vm2938, %v2887
      %2962 = vst.msk [vmem:[#allocation3 + $0x5c] sm:$0xf] %vm2938, %v2889
      %2963 = vst.msk [vmem:[#allocation3 + $0x60] sm:$0xf] %vm2938, %v2891
      %2964 = vst.msk [vmem:[#allocation3 + $0x64] sm:$0xf] %vm2938, %v2893
      %2965 = vst.msk [vmem:[#allocation3 + $0x68] sm:$0xf] %vm2938, %v2895
      %2966 = vst.msk [vmem:[#allocation3 + $0x6c] sm:$0xf] %vm2938, %v2897
      %2967 = vst.msk [vmem:[#allocation3 + $0x70] sm:$0xf] %vm2938, %v2899
      %2968 = vst.msk [vmem:[#allocation3 + $0x74] sm:$0xf] %vm2938, %v2901
      %2969 = vst.msk [vmem:[#allocation3 + $0x78] sm:$0xf] %vm2938, %v2903
      %2970 = vst.msk [vmem:[#allocation3 + $0x7c] sm:$0xf] %vm2938, %v2905
      %s2971 = scalar_lea.vmem [#allocation2], 24
      %v2972 = vld [vmem:[%s2971] sm:$0xf]
      %v2973 = vld [vmem:[%s2971 + $0x4] sm:$0xf]
      %v2974 = vld [vmem:[%s2971 + $0xc] sm:$0xf]
      %v2975 = vld [vmem:[%s2971 + $0x10] sm:$0xf]
      %v2976 = vld [vmem:[%s2971 + $0x18] sm:$0xf]
      %v2977 = vld [vmem:[%s2971 + $0x1c] sm:$0xf]
      %v2978 = vld [vmem:[%s2971 + $0x24] sm:$0xf]
      %v2979 = vld [vmem:[%s2971 + $0x28] sm:$0xf]
      %v2980 = vld [vmem:[%s2971 + $0x30] sm:$0xf]
      %v2981 = vld [vmem:[%s2971 + $0x34] sm:$0xf]
      %v2982 = vld [vmem:[%s2971 + $0x3c] sm:$0xf]
      %v2983 = vld [vmem:[%s2971 + $0x40] sm:$0xf]
      %v2984 = vld [vmem:[%s2971 + $0x48] sm:$0xf]
      %v2985 = vld [vmem:[%s2971 + $0x4c] sm:$0xf]
      %v2986 = vld [vmem:[%s2971 + $0x54] sm:$0xf]
      %v2987 = vld [vmem:[%s2971 + $0x58] sm:$0xf]
      %v2988 = vld [vmem:[%s2971 + $0x60] sm:$0xf]
      %v2989 = vld [vmem:[%s2971 + $0x64] sm:$0xf]
      %v2990 = vld [vmem:[%s2971 + $0x6c] sm:$0xf]
      %v2991 = vld [vmem:[%s2971 + $0x70] sm:$0xf]
      %v2992 = vld [vmem:[%s2971 + $0x78] sm:$0xf]
      %v2993 = vld [vmem:[%s2971 + $0x7c] sm:$0xf]
      %v2994 = vld [vmem:[%s2971 + $0x84] sm:$0xf]
      %v2995 = vld [vmem:[%s2971 + $0x88] sm:$0xf]
      %v2996 = vld [vmem:[%s2971 + $0x90] sm:$0xf]
      %v2997 = vld [vmem:[%s2971 + $0x94] sm:$0xf]
      %v2998 = vld [vmem:[%s2971 + $0x9c] sm:$0xf]
      %v2999 = vld [vmem:[%s2971 + $0xa0] sm:$0xf]
      %v3000 = vld [vmem:[%s2971 + $0xa8] sm:$0xf]
      %v3001 = vld [vmem:[%s2971 + $0xac] sm:$0xf]
      %v3002 = vld [vmem:[%s2971 + $0xb4] sm:$0xf]
      %v3003 = vld [vmem:[%s2971 + $0xb8] sm:$0xf]
      %3036 = vrot.lane.b32.xlu0 %v2972, 24
      %v3037 = vpop.permute.xlu0 %3036
      %3038 = vrot.lane.b32.xlu0 %v2973, 24
      %v3039 = vpop.permute.xlu0 %3038
      %3040 = vrot.lane.b32.xlu0 %v2974, 24
      %v3041 = vpop.permute.xlu0 %3040
      %3042 = vrot.lane.b32.xlu0 %v2975, 24
      %v3043 = vpop.permute.xlu0 %3042
      %3044 = vrot.lane.b32.xlu0 %v2976, 24
      %v3045 = vpop.permute.xlu0 %3044
      %3046 = vrot.lane.b32.xlu0 %v2977, 24
      %v3047 = vpop.permute.xlu0 %3046
      %3048 = vrot.lane.b32.xlu0 %v2978, 24
      %v3049 = vpop.permute.xlu0 %3048
      %3050 = vrot.lane.b32.xlu0 %v2979, 24
      %v3051 = vpop.permute.xlu0 %3050
      %3052 = vrot.lane.b32.xlu0 %v2980, 24
      %v3053 = vpop.permute.xlu0 %3052
      %3054 = vrot.lane.b32.xlu0 %v2981, 24
      %v3055 = vpop.permute.xlu0 %3054
      %3056 = vrot.lane.b32.xlu0 %v2982, 24
      %v3057 = vpop.permute.xlu0 %3056
      %3058 = vrot.lane.b32.xlu0 %v2983, 24
      %v3059 = vpop.permute.xlu0 %3058
      %3060 = vrot.lane.b32.xlu0 %v2984, 24
      %v3061 = vpop.permute.xlu0 %3060
      %3062 = vrot.lane.b32.xlu0 %v2985, 24
      %v3063 = vpop.permute.xlu0 %3062
      %3064 = vrot.lane.b32.xlu0 %v2986, 24
      %v3065 = vpop.permute.xlu0 %3064
      %3066 = vrot.lane.b32.xlu0 %v2987, 24
      %v3067 = vpop.permute.xlu0 %3066
      %3068 = vrot.lane.b32.xlu0 %v2988, 24
      %v3069 = vpop.permute.xlu0 %3068
      %3070 = vrot.lane.b32.xlu0 %v2989, 24
      %v3071 = vpop.permute.xlu0 %3070
      %3072 = vrot.lane.b32.xlu0 %v2990, 24
      %v3073 = vpop.permute.xlu0 %3072
      %3074 = vrot.lane.b32.xlu0 %v2991, 24
      %v3075 = vpop.permute.xlu0 %3074
      %3076 = vrot.lane.b32.xlu0 %v2992, 24
      %v3077 = vpop.permute.xlu0 %3076
      %3078 = vrot.lane.b32.xlu0 %v2993, 24
      %v3079 = vpop.permute.xlu0 %3078
      %3080 = vrot.lane.b32.xlu0 %v2994, 24
      %v3081 = vpop.permute.xlu0 %3080
      %3082 = vrot.lane.b32.xlu0 %v2995, 24
      %v3083 = vpop.permute.xlu0 %3082
      %3084 = vrot.lane.b32.xlu0 %v2996, 24
      %v3085 = vpop.permute.xlu0 %3084
      %3086 = vrot.lane.b32.xlu0 %v2997, 24
      %v3087 = vpop.permute.xlu0 %3086
      %3088 = vrot.lane.b32.xlu0 %v2998, 24
      %v3089 = vpop.permute.xlu0 %3088
      %3090 = vrot.lane.b32.xlu0 %v2999, 24
      %v3091 = vpop.permute.xlu0 %3090
      %3092 = vrot.lane.b32.xlu0 %v3000, 24
      %v3093 = vpop.permute.xlu0 %3092
      %3094 = vrot.lane.b32.xlu0 %v3001, 24
      %v3095 = vpop.permute.xlu0 %3094
      %3096 = vrot.lane.b32.xlu0 %v3002, 24
      %v3097 = vpop.permute.xlu0 %3096
      %3098 = vrot.lane.b32.xlu0 %v3003, 24
      %v3099 = vpop.permute.xlu0 %3098
      %vm3132 = vcmask 224448
      %3133 = vst.msk [vmem:[#allocation3] sm:$0xf] %vm3132, %v3037
      %3134 = vst.msk [vmem:[#allocation3 + $0x4] sm:$0xf] %vm3132, %v3039
      %3135 = vst.msk [vmem:[#allocation3 + $0x8] sm:$0xf] %vm3132, %v3041
      %3136 = vst.msk [vmem:[#allocation3 + $0xc] sm:$0xf] %vm3132, %v3043
      %3137 = vst.msk [vmem:[#allocation3 + $0x10] sm:$0xf] %vm3132, %v3045
      %3138 = vst.msk [vmem:[#allocation3 + $0x14] sm:$0xf] %vm3132, %v3047
      %3139 = vst.msk [vmem:[#allocation3 + $0x18] sm:$0xf] %vm3132, %v3049
      %3140 = vst.msk [vmem:[#allocation3 + $0x1c] sm:$0xf] %vm3132, %v3051
      %3141 = vst.msk [vmem:[#allocation3 + $0x20] sm:$0xf] %vm3132, %v3053
      %3142 = vst.msk [vmem:[#allocation3 + $0x24] sm:$0xf] %vm3132, %v3055
      %3143 = vst.msk [vmem:[#allocation3 + $0x28] sm:$0xf] %vm3132, %v3057
      %3144 = vst.msk [vmem:[#allocation3 + $0x2c] sm:$0xf] %vm3132, %v3059
      %3145 = vst.msk [vmem:[#allocation3 + $0x30] sm:$0xf] %vm3132, %v3061
      %3146 = vst.msk [vmem:[#allocation3 + $0x34] sm:$0xf] %vm3132, %v3063
      %3147 = vst.msk [vmem:[#allocation3 + $0x38] sm:$0xf] %vm3132, %v3065
      %3148 = vst.msk [vmem:[#allocation3 + $0x3c] sm:$0xf] %vm3132, %v3067
      %3149 = vst.msk [vmem:[#allocation3 + $0x40] sm:$0xf] %vm3132, %v3069
      %3150 = vst.msk [vmem:[#allocation3 + $0x44] sm:$0xf] %vm3132, %v3071
      %3151 = vst.msk [vmem:[#allocation3 + $0x48] sm:$0xf] %vm3132, %v3073
      %3152 = vst.msk [vmem:[#allocation3 + $0x4c] sm:$0xf] %vm3132, %v3075
      %3153 = vst.msk [vmem:[#allocation3 + $0x50] sm:$0xf] %vm3132, %v3077
      %3154 = vst.msk [vmem:[#allocation3 + $0x54] sm:$0xf] %vm3132, %v3079
      %3155 = vst.msk [vmem:[#allocation3 + $0x58] sm:$0xf] %vm3132, %v3081
      %3156 = vst.msk [vmem:[#allocation3 + $0x5c] sm:$0xf] %vm3132, %v3083
      %3157 = vst.msk [vmem:[#allocation3 + $0x60] sm:$0xf] %vm3132, %v3085
      %3158 = vst.msk [vmem:[#allocation3 + $0x64] sm:$0xf] %vm3132, %v3087
      %3159 = vst.msk [vmem:[#allocation3 + $0x68] sm:$0xf] %vm3132, %v3089
      %3160 = vst.msk [vmem:[#allocation3 + $0x6c] sm:$0xf] %vm3132, %v3091
      %3161 = vst.msk [vmem:[#allocation3 + $0x70] sm:$0xf] %vm3132, %v3093
      %3162 = vst.msk [vmem:[#allocation3 + $0x74] sm:$0xf] %vm3132, %v3095
      %3163 = vst.msk [vmem:[#allocation3 + $0x78] sm:$0xf] %vm3132, %v3097
      %3164 = vst.msk [vmem:[#allocation3 + $0x7c] sm:$0xf] %vm3132, %v3099
      %v3165 = vld [vmem:[%s2971] sm:$0xf]
      %v3166 = vld [vmem:[%s2971 + $0x4] sm:$0xf]
      %v3167 = vld [vmem:[%s2971 + $0x8] sm:$0x1]
      %v3168 = vld [vmem:[%s2971 + $0xc] sm:$0xf]
      %v3169 = vld [vmem:[%s2971 + $0x10] sm:$0xf]
      %v3170 = vld [vmem:[%s2971 + $0x14] sm:$0x1]
      %v3171 = vld [vmem:[%s2971 + $0x18] sm:$0xf]
      %v3172 = vld [vmem:[%s2971 + $0x1c] sm:$0xf]
      %v3173 = vld [vmem:[%s2971 + $0x20] sm:$0x1]
      %v3174 = vld [vmem:[%s2971 + $0x24] sm:$0xf]
      %v3175 = vld [vmem:[%s2971 + $0x28] sm:$0xf]
      %v3176 = vld [vmem:[%s2971 + $0x2c] sm:$0x1]
      %v3177 = vld [vmem:[%s2971 + $0x30] sm:$0xf]
      %v3178 = vld [vmem:[%s2971 + $0x34] sm:$0xf]
      %v3179 = vld [vmem:[%s2971 + $0x38] sm:$0x1]
      %v3180 = vld [vmem:[%s2971 + $0x3c] sm:$0xf]
      %v3181 = vld [vmem:[%s2971 + $0x40] sm:$0xf]
      %v3182 = vld [vmem:[%s2971 + $0x44] sm:$0x1]
      %v3183 = vld [vmem:[%s2971 + $0x48] sm:$0xf]
      %v3184 = vld [vmem:[%s2971 + $0x4c] sm:$0xf]
      %v3185 = vld [vmem:[%s2971 + $0x50] sm:$0x1]
      %v3186 = vld [vmem:[%s2971 + $0x54] sm:$0xf]
      %v3187 = vld [vmem:[%s2971 + $0x58] sm:$0xf]
      %v3188 = vld [vmem:[%s2971 + $0x5c] sm:$0x1]
      %v3189 = vld [vmem:[%s2971 + $0x60] sm:$0xf]
      %v3190 = vld [vmem:[%s2971 + $0x64] sm:$0xf]
      %v3191 = vld [vmem:[%s2971 + $0x68] sm:$0x1]
      %v3192 = vld [vmem:[%s2971 + $0x6c] sm:$0xf]
      %v3193 = vld [vmem:[%s2971 + $0x70] sm:$0xf]
      %v3194 = vld [vmem:[%s2971 + $0x74] sm:$0x1]
      %v3195 = vld [vmem:[%s2971 + $0x78] sm:$0xf]
      %v3196 = vld [vmem:[%s2971 + $0x7c] sm:$0xf]
      %v3197 = vld [vmem:[%s2971 + $0x80] sm:$0x1]
      %v3198 = vld [vmem:[%s2971 + $0x84] sm:$0xf]
      %v3199 = vld [vmem:[%s2971 + $0x88] sm:$0xf]
      %v3200 = vld [vmem:[%s2971 + $0x8c] sm:$0x1]
      %v3201 = vld [vmem:[%s2971 + $0x90] sm:$0xf]
      %v3202 = vld [vmem:[%s2971 + $0x94] sm:$0xf]
      %v3203 = vld [vmem:[%s2971 + $0x98] sm:$0x1]
      %v3204 = vld [vmem:[%s2971 + $0x9c] sm:$0xf]
      %v3205 = vld [vmem:[%s2971 + $0xa0] sm:$0xf]
      %v3206 = vld [vmem:[%s2971 + $0xa4] sm:$0x1]
      %v3207 = vld [vmem:[%s2971 + $0xa8] sm:$0xf]
      %v3208 = vld [vmem:[%s2971 + $0xac] sm:$0xf]
      %v3209 = vld [vmem:[%s2971 + $0xb0] sm:$0x1]
      %v3210 = vld [vmem:[%s2971 + $0xb4] sm:$0xf]
      %v3211 = vld [vmem:[%s2971 + $0xb8] sm:$0xf]
      %v3212 = vld [vmem:[%s2971 + $0xbc] sm:$0x1]
      %v3214 = vshrl.u32 %v3165, 16
      %v3216 = vrot.slane %v3214, 4
      %v3217 = vshll.u32 %v3165, 16
      %v3219 = vrot.slane %v3217, 5
      %v3220 = vor.u32 %v3216, %v3219
      %v3221 = vrot.slane %v3220, 4
      %v3223 = vshll.u32 %v3166, 16
      %v3225 = vrot.slane %v3223, 5
      %v3226 = vsel %vm1026, %v3221, %v3225
      %v3227 = vshrl.u32 %v3166, 16
      %v3229 = vrot.slane %v3227, 4
      %v3230 = vor.u32 %v3229, %v3225
      %v3231 = vrot.slane %v3230, 4
      %v3233 = vshll.u32 %v3167, 16
      %v3235 = vrot.slane %v3233, 5
      %v3236 = vsel %vm1026, %v3231, %v3235
      %v3238 = vshrl.u32 %v3168, 16
      %v3240 = vrot.slane %v3238, 4
      %v3241 = vshll.u32 %v3168, 16
      %v3243 = vrot.slane %v3241, 5
      %v3244 = vor.u32 %v3240, %v3243
      %v3245 = vrot.slane %v3244, 4
      %v3247 = vshll.u32 %v3169, 16
      %v3249 = vrot.slane %v3247, 5
      %v3250 = vsel %vm1026, %v3245, %v3249
      %v3251 = vshrl.u32 %v3169, 16
      %v3253 = vrot.slane %v3251, 4
      %v3254 = vor.u32 %v3253, %v3249
      %v3255 = vrot.slane %v3254, 4
      %v3257 = vshll.u32 %v3170, 16
      %v3259 = vrot.slane %v3257, 5
      %v3260 = vsel %vm1026, %v3255, %v3259
      %v3262 = vshrl.u32 %v3171, 16
      %v3264 = vrot.slane %v3262, 4
      %v3265 = vshll.u32 %v3171, 16
      %v3267 = vrot.slane %v3265, 5
      %v3268 = vor.u32 %v3264, %v3267
      %v3269 = vrot.slane %v3268, 4
      %v3271 = vshll.u32 %v3172, 16
      %v3273 = vrot.slane %v3271, 5
      %v3274 = vsel %vm1026, %v3269, %v3273
      %v3275 = vshrl.u32 %v3172, 16
      %v3277 = vrot.slane %v3275, 4
      %v3278 = vor.u32 %v3277, %v3273
      %v3279 = vrot.slane %v3278, 4
      %v3281 = vshll.u32 %v3173, 16
      %v3283 = vrot.slane %v3281, 5
      %v3284 = vsel %vm1026, %v3279, %v3283
      %v3286 = vshrl.u32 %v3174, 16
      %v3288 = vrot.slane %v3286, 4
      %v3289 = vshll.u32 %v3174, 16
      %v3291 = vrot.slane %v3289, 5
      %v3292 = vor.u32 %v3288, %v3291
      %v3293 = vrot.slane %v3292, 4
      %v3295 = vshll.u32 %v3175, 16
      %v3297 = vrot.slane %v3295, 5
      %v3298 = vsel %vm1026, %v3293, %v3297
      %v3299 = vshrl.u32 %v3175, 16
      %v3301 = vrot.slane %v3299, 4
      %v3302 = vor.u32 %v3301, %v3297
      %v3303 = vrot.slane %v3302, 4
      %v3305 = vshll.u32 %v3176, 16
      %v3307 = vrot.slane %v3305, 5
      %v3308 = vsel %vm1026, %v3303, %v3307
      %v3310 = vshrl.u32 %v3177, 16
      %v3312 = vrot.slane %v3310, 4
      %v3313 = vshll.u32 %v3177, 16
      %v3315 = vrot.slane %v3313, 5
      %v3316 = vor.u32 %v3312, %v3315
      %v3317 = vrot.slane %v3316, 4
      %v3319 = vshll.u32 %v3178, 16
      %v3321 = vrot.slane %v3319, 5
      %v3322 = vsel %vm1026, %v3317, %v3321
      %v3323 = vshrl.u32 %v3178, 16
      %v3325 = vrot.slane %v3323, 4
      %v3326 = vor.u32 %v3325, %v3321
      %v3327 = vrot.slane %v3326, 4
      %v3329 = vshll.u32 %v3179, 16
      %v3331 = vrot.slane %v3329, 5
      %v3332 = vsel %vm1026, %v3327, %v3331
      %v3334 = vshrl.u32 %v3180, 16
      %v3336 = vrot.slane %v3334, 4
      %v3337 = vshll.u32 %v3180, 16
      %v3339 = vrot.slane %v3337, 5
      %v3340 = vor.u32 %v3336, %v3339
      %v3341 = vrot.slane %v3340, 4
      %v3343 = vshll.u32 %v3181, 16
      %v3345 = vrot.slane %v3343, 5
      %v3346 = vsel %vm1026, %v3341, %v3345
      %v3347 = vshrl.u32 %v3181, 16
      %v3349 = vrot.slane %v3347, 4
      %v3350 = vor.u32 %v3349, %v3345
      %v3351 = vrot.slane %v3350, 4
      %v3353 = vshll.u32 %v3182, 16
      %v3355 = vrot.slane %v3353, 5
      %v3356 = vsel %vm1026, %v3351, %v3355
      %v3358 = vshrl.u32 %v3183, 16
      %v3360 = vrot.slane %v3358, 4
      %v3361 = vshll.u32 %v3183, 16
      %v3363 = vrot.slane %v3361, 5
      %v3364 = vor.u32 %v3360, %v3363
      %v3365 = vrot.slane %v3364, 4
      %v3367 = vshll.u32 %v3184, 16
      %v3369 = vrot.slane %v3367, 5
      %v3370 = vsel %vm1026, %v3365, %v3369
      %v3371 = vshrl.u32 %v3184, 16
      %v3373 = vrot.slane %v3371, 4
      %v3374 = vor.u32 %v3373, %v3369
      %v3375 = vrot.slane %v3374, 4
      %v3377 = vshll.u32 %v3185, 16
      %v3379 = vrot.slane %v3377, 5
      %v3380 = vsel %vm1026, %v3375, %v3379
      %v3382 = vshrl.u32 %v3186, 16
      %v3384 = vrot.slane %v3382, 4
      %v3385 = vshll.u32 %v3186, 16
      %v3387 = vrot.slane %v3385, 5
      %v3388 = vor.u32 %v3384, %v3387
      %v3389 = vrot.slane %v3388, 4
      %v3391 = vshll.u32 %v3187, 16
      %v3393 = vrot.slane %v3391, 5
      %v3394 = vsel %vm1026, %v3389, %v3393
      %v3395 = vshrl.u32 %v3187, 16
      %v3397 = vrot.slane %v3395, 4
      %v3398 = vor.u32 %v3397, %v3393
      %v3399 = vrot.slane %v3398, 4
      %v3401 = vshll.u32 %v3188, 16
      %v3403 = vrot.slane %v3401, 5
      %v3404 = vsel %vm1026, %v3399, %v3403
      %v3406 = vshrl.u32 %v3189, 16
      %v3408 = vrot.slane %v3406, 4
      %v3409 = vshll.u32 %v3189, 16
      %v3411 = vrot.slane %v3409, 5
      %v3412 = vor.u32 %v3408, %v3411
      %v3413 = vrot.slane %v3412, 4
      %v3415 = vshll.u32 %v3190, 16
      %v3417 = vrot.slane %v3415, 5
      %v3418 = vsel %vm1026, %v3413, %v3417
      %v3419 = vshrl.u32 %v3190, 16
      %v3421 = vrot.slane %v3419, 4
      %v3422 = vor.u32 %v3421, %v3417
      %v3423 = vrot.slane %v3422, 4
      %v3425 = vshll.u32 %v3191, 16
      %v3427 = vrot.slane %v3425, 5
      %v3428 = vsel %vm1026, %v3423, %v3427
      %v3430 = vshrl.u32 %v3192, 16
      %v3432 = vrot.slane %v3430, 4
      %v3433 = vshll.u32 %v3192, 16
      %v3435 = vrot.slane %v3433, 5
      %v3436 = vor.u32 %v3432, %v3435
      %v3437 = vrot.slane %v3436, 4
      %v3439 = vshll.u32 %v3193, 16
      %v3441 = vrot.slane %v3439, 5
      %v3442 = vsel %vm1026, %v3437, %v3441
      %v3443 = vshrl.u32 %v3193, 16
      %v3445 = vrot.slane %v3443, 4
      %v3446 = vor.u32 %v3445, %v3441
      %v3447 = vrot.slane %v3446, 4
      %v3449 = vshll.u32 %v3194, 16
      %v3451 = vrot.slane %v3449, 5
      %v3452 = vsel %vm1026, %v3447, %v3451
      %v3454 = vshrl.u32 %v3195, 16
      %v3456 = vrot.slane %v3454, 4
      %v3457 = vshll.u32 %v3195, 16
      %v3459 = vrot.slane %v3457, 5
      %v3460 = vor.u32 %v3456, %v3459
      %v3461 = vrot.slane %v3460, 4
      %v3463 = vshll.u32 %v3196, 16
      %v3465 = vrot.slane %v3463, 5
      %v3466 = vsel %vm1026, %v3461, %v3465
      %v3467 = vshrl.u32 %v3196, 16
      %v3469 = vrot.slane %v3467, 4
      %v3470 = vor.u32 %v3469, %v3465
      %v3471 = vrot.slane %v3470, 4
      %v3473 = vshll.u32 %v3197, 16
      %v3475 = vrot.slane %v3473, 5
      %v3476 = vsel %vm1026, %v3471, %v3475
      %v3478 = vshrl.u32 %v3198, 16
      %v3480 = vrot.slane %v3478, 4
      %v3481 = vshll.u32 %v3198, 16
      %v3483 = vrot.slane %v3481, 5
      %v3484 = vor.u32 %v3480, %v3483
      %v3485 = vrot.slane %v3484, 4
      %v3487 = vshll.u32 %v3199, 16
      %v3489 = vrot.slane %v3487, 5
      %v3490 = vsel %vm1026, %v3485, %v3489
      %v3491 = vshrl.u32 %v3199, 16
      %v3493 = vrot.slane %v3491, 4
      %v3494 = vor.u32 %v3493, %v3489
      %v3495 = vrot.slane %v3494, 4
      %v3497 = vshll.u32 %v3200, 16
      %v3499 = vrot.slane %v3497, 5
      %v3500 = vsel %vm1026, %v3495, %v3499
      %v3502 = vshrl.u32 %v3201, 16
      %v3504 = vrot.slane %v3502, 4
      %v3505 = vshll.u32 %v3201, 16
      %v3507 = vrot.slane %v3505, 5
      %v3508 = vor.u32 %v3504, %v3507
      %v3509 = vrot.slane %v3508, 4
      %v3511 = vshll.u32 %v3202, 16
      %v3513 = vrot.slane %v3511, 5
      %v3514 = vsel %vm1026, %v3509, %v3513
      %v3515 = vshrl.u32 %v3202, 16
      %v3517 = vrot.slane %v3515, 4
      %v3518 = vor.u32 %v3517, %v3513
      %v3519 = vrot.slane %v3518, 4
      %v3521 = vshll.u32 %v3203, 16
      %v3523 = vrot.slane %v3521, 5
      %v3524 = vsel %vm1026, %v3519, %v3523
      %v3526 = vshrl.u32 %v3204, 16
      %v3528 = vrot.slane %v3526, 4
      %v3529 = vshll.u32 %v3204, 16
      %v3531 = vrot.slane %v3529, 5
      %v3532 = vor.u32 %v3528, %v3531
      %v3533 = vrot.slane %v3532, 4
      %v3535 = vshll.u32 %v3205, 16
      %v3537 = vrot.slane %v3535, 5
      %v3538 = vsel %vm1026, %v3533, %v3537
      %v3539 = vshrl.u32 %v3205, 16
      %v3541 = vrot.slane %v3539, 4
      %v3542 = vor.u32 %v3541, %v3537
      %v3543 = vrot.slane %v3542, 4
      %v3545 = vshll.u32 %v3206, 16
      %v3547 = vrot.slane %v3545, 5
      %v3548 = vsel %vm1026, %v3543, %v3547
      %v3550 = vshrl.u32 %v3207, 16
      %v3552 = vrot.slane %v3550, 4
      %v3553 = vshll.u32 %v3207, 16
      %v3555 = vrot.slane %v3553, 5
      %v3556 = vor.u32 %v3552, %v3555
      %v3557 = vrot.slane %v3556, 4
      %v3559 = vshll.u32 %v3208, 16
      %v3561 = vrot.slane %v3559, 5
      %v3562 = vsel %vm1026, %v3557, %v3561
      %v3563 = vshrl.u32 %v3208, 16
      %v3565 = vrot.slane %v3563, 4
      %v3566 = vor.u32 %v3565, %v3561
      %v3567 = vrot.slane %v3566, 4
      %v3569 = vshll.u32 %v3209, 16
      %v3571 = vrot.slane %v3569, 5
      %v3572 = vsel %vm1026, %v3567, %v3571
      %v3574 = vshrl.u32 %v3210, 16
      %v3576 = vrot.slane %v3574, 4
      %v3577 = vshll.u32 %v3210, 16
      %v3579 = vrot.slane %v3577, 5
      %v3580 = vor.u32 %v3576, %v3579
      %v3581 = vrot.slane %v3580, 4
      %v3583 = vshll.u32 %v3211, 16
      %v3585 = vrot.slane %v3583, 5
      %v3586 = vsel %vm1026, %v3581, %v3585
      %v3587 = vshrl.u32 %v3211, 16
      %v3589 = vrot.slane %v3587, 4
      %v3590 = vor.u32 %v3589, %v3585
      %v3591 = vrot.slane %v3590, 4
      %v3593 = vshll.u32 %v3212, 16
      %v3595 = vrot.slane %v3593, 5
      %v3596 = vsel %vm1026, %v3591, %v3595
      %3597 = vrot.lane.b32.xlu0 %v3226, 28
      %v3598 = vpop.permute.xlu0 %3597
      %3599 = vrot.lane.b32.xlu0 %v3236, 28
      %v3600 = vpop.permute.xlu0 %3599
      %3601 = vrot.lane.b32.xlu0 %v3250, 28
      %v3602 = vpop.permute.xlu0 %3601
      %3603 = vrot.lane.b32.xlu0 %v3260, 28
      %v3604 = vpop.permute.xlu0 %3603
      %3605 = vrot.lane.b32.xlu0 %v3274, 28
      %v3606 = vpop.permute.xlu0 %3605
      %3607 = vrot.lane.b32.xlu0 %v3284, 28
      %v3608 = vpop.permute.xlu0 %3607
      %3609 = vrot.lane.b32.xlu0 %v3298, 28
      %v3610 = vpop.permute.xlu0 %3609
      %3611 = vrot.lane.b32.xlu0 %v3308, 28
      %v3612 = vpop.permute.xlu0 %3611
      %3613 = vrot.lane.b32.xlu0 %v3322, 28
      %v3614 = vpop.permute.xlu0 %3613
      %3615 = vrot.lane.b32.xlu0 %v3332, 28
      %v3616 = vpop.permute.xlu0 %3615
      %3617 = vrot.lane.b32.xlu0 %v3346, 28
      %v3618 = vpop.permute.xlu0 %3617
      %3619 = vrot.lane.b32.xlu0 %v3356, 28
      %v3620 = vpop.permute.xlu0 %3619
      %3621 = vrot.lane.b32.xlu0 %v3370, 28
      %v3622 = vpop.permute.xlu0 %3621
      %3623 = vrot.lane.b32.xlu0 %v3380, 28
      %v3624 = vpop.permute.xlu0 %3623
      %3625 = vrot.lane.b32.xlu0 %v3394, 28
      %v3626 = vpop.permute.xlu0 %3625
      %3627 = vrot.lane.b32.xlu0 %v3404, 28
      %v3628 = vpop.permute.xlu0 %3627
      %3629 = vrot.lane.b32.xlu0 %v3418, 28
      %v3630 = vpop.permute.xlu0 %3629
      %3631 = vrot.lane.b32.xlu0 %v3428, 28
      %v3632 = vpop.permute.xlu0 %3631
      %3633 = vrot.lane.b32.xlu0 %v3442, 28
      %v3634 = vpop.permute.xlu0 %3633
      %3635 = vrot.lane.b32.xlu0 %v3452, 28
      %v3636 = vpop.permute.xlu0 %3635
      %3637 = vrot.lane.b32.xlu0 %v3466, 28
      %v3638 = vpop.permute.xlu0 %3637
      %3639 = vrot.lane.b32.xlu0 %v3476, 28
      %v3640 = vpop.permute.xlu0 %3639
      %3641 = vrot.lane.b32.xlu0 %v3490, 28
      %v3642 = vpop.permute.xlu0 %3641
      %3643 = vrot.lane.b32.xlu0 %v3500, 28
      %v3644 = vpop.permute.xlu0 %3643
      %3645 = vrot.lane.b32.xlu0 %v3514, 28
      %v3646 = vpop.permute.xlu0 %3645
      %3647 = vrot.lane.b32.xlu0 %v3524, 28
      %v3648 = vpop.permute.xlu0 %3647
      %3649 = vrot.lane.b32.xlu0 %v3538, 28
      %v3650 = vpop.permute.xlu0 %3649
      %3651 = vrot.lane.b32.xlu0 %v3548, 28
      %v3652 = vpop.permute.xlu0 %3651
      %3653 = vrot.lane.b32.xlu0 %v3562, 28
      %v3654 = vpop.permute.xlu0 %3653
      %3655 = vrot.lane.b32.xlu0 %v3572, 28
      %v3656 = vpop.permute.xlu0 %3655
      %3657 = vrot.lane.b32.xlu0 %v3586, 28
      %v3658 = vpop.permute.xlu0 %3657
      %3659 = vrot.lane.b32.xlu0 %v3596, 28
      %v3660 = vpop.permute.xlu0 %3659
      %vm3693 = vcmask 257248
      %3694 = vst.msk [vmem:[#allocation3] sm:$0xf] %vm3693, %v3598
      %3695 = vst.msk [vmem:[#allocation3 + $0x4] sm:$0xf] %vm3693, %v3600
      %3696 = vst.msk [vmem:[#allocation3 + $0x8] sm:$0xf] %vm3693, %v3602
      %3697 = vst.msk [vmem:[#allocation3 + $0xc] sm:$0xf] %vm3693, %v3604
      %3698 = vst.msk [vmem:[#allocation3 + $0x10] sm:$0xf] %vm3693, %v3606
      %3699 = vst.msk [vmem:[#allocation3 + $0x14] sm:$0xf] %vm3693, %v3608
      %3700 = vst.msk [vmem:[#allocation3 + $0x18] sm:$0xf] %vm3693, %v3610
      %3701 = vst.msk [vmem:[#allocation3 + $0x1c] sm:$0xf] %vm3693, %v3612
      %3702 = vst.msk [vmem:[#allocation3 + $0x20] sm:$0xf] %vm3693, %v3614
      %3703 = vst.msk [vmem:[#allocation3 + $0x24] sm:$0xf] %vm3693, %v3616
      %3704 = vst.msk [vmem:[#allocation3 + $0x28] sm:$0xf] %vm3693, %v3618
      %3705 = vst.msk [vmem:[#allocation3 + $0x2c] sm:$0xf] %vm3693, %v3620
      %3706 = vst.msk [vmem:[#allocation3 + $0x30] sm:$0xf] %vm3693, %v3622
      %3707 = vst.msk [vmem:[#allocation3 + $0x34] sm:$0xf] %vm3693, %v3624
      %3708 = vst.msk [vmem:[#allocation3 + $0x38] sm:$0xf] %vm3693, %v3626
      %3709 = vst.msk [vmem:[#allocation3 + $0x3c] sm:$0xf] %vm3693, %v3628
      %3710 = vst.msk [vmem:[#allocation3 + $0x40] sm:$0xf] %vm3693, %v3630
      %3711 = vst.msk [vmem:[#allocation3 + $0x44] sm:$0xf] %vm3693, %v3632
      %3712 = vst.msk [vmem:[#allocation3 + $0x48] sm:$0xf] %vm3693, %v3634
      %3713 = vst.msk [vmem:[#allocation3 + $0x4c] sm:$0xf] %vm3693, %v3636
      %3714 = vst.msk [vmem:[#allocation3 + $0x50] sm:$0xf] %vm3693, %v3638
      %3715 = vst.msk [vmem:[#allocation3 + $0x54] sm:$0xf] %vm3693, %v3640
      %3716 = vst.msk [vmem:[#allocation3 + $0x58] sm:$0xf] %vm3693, %v3642
      %3717 = vst.msk [vmem:[#allocation3 + $0x5c] sm:$0xf] %vm3693, %v3644
      %3718 = vst.msk [vmem:[#allocation3 + $0x60] sm:$0xf] %vm3693, %v3646
      %3719 = vst.msk [vmem:[#allocation3 + $0x64] sm:$0xf] %vm3693, %v3648
      %3720 = vst.msk [vmem:[#allocation3 + $0x68] sm:$0xf] %vm3693, %v3650
      %3721 = vst.msk [vmem:[#allocation3 + $0x6c] sm:$0xf] %vm3693, %v3652
      %3722 = vst.msk [vmem:[#allocation3 + $0x70] sm:$0xf] %vm3693, %v3654
      %3723 = vst.msk [vmem:[#allocation3 + $0x74] sm:$0xf] %vm3693, %v3656
      %3724 = vst.msk [vmem:[#allocation3 + $0x78] sm:$0xf] %vm3693, %v3658
      %3725 = vst.msk [vmem:[#allocation3 + $0x7c] sm:$0xf] %vm3693, %v3660
      %v3726 = vld [vmem:[%s2971] sm:$0xe]
      %v3727 = vld [vmem:[%s2971 + $0x4] sm:$0xf]
      %v3728 = vld [vmem:[%s2971 + $0x8] sm:$0x1]
      %v3729 = vld [vmem:[%s2971 + $0xc] sm:$0xe]
      %v3730 = vld [vmem:[%s2971 + $0x10] sm:$0xf]
      %v3731 = vld [vmem:[%s2971 + $0x14] sm:$0x1]
      %v3732 = vld [vmem:[%s2971 + $0x18] sm:$0xe]
      %v3733 = vld [vmem:[%s2971 + $0x1c] sm:$0xf]
      %v3734 = vld [vmem:[%s2971 + $0x20] sm:$0x1]
      %v3735 = vld [vmem:[%s2971 + $0x24] sm:$0xe]
      %v3736 = vld [vmem:[%s2971 + $0x28] sm:$0xf]
      %v3737 = vld [vmem:[%s2971 + $0x2c] sm:$0x1]
      %v3738 = vld [vmem:[%s2971 + $0x30] sm:$0xe]
      %v3739 = vld [vmem:[%s2971 + $0x34] sm:$0xf]
      %v3740 = vld [vmem:[%s2971 + $0x38] sm:$0x1]
      %v3741 = vld [vmem:[%s2971 + $0x3c] sm:$0xe]
      %v3742 = vld [vmem:[%s2971 + $0x40] sm:$0xf]
      %v3743 = vld [vmem:[%s2971 + $0x44] sm:$0x1]
      %v3744 = vld [vmem:[%s2971 + $0x48] sm:$0xe]
      %v3745 = vld [vmem:[%s2971 + $0x4c] sm:$0xf]
      %v3746 = vld [vmem:[%s2971 + $0x50] sm:$0x1]
      %v3747 = vld [vmem:[%s2971 + $0x54] sm:$0xe]
      %v3748 = vld [vmem:[%s2971 + $0x58] sm:$0xf]
      %v3749 = vld [vmem:[%s2971 + $0x5c] sm:$0x1]
      %v3750 = vld [vmem:[%s2971 + $0x60] sm:$0xe]
      %v3751 = vld [vmem:[%s2971 + $0x64] sm:$0xf]
      %v3752 = vld [vmem:[%s2971 + $0x68] sm:$0x1]
      %v3753 = vld [vmem:[%s2971 + $0x6c] sm:$0xe]
      %v3754 = vld [vmem:[%s2971 + $0x70] sm:$0xf]
      %v3755 = vld [vmem:[%s2971 + $0x74] sm:$0x1]
      %v3756 = vld [vmem:[%s2971 + $0x78] sm:$0xe]
      %v3757 = vld [vmem:[%s2971 + $0x7c] sm:$0xf]
      %v3758 = vld [vmem:[%s2971 + $0x80] sm:$0x1]
      %v3759 = vld [vmem:[%s2971 + $0x84] sm:$0xe]
      %v3760 = vld [vmem:[%s2971 + $0x88] sm:$0xf]
      %v3761 = vld [vmem:[%s2971 + $0x8c] sm:$0x1]
      %v3762 = vld [vmem:[%s2971 + $0x90] sm:$0xe]
      %v3763 = vld [vmem:[%s2971 + $0x94] sm:$0xf]
      %v3764 = vld [vmem:[%s2971 + $0x98] sm:$0x1]
      %v3765 = vld [vmem:[%s2971 + $0x9c] sm:$0xe]
      %v3766 = vld [vmem:[%s2971 + $0xa0] sm:$0xf]
      %v3767 = vld [vmem:[%s2971 + $0xa4] sm:$0x1]
      %v3768 = vld [vmem:[%s2971 + $0xa8] sm:$0xe]
      %v3769 = vld [vmem:[%s2971 + $0xac] sm:$0xf]
      %v3770 = vld [vmem:[%s2971 + $0xb0] sm:$0x1]
      %v3771 = vld [vmem:[%s2971 + $0xb4] sm:$0xe]
      %v3772 = vld [vmem:[%s2971 + $0xb8] sm:$0xf]
      %v3773 = vld [vmem:[%s2971 + $0xbc] sm:$0x1]
      %v3822 = vrot.slane %v3726, 5
      %v3823 = vrot.slane %v3822, 4
      %v3824 = vrot.slane %v3727, 5
      %v3825 = vsel %vm1638, %v3823, %v3824
      %v3826 = vrot.slane %v3824, 4
      %v3827 = vrot.slane %v3728, 5
      %v3828 = vsel %vm1638, %v3826, %v3827
      %v3829 = vrot.slane %v3729, 5
      %v3830 = vrot.slane %v3829, 4
      %v3831 = vrot.slane %v3730, 5
      %v3832 = vsel %vm1638, %v3830, %v3831
      %v3833 = vrot.slane %v3831, 4
      %v3834 = vrot.slane %v3731, 5
      %v3835 = vsel %vm1638, %v3833, %v3834
      %v3836 = vrot.slane %v3732, 5
      %v3837 = vrot.slane %v3836, 4
      %v3838 = vrot.slane %v3733, 5
      %v3839 = vsel %vm1638, %v3837, %v3838
      %v3840 = vrot.slane %v3838, 4
      %v3841 = vrot.slane %v3734, 5
      %v3842 = vsel %vm1638, %v3840, %v3841
      %v3843 = vrot.slane %v3735, 5
      %v3844 = vrot.slane %v3843, 4
      %v3845 = vrot.slane %v3736, 5
      %v3846 = vsel %vm1638, %v3844, %v3845
      %v3847 = vrot.slane %v3845, 4
      %v3848 = vrot.slane %v3737, 5
      %v3849 = vsel %vm1638, %v3847, %v3848
      %v3850 = vrot.slane %v3738, 5
      %v3851 = vrot.slane %v3850, 4
      %v3852 = vrot.slane %v3739, 5
      %v3853 = vsel %vm1638, %v3851, %v3852
      %v3854 = vrot.slane %v3852, 4
      %v3855 = vrot.slane %v3740, 5
      %v3856 = vsel %vm1638, %v3854, %v3855
      %v3857 = vrot.slane %v3741, 5
      %v3858 = vrot.slane %v3857, 4
      %v3859 = vrot.slane %v3742, 5
      %v3860 = vsel %vm1638, %v3858, %v3859
      %v3861 = vrot.slane %v3859, 4
      %v3862 = vrot.slane %v3743, 5
      %v3863 = vsel %vm1638, %v3861, %v3862
      %v3864 = vrot.slane %v3744, 5
      %v3865 = vrot.slane %v3864, 4
      %v3866 = vrot.slane %v3745, 5
      %v3867 = vsel %vm1638, %v3865, %v3866
      %v3868 = vrot.slane %v3866, 4
      %v3869 = vrot.slane %v3746, 5
      %v3870 = vsel %vm1638, %v3868, %v3869
      %v3871 = vrot.slane %v3747, 5
      %v3872 = vrot.slane %v3871, 4
      %v3873 = vrot.slane %v3748, 5
      %v3874 = vsel %vm1638, %v3872, %v3873
      %v3875 = vrot.slane %v3873, 4
      %v3876 = vrot.slane %v3749, 5
      %v3877 = vsel %vm1638, %v3875, %v3876
      %v3878 = vrot.slane %v3750, 5
      %v3879 = vrot.slane %v3878, 4
      %v3880 = vrot.slane %v3751, 5
      %v3881 = vsel %vm1638, %v3879, %v3880
      %v3882 = vrot.slane %v3880, 4
      %v3883 = vrot.slane %v3752, 5
      %v3884 = vsel %vm1638, %v3882, %v3883
      %v3885 = vrot.slane %v3753, 5
      %v3886 = vrot.slane %v3885, 4
      %v3887 = vrot.slane %v3754, 5
      %v3888 = vsel %vm1638, %v3886, %v3887
      %v3889 = vrot.slane %v3887, 4
      %v3890 = vrot.slane %v3755, 5
      %v3891 = vsel %vm1638, %v3889, %v3890
      %v3892 = vrot.slane %v3756, 5
      %v3893 = vrot.slane %v3892, 4
      %v3894 = vrot.slane %v3757, 5
      %v3895 = vsel %vm1638, %v3893, %v3894
      %v3896 = vrot.slane %v3894, 4
      %v3897 = vrot.slane %v3758, 5
      %v3898 = vsel %vm1638, %v3896, %v3897
      %v3899 = vrot.slane %v3759, 5
      %v3900 = vrot.slane %v3899, 4
      %v3901 = vrot.slane %v3760, 5
      %v3902 = vsel %vm1638, %v3900, %v3901
      %v3903 = vrot.slane %v3901, 4
      %v3904 = vrot.slane %v3761, 5
      %v3905 = vsel %vm1638, %v3903, %v3904
      %v3906 = vrot.slane %v3762, 5
      %v3907 = vrot.slane %v3906, 4
      %v3908 = vrot.slane %v3763, 5
      %v3909 = vsel %vm1638, %v3907, %v3908
      %v3910 = vrot.slane %v3908, 4
      %v3911 = vrot.slane %v3764, 5
      %v3912 = vsel %vm1638, %v3910, %v3911
      %v3913 = vrot.slane %v3765, 5
      %v3914 = vrot.slane %v3913, 4
      %v3915 = vrot.slane %v3766, 5
      %v3916 = vsel %vm1638, %v3914, %v3915
      %v3917 = vrot.slane %v3915, 4
      %v3918 = vrot.slane %v3767, 5
      %v3919 = vsel %vm1638, %v3917, %v3918
      %v3920 = vrot.slane %v3768, 5
      %v3921 = vrot.slane %v3920, 4
      %v3922 = vrot.slane %v3769, 5
      %v3923 = vsel %vm1638, %v3921, %v3922
      %v3924 = vrot.slane %v3922, 4
      %v3925 = vrot.slane %v3770, 5
      %v3926 = vsel %vm1638, %v3924, %v3925
      %v3927 = vrot.slane %v3771, 5
      %v3928 = vrot.slane %v3927, 4
      %v3929 = vrot.slane %v3772, 5
      %v3930 = vsel %vm1638, %v3928, %v3929
      %v3931 = vrot.slane %v3929, 4
      %v3932 = vrot.slane %v3773, 5
      %v3933 = vsel %vm1638, %v3931, %v3932
      %3934 = vrot.lane.b32.xlu0 %v3825, 32
      %v3935 = vpop.permute.xlu0 %3934
      %3936 = vrot.lane.b32.xlu0 %v3828, 32
      %v3937 = vpop.permute.xlu0 %3936
      %3938 = vrot.lane.b32.xlu0 %v3832, 32
      %v3939 = vpop.permute.xlu0 %3938
      %3940 = vrot.lane.b32.xlu0 %v3835, 32
      %v3941 = vpop.permute.xlu0 %3940
      %3942 = vrot.lane.b32.xlu0 %v3839, 32
      %v3943 = vpop.permute.xlu0 %3942
      %3944 = vrot.lane.b32.xlu0 %v3842, 32
      %v3945 = vpop.permute.xlu0 %3944
      %3946 = vrot.lane.b32.xlu0 %v3846, 32
      %v3947 = vpop.permute.xlu0 %3946
      %3948 = vrot.lane.b32.xlu0 %v3849, 32
      %v3949 = vpop.permute.xlu0 %3948
      %3950 = vrot.lane.b32.xlu0 %v3853, 32
      %v3951 = vpop.permute.xlu0 %3950
      %3952 = vrot.lane.b32.xlu0 %v3856, 32
      %v3953 = vpop.permute.xlu0 %3952
      %3954 = vrot.lane.b32.xlu0 %v3860, 32
      %v3955 = vpop.permute.xlu0 %3954
      %3956 = vrot.lane.b32.xlu0 %v3863, 32
      %v3957 = vpop.permute.xlu0 %3956
      %3958 = vrot.lane.b32.xlu0 %v3867, 32
      %v3959 = vpop.permute.xlu0 %3958
      %3960 = vrot.lane.b32.xlu0 %v3870, 32
      %v3961 = vpop.permute.xlu0 %3960
      %3962 = vrot.lane.b32.xlu0 %v3874, 32
      %v3963 = vpop.permute.xlu0 %3962
      %3964 = vrot.lane.b32.xlu0 %v3877, 32
      %v3965 = vpop.permute.xlu0 %3964
      %3966 = vrot.lane.b32.xlu0 %v3881, 32
      %v3967 = vpop.permute.xlu0 %3966
      %3968 = vrot.lane.b32.xlu0 %v3884, 32
      %v3969 = vpop.permute.xlu0 %3968
      %3970 = vrot.lane.b32.xlu0 %v3888, 32
      %v3971 = vpop.permute.xlu0 %3970
      %3972 = vrot.lane.b32.xlu0 %v3891, 32
      %v3973 = vpop.permute.xlu0 %3972
      %3974 = vrot.lane.b32.xlu0 %v3895, 32
      %v3975 = vpop.permute.xlu0 %3974
      %3976 = vrot.lane.b32.xlu0 %v3898, 32
      %v3977 = vpop.permute.xlu0 %3976
      %3978 = vrot.lane.b32.xlu0 %v3902, 32
      %v3979 = vpop.permute.xlu0 %3978
      %3980 = vrot.lane.b32.xlu0 %v3905, 32
      %v3981 = vpop.permute.xlu0 %3980
      %3982 = vrot.lane.b32.xlu0 %v3909, 32
      %v3983 = vpop.permute.xlu0 %3982
      %3984 = vrot.lane.b32.xlu0 %v3912, 32
      %v3985 = vpop.permute.xlu0 %3984
      %3986 = vrot.lane.b32.xlu0 %v3916, 32
      %v3987 = vpop.permute.xlu0 %3986
      %3988 = vrot.lane.b32.xlu0 %v3919, 32
      %v3989 = vpop.permute.xlu0 %3988
      %3990 = vrot.lane.b32.xlu0 %v3923, 32
      %v3991 = vpop.permute.xlu0 %3990
      %3992 = vrot.lane.b32.xlu0 %v3926, 32
      %v3993 = vpop.permute.xlu0 %3992
      %3994 = vrot.lane.b32.xlu0 %v3930, 32
      %v3995 = vpop.permute.xlu0 %3994
      %3996 = vrot.lane.b32.xlu0 %v3933, 32
      %v3997 = vpop.permute.xlu0 %3996
      %vm4030 = vcmask 290048
      %4031 = vst.msk [vmem:[#allocation3] sm:$0xf] %vm4030, %v3935
      %4032 = vst.msk [vmem:[#allocation3 + $0x4] sm:$0xf] %vm4030, %v3937
      %4033 = vst.msk [vmem:[#allocation3 + $0x8] sm:$0xf] %vm4030, %v3939
      %4034 = vst.msk [vmem:[#allocation3 + $0xc] sm:$0xf] %vm4030, %v3941
      %4035 = vst.msk [vmem:[#allocation3 + $0x10] sm:$0xf] %vm4030, %v3943
      %4036 = vst.msk [vmem:[#allocation3 + $0x14] sm:$0xf] %vm4030, %v3945
      %4037 = vst.msk [vmem:[#allocation3 + $0x18] sm:$0xf] %vm4030, %v3947
      %4038 = vst.msk [vmem:[#allocation3 + $0x1c] sm:$0xf] %vm4030, %v3949
      %4039 = vst.msk [vmem:[#allocation3 + $0x20] sm:$0xf] %vm4030, %v3951
      %4040 = vst.msk [vmem:[#allocation3 + $0x24] sm:$0xf] %vm4030, %v3953
      %4041 = vst.msk [vmem:[#allocation3 + $0x28] sm:$0xf] %vm4030, %v3955
      %4042 = vst.msk [vmem:[#allocation3 + $0x2c] sm:$0xf] %vm4030, %v3957
      %4043 = vst.msk [vmem:[#allocation3 + $0x30] sm:$0xf] %vm4030, %v3959
      %4044 = vst.msk [vmem:[#allocation3 + $0x34] sm:$0xf] %vm4030, %v3961
      %4045 = vst.msk [vmem:[#allocation3 + $0x38] sm:$0xf] %vm4030, %v3963
      %4046 = vst.msk [vmem:[#allocation3 + $0x3c] sm:$0xf] %vm4030, %v3965
      %4047 = vst.msk [vmem:[#allocation3 + $0x40] sm:$0xf] %vm4030, %v3967
      %4048 = vst.msk [vmem:[#allocation3 + $0x44] sm:$0xf] %vm4030, %v3969
      %4049 = vst.msk [vmem:[#allocation3 + $0x48] sm:$0xf] %vm4030, %v3971
      %4050 = vst.msk [vmem:[#allocation3 + $0x4c] sm:$0xf] %vm4030, %v3973
      %4051 = vst.msk [vmem:[#allocation3 + $0x50] sm:$0xf] %vm4030, %v3975
      %4052 = vst.msk [vmem:[#allocation3 + $0x54] sm:$0xf] %vm4030, %v3977
      %4053 = vst.msk [vmem:[#allocation3 + $0x58] sm:$0xf] %vm4030, %v3979
      %4054 = vst.msk [vmem:[#allocation3 + $0x5c] sm:$0xf] %vm4030, %v3981
      %4055 = vst.msk [vmem:[#allocation3 + $0x60] sm:$0xf] %vm4030, %v3983
      %4056 = vst.msk [vmem:[#allocation3 + $0x64] sm:$0xf] %vm4030, %v3985
      %4057 = vst.msk [vmem:[#allocation3 + $0x68] sm:$0xf] %vm4030, %v3987
      %4058 = vst.msk [vmem:[#allocation3 + $0x6c] sm:$0xf] %vm4030, %v3989
      %4059 = vst.msk [vmem:[#allocation3 + $0x70] sm:$0xf] %vm4030, %v3991
      %4060 = vst.msk [vmem:[#allocation3 + $0x74] sm:$0xf] %vm4030, %v3993
      %4061 = vst.msk [vmem:[#allocation3 + $0x78] sm:$0xf] %vm4030, %v3995
      %4062 = vst.msk [vmem:[#allocation3 + $0x7c] sm:$0xf] %vm4030, %v3997
      %v4063 = vld [vmem:[#allocation3] sm:$0xf]
      %v4064 = vld [vmem:[#allocation3 + $0x4] sm:$0xf]
      %v4065 = vld [vmem:[#allocation3 + $0x8] sm:$0xf]
      %v4066 = vld [vmem:[#allocation3 + $0xc] sm:$0xf]
      %v4067 = vld [vmem:[#allocation3 + $0x10] sm:$0xf]
      %v4068 = vld [vmem:[#allocation3 + $0x14] sm:$0xf]
      %v4069 = vld [vmem:[#allocation3 + $0x18] sm:$0xf]
      %v4070 = vld [vmem:[#allocation3 + $0x1c] sm:$0xf]
      %v4071 = vld [vmem:[#allocation3 + $0x20] sm:$0xf]
      %v4072 = vld [vmem:[#allocation3 + $0x24] sm:$0xf]
      %v4073 = vld [vmem:[#allocation3 + $0x28] sm:$0xf]
      %v4074 = vld [vmem:[#allocation3 + $0x2c] sm:$0xf]
      %v4075 = vld [vmem:[#allocation3 + $0x30] sm:$0xf]
      %v4076 = vld [vmem:[#allocation3 + $0x34] sm:$0xf]
      %v4077 = vld [vmem:[#allocation3 + $0x38] sm:$0xf]
      %v4078 = vld [vmem:[#allocation3 + $0x3c] sm:$0xf]
      %v4079 = vld [vmem:[#allocation3 + $0x40] sm:$0xf]
      %v4080 = vld [vmem:[#allocation3 + $0x44] sm:$0xf]
      %v4081 = vld [vmem:[#allocation3 + $0x48] sm:$0xf]
      %v4082 = vld [vmem:[#allocation3 + $0x4c] sm:$0xf]
      %v4083 = vld [vmem:[#allocation3 + $0x50] sm:$0xf]
      %v4084 = vld [vmem:[#allocation3 + $0x54] sm:$0xf]
      %v4085 = vld [vmem:[#allocation3 + $0x58] sm:$0xf]
      %v4086 = vld [vmem:[#allocation3 + $0x5c] sm:$0xf]
      %v4087 = vld [vmem:[#allocation3 + $0x60] sm:$0xf]
      %v4088 = vld [vmem:[#allocation3 + $0x64] sm:$0xf]
      %v4089 = vld [vmem:[#allocation3 + $0x68] sm:$0xf]
      %v4090 = vld [vmem:[#allocation3 + $0x6c] sm:$0xf]
      %v4091 = vld [vmem:[#allocation3 + $0x70] sm:$0xf]
      %v4092 = vld [vmem:[#allocation3 + $0x74] sm:$0xf]
      %v4093 = vld [vmem:[#allocation3 + $0x78] sm:$0xf]
      %v4094 = vld [vmem:[#allocation3 + $0x7c] sm:$0xf]
      %v4095 = vld [vmem:[%s1] sm:$0xf]
      %v4096 = vld [vmem:[%s1 + $0x4] sm:$0xf]
      %v4097 = vld [vmem:[%s1 + $0x8] sm:$0xf]
      %v4098 = vld [vmem:[%s1 + $0xc] sm:$0xf]
      %v4099 = vld [vmem:[%s1 + $0x10] sm:$0x3]
      %v4100 = vld [vmem:[%s2] sm:$0x1]
      %v4102 = vperm.slane %v4100, 0
      %v4136 = vunpack.c.l.b16 %v4063
      %v4137 = vunpack.c.l.b16 %v4064
      %v4138 = vunpack.c.l.b16 %v4065
      %v4139 = vunpack.c.l.b16 %v4066
      %v4140 = vunpack.c.l.b16 %v4067
      %v4141 = vunpack.c.l.b16 %v4068
      %v4142 = vunpack.c.l.b16 %v4069
      %v4143 = vunpack.c.l.b16 %v4070
      %v4144 = vunpack.c.l.b16 %v4071
      %v4145 = vunpack.c.l.b16 %v4072
      %v4146 = vunpack.c.l.b16 %v4073
      %v4147 = vunpack.c.l.b16 %v4074
      %v4148 = vunpack.c.l.b16 %v4075
      %v4149 = vunpack.c.l.b16 %v4076
      %v4150 = vunpack.c.l.b16 %v4077
      %v4151 = vunpack.c.l.b16 %v4078
      %v4152 = vunpack.c.l.b16 %v4079
      %v4153 = vunpack.c.l.b16 %v4080
      %v4154 = vunpack.c.l.b16 %v4081
      %v4155 = vunpack.c.l.b16 %v4082
      %v4156 = vunpack.c.l.b16 %v4083
      %v4157 = vunpack.c.l.b16 %v4084
      %v4158 = vunpack.c.l.b16 %v4085
      %v4159 = vunpack.c.l.b16 %v4086
      %v4160 = vunpack.c.l.b16 %v4087
      %v4161 = vunpack.c.l.b16 %v4088
      %v4162 = vunpack.c.l.b16 %v4089
      %v4163 = vunpack.c.l.b16 %v4090
      %v4164 = vunpack.c.l.b16 %v4091
      %v4165 = vunpack.c.l.b16 %v4092
      %v4166 = vunpack.c.l.b16 %v4093
      %v4167 = vunpack.c.l.b16 %v4094
      %v4168 = vpack.c.b16 %v4137, %v4136
      %v4169 = vpack.c.b16 %v4139, %v4138
      %v4170 = vpack.c.b16 %v4141, %v4140
      %v4171 = vpack.c.b16 %v4143, %v4142
      %v4172 = vpack.c.b16 %v4145, %v4144
      %v4173 = vpack.c.b16 %v4147, %v4146
      %v4174 = vpack.c.b16 %v4149, %v4148
      %v4175 = vpack.c.b16 %v4151, %v4150
      %v4176 = vpack.c.b16 %v4153, %v4152
      %v4177 = vpack.c.b16 %v4155, %v4154
      %v4178 = vpack.c.b16 %v4157, %v4156
      %v4179 = vpack.c.b16 %v4159, %v4158
      %v4180 = vpack.c.b16 %v4161, %v4160
      %v4181 = vpack.c.b16 %v4163, %v4162
      %v4182 = vpack.c.b16 %v4165, %v4164
      %v4183 = vpack.c.b16 %v4167, %v4166
      %v4189 = vunpack.c.l.b16 %v4095
      %v4190 = vunpack.c.l.b16 %v4096
      %v4191 = vunpack.c.l.b16 %v4097
      %v4192 = vunpack.c.l.b16 %v4098
      %v4193 = vunpack.c.l.b16 %v4099
      %v4194 = vpack.c.b16 %v4190, %v4189
      %v4195 = vpack.c.b16 %v4192, %v4191
      %v4196 = vpack.c.b16 %v4193, %v4193
      %vm4199 = vcmask 293888
      %v4201 = vsel %vm4199, %v4168, 0
      %v4204 = vsel %vm4199, %v4169, 0
      %v4207 = vsel %vm4199, %v4170, 0
      %v4210 = vsel %vm4199, %v4171, 0
      %v4213 = vsel %vm4199, %v4172, 0
      %v4216 = vsel %vm4199, %v4173, 0
      %v4219 = vsel %vm4199, %v4174, 0
      %v4222 = vsel %vm4199, %v4175, 0
      %v4225 = vsel %vm4199, %v4176, 0
      %v4228 = vsel %vm4199, %v4177, 0
      %v4231 = vsel %vm4199, %v4178, 0
      %v4234 = vsel %vm4199, %v4179, 0
      %v4237 = vsel %vm4199, %v4180, 0
      %v4240 = vsel %vm4199, %v4181, 0
      %v4243 = vsel %vm4199, %v4182, 0
      %v4246 = vsel %vm4199, %v4183, 0
      %vm4248 = vcmask 1041408
      %v4250 = vsel %vm4248, %v4196, 0
      %4252 = vmatpush.bf16.msra.mxu0 0
      %4253 = vmatpush.bf16.msra.mxu0 0
      %4254 = vmatpush.bf16.msra.mxu0 0
      %4255 = vmatpush.bf16.msra.mxu0 0
      %4256 = vmatpush.bf16.msra.mxu0 0
      %4257 = vmatpush.bf16.msra.mxu0 %v4250
      %4258 = vmatpush.bf16.msra.mxu0 %v4195
      %4259 = vmatpush.bf16.msra.mxu0 %v4194
      %4260 = vmatmul.bf16.gmra.mxu0 %v4201
      %v4261 = vpop.f32.mrf.mxu0
      %v4262 = vadd.f32 %v4102, %v4261
      %v4263 = vpop.f32.mrf.mxu0
      %v4264 = vadd.f32 %v4102, %v4263
      %4265 = vmatmul.bf16.gmra.mxu0 %v4204
      %v4266 = vpop.f32.mrf.mxu0
      %v4267 = vadd.f32 %v4102, %v4266
      %v4268 = vpop.f32.mrf.mxu0
      %v4269 = vadd.f32 %v4102, %v4268
      %4270 = vmatmul.bf16.gmra.mxu0 %v4207
      %v4271 = vpop.f32.mrf.mxu0
      %v4272 = vadd.f32 %v4102, %v4271
      %v4273 = vpop.f32.mrf.mxu0
      %v4274 = vadd.f32 %v4102, %v4273
      %4275 = vmatmul.bf16.gmra.mxu0 %v4210
      %v4276 = vpop.f32.mrf.mxu0
      %v4277 = vadd.f32 %v4102, %v4276
      %v4278 = vpop.f32.mrf.mxu0
      %v4279 = vadd.f32 %v4102, %v4278
      %4280 = vmatmul.bf16.gmra.mxu0 %v4213
      %v4281 = vpop.f32.mrf.mxu0
      %v4282 = vadd.f32 %v4102, %v4281
      %v4283 = vpop.f32.mrf.mxu0
      %v4284 = vadd.f32 %v4102, %v4283
      %4285 = vmatmul.bf16.gmra.mxu0 %v4216
      %v4286 = vpop.f32.mrf.mxu0
      %v4287 = vadd.f32 %v4102, %v4286
      %v4288 = vpop.f32.mrf.mxu0
      %v4289 = vadd.f32 %v4102, %v4288
      %4290 = vmatmul.bf16.gmra.mxu0 %v4219
      %v4291 = vpop.f32.mrf.mxu0
      %v4292 = vadd.f32 %v4102, %v4291
      %v4293 = vpop.f32.mrf.mxu0
      %v4294 = vadd.f32 %v4102, %v4293
      %4295 = vmatmul.bf16.gmra.mxu0 %v4222
      %v4296 = vpop.f32.mrf.mxu0
      %v4297 = vadd.f32 %v4102, %v4296
      %v4298 = vpop.f32.mrf.mxu0
      %v4299 = vadd.f32 %v4102, %v4298
      %4300 = vmatmul.bf16.gmra.mxu0 %v4225
      %v4301 = vpop.f32.mrf.mxu0
      %v4302 = vadd.f32 %v4102, %v4301
      %v4303 = vpop.f32.mrf.mxu0
      %v4304 = vadd.f32 %v4102, %v4303
      %4305 = vmatmul.bf16.gmra.mxu0 %v4228
      %v4306 = vpop.f32.mrf.mxu0
      %v4307 = vadd.f32 %v4102, %v4306
      %v4308 = vpop.f32.mrf.mxu0
      %v4309 = vadd.f32 %v4102, %v4308
      %4310 = vmatmul.bf16.gmra.mxu0 %v4231
      %v4311 = vpop.f32.mrf.mxu0
      %v4312 = vadd.f32 %v4102, %v4311
      %v4313 = vpop.f32.mrf.mxu0
      %v4314 = vadd.f32 %v4102, %v4313
      %4315 = vmatmul.bf16.gmra.mxu0 %v4234
      %v4316 = vpop.f32.mrf.mxu0
      %v4317 = vadd.f32 %v4102, %v4316
      %v4318 = vpop.f32.mrf.mxu0
      %v4319 = vadd.f32 %v4102, %v4318
      %4320 = vmatmul.bf16.gmra.mxu0 %v4237
      %v4321 = vpop.f32.mrf.mxu0
      %v4322 = vadd.f32 %v4102, %v4321
      %v4323 = vpop.f32.mrf.mxu0
      %v4324 = vadd.f32 %v4102, %v4323
      %4325 = vmatmul.bf16.gmra.mxu0 %v4240
      %v4326 = vpop.f32.mrf.mxu0
      %v4327 = vadd.f32 %v4102, %v4326
      %v4328 = vpop.f32.mrf.mxu0
      %v4329 = vadd.f32 %v4102, %v4328
      %4330 = vmatmul.bf16.gmra.mxu0 %v4243
      %v4331 = vpop.f32.mrf.mxu0
      %v4332 = vadd.f32 %v4102, %v4331
      %v4333 = vpop.f32.mrf.mxu0
      %v4334 = vadd.f32 %v4102, %v4333
      %4335 = vmatmul.bf16.gmra.mxu0 %v4246
      %v4336 = vpop.f32.mrf.mxu0
      %v4337 = vadd.f32 %v4102, %v4336
      %v4338 = vpop.f32.mrf.mxu0
      %v4339 = vadd.f32 %v4102, %v4338
      %4340 = vdwg.mxu0
      %v4341 = vmax.f32 %v4262, 0.0
      %v4342 = vmax.f32 %v4264, 0.0
      %v4343 = vmax.f32 %v4267, 0.0
      %v4344 = vmax.f32 %v4269, 0.0
      %v4345 = vmax.f32 %v4272, 0.0
      %v4346 = vmax.f32 %v4274, 0.0
      %v4347 = vmax.f32 %v4277, 0.0
      %v4348 = vmax.f32 %v4279, 0.0
      %v4349 = vmax.f32 %v4282, 0.0
      %v4350 = vmax.f32 %v4284, 0.0
      %v4351 = vmax.f32 %v4287, 0.0
      %v4352 = vmax.f32 %v4289, 0.0
      %v4353 = vmax.f32 %v4292, 0.0
      %v4354 = vmax.f32 %v4294, 0.0
      %v4355 = vmax.f32 %v4297, 0.0
      %v4356 = vmax.f32 %v4299, 0.0
      %v4357 = vmax.f32 %v4302, 0.0
      %v4358 = vmax.f32 %v4304, 0.0
      %v4359 = vmax.f32 %v4307, 0.0
      %v4360 = vmax.f32 %v4309, 0.0
      %v4361 = vmax.f32 %v4312, 0.0
      %v4362 = vmax.f32 %v4314, 0.0
      %v4363 = vmax.f32 %v4317, 0.0
      %v4364 = vmax.f32 %v4319, 0.0
      %v4365 = vmax.f32 %v4322, 0.0
      %v4366 = vmax.f32 %v4324, 0.0
      %v4367 = vmax.f32 %v4327, 0.0
      %v4368 = vmax.f32 %v4329, 0.0
      %v4369 = vmax.f32 %v4332, 0.0
      %v4370 = vmax.f32 %v4334, 0.0
      %v4371 = vmax.f32 %v4337, 0.0
      %v4372 = vmax.f32 %v4339, 0.0
      %v4373 = vpack.c.bf16 %v4341, %v4341
      %v4374 = vpack.c.bf16 %v4342, %v4342
      %v4375 = vpack.c.bf16 %v4343, %v4343
      %v4376 = vpack.c.bf16 %v4344, %v4344
      %v4377 = vpack.c.bf16 %v4345, %v4345
      %v4378 = vpack.c.bf16 %v4346, %v4346
      %v4379 = vpack.c.bf16 %v4347, %v4347
      %v4380 = vpack.c.bf16 %v4348, %v4348
      %v4381 = vpack.c.bf16 %v4349, %v4349
      %v4382 = vpack.c.bf16 %v4350, %v4350
      %v4383 = vpack.c.bf16 %v4351, %v4351
      %v4384 = vpack.c.bf16 %v4352, %v4352
      %v4385 = vpack.c.bf16 %v4353, %v4353
      %v4386 = vpack.c.bf16 %v4354, %v4354
      %v4387 = vpack.c.bf16 %v4355, %v4355
      %v4388 = vpack.c.bf16 %v4356, %v4356
      %v4389 = vpack.c.bf16 %v4357, %v4357
      %v4390 = vpack.c.bf16 %v4358, %v4358
      %v4391 = vpack.c.bf16 %v4359, %v4359
      %v4392 = vpack.c.bf16 %v4360, %v4360
      %v4393 = vpack.c.bf16 %v4361, %v4361
      %v4394 = vpack.c.bf16 %v4362, %v4362
      %v4395 = vpack.c.bf16 %v4363, %v4363
      %v4396 = vpack.c.bf16 %v4364, %v4364
      %v4397 = vpack.c.bf16 %v4365, %v4365
      %v4398 = vpack.c.bf16 %v4366, %v4366
      %v4399 = vpack.c.bf16 %v4367, %v4367
      %v4400 = vpack.c.bf16 %v4368, %v4368
      %v4401 = vpack.c.bf16 %v4369, %v4369
      %v4402 = vpack.c.bf16 %v4370, %v4370
      %v4403 = vpack.c.bf16 %v4371, %v4371
      %v4404 = vpack.c.bf16 %v4372, %v4372
      %v4406 = vshrl.u32 %v4373, 16
      %v4408 = vrot.slane %v4406, 7
      %v4409 = vshll.u32 %v4373, 16
      %v4411 = vor.u32 %v4408, %v4409
      %v4412 = vrot.slane %v4408, 4
      %v4414 = vshrl.u32 %v4374, 16
      %v4416 = vrot.slane %v4414, 7
      %v4417 = vshll.u32 %v4374, 16
      %v4419 = vor.u32 %v4416, %v4417
      %v4420 = vsel %vm477, %v4412, %v4419
      %v4421 = vrot.slane %v4416, 4
      %v4423 = vshrl.u32 %v4375, 16
      %v4425 = vrot.slane %v4423, 7
      %v4426 = vshll.u32 %v4375, 16
      %v4428 = vor.u32 %v4425, %v4426
      %v4429 = vrot.slane %v4425, 4
      %v4431 = vshrl.u32 %v4376, 16
      %v4433 = vrot.slane %v4431, 7
      %v4434 = vshll.u32 %v4376, 16
      %v4436 = vor.u32 %v4433, %v4434
      %v4437 = vsel %vm477, %v4429, %v4436
      %v4438 = vrot.slane %v4433, 4
      %v4440 = vshrl.u32 %v4377, 16
      %v4442 = vrot.slane %v4440, 7
      %v4443 = vshll.u32 %v4377, 16
      %v4445 = vor.u32 %v4442, %v4443
      %v4446 = vrot.slane %v4442, 4
      %v4448 = vshrl.u32 %v4378, 16
      %v4450 = vrot.slane %v4448, 7
      %v4451 = vshll.u32 %v4378, 16
      %v4453 = vor.u32 %v4450, %v4451
      %v4454 = vsel %vm477, %v4446, %v4453
      %v4455 = vrot.slane %v4450, 4
      %v4457 = vshrl.u32 %v4379, 16
      %v4459 = vrot.slane %v4457, 7
      %v4460 = vshll.u32 %v4379, 16
      %v4462 = vor.u32 %v4459, %v4460
      %v4463 = vrot.slane %v4459, 4
      %v4465 = vshrl.u32 %v4380, 16
      %v4467 = vrot.slane %v4465, 7
      %v4468 = vshll.u32 %v4380, 16
      %v4470 = vor.u32 %v4467, %v4468
      %v4471 = vsel %vm477, %v4463, %v4470
      %v4472 = vrot.slane %v4467, 4
      %v4474 = vshrl.u32 %v4381, 16
      %v4476 = vrot.slane %v4474, 7
      %v4477 = vshll.u32 %v4381, 16
      %v4479 = vor.u32 %v4476, %v4477
      %v4480 = vrot.slane %v4476, 4
      %v4482 = vshrl.u32 %v4382, 16
      %v4484 = vrot.slane %v4482, 7
      %v4485 = vshll.u32 %v4382, 16
      %v4487 = vor.u32 %v4484, %v4485
      %v4488 = vsel %vm477, %v4480, %v4487
      %v4489 = vrot.slane %v4484, 4
      %v4491 = vshrl.u32 %v4383, 16
      %v4493 = vrot.slane %v4491, 7
      %v4494 = vshll.u32 %v4383, 16
      %v4496 = vor.u32 %v4493, %v4494
      %v4497 = vrot.slane %v4493, 4
      %v4499 = vshrl.u32 %v4384, 16
      %v4501 = vrot.slane %v4499, 7
      %v4502 = vshll.u32 %v4384, 16
      %v4504 = vor.u32 %v4501, %v4502
      %v4505 = vsel %vm477, %v4497, %v4504
      %v4506 = vrot.slane %v4501, 4
      %v4508 = vshrl.u32 %v4385, 16
      %v4510 = vrot.slane %v4508, 7
      %v4511 = vshll.u32 %v4385, 16
      %v4513 = vor.u32 %v4510, %v4511
      %v4514 = vrot.slane %v4510, 4
      %v4516 = vshrl.u32 %v4386, 16
      %v4518 = vrot.slane %v4516, 7
      %v4519 = vshll.u32 %v4386, 16
      %v4521 = vor.u32 %v4518, %v4519
      %v4522 = vsel %vm477, %v4514, %v4521
      %v4523 = vrot.slane %v4518, 4
      %v4525 = vshrl.u32 %v4387, 16
      %v4527 = vrot.slane %v4525, 7
      %v4528 = vshll.u32 %v4387, 16
      %v4530 = vor.u32 %v4527, %v4528
      %v4531 = vrot.slane %v4527, 4
      %v4533 = vshrl.u32 %v4388, 16
      %v4535 = vrot.slane %v4533, 7
      %v4536 = vshll.u32 %v4388, 16
      %v4538 = vor.u32 %v4535, %v4536
      %v4539 = vsel %vm477, %v4531, %v4538
      %v4540 = vrot.slane %v4535, 4
      %v4542 = vshrl.u32 %v4389, 16
      %v4544 = vrot.slane %v4542, 7
      %v4545 = vshll.u32 %v4389, 16
      %v4547 = vor.u32 %v4544, %v4545
      %v4548 = vrot.slane %v4544, 4
      %v4550 = vshrl.u32 %v4390, 16
      %v4552 = vrot.slane %v4550, 7
      %v4553 = vshll.u32 %v4390, 16
      %v4555 = vor.u32 %v4552, %v4553
      %v4556 = vsel %vm477, %v4548, %v4555
      %v4557 = vrot.slane %v4552, 4
      %v4559 = vshrl.u32 %v4391, 16
      %v4561 = vrot.slane %v4559, 7
      %v4562 = vshll.u32 %v4391, 16
      %v4564 = vor.u32 %v4561, %v4562
      %v4565 = vrot.slane %v4561, 4
      %v4567 = vshrl.u32 %v4392, 16
      %v4569 = vrot.slane %v4567, 7
      %v4570 = vshll.u32 %v4392, 16
      %v4572 = vor.u32 %v4569, %v4570
      %v4573 = vsel %vm477, %v4565, %v4572
      %v4574 = vrot.slane %v4569, 4
      %v4576 = vshrl.u32 %v4393, 16
      %v4578 = vrot.slane %v4576, 7
      %v4579 = vshll.u32 %v4393, 16
      %v4581 = vor.u32 %v4578, %v4579
      %v4582 = vrot.slane %v4578, 4
      %v4584 = vshrl.u32 %v4394, 16
      %v4586 = vrot.slane %v4584, 7
      %v4587 = vshll.u32 %v4394, 16
      %v4589 = vor.u32 %v4586, %v4587
      %v4590 = vsel %vm477, %v4582, %v4589
      %v4591 = vrot.slane %v4586, 4
      %v4593 = vshrl.u32 %v4395, 16
      %v4595 = vrot.slane %v4593, 7
      %v4596 = vshll.u32 %v4395, 16
      %v4598 = vor.u32 %v4595, %v4596
      %v4599 = vrot.slane %v4595, 4
      %v4601 = vshrl.u32 %v4396, 16
      %v4603 = vrot.slane %v4601, 7
      %v4604 = vshll.u32 %v4396, 16
      %v4606 = vor.u32 %v4603, %v4604
      %v4607 = vsel %vm477, %v4599, %v4606
      %v4608 = vrot.slane %v4603, 4
      %v4610 = vshrl.u32 %v4397, 16
      %v4612 = vrot.slane %v4610, 7
      %v4613 = vshll.u32 %v4397, 16
      %v4615 = vor.u32 %v4612, %v4613
      %v4616 = vrot.slane %v4612, 4
      %v4618 = vshrl.u32 %v4398, 16
      %v4620 = vrot.slane %v4618, 7
      %v4621 = vshll.u32 %v4398, 16
      %v4623 = vor.u32 %v4620, %v4621
      %v4624 = vsel %vm477, %v4616, %v4623
      %v4625 = vrot.slane %v4620, 4
      %v4627 = vshrl.u32 %v4399, 16
      %v4629 = vrot.slane %v4627, 7
      %v4630 = vshll.u32 %v4399, 16
      %v4632 = vor.u32 %v4629, %v4630
      %v4633 = vrot.slane %v4629, 4
      %v4635 = vshrl.u32 %v4400, 16
      %v4637 = vrot.slane %v4635, 7
      %v4638 = vshll.u32 %v4400, 16
      %v4640 = vor.u32 %v4637, %v4638
      %v4641 = vsel %vm477, %v4633, %v4640
      %v4642 = vrot.slane %v4637, 4
      %v4644 = vshrl.u32 %v4401, 16
      %v4646 = vrot.slane %v4644, 7
      %v4647 = vshll.u32 %v4401, 16
      %v4649 = vor.u32 %v4646, %v4647
      %v4650 = vrot.slane %v4646, 4
      %v4652 = vshrl.u32 %v4402, 16
      %v4654 = vrot.slane %v4652, 7
      %v4655 = vshll.u32 %v4402, 16
      %v4657 = vor.u32 %v4654, %v4655
      %v4658 = vsel %vm477, %v4650, %v4657
      %v4659 = vrot.slane %v4654, 4
      %v4661 = vshrl.u32 %v4403, 16
      %v4663 = vrot.slane %v4661, 7
      %v4664 = vshll.u32 %v4403, 16
      %v4666 = vor.u32 %v4663, %v4664
      %v4667 = vrot.slane %v4663, 4
      %v4669 = vshrl.u32 %v4404, 16
      %v4671 = vrot.slane %v4669, 7
      %v4672 = vshll.u32 %v4404, 16
      %v4674 = vor.u32 %v4671, %v4672
      %v4675 = vsel %vm477, %v4667, %v4674
      %v4676 = vrot.slane %v4671, 4
      %vm4725 = vcmask 60416
      %vm4726 = vmand %vm4725, %vm286
      %v4727 = vld [vmem:[%s344] sm:$0xf]
      %v4728 = vsel %vm4726, %v4411, %v4727
      %4729 = vst [vmem:[%s344] sm:$0xf] %v4728
      %4730 = vst.msk [vmem:[%s344 + $0x4] sm:$0xf] %vm336, %v4420
      %v4731 = vld [vmem:[%s344 + $0x8] sm:$0x1]
      %v4732 = vsel %vm346, %v4421, %v4731
      %4733 = vst [vmem:[%s344 + $0x8] sm:$0x1] %v4732
      %v4734 = vld [vmem:[%s344 + $0xc] sm:$0xf]
      %v4735 = vsel %vm4726, %v4428, %v4734
      %4736 = vst [vmem:[%s344 + $0xc] sm:$0xf] %v4735
      %4737 = vst.msk [vmem:[%s344 + $0x10] sm:$0xf] %vm336, %v4437
      %v4738 = vld [vmem:[%s344 + $0x14] sm:$0x1]
      %v4739 = vsel %vm346, %v4438, %v4738
      %4740 = vst [vmem:[%s344 + $0x14] sm:$0x1] %v4739
      %v4741 = vld [vmem:[%s344 + $0x18] sm:$0xf]
      %v4742 = vsel %vm4726, %v4445, %v4741
      %4743 = vst [vmem:[%s344 + $0x18] sm:$0xf] %v4742
      %4744 = vst.msk [vmem:[%s344 + $0x1c] sm:$0xf] %vm336, %v4454
      %v4745 = vld [vmem:[%s344 + $0x20] sm:$0x1]
      %v4746 = vsel %vm346, %v4455, %v4745
      %4747 = vst [vmem:[%s344 + $0x20] sm:$0x1] %v4746
      %v4748 = vld [vmem:[%s344 + $0x24] sm:$0xf]
      %v4749 = vsel %vm4726, %v4462, %v4748
      %4750 = vst [vmem:[%s344 + $0x24] sm:$0xf] %v4749
      %4751 = vst.msk [vmem:[%s344 + $0x28] sm:$0xf] %vm336, %v4471
      %v4752 = vld [vmem:[%s344 + $0x2c] sm:$0x1]
      %v4753 = vsel %vm346, %v4472, %v4752
      %4754 = vst [vmem:[%s344 + $0x2c] sm:$0x1] %v4753
      %v4755 = vld [vmem:[%s344 + $0x30] sm:$0xf]
      %v4756 = vsel %vm4726, %v4479, %v4755
      %4757 = vst [vmem:[%s344 + $0x30] sm:$0xf] %v4756
      %4758 = vst.msk [vmem:[%s344 + $0x34] sm:$0xf] %vm336, %v4488
      %v4759 = vld [vmem:[%s344 + $0x38] sm:$0x1]
      %v4760 = vsel %vm346, %v4489, %v4759
      %4761 = vst [vmem:[%s344 + $0x38] sm:$0x1] %v4760
      %v4762 = vld [vmem:[%s344 + $0x3c] sm:$0xf]
      %v4763 = vsel %vm4726, %v4496, %v4762
      %4764 = vst [vmem:[%s344 + $0x3c] sm:$0xf] %v4763
      %4765 = vst.msk [vmem:[%s344 + $0x40] sm:$0xf] %vm336, %v4505
      %v4766 = vld [vmem:[%s344 + $0x44] sm:$0x1]
      %v4767 = vsel %vm346, %v4506, %v4766
      %4768 = vst [vmem:[%s344 + $0x44] sm:$0x1] %v4767
      %v4769 = vld [vmem:[%s344 + $0x48] sm:$0xf]
      %v4770 = vsel %vm4726, %v4513, %v4769
      %4771 = vst [vmem:[%s344 + $0x48] sm:$0xf] %v4770
      %4772 = vst.msk [vmem:[%s344 + $0x4c] sm:$0xf] %vm336, %v4522
      %v4773 = vld [vmem:[%s344 + $0x50] sm:$0x1]
      %v4774 = vsel %vm346, %v4523, %v4773
      %4775 = vst [vmem:[%s344 + $0x50] sm:$0x1] %v4774
      %v4776 = vld [vmem:[%s344 + $0x54] sm:$0xf]
      %v4777 = vsel %vm4726, %v4530, %v4776
      %4778 = vst [vmem:[%s344 + $0x54] sm:$0xf] %v4777
      %4779 = vst.msk [vmem:[%s344 + $0x58] sm:$0xf] %vm336, %v4539
      %v4780 = vld [vmem:[%s344 + $0x5c] sm:$0x1]
      %v4781 = vsel %vm346, %v4540, %v4780
      %4782 = vst [vmem:[%s344 + $0x5c] sm:$0x1] %v4781
      %v4783 = vld [vmem:[%s344 + $0x60] sm:$0xf]
      %v4784 = vsel %vm4726, %v4547, %v4783
      %4785 = vst [vmem:[%s344 + $0x60] sm:$0xf] %v4784
      %4786 = vst.msk [vmem:[%s344 + $0x64] sm:$0xf] %vm336, %v4556
      %v4787 = vld [vmem:[%s344 + $0x68] sm:$0x1]
      %v4788 = vsel %vm346, %v4557, %v4787
      %4789 = vst [vmem:[%s344 + $0x68] sm:$0x1] %v4788
      %v4790 = vld [vmem:[%s344 + $0x6c] sm:$0xf]
      %v4791 = vsel %vm4726, %v4564, %v4790
      %4792 = vst [vmem:[%s344 + $0x6c] sm:$0xf] %v4791
      %4793 = vst.msk [vmem:[%s344 + $0x70] sm:$0xf] %vm336, %v4573
      %v4794 = vld [vmem:[%s344 + $0x74] sm:$0x1]
      %v4795 = vsel %vm346, %v4574, %v4794
      %4796 = vst [vmem:[%s344 + $0x74] sm:$0x1] %v4795
      %v4797 = vld [vmem:[%s344 + $0x78] sm:$0xf]
      %v4798 = vsel %vm4726, %v4581, %v4797
      %4799 = vst [vmem:[%s344 + $0x78] sm:$0xf] %v4798
      %4800 = vst.msk [vmem:[%s344 + $0x7c] sm:$0xf] %vm336, %v4590
      %v4801 = vld [vmem:[%s344 + $0x80] sm:$0x1]
      %v4802 = vsel %vm346, %v4591, %v4801
      %4803 = vst [vmem:[%s344 + $0x80] sm:$0x1] %v4802
      %v4804 = vld [vmem:[%s344 + $0x84] sm:$0xf]
      %v4805 = vsel %vm4726, %v4598, %v4804
      %4806 = vst [vmem:[%s344 + $0x84] sm:$0xf] %v4805
      %4807 = vst.msk [vmem:[%s344 + $0x88] sm:$0xf] %vm336, %v4607
      %v4808 = vld [vmem:[%s344 + $0x8c] sm:$0x1]
      %v4809 = vsel %vm346, %v4608, %v4808
      %4810 = vst [vmem:[%s344 + $0x8c] sm:$0x1] %v4809
      %v4811 = vld [vmem:[%s344 + $0x90] sm:$0xf]
      %v4812 = vsel %vm4726, %v4615, %v4811
      %4813 = vst [vmem:[%s344 + $0x90] sm:$0xf] %v4812
      %4814 = vst.msk [vmem:[%s344 + $0x94] sm:$0xf] %vm336, %v4624
      %v4815 = vld [vmem:[%s344 + $0x98] sm:$0x1]
      %v4816 = vsel %vm346, %v4625, %v4815
      %4817 = vst [vmem:[%s344 + $0x98] sm:$0x1] %v4816
      %v4818 = vld [vmem:[%s344 + $0x9c] sm:$0xf]
      %v4819 = vsel %vm4726, %v4632, %v4818
      %4820 = vst [vmem:[%s344 + $0x9c] sm:$0xf] %v4819
      %4821 = vst.msk [vmem:[%s344 + $0xa0] sm:$0xf] %vm336, %v4641
      %v4822 = vld [vmem:[%s344 + $0xa4] sm:$0x1]
      %v4823 = vsel %vm346, %v4642, %v4822
      %4824 = vst [vmem:[%s344 + $0xa4] sm:$0x1] %v4823
      %v4825 = vld [vmem:[%s344 + $0xa8] sm:$0xf]
      %v4826 = vsel %vm4726, %v4649, %v4825
      %4827 = vst [vmem:[%s344 + $0xa8] sm:$0xf] %v4826
      %4828 = vst.msk [vmem:[%s344 + $0xac] sm:$0xf] %vm336, %v4658
      %v4829 = vld [vmem:[%s344 + $0xb0] sm:$0x1]
      %v4830 = vsel %vm346, %v4659, %v4829
      %4831 = vst [vmem:[%s344 + $0xb0] sm:$0x1] %v4830
      %v4832 = vld [vmem:[%s344 + $0xb4] sm:$0xf]
      %v4833 = vsel %vm4726, %v4666, %v4832
      %4834 = vst [vmem:[%s344 + $0xb4] sm:$0xf] %v4833
      %4835 = vst.msk [vmem:[%s344 + $0xb8] sm:$0xf] %vm336, %v4675
      %v4836 = vld [vmem:[%s344 + $0xbc] sm:$0x1]
      %v4837 = vsel %vm346, %v4676, %v4836
      %4838 = vst [vmem:[%s344 + $0xbc] sm:$0x1] %v4837
      %v4839 = vld [vmem:[#allocation4] sm:$0xf]
      %v4840 = vld [vmem:[#allocation4 + $0x4] sm:$0xf]
      %v4841 = vld [vmem:[#allocation4 + $0xc] sm:$0xf]
      %v4842 = vld [vmem:[#allocation4 + $0x10] sm:$0xf]
      %v4843 = vld [vmem:[#allocation4 + $0x18] sm:$0xf]
      %v4844 = vld [vmem:[#allocation4 + $0x1c] sm:$0xf]
      %v4845 = vld [vmem:[#allocation4 + $0x24] sm:$0xf]
      %v4846 = vld [vmem:[#allocation4 + $0x28] sm:$0xf]
      %v4847 = vld [vmem:[#allocation4 + $0x30] sm:$0xf]
      %v4848 = vld [vmem:[#allocation4 + $0x34] sm:$0xf]
      %v4849 = vld [vmem:[#allocation4 + $0x3c] sm:$0xf]
      %v4850 = vld [vmem:[#allocation4 + $0x40] sm:$0xf]
      %v4851 = vld [vmem:[#allocation4 + $0x48] sm:$0xf]
      %v4852 = vld [vmem:[#allocation4 + $0x4c] sm:$0xf]
      %v4853 = vld [vmem:[#allocation4 + $0x54] sm:$0xf]
      %v4854 = vld [vmem:[#allocation4 + $0x58] sm:$0xf]
      %v4855 = vld [vmem:[#allocation4 + $0x60] sm:$0xf]
      %v4856 = vld [vmem:[#allocation4 + $0x64] sm:$0xf]
      %v4857 = vld [vmem:[#allocation4 + $0x6c] sm:$0xf]
      %v4858 = vld [vmem:[#allocation4 + $0x70] sm:$0xf]
      %v4859 = vld [vmem:[#allocation4 + $0x78] sm:$0xf]
      %v4860 = vld [vmem:[#allocation4 + $0x7c] sm:$0xf]
      %v4861 = vld [vmem:[#allocation4 + $0x84] sm:$0xf]
      %v4862 = vld [vmem:[#allocation4 + $0x88] sm:$0xf]
      %v4863 = vld [vmem:[#allocation4 + $0x90] sm:$0xf]
      %v4864 = vld [vmem:[#allocation4 + $0x94] sm:$0xf]
      %v4865 = vld [vmem:[#allocation4 + $0x9c] sm:$0xf]
      %v4866 = vld [vmem:[#allocation4 + $0xa0] sm:$0xf]
      %v4867 = vld [vmem:[#allocation4 + $0xa8] sm:$0xf]
      %v4868 = vld [vmem:[#allocation4 + $0xac] sm:$0xf]
      %v4869 = vld [vmem:[#allocation4 + $0xb4] sm:$0xf]
      %v4870 = vld [vmem:[#allocation4 + $0xb8] sm:$0xf]
      %4871 = vst.msk [vmem:[#allocation5] sm:$0xf] %vm336, %v4839
      %4872 = vst.msk [vmem:[#allocation5 + $0x4] sm:$0xf] %vm336, %v4840
      %4873 = vst.msk [vmem:[#allocation5 + $0x8] sm:$0xf] %vm336, %v4841
      %4874 = vst.msk [vmem:[#allocation5 + $0xc] sm:$0xf] %vm336, %v4842
      %4875 = vst.msk [vmem:[#allocation5 + $0x10] sm:$0xf] %vm336, %v4843
      %4876 = vst.msk [vmem:[#allocation5 + $0x14] sm:$0xf] %vm336, %v4844
      %4877 = vst.msk [vmem:[#allocation5 + $0x18] sm:$0xf] %vm336, %v4845
      %4878 = vst.msk [vmem:[#allocation5 + $0x1c] sm:$0xf] %vm336, %v4846
      %4879 = vst.msk [vmem:[#allocation5 + $0x20] sm:$0xf] %vm336, %v4847
      %4880 = vst.msk [vmem:[#allocation5 + $0x24] sm:$0xf] %vm336, %v4848
      %4881 = vst.msk [vmem:[#allocation5 + $0x28] sm:$0xf] %vm336, %v4849
      %4882 = vst.msk [vmem:[#allocation5 + $0x2c] sm:$0xf] %vm336, %v4850
      %4883 = vst.msk [vmem:[#allocation5 + $0x30] sm:$0xf] %vm336, %v4851
      %4884 = vst.msk [vmem:[#allocation5 + $0x34] sm:$0xf] %vm336, %v4852
      %4885 = vst.msk [vmem:[#allocation5 + $0x38] sm:$0xf] %vm336, %v4853
      %4886 = vst.msk [vmem:[#allocation5 + $0x3c] sm:$0xf] %vm336, %v4854
      %4887 = vst.msk [vmem:[#allocation5 + $0x40] sm:$0xf] %vm336, %v4855
      %4888 = vst.msk [vmem:[#allocation5 + $0x44] sm:$0xf] %vm336, %v4856
      %4889 = vst.msk [vmem:[#allocation5 + $0x48] sm:$0xf] %vm336, %v4857
      %4890 = vst.msk [vmem:[#allocation5 + $0x4c] sm:$0xf] %vm336, %v4858
      %4891 = vst.msk [vmem:[#allocation5 + $0x50] sm:$0xf] %vm336, %v4859
      %4892 = vst.msk [vmem:[#allocation5 + $0x54] sm:$0xf] %vm336, %v4860
      %4893 = vst.msk [vmem:[#allocation5 + $0x58] sm:$0xf] %vm336, %v4861
      %4894 = vst.msk [vmem:[#allocation5 + $0x5c] sm:$0xf] %vm336, %v4862
      %4895 = vst.msk [vmem:[#allocation5 + $0x60] sm:$0xf] %vm336, %v4863
      %4896 = vst.msk [vmem:[#allocation5 + $0x64] sm:$0xf] %vm336, %v4864
      %4897 = vst.msk [vmem:[#allocation5 + $0x68] sm:$0xf] %vm336, %v4865
      %4898 = vst.msk [vmem:[#allocation5 + $0x6c] sm:$0xf] %vm336, %v4866
      %4899 = vst.msk [vmem:[#allocation5 + $0x70] sm:$0xf] %vm336, %v4867
      %4900 = vst.msk [vmem:[#allocation5 + $0x74] sm:$0xf] %vm336, %v4868
      %4901 = vst.msk [vmem:[#allocation5 + $0x78] sm:$0xf] %vm336, %v4869
      %4902 = vst.msk [vmem:[#allocation5 + $0x7c] sm:$0xf] %vm336, %v4870
      %v4903 = vld [vmem:[#allocation4] sm:$0xf]
      %v4904 = vld [vmem:[#allocation4 + $0x4] sm:$0xf]
      %v4905 = vld [vmem:[#allocation4 + $0x8] sm:$0x1]
      %v4906 = vld [vmem:[#allocation4 + $0xc] sm:$0xf]
      %v4907 = vld [vmem:[#allocation4 + $0x10] sm:$0xf]
      %v4908 = vld [vmem:[#allocation4 + $0x14] sm:$0x1]
      %v4909 = vld [vmem:[#allocation4 + $0x18] sm:$0xf]
      %v4910 = vld [vmem:[#allocation4 + $0x1c] sm:$0xf]
      %v4911 = vld [vmem:[#allocation4 + $0x20] sm:$0x1]
      %v4912 = vld [vmem:[#allocation4 + $0x24] sm:$0xf]
      %v4913 = vld [vmem:[#allocation4 + $0x28] sm:$0xf]
      %v4914 = vld [vmem:[#allocation4 + $0x2c] sm:$0x1]
      %v4915 = vld [vmem:[#allocation4 + $0x30] sm:$0xf]
      %v4916 = vld [vmem:[#allocation4 + $0x34] sm:$0xf]
      %v4917 = vld [vmem:[#allocation4 + $0x38] sm:$0x1]
      %v4918 = vld [vmem:[#allocation4 + $0x3c] sm:$0xf]
      %v4919 = vld [vmem:[#allocation4 + $0x40] sm:$0xf]
      %v4920 = vld [vmem:[#allocation4 + $0x44] sm:$0x1]
      %v4921 = vld [vmem:[#allocation4 + $0x48] sm:$0xf]
      %v4922 = vld [vmem:[#allocation4 + $0x4c] sm:$0xf]
      %v4923 = vld [vmem:[#allocation4 + $0x50] sm:$0x1]
      %v4924 = vld [vmem:[#allocation4 + $0x54] sm:$0xf]
      %v4925 = vld [vmem:[#allocation4 + $0x58] sm:$0xf]
      %v4926 = vld [vmem:[#allocation4 + $0x5c] sm:$0x1]
      %v4927 = vld [vmem:[#allocation4 + $0x60] sm:$0xf]
      %v4928 = vld [vmem:[#allocation4 + $0x64] sm:$0xf]
      %v4929 = vld [vmem:[#allocation4 + $0x68] sm:$0x1]
      %v4930 = vld [vmem:[#allocation4 + $0x6c] sm:$0xf]
      %v4931 = vld [vmem:[#allocation4 + $0x70] sm:$0xf]
      %v4932 = vld [vmem:[#allocation4 + $0x74] sm:$0x1]
      %v4933 = vld [vmem:[#allocation4 + $0x78] sm:$0xf]
      %v4934 = vld [vmem:[#allocation4 + $0x7c] sm:$0xf]
      %v4935 = vld [vmem:[#allocation4 + $0x80] sm:$0x1]
      %v4936 = vld [vmem:[#allocation4 + $0x84] sm:$0xf]
      %v4937 = vld [vmem:[#allocation4 + $0x88] sm:$0xf]
      %v4938 = vld [vmem:[#allocation4 + $0x8c] sm:$0x1]
      %v4939 = vld [vmem:[#allocation4 + $0x90] sm:$0xf]
      %v4940 = vld [vmem:[#allocation4 + $0x94] sm:$0xf]
      %v4941 = vld [vmem:[#allocation4 + $0x98] sm:$0x1]
      %v4942 = vld [vmem:[#allocation4 + $0x9c] sm:$0xf]
      %v4943 = vld [vmem:[#allocation4 + $0xa0] sm:$0xf]
      %v4944 = vld [vmem:[#allocation4 + $0xa4] sm:$0x1]
      %v4945 = vld [vmem:[#allocation4 + $0xa8] sm:$0xf]
      %v4946 = vld [vmem:[#allocation4 + $0xac] sm:$0xf]
      %v4947 = vld [vmem:[#allocation4 + $0xb0] sm:$0x1]
      %v4948 = vld [vmem:[#allocation4 + $0xb4] sm:$0xf]
      %v4949 = vld [vmem:[#allocation4 + $0xb8] sm:$0xf]
      %v4950 = vld [vmem:[#allocation4 + $0xbc] sm:$0x1]
      %v4952 = vshrl.u32 %v4903, 16
      %v4954 = vrot.slane %v4952, 4
      %v4955 = vshll.u32 %v4903, 16
      %v4957 = vrot.slane %v4955, 5
      %v4958 = vor.u32 %v4954, %v4957
      %v4959 = vrot.slane %v4958, 4
      %v4961 = vshll.u32 %v4904, 16
      %v4963 = vrot.slane %v4961, 5
      %v4964 = vsel %vm1026, %v4959, %v4963
      %v4965 = vshrl.u32 %v4904, 16
      %v4967 = vrot.slane %v4965, 4
      %v4968 = vor.u32 %v4967, %v4963
      %v4969 = vrot.slane %v4968, 4
      %v4971 = vshll.u32 %v4905, 16
      %v4973 = vrot.slane %v4971, 5
      %v4974 = vsel %vm1026, %v4969, %v4973
      %v4976 = vshrl.u32 %v4906, 16
      %v4978 = vrot.slane %v4976, 4
      %v4979 = vshll.u32 %v4906, 16
      %v4981 = vrot.slane %v4979, 5
      %v4982 = vor.u32 %v4978, %v4981
      %v4983 = vrot.slane %v4982, 4
      %v4985 = vshll.u32 %v4907, 16
      %v4987 = vrot.slane %v4985, 5
      %v4988 = vsel %vm1026, %v4983, %v4987
      %v4989 = vshrl.u32 %v4907, 16
      %v4991 = vrot.slane %v4989, 4
      %v4992 = vor.u32 %v4991, %v4987
      %v4993 = vrot.slane %v4992, 4
      %v4995 = vshll.u32 %v4908, 16
      %v4997 = vrot.slane %v4995, 5
      %v4998 = vsel %vm1026, %v4993, %v4997
      %v5000 = vshrl.u32 %v4909, 16
      %v5002 = vrot.slane %v5000, 4
      %v5003 = vshll.u32 %v4909, 16
      %v5005 = vrot.slane %v5003, 5
      %v5006 = vor.u32 %v5002, %v5005
      %v5007 = vrot.slane %v5006, 4
      %v5009 = vshll.u32 %v4910, 16
      %v5011 = vrot.slane %v5009, 5
      %v5012 = vsel %vm1026, %v5007, %v5011
      %v5013 = vshrl.u32 %v4910, 16
      %v5015 = vrot.slane %v5013, 4
      %v5016 = vor.u32 %v5015, %v5011
      %v5017 = vrot.slane %v5016, 4
      %v5019 = vshll.u32 %v4911, 16
      %v5021 = vrot.slane %v5019, 5
      %v5022 = vsel %vm1026, %v5017, %v5021
      %v5024 = vshrl.u32 %v4912, 16
      %v5026 = vrot.slane %v5024, 4
      %v5027 = vshll.u32 %v4912, 16
      %v5029 = vrot.slane %v5027, 5
      %v5030 = vor.u32 %v5026, %v5029
      %v5031 = vrot.slane %v5030, 4
      %v5033 = vshll.u32 %v4913, 16
      %v5035 = vrot.slane %v5033, 5
      %v5036 = vsel %vm1026, %v5031, %v5035
      %v5037 = vshrl.u32 %v4913, 16
      %v5039 = vrot.slane %v5037, 4
      %v5040 = vor.u32 %v5039, %v5035
      %v5041 = vrot.slane %v5040, 4
      %v5043 = vshll.u32 %v4914, 16
      %v5045 = vrot.slane %v5043, 5
      %v5046 = vsel %vm1026, %v5041, %v5045
      %v5048 = vshrl.u32 %v4915, 16
      %v5050 = vrot.slane %v5048, 4
      %v5051 = vshll.u32 %v4915, 16
      %v5053 = vrot.slane %v5051, 5
      %v5054 = vor.u32 %v5050, %v5053
      %v5055 = vrot.slane %v5054, 4
      %v5057 = vshll.u32 %v4916, 16
      %v5059 = vrot.slane %v5057, 5
      %v5060 = vsel %vm1026, %v5055, %v5059
      %v5061 = vshrl.u32 %v4916, 16
      %v5063 = vrot.slane %v5061, 4
      %v5064 = vor.u32 %v5063, %v5059
      %v5065 = vrot.slane %v5064, 4
      %v5067 = vshll.u32 %v4917, 16
      %v5069 = vrot.slane %v5067, 5
      %v5070 = vsel %vm1026, %v5065, %v5069
      %v5072 = vshrl.u32 %v4918, 16
      %v5074 = vrot.slane %v5072, 4
      %v5075 = vshll.u32 %v4918, 16
      %v5077 = vrot.slane %v5075, 5
      %v5078 = vor.u32 %v5074, %v5077
      %v5079 = vrot.slane %v5078, 4
      %v5081 = vshll.u32 %v4919, 16
      %v5083 = vrot.slane %v5081, 5
      %v5084 = vsel %vm1026, %v5079, %v5083
      %v5085 = vshrl.u32 %v4919, 16
      %v5087 = vrot.slane %v5085, 4
      %v5088 = vor.u32 %v5087, %v5083
      %v5089 = vrot.slane %v5088, 4
      %v5091 = vshll.u32 %v4920, 16
      %v5093 = vrot.slane %v5091, 5
      %v5094 = vsel %vm1026, %v5089, %v5093
      %v5096 = vshrl.u32 %v4921, 16
      %v5098 = vrot.slane %v5096, 4
      %v5099 = vshll.u32 %v4921, 16
      %v5101 = vrot.slane %v5099, 5
      %v5102 = vor.u32 %v5098, %v5101
      %v5103 = vrot.slane %v5102, 4
      %v5105 = vshll.u32 %v4922, 16
      %v5107 = vrot.slane %v5105, 5
      %v5108 = vsel %vm1026, %v5103, %v5107
      %v5109 = vshrl.u32 %v4922, 16
      %v5111 = vrot.slane %v5109, 4
      %v5112 = vor.u32 %v5111, %v5107
      %v5113 = vrot.slane %v5112, 4
      %v5115 = vshll.u32 %v4923, 16
      %v5117 = vrot.slane %v5115, 5
      %v5118 = vsel %vm1026, %v5113, %v5117
      %v5120 = vshrl.u32 %v4924, 16
      %v5122 = vrot.slane %v5120, 4
      %v5123 = vshll.u32 %v4924, 16
      %v5125 = vrot.slane %v5123, 5
      %v5126 = vor.u32 %v5122, %v5125
      %v5127 = vrot.slane %v5126, 4
      %v5129 = vshll.u32 %v4925, 16
      %v5131 = vrot.slane %v5129, 5
      %v5132 = vsel %vm1026, %v5127, %v5131
      %v5133 = vshrl.u32 %v4925, 16
      %v5135 = vrot.slane %v5133, 4
      %v5136 = vor.u32 %v5135, %v5131
      %v5137 = vrot.slane %v5136, 4
      %v5139 = vshll.u32 %v4926, 16
      %v5141 = vrot.slane %v5139, 5
      %v5142 = vsel %vm1026, %v5137, %v5141
      %v5144 = vshrl.u32 %v4927, 16
      %v5146 = vrot.slane %v5144, 4
      %v5147 = vshll.u32 %v4927, 16
      %v5149 = vrot.slane %v5147, 5
      %v5150 = vor.u32 %v5146, %v5149
      %v5151 = vrot.slane %v5150, 4
      %v5153 = vshll.u32 %v4928, 16
      %v5155 = vrot.slane %v5153, 5
      %v5156 = vsel %vm1026, %v5151, %v5155
      %v5157 = vshrl.u32 %v4928, 16
      %v5159 = vrot.slane %v5157, 4
      %v5160 = vor.u32 %v5159, %v5155
      %v5161 = vrot.slane %v5160, 4
      %v5163 = vshll.u32 %v4929, 16
      %v5165 = vrot.slane %v5163, 5
      %v5166 = vsel %vm1026, %v5161, %v5165
      %v5168 = vshrl.u32 %v4930, 16
      %v5170 = vrot.slane %v5168, 4
      %v5171 = vshll.u32 %v4930, 16
      %v5173 = vrot.slane %v5171, 5
      %v5174 = vor.u32 %v5170, %v5173
      %v5175 = vrot.slane %v5174, 4
      %v5177 = vshll.u32 %v4931, 16
      %v5179 = vrot.slane %v5177, 5
      %v5180 = vsel %vm1026, %v5175, %v5179
      %v5181 = vshrl.u32 %v4931, 16
      %v5183 = vrot.slane %v5181, 4
      %v5184 = vor.u32 %v5183, %v5179
      %v5185 = vrot.slane %v5184, 4
      %v5187 = vshll.u32 %v4932, 16
      %v5189 = vrot.slane %v5187, 5
      %v5190 = vsel %vm1026, %v5185, %v5189
      %v5192 = vshrl.u32 %v4933, 16
      %v5194 = vrot.slane %v5192, 4
      %v5195 = vshll.u32 %v4933, 16
      %v5197 = vrot.slane %v5195, 5
      %v5198 = vor.u32 %v5194, %v5197
      %v5199 = vrot.slane %v5198, 4
      %v5201 = vshll.u32 %v4934, 16
      %v5203 = vrot.slane %v5201, 5
      %v5204 = vsel %vm1026, %v5199, %v5203
      %v5205 = vshrl.u32 %v4934, 16
      %v5207 = vrot.slane %v5205, 4
      %v5208 = vor.u32 %v5207, %v5203
      %v5209 = vrot.slane %v5208, 4
      %v5211 = vshll.u32 %v4935, 16
      %v5213 = vrot.slane %v5211, 5
      %v5214 = vsel %vm1026, %v5209, %v5213
      %v5216 = vshrl.u32 %v4936, 16
      %v5218 = vrot.slane %v5216, 4
      %v5219 = vshll.u32 %v4936, 16
      %v5221 = vrot.slane %v5219, 5
      %v5222 = vor.u32 %v5218, %v5221
      %v5223 = vrot.slane %v5222, 4
      %v5225 = vshll.u32 %v4937, 16
      %v5227 = vrot.slane %v5225, 5
      %v5228 = vsel %vm1026, %v5223, %v5227
      %v5229 = vshrl.u32 %v4937, 16
      %v5231 = vrot.slane %v5229, 4
      %v5232 = vor.u32 %v5231, %v5227
      %v5233 = vrot.slane %v5232, 4
      %v5235 = vshll.u32 %v4938, 16
      %v5237 = vrot.slane %v5235, 5
      %v5238 = vsel %vm1026, %v5233, %v5237
      %v5240 = vshrl.u32 %v4939, 16
      %v5242 = vrot.slane %v5240, 4
      %v5243 = vshll.u32 %v4939, 16
      %v5245 = vrot.slane %v5243, 5
      %v5246 = vor.u32 %v5242, %v5245
      %v5247 = vrot.slane %v5246, 4
      %v5249 = vshll.u32 %v4940, 16
      %v5251 = vrot.slane %v5249, 5
      %v5252 = vsel %vm1026, %v5247, %v5251
      %v5253 = vshrl.u32 %v4940, 16
      %v5255 = vrot.slane %v5253, 4
      %v5256 = vor.u32 %v5255, %v5251
      %v5257 = vrot.slane %v5256, 4
      %v5259 = vshll.u32 %v4941, 16
      %v5261 = vrot.slane %v5259, 5
      %v5262 = vsel %vm1026, %v5257, %v5261
      %v5264 = vshrl.u32 %v4942, 16
      %v5266 = vrot.slane %v5264, 4
      %v5267 = vshll.u32 %v4942, 16
      %v5269 = vrot.slane %v5267, 5
      %v5270 = vor.u32 %v5266, %v5269
      %v5271 = vrot.slane %v5270, 4
      %v5273 = vshll.u32 %v4943, 16
      %v5275 = vrot.slane %v5273, 5
      %v5276 = vsel %vm1026, %v5271, %v5275
      %v5277 = vshrl.u32 %v4943, 16
      %v5279 = vrot.slane %v5277, 4
      %v5280 = vor.u32 %v5279, %v5275
      %v5281 = vrot.slane %v5280, 4
      %v5283 = vshll.u32 %v4944, 16
      %v5285 = vrot.slane %v5283, 5
      %v5286 = vsel %vm1026, %v5281, %v5285
      %v5288 = vshrl.u32 %v4945, 16
      %v5290 = vrot.slane %v5288, 4
      %v5291 = vshll.u32 %v4945, 16
      %v5293 = vrot.slane %v5291, 5
      %v5294 = vor.u32 %v5290, %v5293
      %v5295 = vrot.slane %v5294, 4
      %v5297 = vshll.u32 %v4946, 16
      %v5299 = vrot.slane %v5297, 5
      %v5300 = vsel %vm1026, %v5295, %v5299
      %v5301 = vshrl.u32 %v4946, 16
      %v5303 = vrot.slane %v5301, 4
      %v5304 = vor.u32 %v5303, %v5299
      %v5305 = vrot.slane %v5304, 4
      %v5307 = vshll.u32 %v4947, 16
      %v5309 = vrot.slane %v5307, 5
      %v5310 = vsel %vm1026, %v5305, %v5309
      %v5312 = vshrl.u32 %v4948, 16
      %v5314 = vrot.slane %v5312, 4
      %v5315 = vshll.u32 %v4948, 16
      %v5317 = vrot.slane %v5315, 5
      %v5318 = vor.u32 %v5314, %v5317
      %v5319 = vrot.slane %v5318, 4
      %v5321 = vshll.u32 %v4949, 16
      %v5323 = vrot.slane %v5321, 5
      %v5324 = vsel %vm1026, %v5319, %v5323
      %v5325 = vshrl.u32 %v4949, 16
      %v5327 = vrot.slane %v5325, 4
      %v5328 = vor.u32 %v5327, %v5323
      %v5329 = vrot.slane %v5328, 4
      %v5331 = vshll.u32 %v4950, 16
      %v5333 = vrot.slane %v5331, 5
      %v5334 = vsel %vm1026, %v5329, %v5333
      %5335 = vrot.lane.b32.xlu0 %v4964, 8
      %v5336 = vpop.permute.xlu0 %5335
      %5337 = vrot.lane.b32.xlu0 %v4974, 8
      %v5338 = vpop.permute.xlu0 %5337
      %5339 = vrot.lane.b32.xlu0 %v4988, 8
      %v5340 = vpop.permute.xlu0 %5339
      %5341 = vrot.lane.b32.xlu0 %v4998, 8
      %v5342 = vpop.permute.xlu0 %5341
      %5343 = vrot.lane.b32.xlu0 %v5012, 8
      %v5344 = vpop.permute.xlu0 %5343
      %5345 = vrot.lane.b32.xlu0 %v5022, 8
      %v5346 = vpop.permute.xlu0 %5345
      %5347 = vrot.lane.b32.xlu0 %v5036, 8
      %v5348 = vpop.permute.xlu0 %5347
      %5349 = vrot.lane.b32.xlu0 %v5046, 8
      %v5350 = vpop.permute.xlu0 %5349
      %5351 = vrot.lane.b32.xlu0 %v5060, 8
      %v5352 = vpop.permute.xlu0 %5351
      %5353 = vrot.lane.b32.xlu0 %v5070, 8
      %v5354 = vpop.permute.xlu0 %5353
      %5355 = vrot.lane.b32.xlu0 %v5084, 8
      %v5356 = vpop.permute.xlu0 %5355
      %5357 = vrot.lane.b32.xlu0 %v5094, 8
      %v5358 = vpop.permute.xlu0 %5357
      %5359 = vrot.lane.b32.xlu0 %v5108, 8
      %v5360 = vpop.permute.xlu0 %5359
      %5361 = vrot.lane.b32.xlu0 %v5118, 8
      %v5362 = vpop.permute.xlu0 %5361
      %5363 = vrot.lane.b32.xlu0 %v5132, 8
      %v5364 = vpop.permute.xlu0 %5363
      %5365 = vrot.lane.b32.xlu0 %v5142, 8
      %v5366 = vpop.permute.xlu0 %5365
      %5367 = vrot.lane.b32.xlu0 %v5156, 8
      %v5368 = vpop.permute.xlu0 %5367
      %5369 = vrot.lane.b32.xlu0 %v5166, 8
      %v5370 = vpop.permute.xlu0 %5369
      %5371 = vrot.lane.b32.xlu0 %v5180, 8
      %v5372 = vpop.permute.xlu0 %5371
      %5373 = vrot.lane.b32.xlu0 %v5190, 8
      %v5374 = vpop.permute.xlu0 %5373
      %5375 = vrot.lane.b32.xlu0 %v5204, 8
      %v5376 = vpop.permute.xlu0 %5375
      %5377 = vrot.lane.b32.xlu0 %v5214, 8
      %v5378 = vpop.permute.xlu0 %5377
      %5379 = vrot.lane.b32.xlu0 %v5228, 8
      %v5380 = vpop.permute.xlu0 %5379
      %5381 = vrot.lane.b32.xlu0 %v5238, 8
      %v5382 = vpop.permute.xlu0 %5381
      %5383 = vrot.lane.b32.xlu0 %v5252, 8
      %v5384 = vpop.permute.xlu0 %5383
      %5385 = vrot.lane.b32.xlu0 %v5262, 8
      %v5386 = vpop.permute.xlu0 %5385
      %5387 = vrot.lane.b32.xlu0 %v5276, 8
      %v5388 = vpop.permute.xlu0 %5387
      %5389 = vrot.lane.b32.xlu0 %v5286, 8
      %v5390 = vpop.permute.xlu0 %5389
      %5391 = vrot.lane.b32.xlu0 %v5300, 8
      %v5392 = vpop.permute.xlu0 %5391
      %5393 = vrot.lane.b32.xlu0 %v5310, 8
      %v5394 = vpop.permute.xlu0 %5393
      %5395 = vrot.lane.b32.xlu0 %v5324, 8
      %v5396 = vpop.permute.xlu0 %5395
      %5397 = vrot.lane.b32.xlu0 %v5334, 8
      %v5398 = vpop.permute.xlu0 %5397
      %vm5431 = vcmask 126016
      %5432 = vst.msk [vmem:[#allocation5] sm:$0xf] %vm5431, %v5336
      %5433 = vst.msk [vmem:[#allocation5 + $0x4] sm:$0xf] %vm5431, %v5338
      %5434 = vst.msk [vmem:[#allocation5 + $0x8] sm:$0xf] %vm5431, %v5340
      %5435 = vst.msk [vmem:[#allocation5 + $0xc] sm:$0xf] %vm5431, %v5342
      %5436 = vst.msk [vmem:[#allocation5 + $0x10] sm:$0xf] %vm5431, %v5344
      %5437 = vst.msk [vmem:[#allocation5 + $0x14] sm:$0xf] %vm5431, %v5346
      %5438 = vst.msk [vmem:[#allocation5 + $0x18] sm:$0xf] %vm5431, %v5348
      %5439 = vst.msk [vmem:[#allocation5 + $0x1c] sm:$0xf] %vm5431, %v5350
      %5440 = vst.msk [vmem:[#allocation5 + $0x20] sm:$0xf] %vm5431, %v5352
      %5441 = vst.msk [vmem:[#allocation5 + $0x24] sm:$0xf] %vm5431, %v5354
      %5442 = vst.msk [vmem:[#allocation5 + $0x28] sm:$0xf] %vm5431, %v5356
      %5443 = vst.msk [vmem:[#allocation5 + $0x2c] sm:$0xf] %vm5431, %v5358
      %5444 = vst.msk [vmem:[#allocation5 + $0x30] sm:$0xf] %vm5431, %v5360
      %5445 = vst.msk [vmem:[#allocation5 + $0x34] sm:$0xf] %vm5431, %v5362
      %5446 = vst.msk [vmem:[#allocation5 + $0x38] sm:$0xf] %vm5431, %v5364
      %5447 = vst.msk [vmem:[#allocation5 + $0x3c] sm:$0xf] %vm5431, %v5366
      %5448 = vst.msk [vmem:[#allocation5 + $0x40] sm:$0xf] %vm5431, %v5368
      %5449 = vst.msk [vmem:[#allocation5 + $0x44] sm:$0xf] %vm5431, %v5370
      %5450 = vst.msk [vmem:[#allocation5 + $0x48] sm:$0xf] %vm5431, %v5372
      %5451 = vst.msk [vmem:[#allocation5 + $0x4c] sm:$0xf] %vm5431, %v5374
      %5452 = vst.msk [vmem:[#allocation5 + $0x50] sm:$0xf] %vm5431, %v5376
      %5453 = vst.msk [vmem:[#allocation5 + $0x54] sm:$0xf] %vm5431, %v5378
      %5454 = vst.msk [vmem:[#allocation5 + $0x58] sm:$0xf] %vm5431, %v5380
      %5455 = vst.msk [vmem:[#allocation5 + $0x5c] sm:$0xf] %vm5431, %v5382
      %5456 = vst.msk [vmem:[#allocation5 + $0x60] sm:$0xf] %vm5431, %v5384
      %5457 = vst.msk [vmem:[#allocation5 + $0x64] sm:$0xf] %vm5431, %v5386
      %5458 = vst.msk [vmem:[#allocation5 + $0x68] sm:$0xf] %vm5431, %v5388
      %5459 = vst.msk [vmem:[#allocation5 + $0x6c] sm:$0xf] %vm5431, %v5390
      %5460 = vst.msk [vmem:[#allocation5 + $0x70] sm:$0xf] %vm5431, %v5392
      %5461 = vst.msk [vmem:[#allocation5 + $0x74] sm:$0xf] %vm5431, %v5394
      %5462 = vst.msk [vmem:[#allocation5 + $0x78] sm:$0xf] %vm5431, %v5396
      %5463 = vst.msk [vmem:[#allocation5 + $0x7c] sm:$0xf] %vm5431, %v5398
      %v5464 = vld [vmem:[#allocation4] sm:$0xe]
      %v5465 = vld [vmem:[#allocation4 + $0x4] sm:$0xf]
      %v5466 = vld [vmem:[#allocation4 + $0x8] sm:$0x1]
      %v5467 = vld [vmem:[#allocation4 + $0xc] sm:$0xe]
      %v5468 = vld [vmem:[#allocation4 + $0x10] sm:$0xf]
      %v5469 = vld [vmem:[#allocation4 + $0x14] sm:$0x1]
      %v5470 = vld [vmem:[#allocation4 + $0x18] sm:$0xe]
      %v5471 = vld [vmem:[#allocation4 + $0x1c] sm:$0xf]
      %v5472 = vld [vmem:[#allocation4 + $0x20] sm:$0x1]
      %v5473 = vld [vmem:[#allocation4 + $0x24] sm:$0xe]
      %v5474 = vld [vmem:[#allocation4 + $0x28] sm:$0xf]
      %v5475 = vld [vmem:[#allocation4 + $0x2c] sm:$0x1]
      %v5476 = vld [vmem:[#allocation4 + $0x30] sm:$0xe]
      %v5477 = vld [vmem:[#allocation4 + $0x34] sm:$0xf]
      %v5478 = vld [vmem:[#allocation4 + $0x38] sm:$0x1]
      %v5479 = vld [vmem:[#allocation4 + $0x3c] sm:$0xe]
      %v5480 = vld [vmem:[#allocation4 + $0x40] sm:$0xf]
      %v5481 = vld [vmem:[#allocation4 + $0x44] sm:$0x1]
      %v5482 = vld [vmem:[#allocation4 + $0x48] sm:$0xe]
      %v5483 = vld [vmem:[#allocation4 + $0x4c] sm:$0xf]
      %v5484 = vld [vmem:[#allocation4 + $0x50] sm:$0x1]
      %v5485 = vld [vmem:[#allocation4 + $0x54] sm:$0xe]
      %v5486 = vld [vmem:[#allocation4 + $0x58] sm:$0xf]
      %v5487 = vld [vmem:[#allocation4 + $0x5c] sm:$0x1]
      %v5488 = vld [vmem:[#allocation4 + $0x60] sm:$0xe]
      %v5489 = vld [vmem:[#allocation4 + $0x64] sm:$0xf]
      %v5490 = vld [vmem:[#allocation4 + $0x68] sm:$0x1]
      %v5491 = vld [vmem:[#allocation4 + $0x6c] sm:$0xe]
      %v5492 = vld [vmem:[#allocation4 + $0x70] sm:$0xf]
      %v5493 = vld [vmem:[#allocation4 + $0x74] sm:$0x1]
      %v5494 = vld [vmem:[#allocation4 + $0x78] sm:$0xe]
      %v5495 = vld [vmem:[#allocation4 + $0x7c] sm:$0xf]
      %v5496 = vld [vmem:[#allocation4 + $0x80] sm:$0x1]
      %v5497 = vld [vmem:[#allocation4 + $0x84] sm:$0xe]
      %v5498 = vld [vmem:[#allocation4 + $0x88] sm:$0xf]
      %v5499 = vld [vmem:[#allocation4 + $0x8c] sm:$0x1]
      %v5500 = vld [vmem:[#allocation4 + $0x90] sm:$0xe]
      %v5501 = vld [vmem:[#allocation4 + $0x94] sm:$0xf]
      %v5502 = vld [vmem:[#allocation4 + $0x98] sm:$0x1]
      %v5503 = vld [vmem:[#allocation4 + $0x9c] sm:$0xe]
      %v5504 = vld [vmem:[#allocation4 + $0xa0] sm:$0xf]
      %v5505 = vld [vmem:[#allocation4 + $0xa4] sm:$0x1]
      %v5506 = vld [vmem:[#allocation4 + $0xa8] sm:$0xe]
      %v5507 = vld [vmem:[#allocation4 + $0xac] sm:$0xf]
      %v5508 = vld [vmem:[#allocation4 + $0xb0] sm:$0x1]
      %v5509 = vld [vmem:[#allocation4 + $0xb4] sm:$0xe]
      %v5510 = vld [vmem:[#allocation4 + $0xb8] sm:$0xf]
      %v5511 = vld [vmem:[#allocation4 + $0xbc] sm:$0x1]
      %v5560 = vrot.slane %v5464, 5
      %v5561 = vrot.slane %v5560, 4
      %v5562 = vrot.slane %v5465, 5
      %v5563 = vsel %vm1638, %v5561, %v5562
      %v5564 = vrot.slane %v5562, 4
      %v5565 = vrot.slane %v5466, 5
      %v5566 = vsel %vm1638, %v5564, %v5565
      %v5567 = vrot.slane %v5467, 5
      %v5568 = vrot.slane %v5567, 4
      %v5569 = vrot.slane %v5468, 5
      %v5570 = vsel %vm1638, %v5568, %v5569
      %v5571 = vrot.slane %v5569, 4
      %v5572 = vrot.slane %v5469, 5
      %v5573 = vsel %vm1638, %v5571, %v5572
      %v5574 = vrot.slane %v5470, 5
      %v5575 = vrot.slane %v5574, 4
      %v5576 = vrot.slane %v5471, 5
      %v5577 = vsel %vm1638, %v5575, %v5576
      %v5578 = vrot.slane %v5576, 4
      %v5579 = vrot.slane %v5472, 5
      %v5580 = vsel %vm1638, %v5578, %v5579
      %v5581 = vrot.slane %v5473, 5
      %v5582 = vrot.slane %v5581, 4
      %v5583 = vrot.slane %v5474, 5
      %v5584 = vsel %vm1638, %v5582, %v5583
      %v5585 = vrot.slane %v5583, 4
      %v5586 = vrot.slane %v5475, 5
      %v5587 = vsel %vm1638, %v5585, %v5586
      %v5588 = vrot.slane %v5476, 5
      %v5589 = vrot.slane %v5588, 4
      %v5590 = vrot.slane %v5477, 5
      %v5591 = vsel %vm1638, %v5589, %v5590
      %v5592 = vrot.slane %v5590, 4
      %v5593 = vrot.slane %v5478, 5
      %v5594 = vsel %vm1638, %v5592, %v5593
      %v5595 = vrot.slane %v5479, 5
      %v5596 = vrot.slane %v5595, 4
      %v5597 = vrot.slane %v5480, 5
      %v5598 = vsel %vm1638, %v5596, %v5597
      %v5599 = vrot.slane %v5597, 4
      %v5600 = vrot.slane %v5481, 5
      %v5601 = vsel %vm1638, %v5599, %v5600
      %v5602 = vrot.slane %v5482, 5
      %v5603 = vrot.slane %v5602, 4
      %v5604 = vrot.slane %v5483, 5
      %v5605 = vsel %vm1638, %v5603, %v5604
      %v5606 = vrot.slane %v5604, 4
      %v5607 = vrot.slane %v5484, 5
      %v5608 = vsel %vm1638, %v5606, %v5607
      %v5609 = vrot.slane %v5485, 5
      %v5610 = vrot.slane %v5609, 4
      %v5611 = vrot.slane %v5486, 5
      %v5612 = vsel %vm1638, %v5610, %v5611
      %v5613 = vrot.slane %v5611, 4
      %v5614 = vrot.slane %v5487, 5
      %v5615 = vsel %vm1638, %v5613, %v5614
      %v5616 = vrot.slane %v5488, 5
      %v5617 = vrot.slane %v5616, 4
      %v5618 = vrot.slane %v5489, 5
      %v5619 = vsel %vm1638, %v5617, %v5618
      %v5620 = vrot.slane %v5618, 4
      %v5621 = vrot.slane %v5490, 5
      %v5622 = vsel %vm1638, %v5620, %v5621
      %v5623 = vrot.slane %v5491, 5
      %v5624 = vrot.slane %v5623, 4
      %v5625 = vrot.slane %v5492, 5
      %v5626 = vsel %vm1638, %v5624, %v5625
      %v5627 = vrot.slane %v5625, 4
      %v5628 = vrot.slane %v5493, 5
      %v5629 = vsel %vm1638, %v5627, %v5628
      %v5630 = vrot.slane %v5494, 5
      %v5631 = vrot.slane %v5630, 4
      %v5632 = vrot.slane %v5495, 5
      %v5633 = vsel %vm1638, %v5631, %v5632
      %v5634 = vrot.slane %v5632, 4
      %v5635 = vrot.slane %v5496, 5
      %v5636 = vsel %vm1638, %v5634, %v5635
      %v5637 = vrot.slane %v5497, 5
      %v5638 = vrot.slane %v5637, 4
      %v5639 = vrot.slane %v5498, 5
      %v5640 = vsel %vm1638, %v5638, %v5639
      %v5641 = vrot.slane %v5639, 4
      %v5642 = vrot.slane %v5499, 5
      %v5643 = vsel %vm1638, %v5641, %v5642
      %v5644 = vrot.slane %v5500, 5
      %v5645 = vrot.slane %v5644, 4
      %v5646 = vrot.slane %v5501, 5
      %v5647 = vsel %vm1638, %v5645, %v5646
      %v5648 = vrot.slane %v5646, 4
      %v5649 = vrot.slane %v5502, 5
      %v5650 = vsel %vm1638, %v5648, %v5649
      %v5651 = vrot.slane %v5503, 5
      %v5652 = vrot.slane %v5651, 4
      %v5653 = vrot.slane %v5504, 5
      %v5654 = vsel %vm1638, %v5652, %v5653
      %v5655 = vrot.slane %v5653, 4
      %v5656 = vrot.slane %v5505, 5
      %v5657 = vsel %vm1638, %v5655, %v5656
      %v5658 = vrot.slane %v5506, 5
      %v5659 = vrot.slane %v5658, 4
      %v5660 = vrot.slane %v5507, 5
      %v5661 = vsel %vm1638, %v5659, %v5660
      %v5662 = vrot.slane %v5660, 4
      %v5663 = vrot.slane %v5508, 5
      %v5664 = vsel %vm1638, %v5662, %v5663
      %v5665 = vrot.slane %v5509, 5
      %v5666 = vrot.slane %v5665, 4
      %v5667 = vrot.slane %v5510, 5
      %v5668 = vsel %vm1638, %v5666, %v5667
      %v5669 = vrot.slane %v5667, 4
      %v5670 = vrot.slane %v5511, 5
      %v5671 = vsel %vm1638, %v5669, %v5670
      %5672 = vrot.lane.b32.xlu0 %v5563, 16
      %v5673 = vpop.permute.xlu0 %5672
      %5674 = vrot.lane.b32.xlu0 %v5566, 16
      %v5675 = vpop.permute.xlu0 %5674
      %5676 = vrot.lane.b32.xlu0 %v5570, 16
      %v5677 = vpop.permute.xlu0 %5676
      %5678 = vrot.lane.b32.xlu0 %v5573, 16
      %v5679 = vpop.permute.xlu0 %5678
      %5680 = vrot.lane.b32.xlu0 %v5577, 16
      %v5681 = vpop.permute.xlu0 %5680
      %5682 = vrot.lane.b32.xlu0 %v5580, 16
      %v5683 = vpop.permute.xlu0 %5682
      %5684 = vrot.lane.b32.xlu0 %v5584, 16
      %v5685 = vpop.permute.xlu0 %5684
      %5686 = vrot.lane.b32.xlu0 %v5587, 16
      %v5687 = vpop.permute.xlu0 %5686
      %5688 = vrot.lane.b32.xlu0 %v5591, 16
      %v5689 = vpop.permute.xlu0 %5688
      %5690 = vrot.lane.b32.xlu0 %v5594, 16
      %v5691 = vpop.permute.xlu0 %5690
      %5692 = vrot.lane.b32.xlu0 %v5598, 16
      %v5693 = vpop.permute.xlu0 %5692
      %5694 = vrot.lane.b32.xlu0 %v5601, 16
      %v5695 = vpop.permute.xlu0 %5694
      %5696 = vrot.lane.b32.xlu0 %v5605, 16
      %v5697 = vpop.permute.xlu0 %5696
      %5698 = vrot.lane.b32.xlu0 %v5608, 16
      %v5699 = vpop.permute.xlu0 %5698
      %5700 = vrot.lane.b32.xlu0 %v5612, 16
      %v5701 = vpop.permute.xlu0 %5700
      %5702 = vrot.lane.b32.xlu0 %v5615, 16
      %v5703 = vpop.permute.xlu0 %5702
      %5704 = vrot.lane.b32.xlu0 %v5619, 16
      %v5705 = vpop.permute.xlu0 %5704
      %5706 = vrot.lane.b32.xlu0 %v5622, 16
      %v5707 = vpop.permute.xlu0 %5706
      %5708 = vrot.lane.b32.xlu0 %v5626, 16
      %v5709 = vpop.permute.xlu0 %5708
      %5710 = vrot.lane.b32.xlu0 %v5629, 16
      %v5711 = vpop.permute.xlu0 %5710
      %5712 = vrot.lane.b32.xlu0 %v5633, 16
      %v5713 = vpop.permute.xlu0 %5712
      %5714 = vrot.lane.b32.xlu0 %v5636, 16
      %v5715 = vpop.permute.xlu0 %5714
      %5716 = vrot.lane.b32.xlu0 %v5640, 16
      %v5717 = vpop.permute.xlu0 %5716
      %5718 = vrot.lane.b32.xlu0 %v5643, 16
      %v5719 = vpop.permute.xlu0 %5718
      %5720 = vrot.lane.b32.xlu0 %v5647, 16
      %v5721 = vpop.permute.xlu0 %5720
      %5722 = vrot.lane.b32.xlu0 %v5650, 16
      %v5723 = vpop.permute.xlu0 %5722
      %5724 = vrot.lane.b32.xlu0 %v5654, 16
      %v5725 = vpop.permute.xlu0 %5724
      %5726 = vrot.lane.b32.xlu0 %v5657, 16
      %v5727 = vpop.permute.xlu0 %5726
      %5728 = vrot.lane.b32.xlu0 %v5661, 16
      %v5729 = vpop.permute.xlu0 %5728
      %5730 = vrot.lane.b32.xlu0 %v5664, 16
      %v5731 = vpop.permute.xlu0 %5730
      %5732 = vrot.lane.b32.xlu0 %v5668, 16
      %v5733 = vpop.permute.xlu0 %5732
      %5734 = vrot.lane.b32.xlu0 %v5671, 16
      %v5735 = vpop.permute.xlu0 %5734
      %vm5768 = vcmask 191616
      %5769 = vst.msk [vmem:[#allocation5] sm:$0xf] %vm5768, %v5673
      %5770 = vst.msk [vmem:[#allocation5 + $0x4] sm:$0xf] %vm5768, %v5675
      %5771 = vst.msk [vmem:[#allocation5 + $0x8] sm:$0xf] %vm5768, %v5677
      %5772 = vst.msk [vmem:[#allocation5 + $0xc] sm:$0xf] %vm5768, %v5679
      %5773 = vst.msk [vmem:[#allocation5 + $0x10] sm:$0xf] %vm5768, %v5681
      %5774 = vst.msk [vmem:[#allocation5 + $0x14] sm:$0xf] %vm5768, %v5683
      %5775 = vst.msk [vmem:[#allocation5 + $0x18] sm:$0xf] %vm5768, %v5685
      %5776 = vst.msk [vmem:[#allocation5 + $0x1c] sm:$0xf] %vm5768, %v5687
      %5777 = vst.msk [vmem:[#allocation5 + $0x20] sm:$0xf] %vm5768, %v5689
      %5778 = vst.msk [vmem:[#allocation5 + $0x24] sm:$0xf] %vm5768, %v5691
      %5779 = vst.msk [vmem:[#allocation5 + $0x28] sm:$0xf] %vm5768, %v5693
      %5780 = vst.msk [vmem:[#allocation5 + $0x2c] sm:$0xf] %vm5768, %v5695
      %5781 = vst.msk [vmem:[#allocation5 + $0x30] sm:$0xf] %vm5768, %v5697
      %5782 = vst.msk [vmem:[#allocation5 + $0x34] sm:$0xf] %vm5768, %v5699
      %5783 = vst.msk [vmem:[#allocation5 + $0x38] sm:$0xf] %vm5768, %v5701
      %5784 = vst.msk [vmem:[#allocation5 + $0x3c] sm:$0xf] %vm5768, %v5703
      %5785 = vst.msk [vmem:[#allocation5 + $0x40] sm:$0xf] %vm5768, %v5705
      %5786 = vst.msk [vmem:[#allocation5 + $0x44] sm:$0xf] %vm5768, %v5707
      %5787 = vst.msk [vmem:[#allocation5 + $0x48] sm:$0xf] %vm5768, %v5709
      %5788 = vst.msk [vmem:[#allocation5 + $0x4c] sm:$0xf] %vm5768, %v5711
      %5789 = vst.msk [vmem:[#allocation5 + $0x50] sm:$0xf] %vm5768, %v5713
      %5790 = vst.msk [vmem:[#allocation5 + $0x54] sm:$0xf] %vm5768, %v5715
      %5791 = vst.msk [vmem:[#allocation5 + $0x58] sm:$0xf] %vm5768, %v5717
      %5792 = vst.msk [vmem:[#allocation5 + $0x5c] sm:$0xf] %vm5768, %v5719
      %5793 = vst.msk [vmem:[#allocation5 + $0x60] sm:$0xf] %vm5768, %v5721
      %5794 = vst.msk [vmem:[#allocation5 + $0x64] sm:$0xf] %vm5768, %v5723
      %5795 = vst.msk [vmem:[#allocation5 + $0x68] sm:$0xf] %vm5768, %v5725
      %5796 = vst.msk [vmem:[#allocation5 + $0x6c] sm:$0xf] %vm5768, %v5727
      %5797 = vst.msk [vmem:[#allocation5 + $0x70] sm:$0xf] %vm5768, %v5729
      %5798 = vst.msk [vmem:[#allocation5 + $0x74] sm:$0xf] %vm5768, %v5731
      %5799 = vst.msk [vmem:[#allocation5 + $0x78] sm:$0xf] %vm5768, %v5733
      %5800 = vst.msk [vmem:[#allocation5 + $0x7c] sm:$0xf] %vm5768, %v5735
      %v5801 = vld [vmem:[%s344] sm:$0xf]
      %v5802 = vld [vmem:[%s344 + $0x4] sm:$0xf]
      %v5803 = vld [vmem:[%s344 + $0xc] sm:$0xf]
      %v5804 = vld [vmem:[%s344 + $0x10] sm:$0xf]
      %v5805 = vld [vmem:[%s344 + $0x18] sm:$0xf]
      %v5806 = vld [vmem:[%s344 + $0x1c] sm:$0xf]
      %v5807 = vld [vmem:[%s344 + $0x24] sm:$0xf]
      %v5808 = vld [vmem:[%s344 + $0x28] sm:$0xf]
      %v5809 = vld [vmem:[%s344 + $0x30] sm:$0xf]
      %v5810 = vld [vmem:[%s344 + $0x34] sm:$0xf]
      %v5811 = vld [vmem:[%s344 + $0x3c] sm:$0xf]
      %v5812 = vld [vmem:[%s344 + $0x40] sm:$0xf]
      %v5813 = vld [vmem:[%s344 + $0x48] sm:$0xf]
      %v5814 = vld [vmem:[%s344 + $0x4c] sm:$0xf]
      %v5815 = vld [vmem:[%s344 + $0x54] sm:$0xf]
      %v5816 = vld [vmem:[%s344 + $0x58] sm:$0xf]
      %v5817 = vld [vmem:[%s344 + $0x60] sm:$0xf]
      %v5818 = vld [vmem:[%s344 + $0x64] sm:$0xf]
      %v5819 = vld [vmem:[%s344 + $0x6c] sm:$0xf]
      %v5820 = vld [vmem:[%s344 + $0x70] sm:$0xf]
      %v5821 = vld [vmem:[%s344 + $0x78] sm:$0xf]
      %v5822 = vld [vmem:[%s344 + $0x7c] sm:$0xf]
      %v5823 = vld [vmem:[%s344 + $0x84] sm:$0xf]
      %v5824 = vld [vmem:[%s344 + $0x88] sm:$0xf]
      %v5825 = vld [vmem:[%s344 + $0x90] sm:$0xf]
      %v5826 = vld [vmem:[%s344 + $0x94] sm:$0xf]
      %v5827 = vld [vmem:[%s344 + $0x9c] sm:$0xf]
      %v5828 = vld [vmem:[%s344 + $0xa0] sm:$0xf]
      %v5829 = vld [vmem:[%s344 + $0xa8] sm:$0xf]
      %v5830 = vld [vmem:[%s344 + $0xac] sm:$0xf]
      %v5831 = vld [vmem:[%s344 + $0xb4] sm:$0xf]
      %v5832 = vld [vmem:[%s344 + $0xb8] sm:$0xf]
      %5865 = vrot.lane.b32.xlu0 %v5801, 24
      %v5866 = vpop.permute.xlu0 %5865
      %5867 = vrot.lane.b32.xlu0 %v5802, 24
      %v5868 = vpop.permute.xlu0 %5867
      %5869 = vrot.lane.b32.xlu0 %v5803, 24
      %v5870 = vpop.permute.xlu0 %5869
      %5871 = vrot.lane.b32.xlu0 %v5804, 24
      %v5872 = vpop.permute.xlu0 %5871
      %5873 = vrot.lane.b32.xlu0 %v5805, 24
      %v5874 = vpop.permute.xlu0 %5873
      %5875 = vrot.lane.b32.xlu0 %v5806, 24
      %v5876 = vpop.permute.xlu0 %5875
      %5877 = vrot.lane.b32.xlu0 %v5807, 24
      %v5878 = vpop.permute.xlu0 %5877
      %5879 = vrot.lane.b32.xlu0 %v5808, 24
      %v5880 = vpop.permute.xlu0 %5879
      %5881 = vrot.lane.b32.xlu0 %v5809, 24
      %v5882 = vpop.permute.xlu0 %5881
      %5883 = vrot.lane.b32.xlu0 %v5810, 24
      %v5884 = vpop.permute.xlu0 %5883
      %5885 = vrot.lane.b32.xlu0 %v5811, 24
      %v5886 = vpop.permute.xlu0 %5885
      %5887 = vrot.lane.b32.xlu0 %v5812, 24
      %v5888 = vpop.permute.xlu0 %5887
      %5889 = vrot.lane.b32.xlu0 %v5813, 24
      %v5890 = vpop.permute.xlu0 %5889
      %5891 = vrot.lane.b32.xlu0 %v5814, 24
      %v5892 = vpop.permute.xlu0 %5891
      %5893 = vrot.lane.b32.xlu0 %v5815, 24
      %v5894 = vpop.permute.xlu0 %5893
      %5895 = vrot.lane.b32.xlu0 %v5816, 24
      %v5896 = vpop.permute.xlu0 %5895
      %5897 = vrot.lane.b32.xlu0 %v5817, 24
      %v5898 = vpop.permute.xlu0 %5897
      %5899 = vrot.lane.b32.xlu0 %v5818, 24
      %v5900 = vpop.permute.xlu0 %5899
      %5901 = vrot.lane.b32.xlu0 %v5819, 24
      %v5902 = vpop.permute.xlu0 %5901
      %5903 = vrot.lane.b32.xlu0 %v5820, 24
      %v5904 = vpop.permute.xlu0 %5903
      %5905 = vrot.lane.b32.xlu0 %v5821, 24
      %v5906 = vpop.permute.xlu0 %5905
      %5907 = vrot.lane.b32.xlu0 %v5822, 24
      %v5908 = vpop.permute.xlu0 %5907
      %5909 = vrot.lane.b32.xlu0 %v5823, 24
      %v5910 = vpop.permute.xlu0 %5909
      %5911 = vrot.lane.b32.xlu0 %v5824, 24
      %v5912 = vpop.permute.xlu0 %5911
      %5913 = vrot.lane.b32.xlu0 %v5825, 24
      %v5914 = vpop.permute.xlu0 %5913
      %5915 = vrot.lane.b32.xlu0 %v5826, 24
      %v5916 = vpop.permute.xlu0 %5915
      %5917 = vrot.lane.b32.xlu0 %v5827, 24
      %v5918 = vpop.permute.xlu0 %5917
      %5919 = vrot.lane.b32.xlu0 %v5828, 24
      %v5920 = vpop.permute.xlu0 %5919
      %5921 = vrot.lane.b32.xlu0 %v5829, 24
      %v5922 = vpop.permute.xlu0 %5921
      %5923 = vrot.lane.b32.xlu0 %v5830, 24
      %v5924 = vpop.permute.xlu0 %5923
      %5925 = vrot.lane.b32.xlu0 %v5831, 24
      %v5926 = vpop.permute.xlu0 %5925
      %5927 = vrot.lane.b32.xlu0 %v5832, 24
      %v5928 = vpop.permute.xlu0 %5927
      %vm5961 = vcmask 257216
      %5962 = vst.msk [vmem:[#allocation5] sm:$0xf] %vm5961, %v5866
      %5963 = vst.msk [vmem:[#allocation5 + $0x4] sm:$0xf] %vm5961, %v5868
      %5964 = vst.msk [vmem:[#allocation5 + $0x8] sm:$0xf] %vm5961, %v5870
      %5965 = vst.msk [vmem:[#allocation5 + $0xc] sm:$0xf] %vm5961, %v5872
      %5966 = vst.msk [vmem:[#allocation5 + $0x10] sm:$0xf] %vm5961, %v5874
      %5967 = vst.msk [vmem:[#allocation5 + $0x14] sm:$0xf] %vm5961, %v5876
      %5968 = vst.msk [vmem:[#allocation5 + $0x18] sm:$0xf] %vm5961, %v5878
      %5969 = vst.msk [vmem:[#allocation5 + $0x1c] sm:$0xf] %vm5961, %v5880
      %5970 = vst.msk [vmem:[#allocation5 + $0x20] sm:$0xf] %vm5961, %v5882
      %5971 = vst.msk [vmem:[#allocation5 + $0x24] sm:$0xf] %vm5961, %v5884
      %5972 = vst.msk [vmem:[#allocation5 + $0x28] sm:$0xf] %vm5961, %v5886
      %5973 = vst.msk [vmem:[#allocation5 + $0x2c] sm:$0xf] %vm5961, %v5888
      %5974 = vst.msk [vmem:[#allocation5 + $0x30] sm:$0xf] %vm5961, %v5890
      %5975 = vst.msk [vmem:[#allocation5 + $0x34] sm:$0xf] %vm5961, %v5892
      %5976 = vst.msk [vmem:[#allocation5 + $0x38] sm:$0xf] %vm5961, %v5894
      %5977 = vst.msk [vmem:[#allocation5 + $0x3c] sm:$0xf] %vm5961, %v5896
      %5978 = vst.msk [vmem:[#allocation5 + $0x40] sm:$0xf] %vm5961, %v5898
      %5979 = vst.msk [vmem:[#allocation5 + $0x44] sm:$0xf] %vm5961, %v5900
      %5980 = vst.msk [vmem:[#allocation5 + $0x48] sm:$0xf] %vm5961, %v5902
      %5981 = vst.msk [vmem:[#allocation5 + $0x4c] sm:$0xf] %vm5961, %v5904
      %5982 = vst.msk [vmem:[#allocation5 + $0x50] sm:$0xf] %vm5961, %v5906
      %5983 = vst.msk [vmem:[#allocation5 + $0x54] sm:$0xf] %vm5961, %v5908
      %5984 = vst.msk [vmem:[#allocation5 + $0x58] sm:$0xf] %vm5961, %v5910
      %5985 = vst.msk [vmem:[#allocation5 + $0x5c] sm:$0xf] %vm5961, %v5912
      %5986 = vst.msk [vmem:[#allocation5 + $0x60] sm:$0xf] %vm5961, %v5914
      %5987 = vst.msk [vmem:[#allocation5 + $0x64] sm:$0xf] %vm5961, %v5916
      %5988 = vst.msk [vmem:[#allocation5 + $0x68] sm:$0xf] %vm5961, %v5918
      %5989 = vst.msk [vmem:[#allocation5 + $0x6c] sm:$0xf] %vm5961, %v5920
      %5990 = vst.msk [vmem:[#allocation5 + $0x70] sm:$0xf] %vm5961, %v5922
      %5991 = vst.msk [vmem:[#allocation5 + $0x74] sm:$0xf] %vm5961, %v5924
      %5992 = vst.msk [vmem:[#allocation5 + $0x78] sm:$0xf] %vm5961, %v5926
      %5993 = vst.msk [vmem:[#allocation5 + $0x7c] sm:$0xf] %vm5961, %v5928
      %v5994 = vld [vmem:[%s344] sm:$0xf]
      %v5995 = vld [vmem:[%s344 + $0x4] sm:$0xf]
      %v5996 = vld [vmem:[%s344 + $0x8] sm:$0x1]
      %v5997 = vld [vmem:[%s344 + $0xc] sm:$0xf]
      %v5998 = vld [vmem:[%s344 + $0x10] sm:$0xf]
      %v5999 = vld [vmem:[%s344 + $0x14] sm:$0x1]
      %v6000 = vld [vmem:[%s344 + $0x18] sm:$0xf]
      %v6001 = vld [vmem:[%s344 + $0x1c] sm:$0xf]
      %v6002 = vld [vmem:[%s344 + $0x20] sm:$0x1]
      %v6003 = vld [vmem:[%s344 + $0x24] sm:$0xf]
      %v6004 = vld [vmem:[%s344 + $0x28] sm:$0xf]
      %v6005 = vld [vmem:[%s344 + $0x2c] sm:$0x1]
      %v6006 = vld [vmem:[%s344 + $0x30] sm:$0xf]
      %v6007 = vld [vmem:[%s344 + $0x34] sm:$0xf]
      %v6008 = vld [vmem:[%s344 + $0x38] sm:$0x1]
      %v6009 = vld [vmem:[%s344 + $0x3c] sm:$0xf]
      %v6010 = vld [vmem:[%s344 + $0x40] sm:$0xf]
      %v6011 = vld [vmem:[%s344 + $0x44] sm:$0x1]
      %v6012 = vld [vmem:[%s344 + $0x48] sm:$0xf]
      %v6013 = vld [vmem:[%s344 + $0x4c] sm:$0xf]
      %v6014 = vld [vmem:[%s344 + $0x50] sm:$0x1]
      %v6015 = vld [vmem:[%s344 + $0x54] sm:$0xf]
      %v6016 = vld [vmem:[%s344 + $0x58] sm:$0xf]
      %v6017 = vld [vmem:[%s344 + $0x5c] sm:$0x1]
      %v6018 = vld [vmem:[%s344 + $0x60] sm:$0xf]
      %v6019 = vld [vmem:[%s344 + $0x64] sm:$0xf]
      %v6020 = vld [vmem:[%s344 + $0x68] sm:$0x1]
      %v6021 = vld [vmem:[%s344 + $0x6c] sm:$0xf]
      %v6022 = vld [vmem:[%s344 + $0x70] sm:$0xf]
      %v6023 = vld [vmem:[%s344 + $0x74] sm:$0x1]
      %v6024 = vld [vmem:[%s344 + $0x78] sm:$0xf]
      %v6025 = vld [vmem:[%s344 + $0x7c] sm:$0xf]
      %v6026 = vld [vmem:[%s344 + $0x80] sm:$0x1]
      %v6027 = vld [vmem:[%s344 + $0x84] sm:$0xf]
      %v6028 = vld [vmem:[%s344 + $0x88] sm:$0xf]
      %v6029 = vld [vmem:[%s344 + $0x8c] sm:$0x1]
      %v6030 = vld [vmem:[%s344 + $0x90] sm:$0xf]
      %v6031 = vld [vmem:[%s344 + $0x94] sm:$0xf]
      %v6032 = vld [vmem:[%s344 + $0x98] sm:$0x1]
      %v6033 = vld [vmem:[%s344 + $0x9c] sm:$0xf]
      %v6034 = vld [vmem:[%s344 + $0xa0] sm:$0xf]
      %v6035 = vld [vmem:[%s344 + $0xa4] sm:$0x1]
      %v6036 = vld [vmem:[%s344 + $0xa8] sm:$0xf]
      %v6037 = vld [vmem:[%s344 + $0xac] sm:$0xf]
      %v6038 = vld [vmem:[%s344 + $0xb0] sm:$0x1]
      %v6039 = vld [vmem:[%s344 + $0xb4] sm:$0xf]
      %v6040 = vld [vmem:[%s344 + $0xb8] sm:$0xf]
      %v6041 = vld [vmem:[%s344 + $0xbc] sm:$0x1]
      %v6043 = vshrl.u32 %v5994, 16
      %v6045 = vrot.slane %v6043, 4
      %v6046 = vshll.u32 %v5994, 16
      %v6048 = vrot.slane %v6046, 5
      %v6049 = vor.u32 %v6045, %v6048
      %v6050 = vrot.slane %v6049, 4
      %v6052 = vshll.u32 %v5995, 16
      %v6054 = vrot.slane %v6052, 5
      %v6055 = vsel %vm1026, %v6050, %v6054
      %v6056 = vshrl.u32 %v5995, 16
      %v6058 = vrot.slane %v6056, 4
      %v6059 = vor.u32 %v6058, %v6054
      %v6060 = vrot.slane %v6059, 4
      %v6062 = vshll.u32 %v5996, 16
      %v6064 = vrot.slane %v6062, 5
      %v6065 = vsel %vm1026, %v6060, %v6064
      %v6067 = vshrl.u32 %v5997, 16
      %v6069 = vrot.slane %v6067, 4
      %v6070 = vshll.u32 %v5997, 16
      %v6072 = vrot.slane %v6070, 5
      %v6073 = vor.u32 %v6069, %v6072
      %v6074 = vrot.slane %v6073, 4
      %v6076 = vshll.u32 %v5998, 16
      %v6078 = vrot.slane %v6076, 5
      %v6079 = vsel %vm1026, %v6074, %v6078
      %v6080 = vshrl.u32 %v5998, 16
      %v6082 = vrot.slane %v6080, 4
      %v6083 = vor.u32 %v6082, %v6078
      %v6084 = vrot.slane %v6083, 4
      %v6086 = vshll.u32 %v5999, 16
      %v6088 = vrot.slane %v6086, 5
      %v6089 = vsel %vm1026, %v6084, %v6088
      %v6091 = vshrl.u32 %v6000, 16
      %v6093 = vrot.slane %v6091, 4
      %v6094 = vshll.u32 %v6000, 16
      %v6096 = vrot.slane %v6094, 5
      %v6097 = vor.u32 %v6093, %v6096
      %v6098 = vrot.slane %v6097, 4
      %v6100 = vshll.u32 %v6001, 16
      %v6102 = vrot.slane %v6100, 5
      %v6103 = vsel %vm1026, %v6098, %v6102
      %v6104 = vshrl.u32 %v6001, 16
      %v6106 = vrot.slane %v6104, 4
      %v6107 = vor.u32 %v6106, %v6102
      %v6108 = vrot.slane %v6107, 4
      %v6110 = vshll.u32 %v6002, 16
      %v6112 = vrot.slane %v6110, 5
      %v6113 = vsel %vm1026, %v6108, %v6112
      %v6115 = vshrl.u32 %v6003, 16
      %v6117 = vrot.slane %v6115, 4
      %v6118 = vshll.u32 %v6003, 16
      %v6120 = vrot.slane %v6118, 5
      %v6121 = vor.u32 %v6117, %v6120
      %v6122 = vrot.slane %v6121, 4
      %v6124 = vshll.u32 %v6004, 16
      %v6126 = vrot.slane %v6124, 5
      %v6127 = vsel %vm1026, %v6122, %v6126
      %v6128 = vshrl.u32 %v6004, 16
      %v6130 = vrot.slane %v6128, 4
      %v6131 = vor.u32 %v6130, %v6126
      %v6132 = vrot.slane %v6131, 4
      %v6134 = vshll.u32 %v6005, 16
      %v6136 = vrot.slane %v6134, 5
      %v6137 = vsel %vm1026, %v6132, %v6136
      %v6139 = vshrl.u32 %v6006, 16
      %v6141 = vrot.slane %v6139, 4
      %v6142 = vshll.u32 %v6006, 16
      %v6144 = vrot.slane %v6142, 5
      %v6145 = vor.u32 %v6141, %v6144
      %v6146 = vrot.slane %v6145, 4
      %v6148 = vshll.u32 %v6007, 16
      %v6150 = vrot.slane %v6148, 5
      %v6151 = vsel %vm1026, %v6146, %v6150
      %v6152 = vshrl.u32 %v6007, 16
      %v6154 = vrot.slane %v6152, 4
      %v6155 = vor.u32 %v6154, %v6150
      %v6156 = vrot.slane %v6155, 4
      %v6158 = vshll.u32 %v6008, 16
      %v6160 = vrot.slane %v6158, 5
      %v6161 = vsel %vm1026, %v6156, %v6160
      %v6163 = vshrl.u32 %v6009, 16
      %v6165 = vrot.slane %v6163, 4
      %v6166 = vshll.u32 %v6009, 16
      %v6168 = vrot.slane %v6166, 5
      %v6169 = vor.u32 %v6165, %v6168
      %v6170 = vrot.slane %v6169, 4
      %v6172 = vshll.u32 %v6010, 16
      %v6174 = vrot.slane %v6172, 5
      %v6175 = vsel %vm1026, %v6170, %v6174
      %v6176 = vshrl.u32 %v6010, 16
      %v6178 = vrot.slane %v6176, 4
      %v6179 = vor.u32 %v6178, %v6174
      %v6180 = vrot.slane %v6179, 4
      %v6182 = vshll.u32 %v6011, 16
      %v6184 = vrot.slane %v6182, 5
      %v6185 = vsel %vm1026, %v6180, %v6184
      %v6187 = vshrl.u32 %v6012, 16
      %v6189 = vrot.slane %v6187, 4
      %v6190 = vshll.u32 %v6012, 16
      %v6192 = vrot.slane %v6190, 5
      %v6193 = vor.u32 %v6189, %v6192
      %v6194 = vrot.slane %v6193, 4
      %v6196 = vshll.u32 %v6013, 16
      %v6198 = vrot.slane %v6196, 5
      %v6199 = vsel %vm1026, %v6194, %v6198
      %v6200 = vshrl.u32 %v6013, 16
      %v6202 = vrot.slane %v6200, 4
      %v6203 = vor.u32 %v6202, %v6198
      %v6204 = vrot.slane %v6203, 4
      %v6206 = vshll.u32 %v6014, 16
      %v6208 = vrot.slane %v6206, 5
      %v6209 = vsel %vm1026, %v6204, %v6208
      %v6211 = vshrl.u32 %v6015, 16
      %v6213 = vrot.slane %v6211, 4
      %v6214 = vshll.u32 %v6015, 16
      %v6216 = vrot.slane %v6214, 5
      %v6217 = vor.u32 %v6213, %v6216
      %v6218 = vrot.slane %v6217, 4
      %v6220 = vshll.u32 %v6016, 16
      %v6222 = vrot.slane %v6220, 5
      %v6223 = vsel %vm1026, %v6218, %v6222
      %v6224 = vshrl.u32 %v6016, 16
      %v6226 = vrot.slane %v6224, 4
      %v6227 = vor.u32 %v6226, %v6222
      %v6228 = vrot.slane %v6227, 4
      %v6230 = vshll.u32 %v6017, 16
      %v6232 = vrot.slane %v6230, 5
      %v6233 = vsel %vm1026, %v6228, %v6232
      %v6235 = vshrl.u32 %v6018, 16
      %v6237 = vrot.slane %v6235, 4
      %v6238 = vshll.u32 %v6018, 16
      %v6240 = vrot.slane %v6238, 5
      %v6241 = vor.u32 %v6237, %v6240
      %v6242 = vrot.slane %v6241, 4
      %v6244 = vshll.u32 %v6019, 16
      %v6246 = vrot.slane %v6244, 5
      %v6247 = vsel %vm1026, %v6242, %v6246
      %v6248 = vshrl.u32 %v6019, 16
      %v6250 = vrot.slane %v6248, 4
      %v6251 = vor.u32 %v6250, %v6246
      %v6252 = vrot.slane %v6251, 4
      %v6254 = vshll.u32 %v6020, 16
      %v6256 = vrot.slane %v6254, 5
      %v6257 = vsel %vm1026, %v6252, %v6256
      %v6259 = vshrl.u32 %v6021, 16
      %v6261 = vrot.slane %v6259, 4
      %v6262 = vshll.u32 %v6021, 16
      %v6264 = vrot.slane %v6262, 5
      %v6265 = vor.u32 %v6261, %v6264
      %v6266 = vrot.slane %v6265, 4
      %v6268 = vshll.u32 %v6022, 16
      %v6270 = vrot.slane %v6268, 5
      %v6271 = vsel %vm1026, %v6266, %v6270
      %v6272 = vshrl.u32 %v6022, 16
      %v6274 = vrot.slane %v6272, 4
      %v6275 = vor.u32 %v6274, %v6270
      %v6276 = vrot.slane %v6275, 4
      %v6278 = vshll.u32 %v6023, 16
      %v6280 = vrot.slane %v6278, 5
      %v6281 = vsel %vm1026, %v6276, %v6280
      %v6283 = vshrl.u32 %v6024, 16
      %v6285 = vrot.slane %v6283, 4
      %v6286 = vshll.u32 %v6024, 16
      %v6288 = vrot.slane %v6286, 5
      %v6289 = vor.u32 %v6285, %v6288
      %v6290 = vrot.slane %v6289, 4
      %v6292 = vshll.u32 %v6025, 16
      %v6294 = vrot.slane %v6292, 5
      %v6295 = vsel %vm1026, %v6290, %v6294
      %v6296 = vshrl.u32 %v6025, 16
      %v6298 = vrot.slane %v6296, 4
      %v6299 = vor.u32 %v6298, %v6294
      %v6300 = vrot.slane %v6299, 4
      %v6302 = vshll.u32 %v6026, 16
      %v6304 = vrot.slane %v6302, 5
      %v6305 = vsel %vm1026, %v6300, %v6304
      %v6307 = vshrl.u32 %v6027, 16
      %v6309 = vrot.slane %v6307, 4
      %v6310 = vshll.u32 %v6027, 16
      %v6312 = vrot.slane %v6310, 5
      %v6313 = vor.u32 %v6309, %v6312
      %v6314 = vrot.slane %v6313, 4
      %v6316 = vshll.u32 %v6028, 16
      %v6318 = vrot.slane %v6316, 5
      %v6319 = vsel %vm1026, %v6314, %v6318
      %v6320 = vshrl.u32 %v6028, 16
      %v6322 = vrot.slane %v6320, 4
      %v6323 = vor.u32 %v6322, %v6318
      %v6324 = vrot.slane %v6323, 4
      %v6326 = vshll.u32 %v6029, 16
      %v6328 = vrot.slane %v6326, 5
      %v6329 = vsel %vm1026, %v6324, %v6328
      %v6331 = vshrl.u32 %v6030, 16
      %v6333 = vrot.slane %v6331, 4
      %v6334 = vshll.u32 %v6030, 16
      %v6336 = vrot.slane %v6334, 5
      %v6337 = vor.u32 %v6333, %v6336
      %v6338 = vrot.slane %v6337, 4
      %v6340 = vshll.u32 %v6031, 16
      %v6342 = vrot.slane %v6340, 5
      %v6343 = vsel %vm1026, %v6338, %v6342
      %v6344 = vshrl.u32 %v6031, 16
      %v6346 = vrot.slane %v6344, 4
      %v6347 = vor.u32 %v6346, %v6342
      %v6348 = vrot.slane %v6347, 4
      %v6350 = vshll.u32 %v6032, 16
      %v6352 = vrot.slane %v6350, 5
      %v6353 = vsel %vm1026, %v6348, %v6352
      %v6355 = vshrl.u32 %v6033, 16
      %v6357 = vrot.slane %v6355, 4
      %v6358 = vshll.u32 %v6033, 16
      %v6360 = vrot.slane %v6358, 5
      %v6361 = vor.u32 %v6357, %v6360
      %v6362 = vrot.slane %v6361, 4
      %v6364 = vshll.u32 %v6034, 16
      %v6366 = vrot.slane %v6364, 5
      %v6367 = vsel %vm1026, %v6362, %v6366
      %v6368 = vshrl.u32 %v6034, 16
      %v6370 = vrot.slane %v6368, 4
      %v6371 = vor.u32 %v6370, %v6366
      %v6372 = vrot.slane %v6371, 4
      %v6374 = vshll.u32 %v6035, 16
      %v6376 = vrot.slane %v6374, 5
      %v6377 = vsel %vm1026, %v6372, %v6376
      %v6379 = vshrl.u32 %v6036, 16
      %v6381 = vrot.slane %v6379, 4
      %v6382 = vshll.u32 %v6036, 16
      %v6384 = vrot.slane %v6382, 5
      %v6385 = vor.u32 %v6381, %v6384
      %v6386 = vrot.slane %v6385, 4
      %v6388 = vshll.u32 %v6037, 16
      %v6390 = vrot.slane %v6388, 5
      %v6391 = vsel %vm1026, %v6386, %v6390
      %v6392 = vshrl.u32 %v6037, 16
      %v6394 = vrot.slane %v6392, 4
      %v6395 = vor.u32 %v6394, %v6390
      %v6396 = vrot.slane %v6395, 4
      %v6398 = vshll.u32 %v6038, 16
      %v6400 = vrot.slane %v6398, 5
      %v6401 = vsel %vm1026, %v6396, %v6400
      %v6403 = vshrl.u32 %v6039, 16
      %v6405 = vrot.slane %v6403, 4
      %v6406 = vshll.u32 %v6039, 16
      %v6408 = vrot.slane %v6406, 5
      %v6409 = vor.u32 %v6405, %v6408
      %v6410 = vrot.slane %v6409, 4
      %v6412 = vshll.u32 %v6040, 16
      %v6414 = vrot.slane %v6412, 5
      %v6415 = vsel %vm1026, %v6410, %v6414
      %v6416 = vshrl.u32 %v6040, 16
      %v6418 = vrot.slane %v6416, 4
      %v6419 = vor.u32 %v6418, %v6414
      %v6420 = vrot.slane %v6419, 4
      %v6422 = vshll.u32 %v6041, 16
      %v6424 = vrot.slane %v6422, 5
      %v6425 = vsel %vm1026, %v6420, %v6424
      %6426 = vrot.lane.b32.xlu0 %v6055, 32
      %v6427 = vpop.permute.xlu0 %6426
      %6428 = vrot.lane.b32.xlu0 %v6065, 32
      %v6429 = vpop.permute.xlu0 %6428
      %6430 = vrot.lane.b32.xlu0 %v6079, 32
      %v6431 = vpop.permute.xlu0 %6430
      %6432 = vrot.lane.b32.xlu0 %v6089, 32
      %v6433 = vpop.permute.xlu0 %6432
      %6434 = vrot.lane.b32.xlu0 %v6103, 32
      %v6435 = vpop.permute.xlu0 %6434
      %6436 = vrot.lane.b32.xlu0 %v6113, 32
      %v6437 = vpop.permute.xlu0 %6436
      %6438 = vrot.lane.b32.xlu0 %v6127, 32
      %v6439 = vpop.permute.xlu0 %6438
      %6440 = vrot.lane.b32.xlu0 %v6137, 32
      %v6441 = vpop.permute.xlu0 %6440
      %6442 = vrot.lane.b32.xlu0 %v6151, 32
      %v6443 = vpop.permute.xlu0 %6442
      %6444 = vrot.lane.b32.xlu0 %v6161, 32
      %v6445 = vpop.permute.xlu0 %6444
      %6446 = vrot.lane.b32.xlu0 %v6175, 32
      %v6447 = vpop.permute.xlu0 %6446
      %6448 = vrot.lane.b32.xlu0 %v6185, 32
      %v6449 = vpop.permute.xlu0 %6448
      %6450 = vrot.lane.b32.xlu0 %v6199, 32
      %v6451 = vpop.permute.xlu0 %6450
      %6452 = vrot.lane.b32.xlu0 %v6209, 32
      %v6453 = vpop.permute.xlu0 %6452
      %6454 = vrot.lane.b32.xlu0 %v6223, 32
      %v6455 = vpop.permute.xlu0 %6454
      %6456 = vrot.lane.b32.xlu0 %v6233, 32
      %v6457 = vpop.permute.xlu0 %6456
      %6458 = vrot.lane.b32.xlu0 %v6247, 32
      %v6459 = vpop.permute.xlu0 %6458
      %6460 = vrot.lane.b32.xlu0 %v6257, 32
      %v6461 = vpop.permute.xlu0 %6460
      %6462 = vrot.lane.b32.xlu0 %v6271, 32
      %v6463 = vpop.permute.xlu0 %6462
      %6464 = vrot.lane.b32.xlu0 %v6281, 32
      %v6465 = vpop.permute.xlu0 %6464
      %6466 = vrot.lane.b32.xlu0 %v6295, 32
      %v6467 = vpop.permute.xlu0 %6466
      %6468 = vrot.lane.b32.xlu0 %v6305, 32
      %v6469 = vpop.permute.xlu0 %6468
      %6470 = vrot.lane.b32.xlu0 %v6319, 32
      %v6471 = vpop.permute.xlu0 %6470
      %6472 = vrot.lane.b32.xlu0 %v6329, 32
      %v6473 = vpop.permute.xlu0 %6472
      %6474 = vrot.lane.b32.xlu0 %v6343, 32
      %v6475 = vpop.permute.xlu0 %6474
      %6476 = vrot.lane.b32.xlu0 %v6353, 32
      %v6477 = vpop.permute.xlu0 %6476
      %6478 = vrot.lane.b32.xlu0 %v6367, 32
      %v6479 = vpop.permute.xlu0 %6478
      %6480 = vrot.lane.b32.xlu0 %v6377, 32
      %v6481 = vpop.permute.xlu0 %6480
      %6482 = vrot.lane.b32.xlu0 %v6391, 32
      %v6483 = vpop.permute.xlu0 %6482
      %6484 = vrot.lane.b32.xlu0 %v6401, 32
      %v6485 = vpop.permute.xlu0 %6484
      %6486 = vrot.lane.b32.xlu0 %v6415, 32
      %v6487 = vpop.permute.xlu0 %6486
      %6488 = vrot.lane.b32.xlu0 %v6425, 32
      %v6489 = vpop.permute.xlu0 %6488
      %vm6522 = vcmask 322816
      %6523 = vst.msk [vmem:[#allocation5] sm:$0xf] %vm6522, %v6427
      %6524 = vst.msk [vmem:[#allocation5 + $0x4] sm:$0xf] %vm6522, %v6429
      %6525 = vst.msk [vmem:[#allocation5 + $0x8] sm:$0xf] %vm6522, %v6431
      %6526 = vst.msk [vmem:[#allocation5 + $0xc] sm:$0xf] %vm6522, %v6433
      %6527 = vst.msk [vmem:[#allocation5 + $0x10] sm:$0xf] %vm6522, %v6435
      %6528 = vst.msk [vmem:[#allocation5 + $0x14] sm:$0xf] %vm6522, %v6437
      %6529 = vst.msk [vmem:[#allocation5 + $0x18] sm:$0xf] %vm6522, %v6439
      %6530 = vst.msk [vmem:[#allocation5 + $0x1c] sm:$0xf] %vm6522, %v6441
      %6531 = vst.msk [vmem:[#allocation5 + $0x20] sm:$0xf] %vm6522, %v6443
      %6532 = vst.msk [vmem:[#allocation5 + $0x24] sm:$0xf] %vm6522, %v6445
      %6533 = vst.msk [vmem:[#allocation5 + $0x28] sm:$0xf] %vm6522, %v6447
      %6534 = vst.msk [vmem:[#allocation5 + $0x2c] sm:$0xf] %vm6522, %v6449
      %6535 = vst.msk [vmem:[#allocation5 + $0x30] sm:$0xf] %vm6522, %v6451
      %6536 = vst.msk [vmem:[#allocation5 + $0x34] sm:$0xf] %vm6522, %v6453
      %6537 = vst.msk [vmem:[#allocation5 + $0x38] sm:$0xf] %vm6522, %v6455
      %6538 = vst.msk [vmem:[#allocation5 + $0x3c] sm:$0xf] %vm6522, %v6457
      %6539 = vst.msk [vmem:[#allocation5 + $0x40] sm:$0xf] %vm6522, %v6459
      %6540 = vst.msk [vmem:[#allocation5 + $0x44] sm:$0xf] %vm6522, %v6461
      %6541 = vst.msk [vmem:[#allocation5 + $0x48] sm:$0xf] %vm6522, %v6463
      %6542 = vst.msk [vmem:[#allocation5 + $0x4c] sm:$0xf] %vm6522, %v6465
      %6543 = vst.msk [vmem:[#allocation5 + $0x50] sm:$0xf] %vm6522, %v6467
      %6544 = vst.msk [vmem:[#allocation5 + $0x54] sm:$0xf] %vm6522, %v6469
      %6545 = vst.msk [vmem:[#allocation5 + $0x58] sm:$0xf] %vm6522, %v6471
      %6546 = vst.msk [vmem:[#allocation5 + $0x5c] sm:$0xf] %vm6522, %v6473
      %6547 = vst.msk [vmem:[#allocation5 + $0x60] sm:$0xf] %vm6522, %v6475
      %6548 = vst.msk [vmem:[#allocation5 + $0x64] sm:$0xf] %vm6522, %v6477
      %6549 = vst.msk [vmem:[#allocation5 + $0x68] sm:$0xf] %vm6522, %v6479
      %6550 = vst.msk [vmem:[#allocation5 + $0x6c] sm:$0xf] %vm6522, %v6481
      %6551 = vst.msk [vmem:[#allocation5 + $0x70] sm:$0xf] %vm6522, %v6483
      %6552 = vst.msk [vmem:[#allocation5 + $0x74] sm:$0xf] %vm6522, %v6485
      %6553 = vst.msk [vmem:[#allocation5 + $0x78] sm:$0xf] %vm6522, %v6487
      %6554 = vst.msk [vmem:[#allocation5 + $0x7c] sm:$0xf] %vm6522, %v6489
      %v6555 = vld [vmem:[%s344] sm:$0xe]
      %v6556 = vld [vmem:[%s344 + $0x4] sm:$0xf]
      %v6557 = vld [vmem:[%s344 + $0x8] sm:$0x1]
      %v6558 = vld [vmem:[%s344 + $0xc] sm:$0xe]
      %v6559 = vld [vmem:[%s344 + $0x10] sm:$0xf]
      %v6560 = vld [vmem:[%s344 + $0x14] sm:$0x1]
      %v6561 = vld [vmem:[%s344 + $0x18] sm:$0xe]
      %v6562 = vld [vmem:[%s344 + $0x1c] sm:$0xf]
      %v6563 = vld [vmem:[%s344 + $0x20] sm:$0x1]
      %v6564 = vld [vmem:[%s344 + $0x24] sm:$0xe]
      %v6565 = vld [vmem:[%s344 + $0x28] sm:$0xf]
      %v6566 = vld [vmem:[%s344 + $0x2c] sm:$0x1]
      %v6567 = vld [vmem:[%s344 + $0x30] sm:$0xe]
      %v6568 = vld [vmem:[%s344 + $0x34] sm:$0xf]
      %v6569 = vld [vmem:[%s344 + $0x38] sm:$0x1]
      %v6570 = vld [vmem:[%s344 + $0x3c] sm:$0xe]
      %v6571 = vld [vmem:[%s344 + $0x40] sm:$0xf]
      %v6572 = vld [vmem:[%s344 + $0x44] sm:$0x1]
      %v6573 = vld [vmem:[%s344 + $0x48] sm:$0xe]
      %v6574 = vld [vmem:[%s344 + $0x4c] sm:$0xf]
      %v6575 = vld [vmem:[%s344 + $0x50] sm:$0x1]
      %v6576 = vld [vmem:[%s344 + $0x54] sm:$0xe]
      %v6577 = vld [vmem:[%s344 + $0x58] sm:$0xf]
      %v6578 = vld [vmem:[%s344 + $0x5c] sm:$0x1]
      %v6579 = vld [vmem:[%s344 + $0x60] sm:$0xe]
      %v6580 = vld [vmem:[%s344 + $0x64] sm:$0xf]
      %v6581 = vld [vmem:[%s344 + $0x68] sm:$0x1]
      %v6582 = vld [vmem:[%s344 + $0x6c] sm:$0xe]
      %v6583 = vld [vmem:[%s344 + $0x70] sm:$0xf]
      %v6584 = vld [vmem:[%s344 + $0x74] sm:$0x1]
      %v6585 = vld [vmem:[%s344 + $0x78] sm:$0xe]
      %v6586 = vld [vmem:[%s344 + $0x7c] sm:$0xf]
      %v6587 = vld [vmem:[%s344 + $0x80] sm:$0x1]
      %v6588 = vld [vmem:[%s344 + $0x84] sm:$0xe]
      %v6589 = vld [vmem:[%s344 + $0x88] sm:$0xf]
      %v6590 = vld [vmem:[%s344 + $0x8c] sm:$0x1]
      %v6591 = vld [vmem:[%s344 + $0x90] sm:$0xe]
      %v6592 = vld [vmem:[%s344 + $0x94] sm:$0xf]
      %v6593 = vld [vmem:[%s344 + $0x98] sm:$0x1]
      %v6594 = vld [vmem:[%s344 + $0x9c] sm:$0xe]
      %v6595 = vld [vmem:[%s344 + $0xa0] sm:$0xf]
      %v6596 = vld [vmem:[%s344 + $0xa4] sm:$0x1]
      %v6597 = vld [vmem:[%s344 + $0xa8] sm:$0xe]
      %v6598 = vld [vmem:[%s344 + $0xac] sm:$0xf]
      %v6599 = vld [vmem:[%s344 + $0xb0] sm:$0x1]
      %v6600 = vld [vmem:[%s344 + $0xb4] sm:$0xe]
      %v6601 = vld [vmem:[%s344 + $0xb8] sm:$0xf]
      %v6602 = vld [vmem:[%s344 + $0xbc] sm:$0x1]
      %v6651 = vrot.slane %v6555, 5
      %v6652 = vrot.slane %v6651, 4
      %v6653 = vrot.slane %v6556, 5
      %v6654 = vsel %vm1638, %v6652, %v6653
      %v6655 = vrot.slane %v6653, 4
      %v6656 = vrot.slane %v6557, 5
      %v6657 = vsel %vm1638, %v6655, %v6656
      %v6658 = vrot.slane %v6558, 5
      %v6659 = vrot.slane %v6658, 4
      %v6660 = vrot.slane %v6559, 5
      %v6661 = vsel %vm1638, %v6659, %v6660
      %v6662 = vrot.slane %v6660, 4
      %v6663 = vrot.slane %v6560, 5
      %v6664 = vsel %vm1638, %v6662, %v6663
      %v6665 = vrot.slane %v6561, 5
      %v6666 = vrot.slane %v6665, 4
      %v6667 = vrot.slane %v6562, 5
      %v6668 = vsel %vm1638, %v6666, %v6667
      %v6669 = vrot.slane %v6667, 4
      %v6670 = vrot.slane %v6563, 5
      %v6671 = vsel %vm1638, %v6669, %v6670
      %v6672 = vrot.slane %v6564, 5
      %v6673 = vrot.slane %v6672, 4
      %v6674 = vrot.slane %v6565, 5
      %v6675 = vsel %vm1638, %v6673, %v6674
      %v6676 = vrot.slane %v6674, 4
      %v6677 = vrot.slane %v6566, 5
      %v6678 = vsel %vm1638, %v6676, %v6677
      %v6679 = vrot.slane %v6567, 5
      %v6680 = vrot.slane %v6679, 4
      %v6681 = vrot.slane %v6568, 5
      %v6682 = vsel %vm1638, %v6680, %v6681
      %v6683 = vrot.slane %v6681, 4
      %v6684 = vrot.slane %v6569, 5
      %v6685 = vsel %vm1638, %v6683, %v6684
      %v6686 = vrot.slane %v6570, 5
      %v6687 = vrot.slane %v6686, 4
      %v6688 = vrot.slane %v6571, 5
      %v6689 = vsel %vm1638, %v6687, %v6688
      %v6690 = vrot.slane %v6688, 4
      %v6691 = vrot.slane %v6572, 5
      %v6692 = vsel %vm1638, %v6690, %v6691
      %v6693 = vrot.slane %v6573, 5
      %v6694 = vrot.slane %v6693, 4
      %v6695 = vrot.slane %v6574, 5
      %v6696 = vsel %vm1638, %v6694, %v6695
      %v6697 = vrot.slane %v6695, 4
      %v6698 = vrot.slane %v6575, 5
      %v6699 = vsel %vm1638, %v6697, %v6698
      %v6700 = vrot.slane %v6576, 5
      %v6701 = vrot.slane %v6700, 4
      %v6702 = vrot.slane %v6577, 5
      %v6703 = vsel %vm1638, %v6701, %v6702
      %v6704 = vrot.slane %v6702, 4
      %v6705 = vrot.slane %v6578, 5
      %v6706 = vsel %vm1638, %v6704, %v6705
      %v6707 = vrot.slane %v6579, 5
      %v6708 = vrot.slane %v6707, 4
      %v6709 = vrot.slane %v6580, 5
      %v6710 = vsel %vm1638, %v6708, %v6709
      %v6711 = vrot.slane %v6709, 4
      %v6712 = vrot.slane %v6581, 5
      %v6713 = vsel %vm1638, %v6711, %v6712
      %v6714 = vrot.slane %v6582, 5
      %v6715 = vrot.slane %v6714, 4
      %v6716 = vrot.slane %v6583, 5
      %v6717 = vsel %vm1638, %v6715, %v6716
      %v6718 = vrot.slane %v6716, 4
      %v6719 = vrot.slane %v6584, 5
      %v6720 = vsel %vm1638, %v6718, %v6719
      %v6721 = vrot.slane %v6585, 5
      %v6722 = vrot.slane %v6721, 4
      %v6723 = vrot.slane %v6586, 5
      %v6724 = vsel %vm1638, %v6722, %v6723
      %v6725 = vrot.slane %v6723, 4
      %v6726 = vrot.slane %v6587, 5
      %v6727 = vsel %vm1638, %v6725, %v6726
      %v6728 = vrot.slane %v6588, 5
      %v6729 = vrot.slane %v6728, 4
      %v6730 = vrot.slane %v6589, 5
      %v6731 = vsel %vm1638, %v6729, %v6730
      %v6732 = vrot.slane %v6730, 4
      %v6733 = vrot.slane %v6590, 5
      %v6734 = vsel %vm1638, %v6732, %v6733
      %v6735 = vrot.slane %v6591, 5
      %v6736 = vrot.slane %v6735, 4
      %v6737 = vrot.slane %v6592, 5
      %v6738 = vsel %vm1638, %v6736, %v6737
      %v6739 = vrot.slane %v6737, 4
      %v6740 = vrot.slane %v6593, 5
      %v6741 = vsel %vm1638, %v6739, %v6740
      %v6742 = vrot.slane %v6594, 5
      %v6743 = vrot.slane %v6742, 4
      %v6744 = vrot.slane %v6595, 5
      %v6745 = vsel %vm1638, %v6743, %v6744
      %v6746 = vrot.slane %v6744, 4
      %v6747 = vrot.slane %v6596, 5
      %v6748 = vsel %vm1638, %v6746, %v6747
      %v6749 = vrot.slane %v6597, 5
      %v6750 = vrot.slane %v6749, 4
      %v6751 = vrot.slane %v6598, 5
      %v6752 = vsel %vm1638, %v6750, %v6751
      %v6753 = vrot.slane %v6751, 4
      %v6754 = vrot.slane %v6599, 5
      %v6755 = vsel %vm1638, %v6753, %v6754
      %v6756 = vrot.slane %v6600, 5
      %v6757 = vrot.slane %v6756, 4
      %v6758 = vrot.slane %v6601, 5
      %v6759 = vsel %vm1638, %v6757, %v6758
      %v6760 = vrot.slane %v6758, 4
      %v6761 = vrot.slane %v6602, 5
      %v6762 = vsel %vm1638, %v6760, %v6761
      %6763 = vrot.lane.b32.xlu0 %v6654, 40
      %v6764 = vpop.permute.xlu0 %6763
      %6765 = vrot.lane.b32.xlu0 %v6657, 40
      %v6766 = vpop.permute.xlu0 %6765
      %6767 = vrot.lane.b32.xlu0 %v6661, 40
      %v6768 = vpop.permute.xlu0 %6767
      %6769 = vrot.lane.b32.xlu0 %v6664, 40
      %v6770 = vpop.permute.xlu0 %6769
      %6771 = vrot.lane.b32.xlu0 %v6668, 40
      %v6772 = vpop.permute.xlu0 %6771
      %6773 = vrot.lane.b32.xlu0 %v6671, 40
      %v6774 = vpop.permute.xlu0 %6773
      %6775 = vrot.lane.b32.xlu0 %v6675, 40
      %v6776 = vpop.permute.xlu0 %6775
      %6777 = vrot.lane.b32.xlu0 %v6678, 40
      %v6778 = vpop.permute.xlu0 %6777
      %6779 = vrot.lane.b32.xlu0 %v6682, 40
      %v6780 = vpop.permute.xlu0 %6779
      %6781 = vrot.lane.b32.xlu0 %v6685, 40
      %v6782 = vpop.permute.xlu0 %6781
      %6783 = vrot.lane.b32.xlu0 %v6689, 40
      %v6784 = vpop.permute.xlu0 %6783
      %6785 = vrot.lane.b32.xlu0 %v6692, 40
      %v6786 = vpop.permute.xlu0 %6785
      %6787 = vrot.lane.b32.xlu0 %v6696, 40
      %v6788 = vpop.permute.xlu0 %6787
      %6789 = vrot.lane.b32.xlu0 %v6699, 40
      %v6790 = vpop.permute.xlu0 %6789
      %6791 = vrot.lane.b32.xlu0 %v6703, 40
      %v6792 = vpop.permute.xlu0 %6791
      %6793 = vrot.lane.b32.xlu0 %v6706, 40
      %v6794 = vpop.permute.xlu0 %6793
      %6795 = vrot.lane.b32.xlu0 %v6710, 40
      %v6796 = vpop.permute.xlu0 %6795
      %6797 = vrot.lane.b32.xlu0 %v6713, 40
      %v6798 = vpop.permute.xlu0 %6797
      %6799 = vrot.lane.b32.xlu0 %v6717, 40
      %v6800 = vpop.permute.xlu0 %6799
      %6801 = vrot.lane.b32.xlu0 %v6720, 40
      %v6802 = vpop.permute.xlu0 %6801
      %6803 = vrot.lane.b32.xlu0 %v6724, 40
      %v6804 = vpop.permute.xlu0 %6803
      %6805 = vrot.lane.b32.xlu0 %v6727, 40
      %v6806 = vpop.permute.xlu0 %6805
      %6807 = vrot.lane.b32.xlu0 %v6731, 40
      %v6808 = vpop.permute.xlu0 %6807
      %6809 = vrot.lane.b32.xlu0 %v6734, 40
      %v6810 = vpop.permute.xlu0 %6809
      %6811 = vrot.lane.b32.xlu0 %v6738, 40
      %v6812 = vpop.permute.xlu0 %6811
      %6813 = vrot.lane.b32.xlu0 %v6741, 40
      %v6814 = vpop.permute.xlu0 %6813
      %6815 = vrot.lane.b32.xlu0 %v6745, 40
      %v6816 = vpop.permute.xlu0 %6815
      %6817 = vrot.lane.b32.xlu0 %v6748, 40
      %v6818 = vpop.permute.xlu0 %6817
      %6819 = vrot.lane.b32.xlu0 %v6752, 40
      %v6820 = vpop.permute.xlu0 %6819
      %6821 = vrot.lane.b32.xlu0 %v6755, 40
      %v6822 = vpop.permute.xlu0 %6821
      %6823 = vrot.lane.b32.xlu0 %v6759, 40
      %v6824 = vpop.permute.xlu0 %6823
      %6825 = vrot.lane.b32.xlu0 %v6762, 40
      %v6826 = vpop.permute.xlu0 %6825
      %vm6859 = vcmask 388416
      %6860 = vst.msk [vmem:[#allocation5] sm:$0xf] %vm6859, %v6764
      %6861 = vst.msk [vmem:[#allocation5 + $0x4] sm:$0xf] %vm6859, %v6766
      %6862 = vst.msk [vmem:[#allocation5 + $0x8] sm:$0xf] %vm6859, %v6768
      %6863 = vst.msk [vmem:[#allocation5 + $0xc] sm:$0xf] %vm6859, %v6770
      %6864 = vst.msk [vmem:[#allocation5 + $0x10] sm:$0xf] %vm6859, %v6772
      %6865 = vst.msk [vmem:[#allocation5 + $0x14] sm:$0xf] %vm6859, %v6774
      %6866 = vst.msk [vmem:[#allocation5 + $0x18] sm:$0xf] %vm6859, %v6776
      %6867 = vst.msk [vmem:[#allocation5 + $0x1c] sm:$0xf] %vm6859, %v6778
      %6868 = vst.msk [vmem:[#allocation5 + $0x20] sm:$0xf] %vm6859, %v6780
      %6869 = vst.msk [vmem:[#allocation5 + $0x24] sm:$0xf] %vm6859, %v6782
      %6870 = vst.msk [vmem:[#allocation5 + $0x28] sm:$0xf] %vm6859, %v6784
      %6871 = vst.msk [vmem:[#allocation5 + $0x2c] sm:$0xf] %vm6859, %v6786
      %6872 = vst.msk [vmem:[#allocation5 + $0x30] sm:$0xf] %vm6859, %v6788
      %6873 = vst.msk [vmem:[#allocation5 + $0x34] sm:$0xf] %vm6859, %v6790
      %6874 = vst.msk [vmem:[#allocation5 + $0x38] sm:$0xf] %vm6859, %v6792
      %6875 = vst.msk [vmem:[#allocation5 + $0x3c] sm:$0xf] %vm6859, %v6794
      %6876 = vst.msk [vmem:[#allocation5 + $0x40] sm:$0xf] %vm6859, %v6796
      %6877 = vst.msk [vmem:[#allocation5 + $0x44] sm:$0xf] %vm6859, %v6798
      %6878 = vst.msk [vmem:[#allocation5 + $0x48] sm:$0xf] %vm6859, %v6800
      %6879 = vst.msk [vmem:[#allocation5 + $0x4c] sm:$0xf] %vm6859, %v6802
      %6880 = vst.msk [vmem:[#allocation5 + $0x50] sm:$0xf] %vm6859, %v6804
      %6881 = vst.msk [vmem:[#allocation5 + $0x54] sm:$0xf] %vm6859, %v6806
      %6882 = vst.msk [vmem:[#allocation5 + $0x58] sm:$0xf] %vm6859, %v6808
      %6883 = vst.msk [vmem:[#allocation5 + $0x5c] sm:$0xf] %vm6859, %v6810
      %6884 = vst.msk [vmem:[#allocation5 + $0x60] sm:$0xf] %vm6859, %v6812
      %6885 = vst.msk [vmem:[#allocation5 + $0x64] sm:$0xf] %vm6859, %v6814
      %6886 = vst.msk [vmem:[#allocation5 + $0x68] sm:$0xf] %vm6859, %v6816
      %6887 = vst.msk [vmem:[#allocation5 + $0x6c] sm:$0xf] %vm6859, %v6818
      %6888 = vst.msk [vmem:[#allocation5 + $0x70] sm:$0xf] %vm6859, %v6820
      %6889 = vst.msk [vmem:[#allocation5 + $0x74] sm:$0xf] %vm6859, %v6822
      %6890 = vst.msk [vmem:[#allocation5 + $0x78] sm:$0xf] %vm6859, %v6824
      %6891 = vst.msk [vmem:[#allocation5 + $0x7c] sm:$0xf] %vm6859, %v6826
      %s6892 = scalar_lea.vmem [#allocation4], 24
      %v6893 = vld [vmem:[%s6892] sm:$0xf]
      %v6894 = vld [vmem:[%s6892 + $0x4] sm:$0xf]
      %v6895 = vld [vmem:[%s6892 + $0xc] sm:$0xf]
      %v6896 = vld [vmem:[%s6892 + $0x10] sm:$0xf]
      %v6897 = vld [vmem:[%s6892 + $0x18] sm:$0xf]
      %v6898 = vld [vmem:[%s6892 + $0x1c] sm:$0xf]
      %v6899 = vld [vmem:[%s6892 + $0x24] sm:$0xf]
      %v6900 = vld [vmem:[%s6892 + $0x28] sm:$0xf]
      %v6901 = vld [vmem:[%s6892 + $0x30] sm:$0xf]
      %v6902 = vld [vmem:[%s6892 + $0x34] sm:$0xf]
      %v6903 = vld [vmem:[%s6892 + $0x3c] sm:$0xf]
      %v6904 = vld [vmem:[%s6892 + $0x40] sm:$0xf]
      %v6905 = vld [vmem:[%s6892 + $0x48] sm:$0xf]
      %v6906 = vld [vmem:[%s6892 + $0x4c] sm:$0xf]
      %v6907 = vld [vmem:[%s6892 + $0x54] sm:$0xf]
      %v6908 = vld [vmem:[%s6892 + $0x58] sm:$0xf]
      %v6909 = vld [vmem:[%s6892 + $0x60] sm:$0xf]
      %v6910 = vld [vmem:[%s6892 + $0x64] sm:$0xf]
      %v6911 = vld [vmem:[%s6892 + $0x6c] sm:$0xf]
      %v6912 = vld [vmem:[%s6892 + $0x70] sm:$0xf]
      %v6913 = vld [vmem:[%s6892 + $0x78] sm:$0xf]
      %v6914 = vld [vmem:[%s6892 + $0x7c] sm:$0xf]
      %v6915 = vld [vmem:[%s6892 + $0x84] sm:$0xf]
      %v6916 = vld [vmem:[%s6892 + $0x88] sm:$0xf]
      %v6917 = vld [vmem:[%s6892 + $0x90] sm:$0xf]
      %v6918 = vld [vmem:[%s6892 + $0x94] sm:$0xf]
      %v6919 = vld [vmem:[%s6892 + $0x9c] sm:$0xf]
      %v6920 = vld [vmem:[%s6892 + $0xa0] sm:$0xf]
      %v6921 = vld [vmem:[%s6892 + $0xa8] sm:$0xf]
      %v6922 = vld [vmem:[%s6892 + $0xac] sm:$0xf]
      %v6923 = vld [vmem:[%s6892 + $0xb4] sm:$0xf]
      %v6924 = vld [vmem:[%s6892 + $0xb8] sm:$0xf]
      %6957 = vrot.lane.b32.xlu0 %v6893, 48
      %v6958 = vpop.permute.xlu0 %6957
      %6959 = vrot.lane.b32.xlu0 %v6894, 48
      %v6960 = vpop.permute.xlu0 %6959
      %6961 = vrot.lane.b32.xlu0 %v6895, 48
      %v6962 = vpop.permute.xlu0 %6961
      %6963 = vrot.lane.b32.xlu0 %v6896, 48
      %v6964 = vpop.permute.xlu0 %6963
      %6965 = vrot.lane.b32.xlu0 %v6897, 48
      %v6966 = vpop.permute.xlu0 %6965
      %6967 = vrot.lane.b32.xlu0 %v6898, 48
      %v6968 = vpop.permute.xlu0 %6967
      %6969 = vrot.lane.b32.xlu0 %v6899, 48
      %v6970 = vpop.permute.xlu0 %6969
      %6971 = vrot.lane.b32.xlu0 %v6900, 48
      %v6972 = vpop.permute.xlu0 %6971
      %6973 = vrot.lane.b32.xlu0 %v6901, 48
      %v6974 = vpop.permute.xlu0 %6973
      %6975 = vrot.lane.b32.xlu0 %v6902, 48
      %v6976 = vpop.permute.xlu0 %6975
      %6977 = vrot.lane.b32.xlu0 %v6903, 48
      %v6978 = vpop.permute.xlu0 %6977
      %6979 = vrot.lane.b32.xlu0 %v6904, 48
      %v6980 = vpop.permute.xlu0 %6979
      %6981 = vrot.lane.b32.xlu0 %v6905, 48
      %v6982 = vpop.permute.xlu0 %6981
      %6983 = vrot.lane.b32.xlu0 %v6906, 48
      %v6984 = vpop.permute.xlu0 %6983
      %6985 = vrot.lane.b32.xlu0 %v6907, 48
      %v6986 = vpop.permute.xlu0 %6985
      %6987 = vrot.lane.b32.xlu0 %v6908, 48
      %v6988 = vpop.permute.xlu0 %6987
      %6989 = vrot.lane.b32.xlu0 %v6909, 48
      %v6990 = vpop.permute.xlu0 %6989
      %6991 = vrot.lane.b32.xlu0 %v6910, 48
      %v6992 = vpop.permute.xlu0 %6991
      %6993 = vrot.lane.b32.xlu0 %v6911, 48
      %v6994 = vpop.permute.xlu0 %6993
      %6995 = vrot.lane.b32.xlu0 %v6912, 48
      %v6996 = vpop.permute.xlu0 %6995
      %6997 = vrot.lane.b32.xlu0 %v6913, 48
      %v6998 = vpop.permute.xlu0 %6997
      %6999 = vrot.lane.b32.xlu0 %v6914, 48
      %v7000 = vpop.permute.xlu0 %6999
      %7001 = vrot.lane.b32.xlu0 %v6915, 48
      %v7002 = vpop.permute.xlu0 %7001
      %7003 = vrot.lane.b32.xlu0 %v6916, 48
      %v7004 = vpop.permute.xlu0 %7003
      %7005 = vrot.lane.b32.xlu0 %v6917, 48
      %v7006 = vpop.permute.xlu0 %7005
      %7007 = vrot.lane.b32.xlu0 %v6918, 48
      %v7008 = vpop.permute.xlu0 %7007
      %7009 = vrot.lane.b32.xlu0 %v6919, 48
      %v7010 = vpop.permute.xlu0 %7009
      %7011 = vrot.lane.b32.xlu0 %v6920, 48
      %v7012 = vpop.permute.xlu0 %7011
      %7013 = vrot.lane.b32.xlu0 %v6921, 48
      %v7014 = vpop.permute.xlu0 %7013
      %7015 = vrot.lane.b32.xlu0 %v6922, 48
      %v7016 = vpop.permute.xlu0 %7015
      %7017 = vrot.lane.b32.xlu0 %v6923, 48
      %v7018 = vpop.permute.xlu0 %7017
      %7019 = vrot.lane.b32.xlu0 %v6924, 48
      %v7020 = vpop.permute.xlu0 %7019
      %vm7053 = vcmask 454016
      %7054 = vst.msk [vmem:[#allocation5] sm:$0xf] %vm7053, %v6958
      %7055 = vst.msk [vmem:[#allocation5 + $0x4] sm:$0xf] %vm7053, %v6960
      %7056 = vst.msk [vmem:[#allocation5 + $0x8] sm:$0xf] %vm7053, %v6962
      %7057 = vst.msk [vmem:[#allocation5 + $0xc] sm:$0xf] %vm7053, %v6964
      %7058 = vst.msk [vmem:[#allocation5 + $0x10] sm:$0xf] %vm7053, %v6966
      %7059 = vst.msk [vmem:[#allocation5 + $0x14] sm:$0xf] %vm7053, %v6968
      %7060 = vst.msk [vmem:[#allocation5 + $0x18] sm:$0xf] %vm7053, %v6970
      %7061 = vst.msk [vmem:[#allocation5 + $0x1c] sm:$0xf] %vm7053, %v6972
      %7062 = vst.msk [vmem:[#allocation5 + $0x20] sm:$0xf] %vm7053, %v6974
      %7063 = vst.msk [vmem:[#allocation5 + $0x24] sm:$0xf] %vm7053, %v6976
      %7064 = vst.msk [vmem:[#allocation5 + $0x28] sm:$0xf] %vm7053, %v6978
      %7065 = vst.msk [vmem:[#allocation5 + $0x2c] sm:$0xf] %vm7053, %v6980
      %7066 = vst.msk [vmem:[#allocation5 + $0x30] sm:$0xf] %vm7053, %v6982
      %7067 = vst.msk [vmem:[#allocation5 + $0x34] sm:$0xf] %vm7053, %v6984
      %7068 = vst.msk [vmem:[#allocation5 + $0x38] sm:$0xf] %vm7053, %v6986
      %7069 = vst.msk [vmem:[#allocation5 + $0x3c] sm:$0xf] %vm7053, %v6988
      %7070 = vst.msk [vmem:[#allocation5 + $0x40] sm:$0xf] %vm7053, %v6990
      %7071 = vst.msk [vmem:[#allocation5 + $0x44] sm:$0xf] %vm7053, %v6992
      %7072 = vst.msk [vmem:[#allocation5 + $0x48] sm:$0xf] %vm7053, %v6994
      %7073 = vst.msk [vmem:[#allocation5 + $0x4c] sm:$0xf] %vm7053, %v6996
      %7074 = vst.msk [vmem:[#allocation5 + $0x50] sm:$0xf] %vm7053, %v6998
      %7075 = vst.msk [vmem:[#allocation5 + $0x54] sm:$0xf] %vm7053, %v7000
      %7076 = vst.msk [vmem:[#allocation5 + $0x58] sm:$0xf] %vm7053, %v7002
      %7077 = vst.msk [vmem:[#allocation5 + $0x5c] sm:$0xf] %vm7053, %v7004
      %7078 = vst.msk [vmem:[#allocation5 + $0x60] sm:$0xf] %vm7053, %v7006
      %7079 = vst.msk [vmem:[#allocation5 + $0x64] sm:$0xf] %vm7053, %v7008
      %7080 = vst.msk [vmem:[#allocation5 + $0x68] sm:$0xf] %vm7053, %v7010
      %7081 = vst.msk [vmem:[#allocation5 + $0x6c] sm:$0xf] %vm7053, %v7012
      %7082 = vst.msk [vmem:[#allocation5 + $0x70] sm:$0xf] %vm7053, %v7014
      %7083 = vst.msk [vmem:[#allocation5 + $0x74] sm:$0xf] %vm7053, %v7016
      %7084 = vst.msk [vmem:[#allocation5 + $0x78] sm:$0xf] %vm7053, %v7018
      %7085 = vst.msk [vmem:[#allocation5 + $0x7c] sm:$0xf] %vm7053, %v7020
      %v7086 = vld [vmem:[%s6892] sm:$0xf]
      %v7087 = vld [vmem:[%s6892 + $0x4] sm:$0xf]
      %v7088 = vld [vmem:[%s6892 + $0x8] sm:$0x1]
      %v7089 = vld [vmem:[%s6892 + $0xc] sm:$0xf]
      %v7090 = vld [vmem:[%s6892 + $0x10] sm:$0xf]
      %v7091 = vld [vmem:[%s6892 + $0x14] sm:$0x1]
      %v7092 = vld [vmem:[%s6892 + $0x18] sm:$0xf]
      %v7093 = vld [vmem:[%s6892 + $0x1c] sm:$0xf]
      %v7094 = vld [vmem:[%s6892 + $0x20] sm:$0x1]
      %v7095 = vld [vmem:[%s6892 + $0x24] sm:$0xf]
      %v7096 = vld [vmem:[%s6892 + $0x28] sm:$0xf]
      %v7097 = vld [vmem:[%s6892 + $0x2c] sm:$0x1]
      %v7098 = vld [vmem:[%s6892 + $0x30] sm:$0xf]
      %v7099 = vld [vmem:[%s6892 + $0x34] sm:$0xf]
      %v7100 = vld [vmem:[%s6892 + $0x38] sm:$0x1]
      %v7101 = vld [vmem:[%s6892 + $0x3c] sm:$0xf]
      %v7102 = vld [vmem:[%s6892 + $0x40] sm:$0xf]
      %v7103 = vld [vmem:[%s6892 + $0x44] sm:$0x1]
      %v7104 = vld [vmem:[%s6892 + $0x48] sm:$0xf]
      %v7105 = vld [vmem:[%s6892 + $0x4c] sm:$0xf]
      %v7106 = vld [vmem:[%s6892 + $0x50] sm:$0x1]
      %v7107 = vld [vmem:[%s6892 + $0x54] sm:$0xf]
      %v7108 = vld [vmem:[%s6892 + $0x58] sm:$0xf]
      %v7109 = vld [vmem:[%s6892 + $0x5c] sm:$0x1]
      %v7110 = vld [vmem:[%s6892 + $0x60] sm:$0xf]
      %v7111 = vld [vmem:[%s6892 + $0x64] sm:$0xf]
      %v7112 = vld [vmem:[%s6892 + $0x68] sm:$0x1]
      %v7113 = vld [vmem:[%s6892 + $0x6c] sm:$0xf]
      %v7114 = vld [vmem:[%s6892 + $0x70] sm:$0xf]
      %v7115 = vld [vmem:[%s6892 + $0x74] sm:$0x1]
      %v7116 = vld [vmem:[%s6892 + $0x78] sm:$0xf]
      %v7117 = vld [vmem:[%s6892 + $0x7c] sm:$0xf]
      %v7118 = vld [vmem:[%s6892 + $0x80] sm:$0x1]
      %v7119 = vld [vmem:[%s6892 + $0x84] sm:$0xf]
      %v7120 = vld [vmem:[%s6892 + $0x88] sm:$0xf]
      %v7121 = vld [vmem:[%s6892 + $0x8c] sm:$0x1]
      %v7122 = vld [vmem:[%s6892 + $0x90] sm:$0xf]
      %v7123 = vld [vmem:[%s6892 + $0x94] sm:$0xf]
      %v7124 = vld [vmem:[%s6892 + $0x98] sm:$0x1]
      %v7125 = vld [vmem:[%s6892 + $0x9c] sm:$0xf]
      %v7126 = vld [vmem:[%s6892 + $0xa0] sm:$0xf]
      %v7127 = vld [vmem:[%s6892 + $0xa4] sm:$0x1]
      %v7128 = vld [vmem:[%s6892 + $0xa8] sm:$0xf]
      %v7129 = vld [vmem:[%s6892 + $0xac] sm:$0xf]
      %v7130 = vld [vmem:[%s6892 + $0xb0] sm:$0x1]
      %v7131 = vld [vmem:[%s6892 + $0xb4] sm:$0xf]
      %v7132 = vld [vmem:[%s6892 + $0xb8] sm:$0xf]
      %v7133 = vld [vmem:[%s6892 + $0xbc] sm:$0x1]
      %v7135 = vshrl.u32 %v7086, 16
      %v7137 = vrot.slane %v7135, 4
      %v7138 = vshll.u32 %v7086, 16
      %v7140 = vrot.slane %v7138, 5
      %v7141 = vor.u32 %v7137, %v7140
      %v7142 = vrot.slane %v7141, 4
      %v7144 = vshll.u32 %v7087, 16
      %v7146 = vrot.slane %v7144, 5
      %v7147 = vsel %vm1026, %v7142, %v7146
      %v7148 = vshrl.u32 %v7087, 16
      %v7150 = vrot.slane %v7148, 4
      %v7151 = vor.u32 %v7150, %v7146
      %v7152 = vrot.slane %v7151, 4
      %v7154 = vshll.u32 %v7088, 16
      %v7156 = vrot.slane %v7154, 5
      %v7157 = vsel %vm1026, %v7152, %v7156
      %v7159 = vshrl.u32 %v7089, 16
      %v7161 = vrot.slane %v7159, 4
      %v7162 = vshll.u32 %v7089, 16
      %v7164 = vrot.slane %v7162, 5
      %v7165 = vor.u32 %v7161, %v7164
      %v7166 = vrot.slane %v7165, 4
      %v7168 = vshll.u32 %v7090, 16
      %v7170 = vrot.slane %v7168, 5
      %v7171 = vsel %vm1026, %v7166, %v7170
      %v7172 = vshrl.u32 %v7090, 16
      %v7174 = vrot.slane %v7172, 4
      %v7175 = vor.u32 %v7174, %v7170
      %v7176 = vrot.slane %v7175, 4
      %v7178 = vshll.u32 %v7091, 16
      %v7180 = vrot.slane %v7178, 5
      %v7181 = vsel %vm1026, %v7176, %v7180
      %v7183 = vshrl.u32 %v7092, 16
      %v7185 = vrot.slane %v7183, 4
      %v7186 = vshll.u32 %v7092, 16
      %v7188 = vrot.slane %v7186, 5
      %v7189 = vor.u32 %v7185, %v7188
      %v7190 = vrot.slane %v7189, 4
      %v7192 = vshll.u32 %v7093, 16
      %v7194 = vrot.slane %v7192, 5
      %v7195 = vsel %vm1026, %v7190, %v7194
      %v7196 = vshrl.u32 %v7093, 16
      %v7198 = vrot.slane %v7196, 4
      %v7199 = vor.u32 %v7198, %v7194
      %v7200 = vrot.slane %v7199, 4
      %v7202 = vshll.u32 %v7094, 16
      %v7204 = vrot.slane %v7202, 5
      %v7205 = vsel %vm1026, %v7200, %v7204
      %v7207 = vshrl.u32 %v7095, 16
      %v7209 = vrot.slane %v7207, 4
      %v7210 = vshll.u32 %v7095, 16
      %v7212 = vrot.slane %v7210, 5
      %v7213 = vor.u32 %v7209, %v7212
      %v7214 = vrot.slane %v7213, 4
      %v7216 = vshll.u32 %v7096, 16
      %v7218 = vrot.slane %v7216, 5
      %v7219 = vsel %vm1026, %v7214, %v7218
      %v7220 = vshrl.u32 %v7096, 16
      %v7222 = vrot.slane %v7220, 4
      %v7223 = vor.u32 %v7222, %v7218
      %v7224 = vrot.slane %v7223, 4
      %v7226 = vshll.u32 %v7097, 16
      %v7228 = vrot.slane %v7226, 5
      %v7229 = vsel %vm1026, %v7224, %v7228
      %v7231 = vshrl.u32 %v7098, 16
      %v7233 = vrot.slane %v7231, 4
      %v7234 = vshll.u32 %v7098, 16
      %v7236 = vrot.slane %v7234, 5
      %v7237 = vor.u32 %v7233, %v7236
      %v7238 = vrot.slane %v7237, 4
      %v7240 = vshll.u32 %v7099, 16
      %v7242 = vrot.slane %v7240, 5
      %v7243 = vsel %vm1026, %v7238, %v7242
      %v7244 = vshrl.u32 %v7099, 16
      %v7246 = vrot.slane %v7244, 4
      %v7247 = vor.u32 %v7246, %v7242
      %v7248 = vrot.slane %v7247, 4
      %v7250 = vshll.u32 %v7100, 16
      %v7252 = vrot.slane %v7250, 5
      %v7253 = vsel %vm1026, %v7248, %v7252
      %v7255 = vshrl.u32 %v7101, 16
      %v7257 = vrot.slane %v7255, 4
      %v7258 = vshll.u32 %v7101, 16
      %v7260 = vrot.slane %v7258, 5
      %v7261 = vor.u32 %v7257, %v7260
      %v7262 = vrot.slane %v7261, 4
      %v7264 = vshll.u32 %v7102, 16
      %v7266 = vrot.slane %v7264, 5
      %v7267 = vsel %vm1026, %v7262, %v7266
      %v7268 = vshrl.u32 %v7102, 16
      %v7270 = vrot.slane %v7268, 4
      %v7271 = vor.u32 %v7270, %v7266
      %v7272 = vrot.slane %v7271, 4
      %v7274 = vshll.u32 %v7103, 16
      %v7276 = vrot.slane %v7274, 5
      %v7277 = vsel %vm1026, %v7272, %v7276
      %v7279 = vshrl.u32 %v7104, 16
      %v7281 = vrot.slane %v7279, 4
      %v7282 = vshll.u32 %v7104, 16
      %v7284 = vrot.slane %v7282, 5
      %v7285 = vor.u32 %v7281, %v7284
      %v7286 = vrot.slane %v7285, 4
      %v7288 = vshll.u32 %v7105, 16
      %v7290 = vrot.slane %v7288, 5
      %v7291 = vsel %vm1026, %v7286, %v7290
      %v7292 = vshrl.u32 %v7105, 16
      %v7294 = vrot.slane %v7292, 4
      %v7295 = vor.u32 %v7294, %v7290
      %v7296 = vrot.slane %v7295, 4
      %v7298 = vshll.u32 %v7106, 16
      %v7300 = vrot.slane %v7298, 5
      %v7301 = vsel %vm1026, %v7296, %v7300
      %v7303 = vshrl.u32 %v7107, 16
      %v7305 = vrot.slane %v7303, 4
      %v7306 = vshll.u32 %v7107, 16
      %v7308 = vrot.slane %v7306, 5
      %v7309 = vor.u32 %v7305, %v7308
      %v7310 = vrot.slane %v7309, 4
      %v7312 = vshll.u32 %v7108, 16
      %v7314 = vrot.slane %v7312, 5
      %v7315 = vsel %vm1026, %v7310, %v7314
      %v7316 = vshrl.u32 %v7108, 16
      %v7318 = vrot.slane %v7316, 4
      %v7319 = vor.u32 %v7318, %v7314
      %v7320 = vrot.slane %v7319, 4
      %v7322 = vshll.u32 %v7109, 16
      %v7324 = vrot.slane %v7322, 5
      %v7325 = vsel %vm1026, %v7320, %v7324
      %v7327 = vshrl.u32 %v7110, 16
      %v7329 = vrot.slane %v7327, 4
      %v7330 = vshll.u32 %v7110, 16
      %v7332 = vrot.slane %v7330, 5
      %v7333 = vor.u32 %v7329, %v7332
      %v7334 = vrot.slane %v7333, 4
      %v7336 = vshll.u32 %v7111, 16
      %v7338 = vrot.slane %v7336, 5
      %v7339 = vsel %vm1026, %v7334, %v7338
      %v7340 = vshrl.u32 %v7111, 16
      %v7342 = vrot.slane %v7340, 4
      %v7343 = vor.u32 %v7342, %v7338
      %v7344 = vrot.slane %v7343, 4
      %v7346 = vshll.u32 %v7112, 16
      %v7348 = vrot.slane %v7346, 5
      %v7349 = vsel %vm1026, %v7344, %v7348
      %v7351 = vshrl.u32 %v7113, 16
      %v7353 = vrot.slane %v7351, 4
      %v7354 = vshll.u32 %v7113, 16
      %v7356 = vrot.slane %v7354, 5
      %v7357 = vor.u32 %v7353, %v7356
      %v7358 = vrot.slane %v7357, 4
      %v7360 = vshll.u32 %v7114, 16
      %v7362 = vrot.slane %v7360, 5
      %v7363 = vsel %vm1026, %v7358, %v7362
      %v7364 = vshrl.u32 %v7114, 16
      %v7366 = vrot.slane %v7364, 4
      %v7367 = vor.u32 %v7366, %v7362
      %v7368 = vrot.slane %v7367, 4
      %v7370 = vshll.u32 %v7115, 16
      %v7372 = vrot.slane %v7370, 5
      %v7373 = vsel %vm1026, %v7368, %v7372
      %v7375 = vshrl.u32 %v7116, 16
      %v7377 = vrot.slane %v7375, 4
      %v7378 = vshll.u32 %v7116, 16
      %v7380 = vrot.slane %v7378, 5
      %v7381 = vor.u32 %v7377, %v7380
      %v7382 = vrot.slane %v7381, 4
      %v7384 = vshll.u32 %v7117, 16
      %v7386 = vrot.slane %v7384, 5
      %v7387 = vsel %vm1026, %v7382, %v7386
      %v7388 = vshrl.u32 %v7117, 16
      %v7390 = vrot.slane %v7388, 4
      %v7391 = vor.u32 %v7390, %v7386
      %v7392 = vrot.slane %v7391, 4
      %v7394 = vshll.u32 %v7118, 16
      %v7396 = vrot.slane %v7394, 5
      %v7397 = vsel %vm1026, %v7392, %v7396
      %v7399 = vshrl.u32 %v7119, 16
      %v7401 = vrot.slane %v7399, 4
      %v7402 = vshll.u32 %v7119, 16
      %v7404 = vrot.slane %v7402, 5
      %v7405 = vor.u32 %v7401, %v7404
      %v7406 = vrot.slane %v7405, 4
      %v7408 = vshll.u32 %v7120, 16
      %v7410 = vrot.slane %v7408, 5
      %v7411 = vsel %vm1026, %v7406, %v7410
      %v7412 = vshrl.u32 %v7120, 16
      %v7414 = vrot.slane %v7412, 4
      %v7415 = vor.u32 %v7414, %v7410
      %v7416 = vrot.slane %v7415, 4
      %v7418 = vshll.u32 %v7121, 16
      %v7420 = vrot.slane %v7418, 5
      %v7421 = vsel %vm1026, %v7416, %v7420
      %v7423 = vshrl.u32 %v7122, 16
      %v7425 = vrot.slane %v7423, 4
      %v7426 = vshll.u32 %v7122, 16
      %v7428 = vrot.slane %v7426, 5
      %v7429 = vor.u32 %v7425, %v7428
      %v7430 = vrot.slane %v7429, 4
      %v7432 = vshll.u32 %v7123, 16
      %v7434 = vrot.slane %v7432, 5
      %v7435 = vsel %vm1026, %v7430, %v7434
      %v7436 = vshrl.u32 %v7123, 16
      %v7438 = vrot.slane %v7436, 4
      %v7439 = vor.u32 %v7438, %v7434
      %v7440 = vrot.slane %v7439, 4
      %v7442 = vshll.u32 %v7124, 16
      %v7444 = vrot.slane %v7442, 5
      %v7445 = vsel %vm1026, %v7440, %v7444
      %v7447 = vshrl.u32 %v7125, 16
      %v7449 = vrot.slane %v7447, 4
      %v7450 = vshll.u32 %v7125, 16
      %v7452 = vrot.slane %v7450, 5
      %v7453 = vor.u32 %v7449, %v7452
      %v7454 = vrot.slane %v7453, 4
      %v7456 = vshll.u32 %v7126, 16
      %v7458 = vrot.slane %v7456, 5
      %v7459 = vsel %vm1026, %v7454, %v7458
      %v7460 = vshrl.u32 %v7126, 16
      %v7462 = vrot.slane %v7460, 4
      %v7463 = vor.u32 %v7462, %v7458
      %v7464 = vrot.slane %v7463, 4
      %v7466 = vshll.u32 %v7127, 16
      %v7468 = vrot.slane %v7466, 5
      %v7469 = vsel %vm1026, %v7464, %v7468
      %v7471 = vshrl.u32 %v7128, 16
      %v7473 = vrot.slane %v7471, 4
      %v7474 = vshll.u32 %v7128, 16
      %v7476 = vrot.slane %v7474, 5
      %v7477 = vor.u32 %v7473, %v7476
      %v7478 = vrot.slane %v7477, 4
      %v7480 = vshll.u32 %v7129, 16
      %v7482 = vrot.slane %v7480, 5
      %v7483 = vsel %vm1026, %v7478, %v7482
      %v7484 = vshrl.u32 %v7129, 16
      %v7486 = vrot.slane %v7484, 4
      %v7487 = vor.u32 %v7486, %v7482
      %v7488 = vrot.slane %v7487, 4
      %v7490 = vshll.u32 %v7130, 16
      %v7492 = vrot.slane %v7490, 5
      %v7493 = vsel %vm1026, %v7488, %v7492
      %v7495 = vshrl.u32 %v7131, 16
      %v7497 = vrot.slane %v7495, 4
      %v7498 = vshll.u32 %v7131, 16
      %v7500 = vrot.slane %v7498, 5
      %v7501 = vor.u32 %v7497, %v7500
      %v7502 = vrot.slane %v7501, 4
      %v7504 = vshll.u32 %v7132, 16
      %v7506 = vrot.slane %v7504, 5
      %v7507 = vsel %vm1026, %v7502, %v7506
      %v7508 = vshrl.u32 %v7132, 16
      %v7510 = vrot.slane %v7508, 4
      %v7511 = vor.u32 %v7510, %v7506
      %v7512 = vrot.slane %v7511, 4
      %v7514 = vshll.u32 %v7133, 16
      %v7516 = vrot.slane %v7514, 5
      %v7517 = vsel %vm1026, %v7512, %v7516
      %7518 = vrot.lane.b32.xlu0 %v7147, 56
      %v7519 = vpop.permute.xlu0 %7518
      %7520 = vrot.lane.b32.xlu0 %v7157, 56
      %v7521 = vpop.permute.xlu0 %7520
      %7522 = vrot.lane.b32.xlu0 %v7171, 56
      %v7523 = vpop.permute.xlu0 %7522
      %7524 = vrot.lane.b32.xlu0 %v7181, 56
      %v7525 = vpop.permute.xlu0 %7524
      %7526 = vrot.lane.b32.xlu0 %v7195, 56
      %v7527 = vpop.permute.xlu0 %7526
      %7528 = vrot.lane.b32.xlu0 %v7205, 56
      %v7529 = vpop.permute.xlu0 %7528
      %7530 = vrot.lane.b32.xlu0 %v7219, 56
      %v7531 = vpop.permute.xlu0 %7530
      %7532 = vrot.lane.b32.xlu0 %v7229, 56
      %v7533 = vpop.permute.xlu0 %7532
      %7534 = vrot.lane.b32.xlu0 %v7243, 56
      %v7535 = vpop.permute.xlu0 %7534
      %7536 = vrot.lane.b32.xlu0 %v7253, 56
      %v7537 = vpop.permute.xlu0 %7536
      %7538 = vrot.lane.b32.xlu0 %v7267, 56
      %v7539 = vpop.permute.xlu0 %7538
      %7540 = vrot.lane.b32.xlu0 %v7277, 56
      %v7541 = vpop.permute.xlu0 %7540
      %7542 = vrot.lane.b32.xlu0 %v7291, 56
      %v7543 = vpop.permute.xlu0 %7542
      %7544 = vrot.lane.b32.xlu0 %v7301, 56
      %v7545 = vpop.permute.xlu0 %7544
      %7546 = vrot.lane.b32.xlu0 %v7315, 56
      %v7547 = vpop.permute.xlu0 %7546
      %7548 = vrot.lane.b32.xlu0 %v7325, 56
      %v7549 = vpop.permute.xlu0 %7548
      %7550 = vrot.lane.b32.xlu0 %v7339, 56
      %v7551 = vpop.permute.xlu0 %7550
      %7552 = vrot.lane.b32.xlu0 %v7349, 56
      %v7553 = vpop.permute.xlu0 %7552
      %7554 = vrot.lane.b32.xlu0 %v7363, 56
      %v7555 = vpop.permute.xlu0 %7554
      %7556 = vrot.lane.b32.xlu0 %v7373, 56
      %v7557 = vpop.permute.xlu0 %7556
      %7558 = vrot.lane.b32.xlu0 %v7387, 56
      %v7559 = vpop.permute.xlu0 %7558
      %7560 = vrot.lane.b32.xlu0 %v7397, 56
      %v7561 = vpop.permute.xlu0 %7560
      %7562 = vrot.lane.b32.xlu0 %v7411, 56
      %v7563 = vpop.permute.xlu0 %7562
      %7564 = vrot.lane.b32.xlu0 %v7421, 56
      %v7565 = vpop.permute.xlu0 %7564
      %7566 = vrot.lane.b32.xlu0 %v7435, 56
      %v7567 = vpop.permute.xlu0 %7566
      %7568 = vrot.lane.b32.xlu0 %v7445, 56
      %v7569 = vpop.permute.xlu0 %7568
      %7570 = vrot.lane.b32.xlu0 %v7459, 56
      %v7571 = vpop.permute.xlu0 %7570
      %7572 = vrot.lane.b32.xlu0 %v7469, 56
      %v7573 = vpop.permute.xlu0 %7572
      %7574 = vrot.lane.b32.xlu0 %v7483, 56
      %v7575 = vpop.permute.xlu0 %7574
      %7576 = vrot.lane.b32.xlu0 %v7493, 56
      %v7577 = vpop.permute.xlu0 %7576
      %7578 = vrot.lane.b32.xlu0 %v7507, 56
      %v7579 = vpop.permute.xlu0 %7578
      %7580 = vrot.lane.b32.xlu0 %v7517, 56
      %v7581 = vpop.permute.xlu0 %7580
      %vm7614 = vcmask 519616
      %7615 = vst.msk [vmem:[#allocation5] sm:$0xf] %vm7614, %v7519
      %7616 = vst.msk [vmem:[#allocation5 + $0x4] sm:$0xf] %vm7614, %v7521
      %7617 = vst.msk [vmem:[#allocation5 + $0x8] sm:$0xf] %vm7614, %v7523
      %7618 = vst.msk [vmem:[#allocation5 + $0xc] sm:$0xf] %vm7614, %v7525
      %7619 = vst.msk [vmem:[#allocation5 + $0x10] sm:$0xf] %vm7614, %v7527
      %7620 = vst.msk [vmem:[#allocation5 + $0x14] sm:$0xf] %vm7614, %v7529
      %7621 = vst.msk [vmem:[#allocation5 + $0x18] sm:$0xf] %vm7614, %v7531
      %7622 = vst.msk [vmem:[#allocation5 + $0x1c] sm:$0xf] %vm7614, %v7533
      %7623 = vst.msk [vmem:[#allocation5 + $0x20] sm:$0xf] %vm7614, %v7535
      %7624 = vst.msk [vmem:[#allocation5 + $0x24] sm:$0xf] %vm7614, %v7537
      %7625 = vst.msk [vmem:[#allocation5 + $0x28] sm:$0xf] %vm7614, %v7539
      %7626 = vst.msk [vmem:[#allocation5 + $0x2c] sm:$0xf] %vm7614, %v7541
      %7627 = vst.msk [vmem:[#allocation5 + $0x30] sm:$0xf] %vm7614, %v7543
      %7628 = vst.msk [vmem:[#allocation5 + $0x34] sm:$0xf] %vm7614, %v7545
      %7629 = vst.msk [vmem:[#allocation5 + $0x38] sm:$0xf] %vm7614, %v7547
      %7630 = vst.msk [vmem:[#allocation5 + $0x3c] sm:$0xf] %vm7614, %v7549
      %7631 = vst.msk [vmem:[#allocation5 + $0x40] sm:$0xf] %vm7614, %v7551
      %7632 = vst.msk [vmem:[#allocation5 + $0x44] sm:$0xf] %vm7614, %v7553
      %7633 = vst.msk [vmem:[#allocation5 + $0x48] sm:$0xf] %vm7614, %v7555
      %7634 = vst.msk [vmem:[#allocation5 + $0x4c] sm:$0xf] %vm7614, %v7557
      %7635 = vst.msk [vmem:[#allocation5 + $0x50] sm:$0xf] %vm7614, %v7559
      %7636 = vst.msk [vmem:[#allocation5 + $0x54] sm:$0xf] %vm7614, %v7561
      %7637 = vst.msk [vmem:[#allocation5 + $0x58] sm:$0xf] %vm7614, %v7563
      %7638 = vst.msk [vmem:[#allocation5 + $0x5c] sm:$0xf] %vm7614, %v7565
      %7639 = vst.msk [vmem:[#allocation5 + $0x60] sm:$0xf] %vm7614, %v7567
      %7640 = vst.msk [vmem:[#allocation5 + $0x64] sm:$0xf] %vm7614, %v7569
      %7641 = vst.msk [vmem:[#allocation5 + $0x68] sm:$0xf] %vm7614, %v7571
      %7642 = vst.msk [vmem:[#allocation5 + $0x6c] sm:$0xf] %vm7614, %v7573
      %7643 = vst.msk [vmem:[#allocation5 + $0x70] sm:$0xf] %vm7614, %v7575
      %7644 = vst.msk [vmem:[#allocation5 + $0x74] sm:$0xf] %vm7614, %v7577
      %7645 = vst.msk [vmem:[#allocation5 + $0x78] sm:$0xf] %vm7614, %v7579
      %7646 = vst.msk [vmem:[#allocation5 + $0x7c] sm:$0xf] %vm7614, %v7581
      %v7647 = vld [vmem:[%s6892] sm:$0xe]
      %v7648 = vld [vmem:[%s6892 + $0x4] sm:$0xf]
      %v7649 = vld [vmem:[%s6892 + $0x8] sm:$0x1]
      %v7650 = vld [vmem:[%s6892 + $0xc] sm:$0xe]
      %v7651 = vld [vmem:[%s6892 + $0x10] sm:$0xf]
      %v7652 = vld [vmem:[%s6892 + $0x14] sm:$0x1]
      %v7653 = vld [vmem:[%s6892 + $0x18] sm:$0xe]
      %v7654 = vld [vmem:[%s6892 + $0x1c] sm:$0xf]
      %v7655 = vld [vmem:[%s6892 + $0x20] sm:$0x1]
      %v7656 = vld [vmem:[%s6892 + $0x24] sm:$0xe]
      %v7657 = vld [vmem:[%s6892 + $0x28] sm:$0xf]
      %v7658 = vld [vmem:[%s6892 + $0x2c] sm:$0x1]
      %v7659 = vld [vmem:[%s6892 + $0x30] sm:$0xe]
      %v7660 = vld [vmem:[%s6892 + $0x34] sm:$0xf]
      %v7661 = vld [vmem:[%s6892 + $0x38] sm:$0x1]
      %v7662 = vld [vmem:[%s6892 + $0x3c] sm:$0xe]
      %v7663 = vld [vmem:[%s6892 + $0x40] sm:$0xf]
      %v7664 = vld [vmem:[%s6892 + $0x44] sm:$0x1]
      %v7665 = vld [vmem:[%s6892 + $0x48] sm:$0xe]
      %v7666 = vld [vmem:[%s6892 + $0x4c] sm:$0xf]
      %v7667 = vld [vmem:[%s6892 + $0x50] sm:$0x1]
      %v7668 = vld [vmem:[%s6892 + $0x54] sm:$0xe]
      %v7669 = vld [vmem:[%s6892 + $0x58] sm:$0xf]
      %v7670 = vld [vmem:[%s6892 + $0x5c] sm:$0x1]
      %v7671 = vld [vmem:[%s6892 + $0x60] sm:$0xe]
      %v7672 = vld [vmem:[%s6892 + $0x64] sm:$0xf]
      %v7673 = vld [vmem:[%s6892 + $0x68] sm:$0x1]
      %v7674 = vld [vmem:[%s6892 + $0x6c] sm:$0xe]
      %v7675 = vld [vmem:[%s6892 + $0x70] sm:$0xf]
      %v7676 = vld [vmem:[%s6892 + $0x74] sm:$0x1]
      %v7677 = vld [vmem:[%s6892 + $0x78] sm:$0xe]
      %v7678 = vld [vmem:[%s6892 + $0x7c] sm:$0xf]
      %v7679 = vld [vmem:[%s6892 + $0x80] sm:$0x1]
      %v7680 = vld [vmem:[%s6892 + $0x84] sm:$0xe]
      %v7681 = vld [vmem:[%s6892 + $0x88] sm:$0xf]
      %v7682 = vld [vmem:[%s6892 + $0x8c] sm:$0x1]
      %v7683 = vld [vmem:[%s6892 + $0x90] sm:$0xe]
      %v7684 = vld [vmem:[%s6892 + $0x94] sm:$0xf]
      %v7685 = vld [vmem:[%s6892 + $0x98] sm:$0x1]
      %v7686 = vld [vmem:[%s6892 + $0x9c] sm:$0xe]
      %v7687 = vld [vmem:[%s6892 + $0xa0] sm:$0xf]
      %v7688 = vld [vmem:[%s6892 + $0xa4] sm:$0x1]
      %v7689 = vld [vmem:[%s6892 + $0xa8] sm:$0xe]
      %v7690 = vld [vmem:[%s6892 + $0xac] sm:$0xf]
      %v7691 = vld [vmem:[%s6892 + $0xb0] sm:$0x1]
      %v7692 = vld [vmem:[%s6892 + $0xb4] sm:$0xe]
      %v7693 = vld [vmem:[%s6892 + $0xb8] sm:$0xf]
      %v7694 = vld [vmem:[%s6892 + $0xbc] sm:$0x1]
      %v7743 = vrot.slane %v7647, 5
      %v7744 = vrot.slane %v7743, 4
      %v7745 = vrot.slane %v7648, 5
      %v7746 = vsel %vm1638, %v7744, %v7745
      %v7747 = vrot.slane %v7745, 4
      %v7748 = vrot.slane %v7649, 5
      %v7749 = vsel %vm1638, %v7747, %v7748
      %v7750 = vrot.slane %v7650, 5
      %v7751 = vrot.slane %v7750, 4
      %v7752 = vrot.slane %v7651, 5
      %v7753 = vsel %vm1638, %v7751, %v7752
      %v7754 = vrot.slane %v7752, 4
      %v7755 = vrot.slane %v7652, 5
      %v7756 = vsel %vm1638, %v7754, %v7755
      %v7757 = vrot.slane %v7653, 5
      %v7758 = vrot.slane %v7757, 4
      %v7759 = vrot.slane %v7654, 5
      %v7760 = vsel %vm1638, %v7758, %v7759
      %v7761 = vrot.slane %v7759, 4
      %v7762 = vrot.slane %v7655, 5
      %v7763 = vsel %vm1638, %v7761, %v7762
      %v7764 = vrot.slane %v7656, 5
      %v7765 = vrot.slane %v7764, 4
      %v7766 = vrot.slane %v7657, 5
      %v7767 = vsel %vm1638, %v7765, %v7766
      %v7768 = vrot.slane %v7766, 4
      %v7769 = vrot.slane %v7658, 5
      %v7770 = vsel %vm1638, %v7768, %v7769
      %v7771 = vrot.slane %v7659, 5
      %v7772 = vrot.slane %v7771, 4
      %v7773 = vrot.slane %v7660, 5
      %v7774 = vsel %vm1638, %v7772, %v7773
      %v7775 = vrot.slane %v7773, 4
      %v7776 = vrot.slane %v7661, 5
      %v7777 = vsel %vm1638, %v7775, %v7776
      %v7778 = vrot.slane %v7662, 5
      %v7779 = vrot.slane %v7778, 4
      %v7780 = vrot.slane %v7663, 5
      %v7781 = vsel %vm1638, %v7779, %v7780
      %v7782 = vrot.slane %v7780, 4
      %v7783 = vrot.slane %v7664, 5
      %v7784 = vsel %vm1638, %v7782, %v7783
      %v7785 = vrot.slane %v7665, 5
      %v7786 = vrot.slane %v7785, 4
      %v7787 = vrot.slane %v7666, 5
      %v7788 = vsel %vm1638, %v7786, %v7787
      %v7789 = vrot.slane %v7787, 4
      %v7790 = vrot.slane %v7667, 5
      %v7791 = vsel %vm1638, %v7789, %v7790
      %v7792 = vrot.slane %v7668, 5
      %v7793 = vrot.slane %v7792, 4
      %v7794 = vrot.slane %v7669, 5
      %v7795 = vsel %vm1638, %v7793, %v7794
      %v7796 = vrot.slane %v7794, 4
      %v7797 = vrot.slane %v7670, 5
      %v7798 = vsel %vm1638, %v7796, %v7797
      %v7799 = vrot.slane %v7671, 5
      %v7800 = vrot.slane %v7799, 4
      %v7801 = vrot.slane %v7672, 5
      %v7802 = vsel %vm1638, %v7800, %v7801
      %v7803 = vrot.slane %v7801, 4
      %v7804 = vrot.slane %v7673, 5
      %v7805 = vsel %vm1638, %v7803, %v7804
      %v7806 = vrot.slane %v7674, 5
      %v7807 = vrot.slane %v7806, 4
      %v7808 = vrot.slane %v7675, 5
      %v7809 = vsel %vm1638, %v7807, %v7808
      %v7810 = vrot.slane %v7808, 4
      %v7811 = vrot.slane %v7676, 5
      %v7812 = vsel %vm1638, %v7810, %v7811
      %v7813 = vrot.slane %v7677, 5
      %v7814 = vrot.slane %v7813, 4
      %v7815 = vrot.slane %v7678, 5
      %v7816 = vsel %vm1638, %v7814, %v7815
      %v7817 = vrot.slane %v7815, 4
      %v7818 = vrot.slane %v7679, 5
      %v7819 = vsel %vm1638, %v7817, %v7818
      %v7820 = vrot.slane %v7680, 5
      %v7821 = vrot.slane %v7820, 4
      %v7822 = vrot.slane %v7681, 5
      %v7823 = vsel %vm1638, %v7821, %v7822
      %v7824 = vrot.slane %v7822, 4
      %v7825 = vrot.slane %v7682, 5
      %v7826 = vsel %vm1638, %v7824, %v7825
      %v7827 = vrot.slane %v7683, 5
      %v7828 = vrot.slane %v7827, 4
      %v7829 = vrot.slane %v7684, 5
      %v7830 = vsel %vm1638, %v7828, %v7829
      %v7831 = vrot.slane %v7829, 4
      %v7832 = vrot.slane %v7685, 5
      %v7833 = vsel %vm1638, %v7831, %v7832
      %v7834 = vrot.slane %v7686, 5
      %v7835 = vrot.slane %v7834, 4
      %v7836 = vrot.slane %v7687, 5
      %v7837 = vsel %vm1638, %v7835, %v7836
      %v7838 = vrot.slane %v7836, 4
      %v7839 = vrot.slane %v7688, 5
      %v7840 = vsel %vm1638, %v7838, %v7839
      %v7841 = vrot.slane %v7689, 5
      %v7842 = vrot.slane %v7841, 4
      %v7843 = vrot.slane %v7690, 5
      %v7844 = vsel %vm1638, %v7842, %v7843
      %v7845 = vrot.slane %v7843, 4
      %v7846 = vrot.slane %v7691, 5
      %v7847 = vsel %vm1638, %v7845, %v7846
      %v7848 = vrot.slane %v7692, 5
      %v7849 = vrot.slane %v7848, 4
      %v7850 = vrot.slane %v7693, 5
      %v7851 = vsel %vm1638, %v7849, %v7850
      %v7852 = vrot.slane %v7850, 4
      %v7853 = vrot.slane %v7694, 5
      %v7854 = vsel %vm1638, %v7852, %v7853
      %7855 = vrot.lane.b32.xlu0 %v7746, 64
      %v7856 = vpop.permute.xlu0 %7855
      %7857 = vrot.lane.b32.xlu0 %v7749, 64
      %v7858 = vpop.permute.xlu0 %7857
      %7859 = vrot.lane.b32.xlu0 %v7753, 64
      %v7860 = vpop.permute.xlu0 %7859
      %7861 = vrot.lane.b32.xlu0 %v7756, 64
      %v7862 = vpop.permute.xlu0 %7861
      %7863 = vrot.lane.b32.xlu0 %v7760, 64
      %v7864 = vpop.permute.xlu0 %7863
      %7865 = vrot.lane.b32.xlu0 %v7763, 64
      %v7866 = vpop.permute.xlu0 %7865
      %7867 = vrot.lane.b32.xlu0 %v7767, 64
      %v7868 = vpop.permute.xlu0 %7867
      %7869 = vrot.lane.b32.xlu0 %v7770, 64
      %v7870 = vpop.permute.xlu0 %7869
      %7871 = vrot.lane.b32.xlu0 %v7774, 64
      %v7872 = vpop.permute.xlu0 %7871
      %7873 = vrot.lane.b32.xlu0 %v7777, 64
      %v7874 = vpop.permute.xlu0 %7873
      %7875 = vrot.lane.b32.xlu0 %v7781, 64
      %v7876 = vpop.permute.xlu0 %7875
      %7877 = vrot.lane.b32.xlu0 %v7784, 64
      %v7878 = vpop.permute.xlu0 %7877
      %7879 = vrot.lane.b32.xlu0 %v7788, 64
      %v7880 = vpop.permute.xlu0 %7879
      %7881 = vrot.lane.b32.xlu0 %v7791, 64
      %v7882 = vpop.permute.xlu0 %7881
      %7883 = vrot.lane.b32.xlu0 %v7795, 64
      %v7884 = vpop.permute.xlu0 %7883
      %7885 = vrot.lane.b32.xlu0 %v7798, 64
      %v7886 = vpop.permute.xlu0 %7885
      %7887 = vrot.lane.b32.xlu0 %v7802, 64
      %v7888 = vpop.permute.xlu0 %7887
      %7889 = vrot.lane.b32.xlu0 %v7805, 64
      %v7890 = vpop.permute.xlu0 %7889
      %7891 = vrot.lane.b32.xlu0 %v7809, 64
      %v7892 = vpop.permute.xlu0 %7891
      %7893 = vrot.lane.b32.xlu0 %v7812, 64
      %v7894 = vpop.permute.xlu0 %7893
      %7895 = vrot.lane.b32.xlu0 %v7816, 64
      %v7896 = vpop.permute.xlu0 %7895
      %7897 = vrot.lane.b32.xlu0 %v7819, 64
      %v7898 = vpop.permute.xlu0 %7897
      %7899 = vrot.lane.b32.xlu0 %v7823, 64
      %v7900 = vpop.permute.xlu0 %7899
      %7901 = vrot.lane.b32.xlu0 %v7826, 64
      %v7902 = vpop.permute.xlu0 %7901
      %7903 = vrot.lane.b32.xlu0 %v7830, 64
      %v7904 = vpop.permute.xlu0 %7903
      %7905 = vrot.lane.b32.xlu0 %v7833, 64
      %v7906 = vpop.permute.xlu0 %7905
      %7907 = vrot.lane.b32.xlu0 %v7837, 64
      %v7908 = vpop.permute.xlu0 %7907
      %7909 = vrot.lane.b32.xlu0 %v7840, 64
      %v7910 = vpop.permute.xlu0 %7909
      %7911 = vrot.lane.b32.xlu0 %v7844, 64
      %v7912 = vpop.permute.xlu0 %7911
      %7913 = vrot.lane.b32.xlu0 %v7847, 64
      %v7914 = vpop.permute.xlu0 %7913
      %7915 = vrot.lane.b32.xlu0 %v7851, 64
      %v7916 = vpop.permute.xlu0 %7915
      %7917 = vrot.lane.b32.xlu0 %v7854, 64
      %v7918 = vpop.permute.xlu0 %7917
      %vm7951 = vcmask 585216
      %7952 = vst.msk [vmem:[#allocation5] sm:$0xf] %vm7951, %v7856
      %7953 = vst.msk [vmem:[#allocation5 + $0x4] sm:$0xf] %vm7951, %v7858
      %7954 = vst.msk [vmem:[#allocation5 + $0x8] sm:$0xf] %vm7951, %v7860
      %7955 = vst.msk [vmem:[#allocation5 + $0xc] sm:$0xf] %vm7951, %v7862
      %7956 = vst.msk [vmem:[#allocation5 + $0x10] sm:$0xf] %vm7951, %v7864
      %7957 = vst.msk [vmem:[#allocation5 + $0x14] sm:$0xf] %vm7951, %v7866
      %7958 = vst.msk [vmem:[#allocation5 + $0x18] sm:$0xf] %vm7951, %v7868
      %7959 = vst.msk [vmem:[#allocation5 + $0x1c] sm:$0xf] %vm7951, %v7870
      %7960 = vst.msk [vmem:[#allocation5 + $0x20] sm:$0xf] %vm7951, %v7872
      %7961 = vst.msk [vmem:[#allocation5 + $0x24] sm:$0xf] %vm7951, %v7874
      %7962 = vst.msk [vmem:[#allocation5 + $0x28] sm:$0xf] %vm7951, %v7876
      %7963 = vst.msk [vmem:[#allocation5 + $0x2c] sm:$0xf] %vm7951, %v7878
      %7964 = vst.msk [vmem:[#allocation5 + $0x30] sm:$0xf] %vm7951, %v7880
      %7965 = vst.msk [vmem:[#allocation5 + $0x34] sm:$0xf] %vm7951, %v7882
      %7966 = vst.msk [vmem:[#allocation5 + $0x38] sm:$0xf] %vm7951, %v7884
      %7967 = vst.msk [vmem:[#allocation5 + $0x3c] sm:$0xf] %vm7951, %v7886
      %7968 = vst.msk [vmem:[#allocation5 + $0x40] sm:$0xf] %vm7951, %v7888
      %7969 = vst.msk [vmem:[#allocation5 + $0x44] sm:$0xf] %vm7951, %v7890
      %7970 = vst.msk [vmem:[#allocation5 + $0x48] sm:$0xf] %vm7951, %v7892
      %7971 = vst.msk [vmem:[#allocation5 + $0x4c] sm:$0xf] %vm7951, %v7894
      %7972 = vst.msk [vmem:[#allocation5 + $0x50] sm:$0xf] %vm7951, %v7896
      %7973 = vst.msk [vmem:[#allocation5 + $0x54] sm:$0xf] %vm7951, %v7898
      %7974 = vst.msk [vmem:[#allocation5 + $0x58] sm:$0xf] %vm7951, %v7900
      %7975 = vst.msk [vmem:[#allocation5 + $0x5c] sm:$0xf] %vm7951, %v7902
      %7976 = vst.msk [vmem:[#allocation5 + $0x60] sm:$0xf] %vm7951, %v7904
      %7977 = vst.msk [vmem:[#allocation5 + $0x64] sm:$0xf] %vm7951, %v7906
      %7978 = vst.msk [vmem:[#allocation5 + $0x68] sm:$0xf] %vm7951, %v7908
      %7979 = vst.msk [vmem:[#allocation5 + $0x6c] sm:$0xf] %vm7951, %v7910
      %7980 = vst.msk [vmem:[#allocation5 + $0x70] sm:$0xf] %vm7951, %v7912
      %7981 = vst.msk [vmem:[#allocation5 + $0x74] sm:$0xf] %vm7951, %v7914
      %7982 = vst.msk [vmem:[#allocation5 + $0x78] sm:$0xf] %vm7951, %v7916
      %7983 = vst.msk [vmem:[#allocation5 + $0x7c] sm:$0xf] %vm7951, %v7918
      %v7984 = vld [vmem:[#allocation5] sm:$0xf]
      %v7985 = vld [vmem:[#allocation5 + $0x4] sm:$0xf]
      %v7986 = vld [vmem:[#allocation5 + $0x8] sm:$0xf]
      %v7987 = vld [vmem:[#allocation5 + $0xc] sm:$0xf]
      %v7988 = vld [vmem:[#allocation5 + $0x10] sm:$0xf]
      %v7989 = vld [vmem:[#allocation5 + $0x14] sm:$0xf]
      %v7990 = vld [vmem:[#allocation5 + $0x18] sm:$0xf]
      %v7991 = vld [vmem:[#allocation5 + $0x1c] sm:$0xf]
      %v7992 = vld [vmem:[#allocation5 + $0x20] sm:$0xf]
      %v7993 = vld [vmem:[#allocation5 + $0x24] sm:$0xf]
      %v7994 = vld [vmem:[#allocation5 + $0x28] sm:$0xf]
      %v7995 = vld [vmem:[#allocation5 + $0x2c] sm:$0xf]
      %v7996 = vld [vmem:[#allocation5 + $0x30] sm:$0xf]
      %v7997 = vld [vmem:[#allocation5 + $0x34] sm:$0xf]
      %v7998 = vld [vmem:[#allocation5 + $0x38] sm:$0xf]
      %v7999 = vld [vmem:[#allocation5 + $0x3c] sm:$0xf]
      %v8000 = vld [vmem:[#allocation5 + $0x40] sm:$0xf]
      %v8001 = vld [vmem:[#allocation5 + $0x44] sm:$0xf]
      %v8002 = vld [vmem:[#allocation5 + $0x48] sm:$0xf]
      %v8003 = vld [vmem:[#allocation5 + $0x4c] sm:$0xf]
      %v8004 = vld [vmem:[#allocation5 + $0x50] sm:$0xf]
      %v8005 = vld [vmem:[#allocation5 + $0x54] sm:$0xf]
      %v8006 = vld [vmem:[#allocation5 + $0x58] sm:$0xf]
      %v8007 = vld [vmem:[#allocation5 + $0x5c] sm:$0xf]
      %v8008 = vld [vmem:[#allocation5 + $0x60] sm:$0xf]
      %v8009 = vld [vmem:[#allocation5 + $0x64] sm:$0xf]
      %v8010 = vld [vmem:[#allocation5 + $0x68] sm:$0xf]
      %v8011 = vld [vmem:[#allocation5 + $0x6c] sm:$0xf]
      %v8012 = vld [vmem:[#allocation5 + $0x70] sm:$0xf]
      %v8013 = vld [vmem:[#allocation5 + $0x74] sm:$0xf]
      %v8014 = vld [vmem:[#allocation5 + $0x78] sm:$0xf]
      %v8015 = vld [vmem:[#allocation5 + $0x7c] sm:$0xf]
      %v8016 = vld [vmem:[%s3] sm:$0xf]
      %v8017 = vld [vmem:[%s3 + $0x4] sm:$0xf]
      %v8018 = vld [vmem:[%s3 + $0x8] sm:$0xf]
      %v8019 = vld [vmem:[%s3 + $0xc] sm:$0xf]
      %v8020 = vld [vmem:[%s3 + $0x10] sm:$0xf]
      %v8021 = vld [vmem:[%s3 + $0x14] sm:$0xf]
      %v8022 = vld [vmem:[%s3 + $0x18] sm:$0xf]
      %v8023 = vld [vmem:[%s3 + $0x1c] sm:$0xf]
      %v8024 = vld [vmem:[%s3 + $0x20] sm:$0xf]
      %v8025 = vld [vmem:[%s4] sm:$0x1]
      %v8027 = vperm.slane %v8025, 0
      %v8061 = vunpack.c.l.b16 %v7984
      %v8062 = vunpack.c.l.b16 %v7985
      %v8063 = vunpack.c.l.b16 %v7986
      %v8064 = vunpack.c.l.b16 %v7987
      %v8065 = vunpack.c.l.b16 %v7988
      %v8066 = vunpack.c.l.b16 %v7989
      %v8067 = vunpack.c.l.b16 %v7990
      %v8068 = vunpack.c.l.b16 %v7991
      %v8069 = vunpack.c.l.b16 %v7992
      %v8070 = vunpack.c.l.b16 %v7993
      %v8071 = vunpack.c.l.b16 %v7994
      %v8072 = vunpack.c.l.b16 %v7995
      %v8073 = vunpack.c.l.b16 %v7996
      %v8074 = vunpack.c.l.b16 %v7997
      %v8075 = vunpack.c.l.b16 %v7998
      %v8076 = vunpack.c.l.b16 %v7999
      %v8077 = vunpack.c.l.b16 %v8000
      %v8078 = vunpack.c.l.b16 %v8001
      %v8079 = vunpack.c.l.b16 %v8002
      %v8080 = vunpack.c.l.b16 %v8003
      %v8081 = vunpack.c.l.b16 %v8004
      %v8082 = vunpack.c.l.b16 %v8005
      %v8083 = vunpack.c.l.b16 %v8006
      %v8084 = vunpack.c.l.b16 %v8007
      %v8085 = vunpack.c.l.b16 %v8008
      %v8086 = vunpack.c.l.b16 %v8009
      %v8087 = vunpack.c.l.b16 %v8010
      %v8088 = vunpack.c.l.b16 %v8011
      %v8089 = vunpack.c.l.b16 %v8012
      %v8090 = vunpack.c.l.b16 %v8013
      %v8091 = vunpack.c.l.b16 %v8014
      %v8092 = vunpack.c.l.b16 %v8015
      %v8093 = vpack.c.b16 %v8062, %v8061
      %v8094 = vpack.c.b16 %v8064, %v8063
      %v8095 = vpack.c.b16 %v8066, %v8065
      %v8096 = vpack.c.b16 %v8068, %v8067
      %v8097 = vpack.c.b16 %v8070, %v8069
      %v8098 = vpack.c.b16 %v8072, %v8071
      %v8099 = vpack.c.b16 %v8074, %v8073
      %v8100 = vpack.c.b16 %v8076, %v8075
      %v8101 = vpack.c.b16 %v8078, %v8077
      %v8102 = vpack.c.b16 %v8080, %v8079
      %v8103 = vpack.c.b16 %v8082, %v8081
      %v8104 = vpack.c.b16 %v8084, %v8083
      %v8105 = vpack.c.b16 %v8086, %v8085
      %v8106 = vpack.c.b16 %v8088, %v8087
      %v8107 = vpack.c.b16 %v8090, %v8089
      %v8108 = vpack.c.b16 %v8092, %v8091
      %v8118 = vunpack.c.l.b16 %v8016
      %v8119 = vunpack.c.l.b16 %v8017
      %v8120 = vunpack.c.l.b16 %v8018
      %v8121 = vunpack.c.l.b16 %v8019
      %v8122 = vunpack.c.l.b16 %v8020
      %v8123 = vunpack.c.l.b16 %v8021
      %v8124 = vunpack.c.l.b16 %v8022
      %v8125 = vunpack.c.l.b16 %v8023
      %v8126 = vunpack.c.l.b16 %v8024
      %v8127 = vpack.c.b16 %v8119, %v8118
      %v8128 = vpack.c.b16 %v8121, %v8120
      %v8129 = vpack.c.b16 %v8123, %v8122
      %v8130 = vpack.c.b16 %v8125, %v8124
      %v8131 = vpack.c.b16 %v8126, %v8126
      %vm8136 = vcmask 588800
      %v8138 = vsel %vm8136, %v8093, 0
      %v8141 = vsel %vm8136, %v8094, 0
      %v8144 = vsel %vm8136, %v8095, 0
      %v8147 = vsel %vm8136, %v8096, 0
      %v8150 = vsel %vm8136, %v8097, 0
      %v8153 = vsel %vm8136, %v8098, 0
      %v8156 = vsel %vm8136, %v8099, 0
      %v8159 = vsel %vm8136, %v8100, 0
      %v8162 = vsel %vm8136, %v8101, 0
      %v8165 = vsel %vm8136, %v8102, 0
      %v8168 = vsel %vm8136, %v8103, 0
      %v8171 = vsel %vm8136, %v8104, 0
      %v8174 = vsel %vm8136, %v8105, 0
      %v8177 = vsel %vm8136, %v8106, 0
      %v8180 = vsel %vm8136, %v8107, 0
      %v8183 = vsel %vm8136, %v8108, 0
      %vm8185 = vcmask 1043456
      %v8187 = vsel %vm8185, %v8131, 0
      %8189 = vmatpush.bf16.msra.mxu0 0
      %8190 = vmatpush.bf16.msra.mxu0 0
      %8191 = vmatpush.bf16.msra.mxu0 0
      %8192 = vmatpush.bf16.msra.mxu0 %v8187
      %8193 = vmatpush.bf16.msra.mxu0 %v8130
      %8194 = vmatpush.bf16.msra.mxu0 %v8129
      %8195 = vmatpush.bf16.msra.mxu0 %v8128
      %8196 = vmatpush.bf16.msra.mxu0 %v8127
      %8197 = vmatmul.bf16.gmra.mxu0 %v8138
      %v8198 = vpop.f32.mrf.mxu0
      %v8199 = vadd.f32 %v8027, %v8198
      %v8200 = vpop.f32.mrf.mxu0
      %v8201 = vadd.f32 %v8027, %v8200
      %8202 = vmatmul.bf16.gmra.mxu0 %v8141
      %v8203 = vpop.f32.mrf.mxu0
      %v8204 = vadd.f32 %v8027, %v8203
      %v8205 = vpop.f32.mrf.mxu0
      %v8206 = vadd.f32 %v8027, %v8205
      %8207 = vmatmul.bf16.gmra.mxu0 %v8144
      %v8208 = vpop.f32.mrf.mxu0
      %v8209 = vadd.f32 %v8027, %v8208
      %v8210 = vpop.f32.mrf.mxu0
      %v8211 = vadd.f32 %v8027, %v8210
      %8212 = vmatmul.bf16.gmra.mxu0 %v8147
      %v8213 = vpop.f32.mrf.mxu0
      %v8214 = vadd.f32 %v8027, %v8213
      %v8215 = vpop.f32.mrf.mxu0
      %v8216 = vadd.f32 %v8027, %v8215
      %8217 = vmatmul.bf16.gmra.mxu0 %v8150
      %v8218 = vpop.f32.mrf.mxu0
      %v8219 = vadd.f32 %v8027, %v8218
      %v8220 = vpop.f32.mrf.mxu0
      %v8221 = vadd.f32 %v8027, %v8220
      %8222 = vmatmul.bf16.gmra.mxu0 %v8153
      %v8223 = vpop.f32.mrf.mxu0
      %v8224 = vadd.f32 %v8027, %v8223
      %v8225 = vpop.f32.mrf.mxu0
      %v8226 = vadd.f32 %v8027, %v8225
      %8227 = vmatmul.bf16.gmra.mxu0 %v8156
      %v8228 = vpop.f32.mrf.mxu0
      %v8229 = vadd.f32 %v8027, %v8228
      %v8230 = vpop.f32.mrf.mxu0
      %v8231 = vadd.f32 %v8027, %v8230
      %8232 = vmatmul.bf16.gmra.mxu0 %v8159
      %v8233 = vpop.f32.mrf.mxu0
      %v8234 = vadd.f32 %v8027, %v8233
      %v8235 = vpop.f32.mrf.mxu0
      %v8236 = vadd.f32 %v8027, %v8235
      %8237 = vmatmul.bf16.gmra.mxu0 %v8162
      %v8238 = vpop.f32.mrf.mxu0
      %v8239 = vadd.f32 %v8027, %v8238
      %v8240 = vpop.f32.mrf.mxu0
      %v8241 = vadd.f32 %v8027, %v8240
      %8242 = vmatmul.bf16.gmra.mxu0 %v8165
      %v8243 = vpop.f32.mrf.mxu0
      %v8244 = vadd.f32 %v8027, %v8243
      %v8245 = vpop.f32.mrf.mxu0
      %v8246 = vadd.f32 %v8027, %v8245
      %8247 = vmatmul.bf16.gmra.mxu0 %v8168
      %v8248 = vpop.f32.mrf.mxu0
      %v8249 = vadd.f32 %v8027, %v8248
      %v8250 = vpop.f32.mrf.mxu0
      %v8251 = vadd.f32 %v8027, %v8250
      %8252 = vmatmul.bf16.gmra.mxu0 %v8171
      %v8253 = vpop.f32.mrf.mxu0
      %v8254 = vadd.f32 %v8027, %v8253
      %v8255 = vpop.f32.mrf.mxu0
      %v8256 = vadd.f32 %v8027, %v8255
      %8257 = vmatmul.bf16.gmra.mxu0 %v8174
      %v8258 = vpop.f32.mrf.mxu0
      %v8259 = vadd.f32 %v8027, %v8258
      %v8260 = vpop.f32.mrf.mxu0
      %v8261 = vadd.f32 %v8027, %v8260
      %8262 = vmatmul.bf16.gmra.mxu0 %v8177
      %v8263 = vpop.f32.mrf.mxu0
      %v8264 = vadd.f32 %v8027, %v8263
      %v8265 = vpop.f32.mrf.mxu0
      %v8266 = vadd.f32 %v8027, %v8265
      %8267 = vmatmul.bf16.gmra.mxu0 %v8180
      %v8268 = vpop.f32.mrf.mxu0
      %v8269 = vadd.f32 %v8027, %v8268
      %v8270 = vpop.f32.mrf.mxu0
      %v8271 = vadd.f32 %v8027, %v8270
      %8272 = vmatmul.bf16.gmra.mxu0 %v8183
      %v8273 = vpop.f32.mrf.mxu0
      %v8274 = vadd.f32 %v8027, %v8273
      %v8275 = vpop.f32.mrf.mxu0
      %v8276 = vadd.f32 %v8027, %v8275
      %8277 = vdwg.mxu0
      %v8278 = vmax.f32 %v8199, 0.0
      %v8279 = vmax.f32 %v8201, 0.0
      %v8280 = vmax.f32 %v8204, 0.0
      %v8281 = vmax.f32 %v8206, 0.0
      %v8282 = vmax.f32 %v8209, 0.0
      %v8283 = vmax.f32 %v8211, 0.0
      %v8284 = vmax.f32 %v8214, 0.0
      %v8285 = vmax.f32 %v8216, 0.0
      %v8286 = vmax.f32 %v8219, 0.0
      %v8287 = vmax.f32 %v8221, 0.0
      %v8288 = vmax.f32 %v8224, 0.0
      %v8289 = vmax.f32 %v8226, 0.0
      %v8290 = vmax.f32 %v8229, 0.0
      %v8291 = vmax.f32 %v8231, 0.0
      %v8292 = vmax.f32 %v8234, 0.0
      %v8293 = vmax.f32 %v8236, 0.0
      %v8294 = vmax.f32 %v8239, 0.0
      %v8295 = vmax.f32 %v8241, 0.0
      %v8296 = vmax.f32 %v8244, 0.0
      %v8297 = vmax.f32 %v8246, 0.0
      %v8298 = vmax.f32 %v8249, 0.0
      %v8299 = vmax.f32 %v8251, 0.0
      %v8300 = vmax.f32 %v8254, 0.0
      %v8301 = vmax.f32 %v8256, 0.0
      %v8302 = vmax.f32 %v8259, 0.0
      %v8303 = vmax.f32 %v8261, 0.0
      %v8304 = vmax.f32 %v8264, 0.0
      %v8305 = vmax.f32 %v8266, 0.0
      %v8306 = vmax.f32 %v8269, 0.0
      %v8307 = vmax.f32 %v8271, 0.0
      %v8308 = vmax.f32 %v8274, 0.0
      %v8309 = vmax.f32 %v8276, 0.0
      %vm8310 = vcmask 64512
      %8311 = vst.msk [vmem:[%s224] sm:$0xff] %vm8310, %v8278
      %8312 = vst.msk [vmem:[%s224 + $0x8] sm:$0xff] %vm8310, %v8279
      %8313 = vst.msk [vmem:[%s224 + $0x10] sm:$0xff] %vm8310, %v8280
      %8314 = vst.msk [vmem:[%s224 + $0x18] sm:$0xff] %vm8310, %v8281
      %8315 = vst.msk [vmem:[%s224 + $0x20] sm:$0xff] %vm8310, %v8282
      %8316 = vst.msk [vmem:[%s224 + $0x28] sm:$0xff] %vm8310, %v8283
      %8317 = vst.msk [vmem:[%s224 + $0x30] sm:$0xff] %vm8310, %v8284
      %8318 = vst.msk [vmem:[%s224 + $0x38] sm:$0xff] %vm8310, %v8285
      %8319 = vst.msk [vmem:[%s224 + $0x40] sm:$0xff] %vm8310, %v8286
      %8320 = vst.msk [vmem:[%s224 + $0x48] sm:$0xff] %vm8310, %v8287
      %8321 = vst.msk [vmem:[%s224 + $0x50] sm:$0xff] %vm8310, %v8288
      %8322 = vst.msk [vmem:[%s224 + $0x58] sm:$0xff] %vm8310, %v8289
      %8323 = vst.msk [vmem:[%s224 + $0x60] sm:$0xff] %vm8310, %v8290
      %8324 = vst.msk [vmem:[%s224 + $0x68] sm:$0xff] %vm8310, %v8291
      %8325 = vst.msk [vmem:[%s224 + $0x70] sm:$0xff] %vm8310, %v8292
      %8326 = vst.msk [vmem:[%s224 + $0x78] sm:$0xff] %vm8310, %v8293
      %8327 = vst.msk [vmem:[%s224 + $0x80] sm:$0xff] %vm8310, %v8294
      %8328 = vst.msk [vmem:[%s224 + $0x88] sm:$0xff] %vm8310, %v8295
      %8329 = vst.msk [vmem:[%s224 + $0x90] sm:$0xff] %vm8310, %v8296
      %8330 = vst.msk [vmem:[%s224 + $0x98] sm:$0xff] %vm8310, %v8297
      %8331 = vst.msk [vmem:[%s224 + $0xa0] sm:$0xff] %vm8310, %v8298
      %8332 = vst.msk [vmem:[%s224 + $0xa8] sm:$0xff] %vm8310, %v8299
      %8333 = vst.msk [vmem:[%s224 + $0xb0] sm:$0xff] %vm8310, %v8300
      %8334 = vst.msk [vmem:[%s224 + $0xb8] sm:$0xff] %vm8310, %v8301
      %8335 = vst.msk [vmem:[%s224 + $0xc0] sm:$0xff] %vm8310, %v8302
      %8336 = vst.msk [vmem:[%s224 + $0xc8] sm:$0xff] %vm8310, %v8303
      %8337 = vst.msk [vmem:[%s224 + $0xd0] sm:$0xff] %vm8310, %v8304
      %8338 = vst.msk [vmem:[%s224 + $0xd8] sm:$0xff] %vm8310, %v8305
      %8339 = vst.msk [vmem:[%s224 + $0xe0] sm:$0xff] %vm8310, %v8306
      %8340 = vst.msk [vmem:[%s224 + $0xe8] sm:$0xff] %vm8310, %v8307
      %8341 = vst.msk [vmem:[%s224 + $0xf0] sm:$0xff] %vm8310, %v8308
      %8342 = vst.msk [vmem:[%s224 + $0xf8] sm:$0xff] %vm8310, %v8309
      %p8343 = scmp.lt.s32.totalorder %s16, 1
      %s8344 = scalar_select %p8343, %s16, 1
      %s8345 = smul.addr %s8344, 32
      %s8346 = smul.addr %s8345, 8
      %s8347 = scalar_lea.vmem %s5, %s8346
      // Predicated region
      $region41: #{tpu_custom_call.1} parent=39 // pred_check
        %p8348 = pneg %p144
      $region42: #{tpu_custom_call.1} parent=39 // pred_check_branch
        %8350 = sbr.rel (%p8348) target = $region44
      $region43: #{tpu_custom_call.1} parent=39 // pred_region
        _
      $region44: #{tpu_custom_call.1} parent=39 // pred_fallthru
        _
    $region40: #{tpu_custom_call.1} parent=5 // pred_fallthru
      _
    %p8351 = scmp.le.s32.totalorder 2, %s11
    // Predicated region
    $region45: #{tpu_custom_call.1} parent=5 // pred_check
      %p8352 = pneg %p8351
    $region46: #{tpu_custom_call.1} parent=5 // pred_check_branch
      %8354 = sbr.rel (%p8352) target = $region48
    $region47: #{tpu_custom_call.1} parent=5 // pred_region
      %s8355 = ssub.s32 %s11, 2
      // Predicated region
      $region49: #{tpu_custom_call.1} parent=47 // pred_check
        %p8356 = pneg %p150
      $region50: #{tpu_custom_call.1} parent=47 // pred_check_branch
        %8358 = sbr.rel (%p8356) target = $region52
      $region51: #{tpu_custom_call.1} parent=47 // pred_region
        %p8359 = scmp.lt.s32.totalorder %s17, 1
        %s8360 = scalar_select %p8359, %s17, 1
        %s8361 = smul.addr %s8360, 32
        %s8362 = smul.addr %s8361, 8
        %s8363 = scalar_lea.vmem %s5, %s8362
      $region52: #{tpu_custom_call.1} parent=47 // pred_fallthru
        _
    $region48: #{tpu_custom_call.1} parent=5 // pred_fallthru
      _
  $region6: #{tpu_custom_call.1} parent=0 // loop_footer
    %s15 = sadd.s32 1, %s11
  $region7: #{tpu_custom_call.1} parent=0 // loop_footer_branch
    %10 = sbr.rel target = $region3
  $region8: #{tpu_custom_call.1} parent=0 // loop_exit
    _

</llo_original>
